<compile_context>
chip_gen: v6e
topology: v6e:2x2x1
jax: 0.10.0
libtpu: 0.0.40
codegen_flags: <defaults>
</compile_context>

<pallas_src>
import functools

import numpy as np
import jax
import jax.numpy as jnp
from jax import lax
from jax.experimental import pallas as pl
from jax.experimental.pallas import tpu as pltpu

# Scoped-VMEM cap: above every generation's default (16/32 MiB) yet with headroom under
# v7x's 64 MiB physical VMEM. The tile choosers below budget ~20 MiB of live buffers.
_VMEM_LIMIT = 48 * 1024 * 1024
_MATMUL_VMEM_BUDGET = 20 << 20   # bytes of pipeline buffers targeted by _choose_tiles
_BN_VMEM_BUDGET = 12 << 20       # bytes of pipeline buffers for the elementwise kernel


# ---------------------------------------------------------------------------
# Pallas kernels
# ---------------------------------------------------------------------------
def _matmul_stats_kernel(a_ref, w_ref, y_ref, stats_ref, acc_ref, *, tk, nk, w_resident):
    """K-tiled conv-as-matmul (bf16 in, f32 accumulate) + per-M-tile channel stats.

    Grid = (M tiles, K tiles); K is the innermost "arbitrary" axis. W is either
    VMEM-resident (full (Kp, Cp) block, sliced per K step) or streamed as (tk, Cp)
    tiles. y (bf16) and the (sum, sumsq) stats rows are written on the last K step.
    """
    k = pl.program_id(1)

    @pl.when(k == 0)
    def _():
        acc_ref[...] = jnp.zeros_like(acc_ref)

    if w_resident and nk > 1:
        w = w_ref[pl.ds(pl.multiple_of(k * tk, tk), tk), :]
    else:
        w = w_ref[...]
    acc_ref[...] += jnp.dot(a_ref[...], w, preferred_element_type=jnp.float32)

    @pl.when(k == nk - 1)
    def _():
        y = acc_ref[...]
        y_ref[...] = y.astype(y_ref.dtype)
        s = jnp.sum(y, axis=0, keepdims=True)         # (1, Cp)
        sq = jnp.sum(y * y, axis=0, keepdims=True)    # (1, Cp)
        stats_ref[0] = jnp.concatenate([s, sq], axis=0)   # (2, Cp) rows: [sum, sumsq]


def _bn_lrelu_kernel(y_ref, scale_ref, shift_ref, o_ref):
    """Affine batch-norm application + LeakyReLU(0.2) on bf16 activations."""
    y = y_ref[...].astype(jnp.float32) * scale_ref[...] + shift_ref[...]
    o_ref[...] = jnp.where(y >= 0.0, y, 0.2 * y).astype(o_ref.dtype)


# ---------------------------------------------------------------------------
# Tiling helpers
# ---------------------------------------------------------------------------
def _round_up(x, m):
    return (x + m - 1) // m * m


def _choose_tiles(M, K, Cout, *, budget_bytes=_MATMUL_VMEM_BUDGET,
                  max_tm=1024, max_tk=2048):
    """Pick (tm, Mp, tk, Kp, nK, Cp, w_resident) under a VMEM byte budget.

    tk divides Kp = round_up(K, 128) exactly (no K over-pad). tm is a multiple of 16
    (native bf16 sublane tile), preferring an exact divisor of round_up(M, 16).
    """
    Cp = _round_up(Cout, 128)
    Kp = _round_up(K, 128)
    q = Kp // 128
    tk = 128 * max(d for d in range(1, q + 1) if q % d == 0 and d * 128 <= max_tk)
    nK = Kp // tk

    w_bytes = Kp * Cp * 2                               # bf16 weights
    w_resident = 2 * w_bytes <= budget_bytes // 3
    fixed = 2 * w_bytes if w_resident else 2 * tk * Cp * 2
    # Per output row: A (2 bufs, bf16) + y (2 bufs, bf16) + f32 accumulator.
    per_row = 2 * tk * 2 + 2 * Cp * 2 + Cp * 4
    tm_cap = min(max_tm, max(16, (budget_bytes - fixed) // per_row))
    tm_cap -= tm_cap % 16
    tm_cap = max(tm_cap, 16)

    Mp16 = _round_up(M, 16)
    if Mp16 <= tm_cap:
        return Mp16, Mp16, tk, Kp, nK, Cp, w_resident
    # Prefer a tile that divides round_up(M, 16) exactly (at most 15 padded rows).
    d = tm_cap
    while d >= 16:
        if Mp16 % d == 0:
            break
        d -= 16
    if d >= 128:
        return d, Mp16, tk, Kp, nK, Cp, w_resident
    tm = tm_cap
    return tm, _round_up(M, tm), tk, Kp, nK, Cp, w_resident
    # TODO(synk): add a Cout (N) grid axis once Cp exceeds ~1024 so deep configs stay
    # inside v7x's 64 MiB VMEM; Cp is <= 128 for the shapes exercised here.


# ---------------------------------------------------------------------------
# Pallas wrappers
# ---------------------------------------------------------------------------
def pallas_matmul_stats(a_p, w_p, tm, tk, w_resident):
    """(Mp,Kp) @ (Kp,Cp) -> bf16 y (Mp,Cp) plus per-channel sum / sum-of-squares."""
    Mp, Kp = a_p.shape
    Cp = w_p.shape[1]
    nM, nK = Mp // tm, Kp // tk

    kernel = functools.partial(_matmul_stats_kernel, tk=tk, nk=nK, w_resident=w_resident)
    if w_resident:
        # Constant block index -> W is DMA'd once and stays resident in VMEM.
        w_spec = pl.BlockSpec((Kp, Cp), lambda i, k: (0, 0))
    else:
        w_spec = pl.BlockSpec((tk, Cp), lambda i, k: (k, 0))

    y, stats = pl.pallas_call(
        kernel,
        out_shape=(jax.ShapeDtypeStruct((Mp, Cp), jnp.bfloat16),
                   jax.ShapeDtypeStruct((nM, 2, Cp), jnp.float32)),
        grid_spec=pltpu.PrefetchScalarGridSpec(
            num_scalar_prefetch=0,
            grid=(nM, nK),
            in_specs=[pl.BlockSpec((tm, tk), lambda i, k: (i, k)), w_spec],
            out_specs=[pl.BlockSpec((tm, Cp), lambda i, k: (i, 0)),
                       pl.BlockSpec((1, 2, Cp), lambda i, k: (i, 0, 0))],
            scratch_shapes=[pltpu.VMEM((tm, Cp), jnp.float32)]),
        compiler_params=pltpu.CompilerParams(
            dimension_semantics=("parallel", "arbitrary"),
            vmem_limit_bytes=_VMEM_LIMIT),
    )(a_p, w_p)

    s = jnp.sum(stats[:, 0, :], axis=0)        # per-channel sum
    sq = jnp.sum(stats[:, 1, :], axis=0)       # per-channel sum of squares
    return y, s, sq


def pallas_bn_lrelu(y_p, scale, shift, budget_bytes=_BN_VMEM_BUDGET):
    """Elementwise scale*y + shift -> LeakyReLU(0.2); bf16 in, bf16 out.

    Tile rows are byte-capped (not a fixed 2048) so the double-buffered in+out
    footprint stays well inside v7x's 64 MiB VMEM even for wide Cp.
    """
    Mp, Cp = y_p.shape
    row_cap = max(16, budget_bytes // (Cp * 2 * 4))   # ~4 live bf16 (tm, Cp) buffers
    cap = min(Mp, row_cap, 4096)
    cap -= cap % 16
    cap = max(cap, 16)
    tm = 16
    d = cap
    while d >= 16:                                    # Mp is always a multiple of 16
        if Mp % d == 0:
            tm = d
            break
        d -= 16
    return pl.pallas_call(
        _bn_lrelu_kernel,
        out_shape=jax.ShapeDtypeStruct((Mp, Cp), jnp.bfloat16),
        grid_spec=pltpu.PrefetchScalarGridSpec(
            num_scalar_prefetch=0,
            grid=(Mp // tm,),
            in_specs=[pl.BlockSpec((tm, Cp), lambda i: (i, 0)),
                      pl.BlockSpec((1, Cp), lambda i: (0, 0)),
                      pl.BlockSpec((1, Cp), lambda i: (0, 0))],
            out_specs=pl.BlockSpec((tm, Cp), lambda i: (i, 0))),
        compiler_params=pltpu.CompilerParams(
            dimension_semantics=("parallel",),
            vmem_limit_bytes=_VMEM_LIMIT),
    )(y_p, scale, shift)


# ---------------------------------------------------------------------------
# Model glue — channel-last (N, T, H, W, C) activations, causal temporal conv,
# stride (1,2,2), spatial pad 1
# ---------------------------------------------------------------------------
def _im2col_cl(x, kT, kH, kW, dilation, Kp, Mp):
    """Channel-last im2col matching Conv3d(pad=(p,1,1), stride=(1,2,2)) + Chomp3d(p).

    Builds A directly in its padded (Mp, Kp) layout: the K pad is appended as a zero
    "tap" column inside the concat and the (rare) M pad as zero rows — no separate
    full-size jnp.pad pass over A. K ordering is (kt, kh, kw, c).
    """
    # TODO(synk): implicit im2col (per-tap accumulation / DMA gather inside the matmul
    # kernel) would avoid materializing the tap-expanded A matrix in HBM entirely.
    N, T, H, W, C = x.shape
    p = (kT - 1) * dilation
    xp = jnp.pad(x, ((0, 0), (p, 0), (1, 1), (1, 1), (0, 0)))
    OH = (H + 2 - kH) // 2 + 1
    OW = (W + 2 - kW) // 2 + 1
    cols = []
    for kt in range(kT):
        for kh in range(kH):
            for kw in range(kW):
                cols.append(xp[:, kt * dilation: kt * dilation + T,
                               kh: kh + 2 * OH: 2,
                               kw: kw + 2 * OW: 2, :])
    K = kT * kH * kW * C
    if Kp > K:
        cols.append(jnp.zeros((N, T, OH, OW, Kp - K), x.dtype))
    a = jnp.concatenate(cols, axis=-1).reshape(N * T * OH * OW, Kp)
    M = N * T * OH * OW
    if Mp > M:
        a = jnp.concatenate([a, jnp.zeros((Mp - M, Kp), x.dtype)], axis=0)
    return a, (N, T, OH, OW)


def dilated_conv_block(x_cl, w, gamma, beta, dilation, eps=1e-5):
    """NoiseLayer(use_noise=False) -> Conv3d -> Chomp3d -> BatchNorm3d(train) -> LeakyReLU(0.2)."""
    # NoiseLayer with use_noise=False is the identity.
    Cout, Cin, kT, kH, kW = w.shape
    N, T, H, Wsp, _ = x_cl.shape
    OH = (H + 2 - kH) // 2 + 1
    OW = (Wsp + 2 - kW) // 2 + 1
    M = N * T * OH * OW
    K = kT * kH * kW * Cin

    tm, Mp, tk, Kp, _, Cp, w_res = _choose_tiles(M, K, Cout)
    a_p, _ = _im2col_cl(x_cl, kT, kH, kW, dilation, Kp=Kp, Mp=Mp)
    wm = jnp.transpose(w, (2, 3, 4, 1, 0)).reshape(K, Cout)
    w_p = jnp.pad(wm.astype(jnp.bfloat16), ((0, Kp - K), (0, Cp - Cout)))

    y_p, s, sq = pallas_matmul_stats(a_p, w_p, tm, tk, w_res)

    mean = s / M
    var = jnp.maximum(sq / M - mean * mean, 0.0)          # biased var (train-mode BN)
    gamma_p = jnp.pad(gamma, (0, Cp - Cout))
    beta_p = jnp.pad(beta, (0, Cp - Cout))
    scale = gamma_p * lax.rsqrt(var + eps)
    shift = beta_p - mean * scale

    out = pallas_bn_lrelu(y_p, scale.reshape(1, Cp), shift.reshape(1, Cp))
    # Stay channel-last for the next layer (no NCDHW round-trip).
    return out[:M, :Cout].reshape(N, T, OH, OW, Cout)


def conv3d_1x4x4(x_cl, w):
    """Conv3d(Cin, 1, (1,4,4), stride=(1,2,2), padding=(0,1,1), bias=False).

    Cout == 1, so this is a tiny (M, K) @ (K, 1) projection done as a plain f32 dot in
    the wrapper (per perf review) instead of a 128-column-padded MXU / f32 HBM write.
    """
    Cout, Cin, kT, kH, kW = w.shape
    N, T, H, Wsp, _ = x_cl.shape
    OH = (H + 2 - kH) // 2 + 1
    OW = (Wsp + 2 - kW) // 2 + 1
    M = N * T * OH * OW
    K = kT * kH * kW * Cin
    a, _ = _im2col_cl(x_cl, kT, kH, kW, 1, Kp=K, Mp=M)
    wm = jnp.transpose(w, (2, 3, 4, 1, 0)).reshape(K, Cout)
    y = jnp.dot(a.astype(jnp.float32), wm, precision=lax.Precision.HIGHEST)
    return y.reshape(N, T, OH, OW, Cout).transpose(0, 4, 1, 2, 3)


@functools.partial(jax.jit, static_argnames=("dilations",))
def temporal_video_discriminator_forward(x, params, disc_w, dilations):
    # One-time NCDHW -> channel-last (N, T, H, W, C) bf16 conversion of the input.
    out = jnp.transpose(x, (0, 2, 3, 4, 1)).astype(jnp.bfloat16)
    for p, d in zip(params, dilations):
        out = dilated_conv_block(out, p["w"], p["gamma"], p["beta"], d)
    # full_score=False path of the PyTorch module: (disc_net(out), None)
    # TODO(synk): gen_net branch is only used when full_score=True; not exercised here.
    return conv3d_1x4x4(out, disc_w), None


def init_params(key, n_channels, n_blocks, ndf, tempo_kernel_size=3):
    params, dilations = [], []
    in_c, out_c = n_channels, ndf
    keys = jax.random.split(key, n_blocks + 1)
    for r in range(n_blocks):
        dilation = 2 ** r
        w = 0.05 * jax.random.normal(
            keys[r], (out_c, in_c, tempo_kernel_size, 4, 4), jnp.float32)
        params.append(dict(w=w,
                           gamma=jnp.ones((out_c,), jnp.float32),
                           beta=jnp.zeros((out_c,), jnp.float32)))
        dilations.append(dilation)
        in_c = ndf * dilation
        out_c = in_c * 2
    disc_w = 0.05 * jax.random.normal(keys[-1], (1, out_c // 2, 1, 4, 4), jnp.float32)
    return params, tuple(dilations), disc_w


# ---------------------------------------------------------------------------
# Pure-JAX fp32 reference (mirrors the PyTorch forward exactly) for validation
# ---------------------------------------------------------------------------
def ref_forward(x, params, disc_w, dilations, tempo_kernel_size=3, eps=1e-5):
    out = x
    for p, d in zip(params, dilations):
        pad = (tempo_kernel_size - 1) * d
        dn = lax.conv_dimension_numbers(out.shape, p["w"].shape,
                                        ('NCDHW', 'OIDHW', 'NCDHW'))
        y = lax.conv_general_dilated(
            out, p["w"], window_strides=(1, 2, 2),
            padding=((pad, pad), (1, 1), (1, 1)),
            rhs_dilation=(d, 1, 1), dimension_numbers=dn,
            precision=lax.Precision.HIGHEST)
        y = y[:, :, :-pad, :, :]                                    # Chomp3d
        mean = jnp.mean(y, axis=(0, 2, 3, 4), keepdims=True)        # BatchNorm3d (train)
        var = jnp.var(y, axis=(0, 2, 3, 4), keepdims=True)
        y = ((y - mean) / jnp.sqrt(var + eps)
             * p["gamma"].reshape(1, -1, 1, 1, 1)
             + p["beta"].reshape(1, -1, 1, 1, 1))
        out = jnp.where(y >= 0, y, 0.2 * y)                         # LeakyReLU(0.2)
    dn = lax.conv_dimension_numbers(out.shape, disc_w.shape,
                                    ('NCDHW', 'OIDHW', 'NCDHW'))
    return lax.conv_general_dilated(
        out, disc_w, window_strides=(1, 2, 2),
        padding=((0, 0), (1, 1), (1, 1)),
        dimension_numbers=dn, precision=lax.Precision.HIGHEST)


# ---------------------------------------------------------------------------
if __name__ == "__main__":
    key = jax.random.PRNGKey(0)
    k_x, k_p = jax.random.split(key)

    # Small shapes: batch=2, n_channels=3, video_length=8, 16x16 frames,
    # n_blocks=2, ndf=16, tempo_kernel_size=3.
    N, C, T, H, W = 2, 3, 8, 16, 16
    n_blocks, ndf = 2, 16
    x = jax.random.normal(k_x, (N, C, T, H, W), jnp.float32)
    params, dilations, disc_w = init_params(k_p, C, n_blocks, ndf)

    disc_score, gen_score = temporal_video_discriminator_forward(
        x, params, disc_w, dilations=dilations)
    disc_score = jax.block_until_ready(disc_score)

    ref = jax.block_until_ready(ref_forward(x, params, disc_w, dilations))
    assert gen_score is None
    assert disc_score.shape == ref.shape == (N, 1, T, 2, 2), disc_score.shape
    # bf16 MXU inputs + bf16 inter-layer activations vs fp32 HIGHEST reference.
    np.testing.assert_allclose(np.asarray(disc_score), np.asarray(ref),
                               rtol=5e-2, atol=5e-2)
    print("KERNEL_OK")
</pallas_src>

<mosaic_0001>
module attributes {stable_mosaic.version = 11 : i64} {
  func.func @_matmul_stats_kernel(%arg0: i32, %arg1: i32, %arg2: memref<1024x256xbf16, #tpu.memory_space<vmem>>, %arg3: memref<256x128xbf16, #tpu.memory_space<vmem>>, %arg4: memref<1024x128xbf16, #tpu.memory_space<vmem>>, %arg5: memref<1x2x128xf32, #tpu.memory_space<vmem>>, %arg6: memref<1024x128xf32, #tpu.memory_space<vmem>>) attributes {dimension_semantics = [#tpu.dimension_semantics<parallel>, #tpu.dimension_semantics<arbitrary>], iteration_bounds = array<i64: 1, 1>, scalar_prefetch = 0 : i64, scratch_operands = 1 : i64, tpu.core_type = #tpu.core_type<tc>, window_params = [{transform_indices = @transform_0, window_bounds = array<i64: 1024, 256>}, {pipeline_mode = #tpu.pipeline_mode<synchronous>, transform_indices = @transform_1, window_bounds = array<i64: 256, 128>}, {transform_indices = @transform_2, window_bounds = array<i64: 1024, 128>}, {transform_indices = @transform_3, window_bounds = array<i64: 1, 2, 128>}]} {
    %c0_i32 = arith.constant 0 : i32
    %0 = arith.cmpi eq, %arg1, %c0_i32 : i32
    %1 = arith.extui %0 : i1 to i32
    %c0_i32_0 = arith.constant 0 : i32
    %2 = arith.cmpi ne, %1, %c0_i32_0 : i32
    scf.if %2 {
      %cst_10 = arith.constant 0.000000e+00 : f32
      %12 = vector.broadcast %cst_10 : f32 to vector<1024x128xf32>
      %c0_11 = arith.constant 0 : index
      %c0_12 = arith.constant 0 : index
      %13 = vector.load %arg6[%c0_11, %c0_12] : memref<1024x128xf32, #tpu.memory_space<vmem>>, vector<1024x128xf32>
      tpu.vector_store %arg6[%c0_11, %c0_12], %12 {strides = array<i32>} : memref<1024x128xf32, #tpu.memory_space<vmem>>, vector<1024x128xf32>,
    } else {
    }
    %c0 = arith.constant 0 : index
    %c0_1 = arith.constant 0 : index
    %3 = vector.load %arg3[%c0, %c0_1] : memref<256x128xbf16, #tpu.memory_space<vmem>>, vector<256x128xbf16>
    %c0_2 = arith.constant 0 : index
    %c0_3 = arith.constant 0 : index
    %4 = vector.load %arg6[%c0_2, %c0_3] : memref<1024x128xf32, #tpu.memory_space<vmem>>, vector<1024x128xf32>
    %c0_4 = arith.constant 0 : index
    %c0_5 = arith.constant 0 : index
    %5 = vector.load %arg2[%c0_4, %c0_5] : memref<1024x256xbf16, #tpu.memory_space<vmem>>, vector<1024x256xbf16>
    %cst = arith.constant dense<0.000000e+00> : vector<1024x128xf32>
    %6 = tpu.matmul %5, %3, %cst {dimension_numbers = #tpu.dot_dimension_numbers<[1], [0], [0], [1], [0, 0, 1, 1], [], []>} : vector<1024x256xbf16>, vector<256x128xbf16>, vector<1024x128xf32> -> vector<1024x128xf32>
    %7 = arith.addf %4, %6 : vector<1024x128xf32>
    %c0_6 = arith.constant 0 : index
    %c0_7 = arith.constant 0 : index
    %8 = vector.load %arg6[%c0_6, %c0_7] : memref<1024x128xf32, #tpu.memory_space<vmem>>, vector<1024x128xf32>
    tpu.vector_store %arg6[%c0_6, %c0_7], %7 {strides = array<i32>} : memref<1024x128xf32, #tpu.memory_space<vmem>>, vector<1024x128xf32>,
    %c0_i32_8 = arith.constant 0 : i32
    %9 = arith.cmpi eq, %arg1, %c0_i32_8 : i32
    %10 = arith.extui %9 : i1 to i32
    %c0_i32_9 = arith.constant 0 : i32
    %11 = arith.cmpi ne, %10, %c0_i32_9 : i32
    scf.if %11 {
      %c0_10 = arith.constant 0 : index
      %c0_11 = arith.constant 0 : index
      %12 = vector.load %arg6[%c0_10, %c0_11] : memref<1024x128xf32, #tpu.memory_space<vmem>>, vector<1024x128xf32>
      %13 = arith.truncf %12 : vector<1024x128xf32> to vector<1024x128xbf16>
      %c0_12 = arith.constant 0 : index
      %c0_13 = arith.constant 0 : index
      %14 = vector.load %arg4[%c0_12, %c0_13] : memref<1024x128xbf16, #tpu.memory_space<vmem>>, vector<1024x128xbf16>
      tpu.vector_store %arg4[%c0_12, %c0_13], %13 {strides = array<i32>} : memref<1024x128xbf16, #tpu.memory_space<vmem>>, vector<1024x128xbf16>,
      %cst_14 = arith.constant dense<0.000000e+00> : vector<128xf32>
      %15 = vector.multi_reduction <add>, %12, %cst_14 [0] : vector<1024x128xf32> to vector<128xf32>
      %16 = vector.shape_cast %15 : vector<128xf32> to vector<1x128xf32>
      %17 = arith.mulf %12, %12 : vector<1024x128xf32>
      %cst_15 = arith.constant dense<0.000000e+00> : vector<128xf32>
      %18 = vector.multi_reduction <add>, %17, %cst_15 [0] : vector<1024x128xf32> to vector<128xf32>
      %19 = vector.shape_cast %18 : vector<128xf32> to vector<1x128xf32>
      %20 = tpu.concatenate %16, %19 in 0 : vector<1x128xf32>, vector<1x128xf32> -> vector<2x128xf32>
      %c0_16 = arith.constant 0 : index
      %c0_17 = arith.constant 0 : index
      %c0_18 = arith.constant 0 : index
      %21 = vector.load %arg5[%c0_16, %c0_17, %c0_18] : memref<1x2x128xf32, #tpu.memory_space<vmem>>, vector<1x2x128xf32>
      %22 = vector.shape_cast %21 : vector<1x2x128xf32> to vector<2x128xf32>
      %23 = vector.shape_cast %20 : vector<2x128xf32> to vector<1x2x128xf32>
      tpu.vector_store %arg5[%c0_16, %c0_17, %c0_18], %23 {strides = array<i32>} : memref<1x2x128xf32, #tpu.memory_space<vmem>>, vector<1x2x128xf32>,
    } else {
    }
    return
  }
  func.func @transform_0(%arg0: i32, %arg1: i32) -> (i32, i32) {
    %c0_i32 = arith.constant 0 : i32
    return %arg0, %arg1 : i32, i32
  }
  func.func @transform_1(%arg0: i32, %arg1: i32) -> (i32, i32) {
    %c0_i32 = arith.constant 0 : i32
    %c0_i32_0 = arith.constant 0 : i32
    %c0_i32_1 = arith.constant 0 : i32
    return %c0_i32, %c0_i32_0 : i32, i32
  }
  func.func @transform_2(%arg0: i32, %arg1: i32) -> (i32, i32) {
    %c0_i32 = arith.constant 0 : i32
    %c0_i32_0 = arith.constant 0 : i32
    return %arg0, %c0_i32 : i32, i32
  }
  func.func @transform_3(%arg0: i32, %arg1: i32) -> (i32, i32, i32) {
    %c0_i32 = arith.constant 0 : i32
    %c0_i32_0 = arith.constant 0 : i32
    %c0_i32_1 = arith.constant 0 : i32
    return %arg0, %c0_i32, %c0_i32_0 : i32, i32, i32
  }
}

module attributes {stable_mosaic.version = 11 : i64} {
  func.func @_bn_lrelu_kernel(%arg0: i32, %arg1: memref<1024x128xbf16, #tpu.memory_space<vmem>>, %arg2: memref<1x128xf32, #tpu.memory_space<vmem>>, %arg3: memref<1x128xf32, #tpu.memory_space<vmem>>, %arg4: memref<1024x128xbf16, #tpu.memory_space<vmem>>) attributes {dimension_semantics = [#tpu.dimension_semantics<parallel>], iteration_bounds = array<i64: 1>, scalar_prefetch = 0 : i64, scratch_operands = 0 : i64, tpu.core_type = #tpu.core_type<tc>, window_params = [{transform_indices = @transform_0, window_bounds = array<i64: 1024, 128>}, {pipeline_mode = #tpu.pipeline_mode<synchronous>, transform_indices = @transform_1, window_bounds = array<i64: 1, 128>}, {pipeline_mode = #tpu.pipeline_mode<synchronous>, transform_indices = @transform_2, window_bounds = array<i64: 1, 128>}, {transform_indices = @transform_3, window_bounds = array<i64: 1024, 128>}]} {
    %c0 = arith.constant 0 : index
    %c0_0 = arith.constant 0 : index
    %0 = vector.load %arg1[%c0, %c0_0] : memref<1024x128xbf16, #tpu.memory_space<vmem>>, vector<1024x128xbf16>
    %1 = arith.extf %0 : vector<1024x128xbf16> to vector<1024x128xf32>
    %c0_1 = arith.constant 0 : index
    %c0_2 = arith.constant 0 : index
    %2 = vector.load %arg2[%c0_1, %c0_2] : memref<1x128xf32, #tpu.memory_space<vmem>>, vector<1x128xf32>
    %3 = vector.broadcast %2 : vector<1x128xf32> to vector<1024x128xf32>
    %4 = arith.mulf %1, %3 : vector<1024x128xf32>
    %c0_3 = arith.constant 0 : index
    %c0_4 = arith.constant 0 : index
    %5 = vector.load %arg3[%c0_3, %c0_4] : memref<1x128xf32, #tpu.memory_space<vmem>>, vector<1x128xf32>
    %6 = vector.broadcast %5 : vector<1x128xf32> to vector<1024x128xf32>
    %7 = arith.addf %4, %6 : vector<1024x128xf32>
    %cst = arith.constant 0.000000e+00 : f32
    %8 = vector.broadcast %cst : f32 to vector<1024x128xf32>
    %9 = arith.cmpf oge, %7, %8 : vector<1024x128xf32>
    %cst_5 = arith.constant 2.000000e-01 : f32
    %10 = vector.broadcast %cst_5 : f32 to vector<1024x128xf32>
    %11 = arith.mulf %10, %7 : vector<1024x128xf32>
    %12 = arith.select %9, %7, %11 : vector<1024x128xi1>, vector<1024x128xf32>
    %13 = arith.truncf %12 : vector<1024x128xf32> to vector<1024x128xbf16>
    %c0_6 = arith.constant 0 : index
    %c0_7 = arith.constant 0 : index
    %14 = vector.load %arg4[%c0_6, %c0_7] : memref<1024x128xbf16, #tpu.memory_space<vmem>>, vector<1024x128xbf16>
    tpu.vector_store %arg4[%c0_6, %c0_7], %13 {strides = array<i32>} : memref<1024x128xbf16, #tpu.memory_space<vmem>>, vector<1024x128xbf16>,
    return
  }
  func.func @transform_0(%arg0: i32) -> (i32, i32) {
    %c0_i32 = arith.constant 0 : i32
    %c0_i32_0 = arith.constant 0 : i32
    return %arg0, %c0_i32 : i32, i32
  }
  func.func @transform_1(%arg0: i32) -> (i32, i32) {
    %c0_i32 = arith.constant 0 : i32
    %c0_i32_0 = arith.constant 0 : i32
    %c0_i32_1 = arith.constant 0 : i32
    return %c0_i32, %c0_i32_0 : i32, i32
  }
  func.func @transform_2(%arg0: i32) -> (i32, i32) {
    %c0_i32 = arith.constant 0 : i32
    %c0_i32_0 = arith.constant 0 : i32
    %c0_i32_1 = arith.constant 0 : i32
    return %c0_i32, %c0_i32_0 : i32, i32
  }
  func.func @transform_3(%arg0: i32) -> (i32, i32) {
    %c0_i32 = arith.constant 0 : i32
    %c0_i32_0 = arith.constant 0 : i32
    return %arg0, %c0_i32 : i32, i32
  }
}

module attributes {stable_mosaic.version = 11 : i64} {
  func.func @_bn_lrelu_kernel(%arg0: i32, %arg1: memref<256x128xbf16, #tpu.memory_space<vmem>>, %arg2: memref<1x128xf32, #tpu.memory_space<vmem>>, %arg3: memref<1x128xf32, #tpu.memory_space<vmem>>, %arg4: memref<256x128xbf16, #tpu.memory_space<vmem>>) attributes {dimension_semantics = [#tpu.dimension_semantics<parallel>], iteration_bounds = array<i64: 1>, scalar_prefetch = 0 : i64, scratch_operands = 0 : i64, tpu.core_type = #tpu.core_type<tc>, window_params = [{transform_indices = @transform_0, window_bounds = array<i64: 256, 128>}, {pipeline_mode = #tpu.pipeline_mode<synchronous>, transform_indices = @transform_1, window_bounds = array<i64: 1, 128>}, {pipeline_mode = #tpu.pipeline_mode<synchronous>, transform_indices = @transform_2, window_bounds = array<i64: 1, 128>}, {transform_indices = @transform_3, window_bounds = array<i64: 256, 128>}]} {
    %c0 = arith.constant 0 : index
    %c0_0 = arith.constant 0 : index
    %0 = vector.load %arg1[%c0, %c0_0] : memref<256x128xbf16, #tpu.memory_space<vmem>>, vector<256x128xbf16>
    %1 = arith.extf %0 : vector<256x128xbf16> to vector<256x128xf32>
    %c0_1 = arith.constant 0 : index
    %c0_2 = arith.constant 0 : index
    %2 = vector.load %arg2[%c0_1, %c0_2] : memref<1x128xf32, #tpu.memory_space<vmem>>, vector<1x128xf32>
    %3 = vector.broadcast %2 : vector<1x128xf32> to vector<256x128xf32>
    %4 = arith.mulf %1, %3 : vector<256x128xf32>
    %c0_3 = arith.constant 0 : index
    %c0_4 = arith.constant 0 : index
    %5 = vector.load %arg3[%c0_3, %c0_4] : memref<1x128xf32, #tpu.memory_space<vmem>>, vector<1x128xf32>
    %6 = vector.broadcast %5 : vector<1x128xf32> to vector<256x128xf32>
    %7 = arith.addf %4, %6 : vector<256x128xf32>
    %cst = arith.constant 0.000000e+00 : f32
    %8 = vector.broadcast %cst : f32 to vector<256x128xf32>
    %9 = arith.cmpf oge, %7, %8 : vector<256x128xf32>
    %cst_5 = arith.constant 2.000000e-01 : f32
    %10 = vector.broadcast %cst_5 : f32 to vector<256x128xf32>
    %11 = arith.mulf %10, %7 : vector<256x128xf32>
    %12 = arith.select %9, %7, %11 : vector<256x128xi1>, vector<256x128xf32>
    %13 = arith.truncf %12 : vector<256x128xf32> to vector<256x128xbf16>
    %c0_6 = arith.constant 0 : index
    %c0_7 = arith.constant 0 : index
    %14 = vector.load %arg4[%c0_6, %c0_7] : memref<256x128xbf16, #tpu.memory_space<vmem>>, vector<256x128xbf16>
    tpu.vector_store %arg4[%c0_6, %c0_7], %13 {strides = array<i32>} : memref<256x128xbf16, #tpu.memory_space<vmem>>, vector<256x128xbf16>,
    return
  }
  func.func @transform_0(%arg0: i32) -> (i32, i32) {
    %c0_i32 = arith.constant 0 : i32
    %c0_i32_0 = arith.constant 0 : i32
    return %arg0, %c0_i32 : i32, i32
  }
  func.func @transform_1(%arg0: i32) -> (i32, i32) {
    %c0_i32 = arith.constant 0 : i32
    %c0_i32_0 = arith.constant 0 : i32
    %c0_i32_1 = arith.constant 0 : i32
    return %c0_i32, %c0_i32_0 : i32, i32
  }
  func.func @transform_2(%arg0: i32) -> (i32, i32) {
    %c0_i32 = arith.constant 0 : i32
    %c0_i32_0 = arith.constant 0 : i32
    %c0_i32_1 = arith.constant 0 : i32
    return %c0_i32, %c0_i32_0 : i32, i32
  }
  func.func @transform_3(%arg0: i32) -> (i32, i32) {
    %c0_i32 = arith.constant 0 : i32
    %c0_i32_0 = arith.constant 0 : i32
    return %arg0, %c0_i32 : i32, i32
  }
}

module attributes {stable_mosaic.version = 11 : i64} {
  func.func @_matmul_stats_kernel(%arg0: i32, %arg1: i32, %arg2: memref<256x768xbf16, #tpu.memory_space<vmem>>, %arg3: memref<768x128xbf16, #tpu.memory_space<vmem>>, %arg4: memref<256x128xbf16, #tpu.memory_space<vmem>>, %arg5: memref<1x2x128xf32, #tpu.memory_space<vmem>>, %arg6: memref<256x128xf32, #tpu.memory_space<vmem>>) attributes {dimension_semantics = [#tpu.dimension_semantics<parallel>, #tpu.dimension_semantics<arbitrary>], iteration_bounds = array<i64: 1, 1>, scalar_prefetch = 0 : i64, scratch_operands = 1 : i64, tpu.core_type = #tpu.core_type<tc>, window_params = [{transform_indices = @transform_0, window_bounds = array<i64: 256, 768>}, {pipeline_mode = #tpu.pipeline_mode<synchronous>, transform_indices = @transform_1, window_bounds = array<i64: 768, 128>}, {transform_indices = @transform_2, window_bounds = array<i64: 256, 128>}, {transform_indices = @transform_3, window_bounds = array<i64: 1, 2, 128>}]} {
    %c0_i32 = arith.constant 0 : i32
    %0 = arith.cmpi eq, %arg1, %c0_i32 : i32
    %1 = arith.extui %0 : i1 to i32
    %c0_i32_0 = arith.constant 0 : i32
    %2 = arith.cmpi ne, %1, %c0_i32_0 : i32
    scf.if %2 {
      %cst_10 = arith.constant 0.000000e+00 : f32
      %12 = vector.broadcast %cst_10 : f32 to vector<256x128xf32>
      %c0_11 = arith.constant 0 : index
      %c0_12 = arith.constant 0 : index
      %13 = vector.load %arg6[%c0_11, %c0_12] : memref<256x128xf32, #tpu.memory_space<vmem>>, vector<256x128xf32>
      tpu.vector_store %arg6[%c0_11, %c0_12], %12 {strides = array<i32>} : memref<256x128xf32, #tpu.memory_space<vmem>>, vector<256x128xf32>,
    } else {
    }
    %c0 = arith.constant 0 : index
    %c0_1 = arith.constant 0 : index
    %3 = vector.load %arg3[%c0, %c0_1] : memref<768x128xbf16, #tpu.memory_space<vmem>>, vector<768x128xbf16>
    %c0_2 = arith.constant 0 : index
    %c0_3 = arith.constant 0 : index
    %4 = vector.load %arg6[%c0_2, %c0_3] : memref<256x128xf32, #tpu.memory_space<vmem>>, vector<256x128xf32>
    %c0_4 = arith.constant 0 : index
    %c0_5 = arith.constant 0 : index
    %5 = vector.load %arg2[%c0_4, %c0_5] : memref<256x768xbf16, #tpu.memory_space<vmem>>, vector<256x768xbf16>
    %cst = arith.constant dense<0.000000e+00> : vector<256x128xf32>
    %6 = tpu.matmul %5, %3, %cst {dimension_numbers = #tpu.dot_dimension_numbers<[1], [0], [0], [1], [0, 0, 1, 1], [], []>} : vector<256x768xbf16>, vector<768x128xbf16>, vector<256x128xf32> -> vector<256x128xf32>
    %7 = arith.addf %4, %6 : vector<256x128xf32>
    %c0_6 = arith.constant 0 : index
    %c0_7 = arith.constant 0 : index
    %8 = vector.load %arg6[%c0_6, %c0_7] : memref<256x128xf32, #tpu.memory_space<vmem>>, vector<256x128xf32>
    tpu.vector_store %arg6[%c0_6, %c0_7], %7 {strides = array<i32>} : memref<256x128xf32, #tpu.memory_space<vmem>>, vector<256x128xf32>,
    %c0_i32_8 = arith.constant 0 : i32
    %9 = arith.cmpi eq, %arg1, %c0_i32_8 : i32
    %10 = arith.extui %9 : i1 to i32
    %c0_i32_9 = arith.constant 0 : i32
    %11 = arith.cmpi ne, %10, %c0_i32_9 : i32
    scf.if %11 {
      %c0_10 = arith.constant 0 : index
      %c0_11 = arith.constant 0 : index
      %12 = vector.load %arg6[%c0_10, %c0_11] : memref<256x128xf32, #tpu.memory_space<vmem>>, vector<256x128xf32>
      %13 = arith.truncf %12 : vector<256x128xf32> to vector<256x128xbf16>
      %c0_12 = arith.constant 0 : index
      %c0_13 = arith.constant 0 : index
      %14 = vector.load %arg4[%c0_12, %c0_13] : memref<256x128xbf16, #tpu.memory_space<vmem>>, vector<256x128xbf16>
      tpu.vector_store %arg4[%c0_12, %c0_13], %13 {strides = array<i32>} : memref<256x128xbf16, #tpu.memory_space<vmem>>, vector<256x128xbf16>,
      %cst_14 = arith.constant dense<0.000000e+00> : vector<128xf32>
      %15 = vector.multi_reduction <add>, %12, %cst_14 [0] : vector<256x128xf32> to vector<128xf32>
      %16 = vector.shape_cast %15 : vector<128xf32> to vector<1x128xf32>
      %17 = arith.mulf %12, %12 : vector<256x128xf32>
      %cst_15 = arith.constant dense<0.000000e+00> : vector<128xf32>
      %18 = vector.multi_reduction <add>, %17, %cst_15 [0] : vector<256x128xf32> to vector<128xf32>
      %19 = vector.shape_cast %18 : vector<128xf32> to vector<1x128xf32>
      %20 = tpu.concatenate %16, %19 in 0 : vector<1x128xf32>, vector<1x128xf32> -> vector<2x128xf32>
      %c0_16 = arith.constant 0 : index
      %c0_17 = arith.constant 0 : index
      %c0_18 = arith.constant 0 : index
      %21 = vector.load %arg5[%c0_16, %c0_17, %c0_18] : memref<1x2x128xf32, #tpu.memory_space<vmem>>, vector<1x2x128xf32>
      %22 = vector.shape_cast %21 : vector<1x2x128xf32> to vector<2x128xf32>
      %23 = vector.shape_cast %20 : vector<2x128xf32> to vector<1x2x128xf32>
      tpu.vector_store %arg5[%c0_16, %c0_17, %c0_18], %23 {strides = array<i32>} : memref<1x2x128xf32, #tpu.memory_space<vmem>>, vector<1x2x128xf32>,
    } else {
    }
    return
  }
  func.func @transform_0(%arg0: i32, %arg1: i32) -> (i32, i32) {
    %c0_i32 = arith.constant 0 : i32
    return %arg0, %arg1 : i32, i32
  }
  func.func @transform_1(%arg0: i32, %arg1: i32) -> (i32, i32) {
    %c0_i32 = arith.constant 0 : i32
    %c0_i32_0 = arith.constant 0 : i32
    %c0_i32_1 = arith.constant 0 : i32
    return %c0_i32, %c0_i32_0 : i32, i32
  }
  func.func @transform_2(%arg0: i32, %arg1: i32) -> (i32, i32) {
    %c0_i32 = arith.constant 0 : i32
    %c0_i32_0 = arith.constant 0 : i32
    return %arg0, %c0_i32 : i32, i32
  }
  func.func @transform_3(%arg0: i32, %arg1: i32) -> (i32, i32, i32) {
    %c0_i32 = arith.constant 0 : i32
    %c0_i32_0 = arith.constant 0 : i32
    %c0_i32_1 = arith.constant 0 : i32
    return %arg0, %c0_i32, %c0_i32_0 : i32, i32, i32
  }
}

</mosaic_0001>

<llo_original>
// kernel: temporal_video_discriminator_forward.5
$region0: #{temporal_video_discriminator_forward.5}
  #allocation0 [shape = 'u32[]', space=smem, size = 0x4, offset = 0x4, fixed_abs, tag = 'smem constant byte address 0x4 - core index']
  #allocation1 [shape = 'u32[144,128]{1,0:T(1,128)}', space=vmem, size = 0x12000, scoped, tag = 'internal scratch']
  %s0 = inlined_call_operand.vmem [shape: bf16[1024,128], index: 0, kind: input, shape index: {}]
  %s1 = inlined_call_operand.vmem [shape: f32[1,128], index: 1, kind: input, shape index: {}]
  %s2 = inlined_call_operand.vmem [shape: f32[1,128], index: 2, kind: input, shape index: {}]
  %s3 = inlined_call_operand.vmem [shape: bf16[1024,128], index: 3, kind: output, shape index: {}]
  %s4 = sld [smem:[#allocation0]]
  $region22: #{temporal_video_discriminator_forward.5} parent=0
    _
  %s6 = ssub.s32 1, %s4
  %s7 = scalar_select 0, %s6, %s4
  // Predicated region
  $region2: #{temporal_video_discriminator_forward.5} parent=0 // pred_check
    _
  $region3: #{temporal_video_discriminator_forward.5} parent=0 // pred_check_branch
    %9 = sbr.rel (0) target = $region5
  $region4: #{temporal_video_discriminator_forward.5} parent=0 // pred_region
    _
  $region5: #{temporal_video_discriminator_forward.5} parent=0 // pred_fallthru
    _
  // Predicated region
  $region6: #{temporal_video_discriminator_forward.5} parent=0 // pred_check
    _
  $region7: #{temporal_video_discriminator_forward.5} parent=0 // pred_check_branch
    %11 = sbr.rel (0) target = $region9
  $region8: #{temporal_video_discriminator_forward.5} parent=0 // pred_region
    _
  $region9: #{temporal_video_discriminator_forward.5} parent=0 // pred_fallthru
    _
  // Predicated region
  $region10: #{temporal_video_discriminator_forward.5} parent=0 // pred_check
    _
  $region11: #{temporal_video_discriminator_forward.5} parent=0 // pred_check_branch
    %13 = sbr.rel (0) target = $region13
  $region12: #{temporal_video_discriminator_forward.5} parent=0 // pred_region
    _
  $region13: #{temporal_video_discriminator_forward.5} parent=0 // pred_fallthru
    _
  %v14 = vld [vmem:[%s0] sm:$0xf]
  %v15 = vld [vmem:[%s0 + $0x4] sm:$0xf]
  %v16 = vld [vmem:[%s0 + $0x8] sm:$0xf]
  %v17 = vld [vmem:[%s0 + $0xc] sm:$0xf]
  %v18 = vld [vmem:[%s0 + $0x10] sm:$0xf]
  %v19 = vld [vmem:[%s0 + $0x14] sm:$0xf]
  %v20 = vld [vmem:[%s0 + $0x18] sm:$0xf]
  %v21 = vld [vmem:[%s0 + $0x1c] sm:$0xf]
  %v22 = vld [vmem:[%s0 + $0x20] sm:$0xf]
  %v23 = vld [vmem:[%s0 + $0x24] sm:$0xf]
  %v24 = vld [vmem:[%s0 + $0x28] sm:$0xf]
  %v25 = vld [vmem:[%s0 + $0x2c] sm:$0xf]
  %v26 = vld [vmem:[%s0 + $0x30] sm:$0xf]
  %v27 = vld [vmem:[%s0 + $0x34] sm:$0xf]
  %v28 = vld [vmem:[%s0 + $0x38] sm:$0xf]
  %v29 = vld [vmem:[%s0 + $0x3c] sm:$0xf]
  %v30 = vld [vmem:[%s0 + $0x40] sm:$0xf]
  %v31 = vld [vmem:[%s0 + $0x44] sm:$0xf]
  %v32 = vld [vmem:[%s0 + $0x48] sm:$0xf]
  %v33 = vld [vmem:[%s0 + $0x4c] sm:$0xf]
  %v34 = vld [vmem:[%s0 + $0x50] sm:$0xf]
  %v35 = vld [vmem:[%s0 + $0x54] sm:$0xf]
  %v36 = vld [vmem:[%s0 + $0x58] sm:$0xf]
  %v37 = vld [vmem:[%s0 + $0x5c] sm:$0xf]
  %v38 = vld [vmem:[%s0 + $0x60] sm:$0xf]
  %v39 = vld [vmem:[%s0 + $0x64] sm:$0xf]
  %v40 = vld [vmem:[%s0 + $0x68] sm:$0xf]
  %v41 = vld [vmem:[%s0 + $0x6c] sm:$0xf]
  %v42 = vld [vmem:[%s0 + $0x70] sm:$0xf]
  %v43 = vld [vmem:[%s0 + $0x74] sm:$0xf]
  %v44 = vld [vmem:[%s0 + $0x78] sm:$0xf]
  %v45 = vld [vmem:[%s0 + $0x7c] sm:$0xf]
  %v46 = vld [vmem:[%s0 + $0x80] sm:$0xf]
  %v47 = vld [vmem:[%s0 + $0x84] sm:$0xf]
  %v48 = vld [vmem:[%s0 + $0x88] sm:$0xf]
  %v49 = vld [vmem:[%s0 + $0x8c] sm:$0xf]
  %v50 = vld [vmem:[%s0 + $0x90] sm:$0xf]
  %v51 = vld [vmem:[%s0 + $0x94] sm:$0xf]
  %v52 = vld [vmem:[%s0 + $0x98] sm:$0xf]
  %v53 = vld [vmem:[%s0 + $0x9c] sm:$0xf]
  %v54 = vld [vmem:[%s0 + $0xa0] sm:$0xf]
  %v55 = vld [vmem:[%s0 + $0xa4] sm:$0xf]
  %v56 = vld [vmem:[%s0 + $0xa8] sm:$0xf]
  %v57 = vld [vmem:[%s0 + $0xac] sm:$0xf]
  %v58 = vld [vmem:[%s0 + $0xb0] sm:$0xf]
  %v59 = vld [vmem:[%s0 + $0xb4] sm:$0xf]
  %v60 = vld [vmem:[%s0 + $0xb8] sm:$0xf]
  %v61 = vld [vmem:[%s0 + $0xbc] sm:$0xf]
  %v62 = vld [vmem:[%s0 + $0xc0] sm:$0xf]
  %v63 = vld [vmem:[%s0 + $0xc4] sm:$0xf]
  %v64 = vld [vmem:[%s0 + $0xc8] sm:$0xf]
  %v65 = vld [vmem:[%s0 + $0xcc] sm:$0xf]
  %v66 = vld [vmem:[%s0 + $0xd0] sm:$0xf]
  %v67 = vld [vmem:[%s0 + $0xd4] sm:$0xf]
  %v68 = vld [vmem:[%s0 + $0xd8] sm:$0xf]
  %v69 = vld [vmem:[%s0 + $0xdc] sm:$0xf]
  %v70 = vld [vmem:[%s0 + $0xe0] sm:$0xf]
  %v71 = vld [vmem:[%s0 + $0xe4] sm:$0xf]
  %v72 = vld [vmem:[%s0 + $0xe8] sm:$0xf]
  %v73 = vld [vmem:[%s0 + $0xec] sm:$0xf]
  %v74 = vld [vmem:[%s0 + $0xf0] sm:$0xf]
  %v75 = vld [vmem:[%s0 + $0xf4] sm:$0xf]
  %v76 = vld [vmem:[%s0 + $0xf8] sm:$0xf]
  %v77 = vld [vmem:[%s0 + $0xfc] sm:$0xf]
  %v78 = vld [vmem:[%s0 + $0x100] sm:$0xf]
  %v79 = vld [vmem:[%s0 + $0x104] sm:$0xf]
  %v80 = vld [vmem:[%s0 + $0x108] sm:$0xf]
  %v81 = vld [vmem:[%s0 + $0x10c] sm:$0xf]
  %v82 = vld [vmem:[%s0 + $0x110] sm:$0xf]
  %v83 = vld [vmem:[%s0 + $0x114] sm:$0xf]
  %v84 = vld [vmem:[%s0 + $0x118] sm:$0xf]
  %v85 = vld [vmem:[%s0 + $0x11c] sm:$0xf]
  %v86 = vld [vmem:[%s0 + $0x120] sm:$0xf]
  %v87 = vld [vmem:[%s0 + $0x124] sm:$0xf]
  %v88 = vld [vmem:[%s0 + $0x128] sm:$0xf]
  %v89 = vld [vmem:[%s0 + $0x12c] sm:$0xf]
  %v90 = vld [vmem:[%s0 + $0x130] sm:$0xf]
  %v91 = vld [vmem:[%s0 + $0x134] sm:$0xf]
  %v92 = vld [vmem:[%s0 + $0x138] sm:$0xf]
  %v93 = vld [vmem:[%s0 + $0x13c] sm:$0xf]
  %v94 = vld [vmem:[%s0 + $0x140] sm:$0xf]
  %v95 = vld [vmem:[%s0 + $0x144] sm:$0xf]
  %v96 = vld [vmem:[%s0 + $0x148] sm:$0xf]
  %v97 = vld [vmem:[%s0 + $0x14c] sm:$0xf]
  %v98 = vld [vmem:[%s0 + $0x150] sm:$0xf]
  %v99 = vld [vmem:[%s0 + $0x154] sm:$0xf]
  %v100 = vld [vmem:[%s0 + $0x158] sm:$0xf]
  %v101 = vld [vmem:[%s0 + $0x15c] sm:$0xf]
  %v102 = vld [vmem:[%s0 + $0x160] sm:$0xf]
  %v103 = vld [vmem:[%s0 + $0x164] sm:$0xf]
  %v104 = vld [vmem:[%s0 + $0x168] sm:$0xf]
  %v105 = vld [vmem:[%s0 + $0x16c] sm:$0xf]
  %v106 = vld [vmem:[%s0 + $0x170] sm:$0xf]
  %v107 = vld [vmem:[%s0 + $0x174] sm:$0xf]
  %v108 = vld [vmem:[%s0 + $0x178] sm:$0xf]
  %v109 = vld [vmem:[%s0 + $0x17c] sm:$0xf]
  %v110 = vld [vmem:[%s0 + $0x180] sm:$0xf]
  %v111 = vld [vmem:[%s0 + $0x184] sm:$0xf]
  %v112 = vld [vmem:[%s0 + $0x188] sm:$0xf]
  %v113 = vld [vmem:[%s0 + $0x18c] sm:$0xf]
  %v114 = vld [vmem:[%s0 + $0x190] sm:$0xf]
  %v115 = vld [vmem:[%s0 + $0x194] sm:$0xf]
  %v116 = vld [vmem:[%s0 + $0x198] sm:$0xf]
  %v117 = vld [vmem:[%s0 + $0x19c] sm:$0xf]
  %v118 = vld [vmem:[%s0 + $0x1a0] sm:$0xf]
  %v119 = vld [vmem:[%s0 + $0x1a4] sm:$0xf]
  %v120 = vld [vmem:[%s0 + $0x1a8] sm:$0xf]
  %v121 = vld [vmem:[%s0 + $0x1ac] sm:$0xf]
  %v122 = vld [vmem:[%s0 + $0x1b0] sm:$0xf]
  %v123 = vld [vmem:[%s0 + $0x1b4] sm:$0xf]
  %v124 = vld [vmem:[%s0 + $0x1b8] sm:$0xf]
  %v125 = vld [vmem:[%s0 + $0x1bc] sm:$0xf]
  %v126 = vld [vmem:[%s0 + $0x1c0] sm:$0xf]
  %v127 = vld [vmem:[%s0 + $0x1c4] sm:$0xf]
  %v128 = vld [vmem:[%s0 + $0x1c8] sm:$0xf]
  %v129 = vld [vmem:[%s0 + $0x1cc] sm:$0xf]
  %v130 = vld [vmem:[%s0 + $0x1d0] sm:$0xf]
  %v131 = vld [vmem:[%s0 + $0x1d4] sm:$0xf]
  %v132 = vld [vmem:[%s0 + $0x1d8] sm:$0xf]
  %v133 = vld [vmem:[%s0 + $0x1dc] sm:$0xf]
  %v134 = vld [vmem:[%s0 + $0x1e0] sm:$0xf]
  %v135 = vld [vmem:[%s0 + $0x1e4] sm:$0xf]
  %v136 = vld [vmem:[%s0 + $0x1e8] sm:$0xf]
  %v137 = vld [vmem:[%s0 + $0x1ec] sm:$0xf]
  %v138 = vld [vmem:[%s0 + $0x1f0] sm:$0xf]
  %v139 = vld [vmem:[%s0 + $0x1f4] sm:$0xf]
  %v140 = vld [vmem:[%s0 + $0x1f8] sm:$0xf]
  %v141 = vld [vmem:[%s0 + $0x1fc] sm:$0xf]
  %v142 = vunpack.c.l.bf16 %v14
  %v143 = vunpack.c.l.bf16 %v15
  %v144 = vunpack.c.l.bf16 %v16
  %v145 = vunpack.c.l.bf16 %v17
  %v146 = vunpack.c.l.bf16 %v18
  %v147 = vunpack.c.l.bf16 %v19
  %v148 = vunpack.c.l.bf16 %v20
  %v149 = vunpack.c.l.bf16 %v21
  %v150 = vunpack.c.l.bf16 %v22
  %v151 = vunpack.c.l.bf16 %v23
  %v152 = vunpack.c.l.bf16 %v24
  %v153 = vunpack.c.l.bf16 %v25
  %v154 = vunpack.c.l.bf16 %v26
  %v155 = vunpack.c.l.bf16 %v27
  %v156 = vunpack.c.l.bf16 %v28
  %v157 = vunpack.c.l.bf16 %v29
  %v158 = vunpack.c.l.bf16 %v30
  %v159 = vunpack.c.l.bf16 %v31
  %v160 = vunpack.c.l.bf16 %v32
  %v161 = vunpack.c.l.bf16 %v33
  %v162 = vunpack.c.l.bf16 %v34
  %v163 = vunpack.c.l.bf16 %v35
  %v164 = vunpack.c.l.bf16 %v36
  %v165 = vunpack.c.l.bf16 %v37
  %v166 = vunpack.c.l.bf16 %v38
  %v167 = vunpack.c.l.bf16 %v39
  %v168 = vunpack.c.l.bf16 %v40
  %v169 = vunpack.c.l.bf16 %v41
  %v170 = vunpack.c.l.bf16 %v42
  %v171 = vunpack.c.l.bf16 %v43
  %v172 = vunpack.c.l.bf16 %v44
  %v173 = vunpack.c.l.bf16 %v45
  %v174 = vunpack.c.l.bf16 %v46
  %v175 = vunpack.c.l.bf16 %v47
  %v176 = vunpack.c.l.bf16 %v48
  %v177 = vunpack.c.l.bf16 %v49
  %v178 = vunpack.c.l.bf16 %v50
  %v179 = vunpack.c.l.bf16 %v51
  %v180 = vunpack.c.l.bf16 %v52
  %v181 = vunpack.c.l.bf16 %v53
  %v182 = vunpack.c.l.bf16 %v54
  %v183 = vunpack.c.l.bf16 %v55
  %v184 = vunpack.c.l.bf16 %v56
  %v185 = vunpack.c.l.bf16 %v57
  %v186 = vunpack.c.l.bf16 %v58
  %v187 = vunpack.c.l.bf16 %v59
  %v188 = vunpack.c.l.bf16 %v60
  %v189 = vunpack.c.l.bf16 %v61
  %v190 = vunpack.c.l.bf16 %v62
  %v191 = vunpack.c.l.bf16 %v63
  %v192 = vunpack.c.l.bf16 %v64
  %v193 = vunpack.c.l.bf16 %v65
  %v194 = vunpack.c.l.bf16 %v66
  %v195 = vunpack.c.l.bf16 %v67
  %v196 = vunpack.c.l.bf16 %v68
  %v197 = vunpack.c.l.bf16 %v69
  %v198 = vunpack.c.l.bf16 %v70
  %v199 = vunpack.c.l.bf16 %v71
  %v200 = vunpack.c.l.bf16 %v72
  %v201 = vunpack.c.l.bf16 %v73
  %v202 = vunpack.c.l.bf16 %v74
  %v203 = vunpack.c.l.bf16 %v75
  %v204 = vunpack.c.l.bf16 %v76
  %v205 = vunpack.c.l.bf16 %v77
  %v206 = vunpack.c.l.bf16 %v78
  %v207 = vunpack.c.l.bf16 %v79
  %v208 = vunpack.c.l.bf16 %v80
  %v209 = vunpack.c.l.bf16 %v81
  %v210 = vunpack.c.l.bf16 %v82
  %v211 = vunpack.c.l.bf16 %v83
  %v212 = vunpack.c.l.bf16 %v84
  %v213 = vunpack.c.l.bf16 %v85
  %v214 = vunpack.c.l.bf16 %v86
  %v215 = vunpack.c.l.bf16 %v87
  %v216 = vunpack.c.l.bf16 %v88
  %v217 = vunpack.c.l.bf16 %v89
  %v218 = vunpack.c.l.bf16 %v90
  %v219 = vunpack.c.l.bf16 %v91
  %v220 = vunpack.c.l.bf16 %v92
  %v221 = vunpack.c.l.bf16 %v93
  %v222 = vunpack.c.l.bf16 %v94
  %v223 = vunpack.c.l.bf16 %v95
  %v224 = vunpack.c.l.bf16 %v96
  %v225 = vunpack.c.l.bf16 %v97
  %v226 = vunpack.c.l.bf16 %v98
  %v227 = vunpack.c.l.bf16 %v99
  %v228 = vunpack.c.l.bf16 %v100
  %v229 = vunpack.c.l.bf16 %v101
  %v230 = vunpack.c.l.bf16 %v102
  %v231 = vunpack.c.l.bf16 %v103
  %v232 = vunpack.c.l.bf16 %v104
  %v233 = vunpack.c.l.bf16 %v105
  %v234 = vunpack.c.l.bf16 %v106
  %v235 = vunpack.c.l.bf16 %v107
  %v236 = vunpack.c.l.bf16 %v108
  %v237 = vunpack.c.l.bf16 %v109
  %v238 = vunpack.c.l.bf16 %v110
  %v239 = vunpack.c.l.bf16 %v111
  %v240 = vunpack.c.l.bf16 %v112
  %v241 = vunpack.c.l.bf16 %v113
  %v242 = vunpack.c.l.bf16 %v114
  %v243 = vunpack.c.l.bf16 %v115
  %v244 = vunpack.c.l.bf16 %v116
  %v245 = vunpack.c.l.bf16 %v117
  %v246 = vunpack.c.l.bf16 %v118
  %v247 = vunpack.c.l.bf16 %v119
  %v248 = vunpack.c.l.bf16 %v120
  %v249 = vunpack.c.l.bf16 %v121
  %v250 = vunpack.c.l.bf16 %v122
  %v251 = vunpack.c.l.bf16 %v123
  %v252 = vunpack.c.l.bf16 %v124
  %v253 = vunpack.c.l.bf16 %v125
  %v254 = vunpack.c.l.bf16 %v126
  %v255 = vunpack.c.l.bf16 %v127
  %v256 = vunpack.c.l.bf16 %v128
  %v257 = vunpack.c.l.bf16 %v129
  %v258 = vunpack.c.l.bf16 %v130
  %v259 = vunpack.c.l.bf16 %v131
  %v260 = vunpack.c.l.bf16 %v132
  %v261 = vunpack.c.l.bf16 %v133
  %v262 = vunpack.c.l.bf16 %v134
  %v263 = vunpack.c.l.bf16 %v135
  %v264 = vunpack.c.l.bf16 %v136
  %v265 = vunpack.c.l.bf16 %v137
  %v266 = vunpack.c.l.bf16 %v138
  %v267 = vunpack.c.l.bf16 %v139
  %v268 = vunpack.c.l.bf16 %v140
  %v269 = vunpack.c.l.bf16 %v141
  %v270 = vld [vmem:[%s1] sm:$0x1]
  %v272 = vlaneseq
  %v273 = vshrl.u32 %v272, 7
  %v274 = vsub.s32 0, %v273
  %v275 = vrot.slane %v270, %v274
  %v277 = vmul.f32 %v142, %v275
  %v278 = vmul.f32 %v143, %v275
  %v279 = vmul.f32 %v144, %v275
  %v280 = vmul.f32 %v145, %v275
  %v281 = vmul.f32 %v146, %v275
  %v282 = vmul.f32 %v147, %v275
  %v283 = vmul.f32 %v148, %v275
  %v284 = vmul.f32 %v149, %v275
  %v285 = vmul.f32 %v150, %v275
  %v286 = vmul.f32 %v151, %v275
  %v287 = vmul.f32 %v152, %v275
  %v288 = vmul.f32 %v153, %v275
  %v289 = vmul.f32 %v154, %v275
  %v290 = vmul.f32 %v155, %v275
  %v291 = vmul.f32 %v156, %v275
  %v292 = vmul.f32 %v157, %v275
  %v293 = vmul.f32 %v158, %v275
  %v294 = vmul.f32 %v159, %v275
  %v295 = vmul.f32 %v160, %v275
  %v296 = vmul.f32 %v161, %v275
  %v297 = vmul.f32 %v162, %v275
  %v298 = vmul.f32 %v163, %v275
  %v299 = vmul.f32 %v164, %v275
  %v300 = vmul.f32 %v165, %v275
  %v301 = vmul.f32 %v166, %v275
  %v302 = vmul.f32 %v167, %v275
  %v303 = vmul.f32 %v168, %v275
  %v304 = vmul.f32 %v169, %v275
  %v305 = vmul.f32 %v170, %v275
  %v306 = vmul.f32 %v171, %v275
  %v307 = vmul.f32 %v172, %v275
  %v308 = vmul.f32 %v173, %v275
  %v309 = vmul.f32 %v174, %v275
  %v310 = vmul.f32 %v175, %v275
  %v311 = vmul.f32 %v176, %v275
  %v312 = vmul.f32 %v177, %v275
  %v313 = vmul.f32 %v178, %v275
  %v314 = vmul.f32 %v179, %v275
  %v315 = vmul.f32 %v180, %v275
  %v316 = vmul.f32 %v181, %v275
  %v317 = vmul.f32 %v182, %v275
  %v318 = vmul.f32 %v183, %v275
  %v319 = vmul.f32 %v184, %v275
  %v320 = vmul.f32 %v185, %v275
  %v321 = vmul.f32 %v186, %v275
  %v322 = vmul.f32 %v187, %v275
  %v323 = vmul.f32 %v188, %v275
  %v324 = vmul.f32 %v189, %v275
  %v325 = vmul.f32 %v190, %v275
  %v326 = vmul.f32 %v191, %v275
  %v327 = vmul.f32 %v192, %v275
  %v328 = vmul.f32 %v193, %v275
  %v329 = vmul.f32 %v194, %v275
  %v330 = vmul.f32 %v195, %v275
  %v331 = vmul.f32 %v196, %v275
  %v332 = vmul.f32 %v197, %v275
  %v333 = vmul.f32 %v198, %v275
  %v334 = vmul.f32 %v199, %v275
  %v335 = vmul.f32 %v200, %v275
  %v336 = vmul.f32 %v201, %v275
  %v337 = vmul.f32 %v202, %v275
  %v338 = vmul.f32 %v203, %v275
  %v339 = vmul.f32 %v204, %v275
  %v340 = vmul.f32 %v205, %v275
  %v341 = vmul.f32 %v206, %v275
  %v342 = vmul.f32 %v207, %v275
  %v343 = vmul.f32 %v208, %v275
  %v344 = vmul.f32 %v209, %v275
  %v345 = vmul.f32 %v210, %v275
  %v346 = vmul.f32 %v211, %v275
  %v347 = vmul.f32 %v212, %v275
  %v348 = vmul.f32 %v213, %v275
  %v349 = vmul.f32 %v214, %v275
  %v350 = vmul.f32 %v215, %v275
  %v351 = vmul.f32 %v216, %v275
  %v352 = vmul.f32 %v217, %v275
  %v353 = vmul.f32 %v218, %v275
  %v354 = vmul.f32 %v219, %v275
  %v355 = vmul.f32 %v220, %v275
  %v356 = vmul.f32 %v221, %v275
  %v357 = vmul.f32 %v222, %v275
  %v358 = vmul.f32 %v223, %v275
  %v359 = vmul.f32 %v224, %v275
  %v360 = vmul.f32 %v225, %v275
  %v361 = vmul.f32 %v226, %v275
  %v362 = vmul.f32 %v227, %v275
  %v363 = vmul.f32 %v228, %v275
  %v364 = vmul.f32 %v229, %v275
  %v365 = vmul.f32 %v230, %v275
  %v366 = vmul.f32 %v231, %v275
  %v367 = vmul.f32 %v232, %v275
  %v368 = vmul.f32 %v233, %v275
  %v369 = vmul.f32 %v234, %v275
  %v370 = vmul.f32 %v235, %v275
  %v371 = vmul.f32 %v236, %v275
  %v372 = vmul.f32 %v237, %v275
  %v373 = vmul.f32 %v238, %v275
  %v374 = vmul.f32 %v239, %v275
  %v375 = vmul.f32 %v240, %v275
  %v376 = vmul.f32 %v241, %v275
  %v377 = vmul.f32 %v242, %v275
  %v378 = vmul.f32 %v243, %v275
  %v379 = vmul.f32 %v244, %v275
  %v380 = vmul.f32 %v245, %v275
  %v381 = vmul.f32 %v246, %v275
  %v382 = vmul.f32 %v247, %v275
  %v383 = vmul.f32 %v248, %v275
  %v384 = vmul.f32 %v249, %v275
  %v385 = vmul.f32 %v250, %v275
  %v386 = vmul.f32 %v251, %v275
  %v387 = vmul.f32 %v252, %v275
  %v388 = vmul.f32 %v253, %v275
  %v389 = vmul.f32 %v254, %v275
  %v390 = vmul.f32 %v255, %v275
  %v391 = vmul.f32 %v256, %v275
  %v392 = vmul.f32 %v257, %v275
  %v393 = vmul.f32 %v258, %v275
  %v394 = vmul.f32 %v259, %v275
  %v395 = vmul.f32 %v260, %v275
  %v396 = vmul.f32 %v261, %v275
  %v397 = vmul.f32 %v262, %v275
  %v398 = vmul.f32 %v263, %v275
  %v399 = vmul.f32 %v264, %v275
  %v400 = vmul.f32 %v265, %v275
  %v401 = vmul.f32 %v266, %v275
  %v402 = vmul.f32 %v267, %v275
  %v403 = vmul.f32 %v268, %v275
  %v404 = vmul.f32 %v269, %v275
  %v405 = vld [vmem:[%s2] sm:$0x1]
  %v407 = vlaneseq
  %v408 = vshrl.u32 %v407, 7
  %v409 = vsub.s32 0, %v408
  %v410 = vrot.slane %v405, %v409
  %v412 = vadd.f32 %v277, %v410
  %v413 = vadd.f32 %v278, %v410
  %v414 = vadd.f32 %v279, %v410
  %v415 = vadd.f32 %v280, %v410
  %v416 = vadd.f32 %v281, %v410
  %v417 = vadd.f32 %v282, %v410
  %v418 = vadd.f32 %v283, %v410
  %v419 = vadd.f32 %v284, %v410
  %v420 = vadd.f32 %v285, %v410
  %v421 = vadd.f32 %v286, %v410
  %v422 = vadd.f32 %v287, %v410
  %v423 = vadd.f32 %v288, %v410
  %v424 = vadd.f32 %v289, %v410
  %v425 = vadd.f32 %v290, %v410
  %v426 = vadd.f32 %v291, %v410
  %v427 = vadd.f32 %v292, %v410
  %v428 = vadd.f32 %v293, %v410
  %v429 = vadd.f32 %v294, %v410
  %v430 = vadd.f32 %v295, %v410
  %v431 = vadd.f32 %v296, %v410
  %v432 = vadd.f32 %v297, %v410
  %v433 = vadd.f32 %v298, %v410
  %v434 = vadd.f32 %v299, %v410
  %v435 = vadd.f32 %v300, %v410
  %v436 = vadd.f32 %v301, %v410
  %v437 = vadd.f32 %v302, %v410
  %v438 = vadd.f32 %v303, %v410
  %v439 = vadd.f32 %v304, %v410
  %v440 = vadd.f32 %v305, %v410
  %v441 = vadd.f32 %v306, %v410
  %v442 = vadd.f32 %v307, %v410
  %v443 = vadd.f32 %v308, %v410
  %v444 = vadd.f32 %v309, %v410
  %v445 = vadd.f32 %v310, %v410
  %v446 = vadd.f32 %v311, %v410
  %v447 = vadd.f32 %v312, %v410
  %v448 = vadd.f32 %v313, %v410
  %v449 = vadd.f32 %v314, %v410
  %v450 = vadd.f32 %v315, %v410
  %v451 = vadd.f32 %v316, %v410
  %v452 = vadd.f32 %v317, %v410
  %v453 = vadd.f32 %v318, %v410
  %v454 = vadd.f32 %v319, %v410
  %v455 = vadd.f32 %v320, %v410
  %v456 = vadd.f32 %v321, %v410
  %v457 = vadd.f32 %v322, %v410
  %v458 = vadd.f32 %v323, %v410
  %v459 = vadd.f32 %v324, %v410
  %v460 = vadd.f32 %v325, %v410
  %v461 = vadd.f32 %v326, %v410
  %v462 = vadd.f32 %v327, %v410
  %v463 = vadd.f32 %v328, %v410
  %v464 = vadd.f32 %v329, %v410
  %v465 = vadd.f32 %v330, %v410
  %v466 = vadd.f32 %v331, %v410
  %v467 = vadd.f32 %v332, %v410
  %v468 = vadd.f32 %v333, %v410
  %v469 = vadd.f32 %v334, %v410
  %v470 = vadd.f32 %v335, %v410
  %v471 = vadd.f32 %v336, %v410
  %v472 = vadd.f32 %v337, %v410
  %v473 = vadd.f32 %v338, %v410
  %v474 = vadd.f32 %v339, %v410
  %v475 = vadd.f32 %v340, %v410
  %v476 = vadd.f32 %v341, %v410
  %v477 = vadd.f32 %v342, %v410
  %v478 = vadd.f32 %v343, %v410
  %v479 = vadd.f32 %v344, %v410
  %v480 = vadd.f32 %v345, %v410
  %v481 = vadd.f32 %v346, %v410
  %v482 = vadd.f32 %v347, %v410
  %v483 = vadd.f32 %v348, %v410
  %v484 = vadd.f32 %v349, %v410
  %v485 = vadd.f32 %v350, %v410
  %v486 = vadd.f32 %v351, %v410
  %v487 = vadd.f32 %v352, %v410
  %v488 = vadd.f32 %v353, %v410
  %v489 = vadd.f32 %v354, %v410
  %v490 = vadd.f32 %v355, %v410
  %v491 = vadd.f32 %v356, %v410
  %v492 = vadd.f32 %v357, %v410
  %v493 = vadd.f32 %v358, %v410
  %v494 = vadd.f32 %v359, %v410
  %v495 = vadd.f32 %v360, %v410
  %v496 = vadd.f32 %v361, %v410
  %v497 = vadd.f32 %v362, %v410
  %v498 = vadd.f32 %v363, %v410
  %v499 = vadd.f32 %v364, %v410
  %v500 = vadd.f32 %v365, %v410
  %v501 = vadd.f32 %v366, %v410
  %v502 = vadd.f32 %v367, %v410
  %v503 = vadd.f32 %v368, %v410
  %v504 = vadd.f32 %v369, %v410
  %v505 = vadd.f32 %v370, %v410
  %v506 = vadd.f32 %v371, %v410
  %v507 = vadd.f32 %v372, %v410
  %v508 = vadd.f32 %v373, %v410
  %v509 = vadd.f32 %v374, %v410
  %v510 = vadd.f32 %v375, %v410
  %v511 = vadd.f32 %v376, %v410
  %v512 = vadd.f32 %v377, %v410
  %v513 = vadd.f32 %v378, %v410
  %v514 = vadd.f32 %v379, %v410
  %v515 = vadd.f32 %v380, %v410
  %v516 = vadd.f32 %v381, %v410
  %v517 = vadd.f32 %v382, %v410
  %v518 = vadd.f32 %v383, %v410
  %v519 = vadd.f32 %v384, %v410
  %v520 = vadd.f32 %v385, %v410
  %v521 = vadd.f32 %v386, %v410
  %v522 = vadd.f32 %v387, %v410
  %v523 = vadd.f32 %v388, %v410
  %v524 = vadd.f32 %v389, %v410
  %v525 = vadd.f32 %v390, %v410
  %v526 = vadd.f32 %v391, %v410
  %v527 = vadd.f32 %v392, %v410
  %v528 = vadd.f32 %v393, %v410
  %v529 = vadd.f32 %v394, %v410
  %v530 = vadd.f32 %v395, %v410
  %v531 = vadd.f32 %v396, %v410
  %v532 = vadd.f32 %v397, %v410
  %v533 = vadd.f32 %v398, %v410
  %v534 = vadd.f32 %v399, %v410
  %v535 = vadd.f32 %v400, %v410
  %v536 = vadd.f32 %v401, %v410
  %v537 = vadd.f32 %v402, %v410
  %v538 = vadd.f32 %v403, %v410
  %v539 = vadd.f32 %v404, %v410
  %vm540 = vcmp.ge.f32.partialorder %v412, 0.0
  %vm541 = vcmp.ge.f32.partialorder %v413, 0.0
  %vm542 = vcmp.ge.f32.partialorder %v414, 0.0
  %vm543 = vcmp.ge.f32.partialorder %v415, 0.0
  %vm544 = vcmp.ge.f32.partialorder %v416, 0.0
  %vm545 = vcmp.ge.f32.partialorder %v417, 0.0
  %vm546 = vcmp.ge.f32.partialorder %v418, 0.0
  %vm547 = vcmp.ge.f32.partialorder %v419, 0.0
  %vm548 = vcmp.ge.f32.partialorder %v420, 0.0
  %vm549 = vcmp.ge.f32.partialorder %v421, 0.0
  %vm550 = vcmp.ge.f32.partialorder %v422, 0.0
  %vm551 = vcmp.ge.f32.partialorder %v423, 0.0
  %vm552 = vcmp.ge.f32.partialorder %v424, 0.0
  %vm553 = vcmp.ge.f32.partialorder %v425, 0.0
  %vm554 = vcmp.ge.f32.partialorder %v426, 0.0
  %vm555 = vcmp.ge.f32.partialorder %v427, 0.0
  %vm556 = vcmp.ge.f32.partialorder %v428, 0.0
  %vm557 = vcmp.ge.f32.partialorder %v429, 0.0
  %vm558 = vcmp.ge.f32.partialorder %v430, 0.0
  %vm559 = vcmp.ge.f32.partialorder %v431, 0.0
  %vm560 = vcmp.ge.f32.partialorder %v432, 0.0
  %vm561 = vcmp.ge.f32.partialorder %v433, 0.0
  %vm562 = vcmp.ge.f32.partialorder %v434, 0.0
  %vm563 = vcmp.ge.f32.partialorder %v435, 0.0
  %vm564 = vcmp.ge.f32.partialorder %v436, 0.0
  %vm565 = vcmp.ge.f32.partialorder %v437, 0.0
  %vm566 = vcmp.ge.f32.partialorder %v438, 0.0
  %vm567 = vcmp.ge.f32.partialorder %v439, 0.0
  %vm568 = vcmp.ge.f32.partialorder %v440, 0.0
  %vm569 = vcmp.ge.f32.partialorder %v441, 0.0
  %vm570 = vcmp.ge.f32.partialorder %v442, 0.0
  %vm571 = vcmp.ge.f32.partialorder %v443, 0.0
  %vm572 = vcmp.ge.f32.partialorder %v444, 0.0
  %vm573 = vcmp.ge.f32.partialorder %v445, 0.0
  %vm574 = vcmp.ge.f32.partialorder %v446, 0.0
  %vm575 = vcmp.ge.f32.partialorder %v447, 0.0
  %vm576 = vcmp.ge.f32.partialorder %v448, 0.0
  %vm577 = vcmp.ge.f32.partialorder %v449, 0.0
  %vm578 = vcmp.ge.f32.partialorder %v450, 0.0
  %vm579 = vcmp.ge.f32.partialorder %v451, 0.0
  %vm580 = vcmp.ge.f32.partialorder %v452, 0.0
  %vm581 = vcmp.ge.f32.partialorder %v453, 0.0
  %vm582 = vcmp.ge.f32.partialorder %v454, 0.0
  %vm583 = vcmp.ge.f32.partialorder %v455, 0.0
  %vm584 = vcmp.ge.f32.partialorder %v456, 0.0
  %vm585 = vcmp.ge.f32.partialorder %v457, 0.0
  %vm586 = vcmp.ge.f32.partialorder %v458, 0.0
  %vm587 = vcmp.ge.f32.partialorder %v459, 0.0
  %vm588 = vcmp.ge.f32.partialorder %v460, 0.0
  %vm589 = vcmp.ge.f32.partialorder %v461, 0.0
  %vm590 = vcmp.ge.f32.partialorder %v462, 0.0
  %vm591 = vcmp.ge.f32.partialorder %v463, 0.0
  %vm592 = vcmp.ge.f32.partialorder %v464, 0.0
  %vm593 = vcmp.ge.f32.partialorder %v465, 0.0
  %vm594 = vcmp.ge.f32.partialorder %v466, 0.0
  %vm595 = vcmp.ge.f32.partialorder %v467, 0.0
  %vm596 = vcmp.ge.f32.partialorder %v468, 0.0
  %vm597 = vcmp.ge.f32.partialorder %v469, 0.0
  %vm598 = vcmp.ge.f32.partialorder %v470, 0.0
  %vm599 = vcmp.ge.f32.partialorder %v471, 0.0
  %vm600 = vcmp.ge.f32.partialorder %v472, 0.0
  %vm601 = vcmp.ge.f32.partialorder %v473, 0.0
  %vm602 = vcmp.ge.f32.partialorder %v474, 0.0
  %vm603 = vcmp.ge.f32.partialorder %v475, 0.0
  %vm604 = vcmp.ge.f32.partialorder %v476, 0.0
  %vm605 = vcmp.ge.f32.partialorder %v477, 0.0
  %vm606 = vcmp.ge.f32.partialorder %v478, 0.0
  %vm607 = vcmp.ge.f32.partialorder %v479, 0.0
  %vm608 = vcmp.ge.f32.partialorder %v480, 0.0
  %vm609 = vcmp.ge.f32.partialorder %v481, 0.0
  %vm610 = vcmp.ge.f32.partialorder %v482, 0.0
  %vm611 = vcmp.ge.f32.partialorder %v483, 0.0
  %vm612 = vcmp.ge.f32.partialorder %v484, 0.0
  %vm613 = vcmp.ge.f32.partialorder %v485, 0.0
  %vm614 = vcmp.ge.f32.partialorder %v486, 0.0
  %vm615 = vcmp.ge.f32.partialorder %v487, 0.0
  %vm616 = vcmp.ge.f32.partialorder %v488, 0.0
  %vm617 = vcmp.ge.f32.partialorder %v489, 0.0
  %vm618 = vcmp.ge.f32.partialorder %v490, 0.0
  %vm619 = vcmp.ge.f32.partialorder %v491, 0.0
  %vm620 = vcmp.ge.f32.partialorder %v492, 0.0
  %vm621 = vcmp.ge.f32.partialorder %v493, 0.0
  %vm622 = vcmp.ge.f32.partialorder %v494, 0.0
  %vm623 = vcmp.ge.f32.partialorder %v495, 0.0
  %vm624 = vcmp.ge.f32.partialorder %v496, 0.0
  %vm625 = vcmp.ge.f32.partialorder %v497, 0.0
  %vm626 = vcmp.ge.f32.partialorder %v498, 0.0
  %vm627 = vcmp.ge.f32.partialorder %v499, 0.0
  %vm628 = vcmp.ge.f32.partialorder %v500, 0.0
  %vm629 = vcmp.ge.f32.partialorder %v501, 0.0
  %vm630 = vcmp.ge.f32.partialorder %v502, 0.0
  %vm631 = vcmp.ge.f32.partialorder %v503, 0.0
  %vm632 = vcmp.ge.f32.partialorder %v504, 0.0
  %vm633 = vcmp.ge.f32.partialorder %v505, 0.0
  %vm634 = vcmp.ge.f32.partialorder %v506, 0.0
  %vm635 = vcmp.ge.f32.partialorder %v507, 0.0
  %vm636 = vcmp.ge.f32.partialorder %v508, 0.0
  %vm637 = vcmp.ge.f32.partialorder %v509, 0.0
  %vm638 = vcmp.ge.f32.partialorder %v510, 0.0
  %vm639 = vcmp.ge.f32.partialorder %v511, 0.0
  %vm640 = vcmp.ge.f32.partialorder %v512, 0.0
  %vm641 = vcmp.ge.f32.partialorder %v513, 0.0
  %vm642 = vcmp.ge.f32.partialorder %v514, 0.0
  %vm643 = vcmp.ge.f32.partialorder %v515, 0.0
  %vm644 = vcmp.ge.f32.partialorder %v516, 0.0
  %vm645 = vcmp.ge.f32.partialorder %v517, 0.0
  %vm646 = vcmp.ge.f32.partialorder %v518, 0.0
  %vm647 = vcmp.ge.f32.partialorder %v519, 0.0
  %vm648 = vcmp.ge.f32.partialorder %v520, 0.0
  %vm649 = vcmp.ge.f32.partialorder %v521, 0.0
  %vm650 = vcmp.ge.f32.partialorder %v522, 0.0
  %vm651 = vcmp.ge.f32.partialorder %v523, 0.0
  %vm652 = vcmp.ge.f32.partialorder %v524, 0.0
  %vm653 = vcmp.ge.f32.partialorder %v525, 0.0
  %vm654 = vcmp.ge.f32.partialorder %v526, 0.0
  %vm655 = vcmp.ge.f32.partialorder %v527, 0.0
  %vm656 = vcmp.ge.f32.partialorder %v528, 0.0
  %vm657 = vcmp.ge.f32.partialorder %v529, 0.0
  %vm658 = vcmp.ge.f32.partialorder %v530, 0.0
  %vm659 = vcmp.ge.f32.partialorder %v531, 0.0
  %vm660 = vcmp.ge.f32.partialorder %v532, 0.0
  %vm661 = vcmp.ge.f32.partialorder %v533, 0.0
  %vm662 = vcmp.ge.f32.partialorder %v534, 0.0
  %vm663 = vcmp.ge.f32.partialorder %v535, 0.0
  %vm664 = vcmp.ge.f32.partialorder %v536, 0.0
  %vm665 = vcmp.ge.f32.partialorder %v537, 0.0
  %vm666 = vcmp.ge.f32.partialorder %v538, 0.0
  %vm667 = vcmp.ge.f32.partialorder %v539, 0.0
  %v668 = vmul.f32 %v412, 0.2
  %v669 = vmul.f32 %v413, 0.2
  %v670 = vmul.f32 %v414, 0.2
  %v671 = vmul.f32 %v415, 0.2
  %v672 = vmul.f32 %v416, 0.2
  %v673 = vmul.f32 %v417, 0.2
  %v674 = vmul.f32 %v418, 0.2
  %v675 = vmul.f32 %v419, 0.2
  %v676 = vmul.f32 %v420, 0.2
  %v677 = vmul.f32 %v421, 0.2
  %v678 = vmul.f32 %v422, 0.2
  %v679 = vmul.f32 %v423, 0.2
  %v680 = vmul.f32 %v424, 0.2
  %v681 = vmul.f32 %v425, 0.2
  %v682 = vmul.f32 %v426, 0.2
  %v683 = vmul.f32 %v427, 0.2
  %v684 = vmul.f32 %v428, 0.2
  %v685 = vmul.f32 %v429, 0.2
  %v686 = vmul.f32 %v430, 0.2
  %v687 = vmul.f32 %v431, 0.2
  %v688 = vmul.f32 %v432, 0.2
  %v689 = vmul.f32 %v433, 0.2
  %v690 = vmul.f32 %v434, 0.2
  %v691 = vmul.f32 %v435, 0.2
  %v692 = vmul.f32 %v436, 0.2
  %v693 = vmul.f32 %v437, 0.2
  %v694 = vmul.f32 %v438, 0.2
  %v695 = vmul.f32 %v439, 0.2
  %v696 = vmul.f32 %v440, 0.2
  %v697 = vmul.f32 %v441, 0.2
  %v698 = vmul.f32 %v442, 0.2
  %v699 = vmul.f32 %v443, 0.2
  %v700 = vmul.f32 %v444, 0.2
  %v701 = vmul.f32 %v445, 0.2
  %v702 = vmul.f32 %v446, 0.2
  %v703 = vmul.f32 %v447, 0.2
  %v704 = vmul.f32 %v448, 0.2
  %v705 = vmul.f32 %v449, 0.2
  %v706 = vmul.f32 %v450, 0.2
  %v707 = vmul.f32 %v451, 0.2
  %v708 = vmul.f32 %v452, 0.2
  %v709 = vmul.f32 %v453, 0.2
  %v710 = vmul.f32 %v454, 0.2
  %v711 = vmul.f32 %v455, 0.2
  %v712 = vmul.f32 %v456, 0.2
  %v713 = vmul.f32 %v457, 0.2
  %v714 = vmul.f32 %v458, 0.2
  %v715 = vmul.f32 %v459, 0.2
  %v716 = vmul.f32 %v460, 0.2
  %v717 = vmul.f32 %v461, 0.2
  %v718 = vmul.f32 %v462, 0.2
  %v719 = vmul.f32 %v463, 0.2
  %v720 = vmul.f32 %v464, 0.2
  %v721 = vmul.f32 %v465, 0.2
  %v722 = vmul.f32 %v466, 0.2
  %v723 = vmul.f32 %v467, 0.2
  %v724 = vmul.f32 %v468, 0.2
  %v725 = vmul.f32 %v469, 0.2
  %v726 = vmul.f32 %v470, 0.2
  %v727 = vmul.f32 %v471, 0.2
  %v728 = vmul.f32 %v472, 0.2
  %v729 = vmul.f32 %v473, 0.2
  %v730 = vmul.f32 %v474, 0.2
  %v731 = vmul.f32 %v475, 0.2
  %v732 = vmul.f32 %v476, 0.2
  %v733 = vmul.f32 %v477, 0.2
  %v734 = vmul.f32 %v478, 0.2
  %v735 = vmul.f32 %v479, 0.2
  %v736 = vmul.f32 %v480, 0.2
  %v737 = vmul.f32 %v481, 0.2
  %v738 = vmul.f32 %v482, 0.2
  %v739 = vmul.f32 %v483, 0.2
  %v740 = vmul.f32 %v484, 0.2
  %v741 = vmul.f32 %v485, 0.2
  %v742 = vmul.f32 %v486, 0.2
  %v743 = vmul.f32 %v487, 0.2
  %v744 = vmul.f32 %v488, 0.2
  %v745 = vmul.f32 %v489, 0.2
  %v746 = vmul.f32 %v490, 0.2
  %v747 = vmul.f32 %v491, 0.2
  %v748 = vmul.f32 %v492, 0.2
  %v749 = vmul.f32 %v493, 0.2
  %v750 = vmul.f32 %v494, 0.2
  %v751 = vmul.f32 %v495, 0.2
  %v752 = vmul.f32 %v496, 0.2
  %v753 = vmul.f32 %v497, 0.2
  %v754 = vmul.f32 %v498, 0.2
  %v755 = vmul.f32 %v499, 0.2
  %v756 = vmul.f32 %v500, 0.2
  %v757 = vmul.f32 %v501, 0.2
  %v758 = vmul.f32 %v502, 0.2
  %v759 = vmul.f32 %v503, 0.2
  %v760 = vmul.f32 %v504, 0.2
  %v761 = vmul.f32 %v505, 0.2
  %v762 = vmul.f32 %v506, 0.2
  %v763 = vmul.f32 %v507, 0.2
  %v764 = vmul.f32 %v508, 0.2
  %v765 = vmul.f32 %v509, 0.2
  %v766 = vmul.f32 %v510, 0.2
  %v767 = vmul.f32 %v511, 0.2
  %v768 = vmul.f32 %v512, 0.2
  %v769 = vmul.f32 %v513, 0.2
  %v770 = vmul.f32 %v514, 0.2
  %v771 = vmul.f32 %v515, 0.2
  %v772 = vmul.f32 %v516, 0.2
  %v773 = vmul.f32 %v517, 0.2
  %v774 = vmul.f32 %v518, 0.2
  %v775 = vmul.f32 %v519, 0.2
  %v776 = vmul.f32 %v520, 0.2
  %v777 = vmul.f32 %v521, 0.2
  %v778 = vmul.f32 %v522, 0.2
  %v779 = vmul.f32 %v523, 0.2
  %v780 = vmul.f32 %v524, 0.2
  %v781 = vmul.f32 %v525, 0.2
  %v782 = vmul.f32 %v526, 0.2
  %v783 = vmul.f32 %v527, 0.2
  %v784 = vmul.f32 %v528, 0.2
  %v785 = vmul.f32 %v529, 0.2
  %v786 = vmul.f32 %v530, 0.2
  %v787 = vmul.f32 %v531, 0.2
  %v788 = vmul.f32 %v532, 0.2
  %v789 = vmul.f32 %v533, 0.2
  %v790 = vmul.f32 %v534, 0.2
  %v791 = vmul.f32 %v535, 0.2
  %v792 = vmul.f32 %v536, 0.2
  %v793 = vmul.f32 %v537, 0.2
  %v794 = vmul.f32 %v538, 0.2
  %v795 = vmul.f32 %v539, 0.2
  %v796 = vsel %vm540, %v412, %v668
  %v797 = vsel %vm541, %v413, %v669
  %v798 = vsel %vm542, %v414, %v670
  %v799 = vsel %vm543, %v415, %v671
  %v800 = vsel %vm544, %v416, %v672
  %v801 = vsel %vm545, %v417, %v673
  %v802 = vsel %vm546, %v418, %v674
  %v803 = vsel %vm547, %v419, %v675
  %v804 = vsel %vm548, %v420, %v676
  %v805 = vsel %vm549, %v421, %v677
  %v806 = vsel %vm550, %v422, %v678
  %v807 = vsel %vm551, %v423, %v679
  %v808 = vsel %vm552, %v424, %v680
  %v809 = vsel %vm553, %v425, %v681
  %v810 = vsel %vm554, %v426, %v682
  %v811 = vsel %vm555, %v427, %v683
  %v812 = vsel %vm556, %v428, %v684
  %v813 = vsel %vm557, %v429, %v685
  %v814 = vsel %vm558, %v430, %v686
  %v815 = vsel %vm559, %v431, %v687
  %v816 = vsel %vm560, %v432, %v688
  %v817 = vsel %vm561, %v433, %v689
  %v818 = vsel %vm562, %v434, %v690
  %v819 = vsel %vm563, %v435, %v691
  %v820 = vsel %vm564, %v436, %v692
  %v821 = vsel %vm565, %v437, %v693
  %v822 = vsel %vm566, %v438, %v694
  %v823 = vsel %vm567, %v439, %v695
  %v824 = vsel %vm568, %v440, %v696
  %v825 = vsel %vm569, %v441, %v697
  %v826 = vsel %vm570, %v442, %v698
  %v827 = vsel %vm571, %v443, %v699
  %v828 = vsel %vm572, %v444, %v700
  %v829 = vsel %vm573, %v445, %v701
  %v830 = vsel %vm574, %v446, %v702
  %v831 = vsel %vm575, %v447, %v703
  %v832 = vsel %vm576, %v448, %v704
  %v833 = vsel %vm577, %v449, %v705
  %v834 = vsel %vm578, %v450, %v706
  %v835 = vsel %vm579, %v451, %v707
  %v836 = vsel %vm580, %v452, %v708
  %v837 = vsel %vm581, %v453, %v709
  %v838 = vsel %vm582, %v454, %v710
  %v839 = vsel %vm583, %v455, %v711
  %v840 = vsel %vm584, %v456, %v712
  %v841 = vsel %vm585, %v457, %v713
  %v842 = vsel %vm586, %v458, %v714
  %v843 = vsel %vm587, %v459, %v715
  %v844 = vsel %vm588, %v460, %v716
  %v845 = vsel %vm589, %v461, %v717
  %v846 = vsel %vm590, %v462, %v718
  %v847 = vsel %vm591, %v463, %v719
  %v848 = vsel %vm592, %v464, %v720
  %v849 = vsel %vm593, %v465, %v721
  %v850 = vsel %vm594, %v466, %v722
  %v851 = vsel %vm595, %v467, %v723
  %v852 = vsel %vm596, %v468, %v724
  %v853 = vsel %vm597, %v469, %v725
  %v854 = vsel %vm598, %v470, %v726
  %v855 = vsel %vm599, %v471, %v727
  %v856 = vsel %vm600, %v472, %v728
  %v857 = vsel %vm601, %v473, %v729
  %v858 = vsel %vm602, %v474, %v730
  %v859 = vsel %vm603, %v475, %v731
  %v860 = vsel %vm604, %v476, %v732
  %v861 = vsel %vm605, %v477, %v733
  %v862 = vsel %vm606, %v478, %v734
  %v863 = vsel %vm607, %v479, %v735
  %v864 = vsel %vm608, %v480, %v736
  %v865 = vsel %vm609, %v481, %v737
  %v866 = vsel %vm610, %v482, %v738
  %v867 = vsel %vm611, %v483, %v739
  %v868 = vsel %vm612, %v484, %v740
  %v869 = vsel %vm613, %v485, %v741
  %v870 = vsel %vm614, %v486, %v742
  %v871 = vsel %vm615, %v487, %v743
  %v872 = vsel %vm616, %v488, %v744
  %v873 = vsel %vm617, %v489, %v745
  %v874 = vsel %vm618, %v490, %v746
  %v875 = vsel %vm619, %v491, %v747
  %v876 = vsel %vm620, %v492, %v748
  %v877 = vsel %vm621, %v493, %v749
  %v878 = vsel %vm622, %v494, %v750
  %v879 = vsel %vm623, %v495, %v751
  %v880 = vsel %vm624, %v496, %v752
  %v881 = vsel %vm625, %v497, %v753
  %v882 = vsel %vm626, %v498, %v754
  %v883 = vsel %vm627, %v499, %v755
  %v884 = vsel %vm628, %v500, %v756
  %v885 = vsel %vm629, %v501, %v757
  %v886 = vsel %vm630, %v502, %v758
  %v887 = vsel %vm631, %v503, %v759
  %v888 = vsel %vm632, %v504, %v760
  %v889 = vsel %vm633, %v505, %v761
  %v890 = vsel %vm634, %v506, %v762
  %v891 = vsel %vm635, %v507, %v763
  %v892 = vsel %vm636, %v508, %v764
  %v893 = vsel %vm637, %v509, %v765
  %v894 = vsel %vm638, %v510, %v766
  %v895 = vsel %vm639, %v511, %v767
  %v896 = vsel %vm640, %v512, %v768
  %v897 = vsel %vm641, %v513, %v769
  %v898 = vsel %vm642, %v514, %v770
  %v899 = vsel %vm643, %v515, %v771
  %v900 = vsel %vm644, %v516, %v772
  %v901 = vsel %vm645, %v517, %v773
  %v902 = vsel %vm646, %v518, %v774
  %v903 = vsel %vm647, %v519, %v775
  %v904 = vsel %vm648, %v520, %v776
  %v905 = vsel %vm649, %v521, %v777
  %v906 = vsel %vm650, %v522, %v778
  %v907 = vsel %vm651, %v523, %v779
  %v908 = vsel %vm652, %v524, %v780
  %v909 = vsel %vm653, %v525, %v781
  %v910 = vsel %vm654, %v526, %v782
  %v911 = vsel %vm655, %v527, %v783
  %v912 = vsel %vm656, %v528, %v784
  %v913 = vsel %vm657, %v529, %v785
  %v914 = vsel %vm658, %v530, %v786
  %v915 = vsel %vm659, %v531, %v787
  %v916 = vsel %vm660, %v532, %v788
  %v917 = vsel %vm661, %v533, %v789
  %v918 = vsel %vm662, %v534, %v790
  %v919 = vsel %vm663, %v535, %v791
  %v920 = vsel %vm664, %v536, %v792
  %v921 = vsel %vm665, %v537, %v793
  %v922 = vsel %vm666, %v538, %v794
  %v923 = vsel %vm667, %v539, %v795
  %v924 = vpack.c.bf16 %v797, %v796
  %v925 = vpack.c.bf16 %v799, %v798
  %v926 = vpack.c.bf16 %v801, %v800
  %v927 = vpack.c.bf16 %v803, %v802
  %v928 = vpack.c.bf16 %v805, %v804
  %v929 = vpack.c.bf16 %v807, %v806
  %v930 = vpack.c.bf16 %v809, %v808
  %v931 = vpack.c.bf16 %v811, %v810
  %v932 = vpack.c.bf16 %v813, %v812
  %v933 = vpack.c.bf16 %v815, %v814
  %v934 = vpack.c.bf16 %v817, %v816
  %v935 = vpack.c.bf16 %v819, %v818
  %v936 = vpack.c.bf16 %v821, %v820
  %v937 = vpack.c.bf16 %v823, %v822
  %v938 = vpack.c.bf16 %v825, %v824
  %v939 = vpack.c.bf16 %v827, %v826
  %v940 = vpack.c.bf16 %v829, %v828
  %v941 = vpack.c.bf16 %v831, %v830
  %v942 = vpack.c.bf16 %v833, %v832
  %v943 = vpack.c.bf16 %v835, %v834
  %v944 = vpack.c.bf16 %v837, %v836
  %v945 = vpack.c.bf16 %v839, %v838
  %v946 = vpack.c.bf16 %v841, %v840
  %v947 = vpack.c.bf16 %v843, %v842
  %v948 = vpack.c.bf16 %v845, %v844
  %v949 = vpack.c.bf16 %v847, %v846
  %v950 = vpack.c.bf16 %v849, %v848
  %v951 = vpack.c.bf16 %v851, %v850
  %v952 = vpack.c.bf16 %v853, %v852
  %v953 = vpack.c.bf16 %v855, %v854
  %v954 = vpack.c.bf16 %v857, %v856
  %v955 = vpack.c.bf16 %v859, %v858
  %v956 = vpack.c.bf16 %v861, %v860
  %v957 = vpack.c.bf16 %v863, %v862
  %v958 = vpack.c.bf16 %v865, %v864
  %v959 = vpack.c.bf16 %v867, %v866
  %v960 = vpack.c.bf16 %v869, %v868
  %v961 = vpack.c.bf16 %v871, %v870
  %v962 = vpack.c.bf16 %v873, %v872
  %v963 = vpack.c.bf16 %v875, %v874
  %v964 = vpack.c.bf16 %v877, %v876
  %v965 = vpack.c.bf16 %v879, %v878
  %v966 = vpack.c.bf16 %v881, %v880
  %v967 = vpack.c.bf16 %v883, %v882
  %v968 = vpack.c.bf16 %v885, %v884
  %v969 = vpack.c.bf16 %v887, %v886
  %v970 = vpack.c.bf16 %v889, %v888
  %v971 = vpack.c.bf16 %v891, %v890
  %v972 = vpack.c.bf16 %v893, %v892
  %v973 = vpack.c.bf16 %v895, %v894
  %v974 = vpack.c.bf16 %v897, %v896
  %v975 = vpack.c.bf16 %v899, %v898
  %v976 = vpack.c.bf16 %v901, %v900
  %v977 = vpack.c.bf16 %v903, %v902
  %v978 = vpack.c.bf16 %v905, %v904
  %v979 = vpack.c.bf16 %v907, %v906
  %v980 = vpack.c.bf16 %v909, %v908
  %v981 = vpack.c.bf16 %v911, %v910
  %v982 = vpack.c.bf16 %v913, %v912
  %v983 = vpack.c.bf16 %v915, %v914
  %v984 = vpack.c.bf16 %v917, %v916
  %v985 = vpack.c.bf16 %v919, %v918
  %v986 = vpack.c.bf16 %v921, %v920
  %v987 = vpack.c.bf16 %v923, %v922
  %v1052 = vunpack.c.l.b16 %v924
  %v1053 = vunpack.c.h.b16 %v924
  %v1054 = vunpack.c.l.b16 %v925
  %v1055 = vunpack.c.h.b16 %v925
  %v1056 = vunpack.c.l.b16 %v926
  %v1057 = vunpack.c.h.b16 %v926
  %v1058 = vunpack.c.l.b16 %v927
  %v1059 = vunpack.c.h.b16 %v927
  %v1060 = vunpack.c.l.b16 %v928
  %v1061 = vunpack.c.h.b16 %v928
  %v1062 = vunpack.c.l.b16 %v929
  %v1063 = vunpack.c.h.b16 %v929
  %v1064 = vunpack.c.l.b16 %v930
  %v1065 = vunpack.c.h.b16 %v930
  %v1066 = vunpack.c.l.b16 %v931
  %v1067 = vunpack.c.h.b16 %v931
  %v1068 = vunpack.c.l.b16 %v932
  %v1069 = vunpack.c.h.b16 %v932
  %v1070 = vunpack.c.l.b16 %v933
  %v1071 = vunpack.c.h.b16 %v933
  %v1072 = vunpack.c.l.b16 %v934
  %v1073 = vunpack.c.h.b16 %v934
  %v1074 = vunpack.c.l.b16 %v935
  %v1075 = vunpack.c.h.b16 %v935
  %v1076 = vunpack.c.l.b16 %v936
  %v1077 = vunpack.c.h.b16 %v936
  %v1078 = vunpack.c.l.b16 %v937
  %v1079 = vunpack.c.h.b16 %v937
  %v1080 = vunpack.c.l.b16 %v938
  %v1081 = vunpack.c.h.b16 %v938
  %v1082 = vunpack.c.l.b16 %v939
  %v1083 = vunpack.c.h.b16 %v939
  %v1084 = vunpack.c.l.b16 %v940
  %v1085 = vunpack.c.h.b16 %v940
  %v1086 = vunpack.c.l.b16 %v941
  %v1087 = vunpack.c.h.b16 %v941
  %v1088 = vunpack.c.l.b16 %v942
  %v1089 = vunpack.c.h.b16 %v942
  %v1090 = vunpack.c.l.b16 %v943
  %v1091 = vunpack.c.h.b16 %v943
  %v1092 = vunpack.c.l.b16 %v944
  %v1093 = vunpack.c.h.b16 %v944
  %v1094 = vunpack.c.l.b16 %v945
  %v1095 = vunpack.c.h.b16 %v945
  %v1096 = vunpack.c.l.b16 %v946
  %v1097 = vunpack.c.h.b16 %v946
  %v1098 = vunpack.c.l.b16 %v947
  %v1099 = vunpack.c.h.b16 %v947
  %v1100 = vunpack.c.l.b16 %v948
  %v1101 = vunpack.c.h.b16 %v948
  %v1102 = vunpack.c.l.b16 %v949
  %v1103 = vunpack.c.h.b16 %v949
  %v1104 = vunpack.c.l.b16 %v950
  %v1105 = vunpack.c.h.b16 %v950
  %v1106 = vunpack.c.l.b16 %v951
  %v1107 = vunpack.c.h.b16 %v951
  %v1108 = vunpack.c.l.b16 %v952
  %v1109 = vunpack.c.h.b16 %v952
  %v1110 = vunpack.c.l.b16 %v953
  %v1111 = vunpack.c.h.b16 %v953
  %v1112 = vunpack.c.l.b16 %v954
  %v1113 = vunpack.c.h.b16 %v954
  %v1114 = vunpack.c.l.b16 %v955
  %v1115 = vunpack.c.h.b16 %v955
  %v1116 = vunpack.c.l.b16 %v956
  %v1117 = vunpack.c.h.b16 %v956
  %v1118 = vunpack.c.l.b16 %v957
  %v1119 = vunpack.c.h.b16 %v957
  %v1120 = vunpack.c.l.b16 %v958
  %v1121 = vunpack.c.h.b16 %v958
  %v1122 = vunpack.c.l.b16 %v959
  %v1123 = vunpack.c.h.b16 %v959
  %v1124 = vunpack.c.l.b16 %v960
  %v1125 = vunpack.c.h.b16 %v960
  %v1126 = vunpack.c.l.b16 %v961
  %v1127 = vunpack.c.h.b16 %v961
  %v1128 = vunpack.c.l.b16 %v962
  %v1129 = vunpack.c.h.b16 %v962
  %v1130 = vunpack.c.l.b16 %v963
  %v1131 = vunpack.c.h.b16 %v963
  %v1132 = vunpack.c.l.b16 %v964
  %v1133 = vunpack.c.h.b16 %v964
  %v1134 = vunpack.c.l.b16 %v965
  %v1135 = vunpack.c.h.b16 %v965
  %v1136 = vunpack.c.l.b16 %v966
  %v1137 = vunpack.c.h.b16 %v966
  %v1138 = vunpack.c.l.b16 %v967
  %v1139 = vunpack.c.h.b16 %v967
  %v1140 = vunpack.c.l.b16 %v968
  %v1141 = vunpack.c.h.b16 %v968
  %v1142 = vunpack.c.l.b16 %v969
  %v1143 = vunpack.c.h.b16 %v969
  %v1144 = vunpack.c.l.b16 %v970
  %v1145 = vunpack.c.h.b16 %v970
  %v1146 = vunpack.c.l.b16 %v971
  %v1147 = vunpack.c.h.b16 %v971
  %v1148 = vunpack.c.l.b16 %v972
  %v1149 = vunpack.c.h.b16 %v972
  %v1150 = vunpack.c.l.b16 %v973
  %v1151 = vunpack.c.h.b16 %v973
  %v1152 = vunpack.c.l.b16 %v974
  %v1153 = vunpack.c.h.b16 %v974
  %v1154 = vunpack.c.l.b16 %v975
  %v1155 = vunpack.c.h.b16 %v975
  %v1156 = vunpack.c.l.b16 %v976
  %v1157 = vunpack.c.h.b16 %v976
  %v1158 = vunpack.c.l.b16 %v977
  %v1159 = vunpack.c.h.b16 %v977
  %v1160 = vunpack.c.l.b16 %v978
  %v1161 = vunpack.c.h.b16 %v978
  %v1162 = vunpack.c.l.b16 %v979
  %v1163 = vunpack.c.h.b16 %v979
  %v1164 = vunpack.c.l.b16 %v980
  %v1165 = vunpack.c.h.b16 %v980
  %v1166 = vunpack.c.l.b16 %v981
  %v1167 = vunpack.c.h.b16 %v981
  %v1168 = vunpack.c.l.b16 %v982
  %v1169 = vunpack.c.h.b16 %v982
  %v1170 = vunpack.c.l.b16 %v983
  %v1171 = vunpack.c.h.b16 %v983
  %v1172 = vunpack.c.l.b16 %v984
  %v1173 = vunpack.c.h.b16 %v984
  %v1174 = vunpack.c.l.b16 %v985
  %v1175 = vunpack.c.h.b16 %v985
  %v1176 = vunpack.c.l.b16 %v986
  %v1177 = vunpack.c.h.b16 %v986
  %v1178 = vunpack.c.l.b16 %v987
  %v1179 = vunpack.c.h.b16 %v987
  %v1180 = vpack.c.b16 %v1052, %v1052
  %v1181 = vpack.c.b16 %v1053, %v1053
  %v1182 = vpack.c.b16 %v1054, %v1054
  %v1183 = vpack.c.b16 %v1055, %v1055
  %v1184 = vpack.c.b16 %v1056, %v1056
  %v1185 = vpack.c.b16 %v1057, %v1057
  %v1186 = vpack.c.b16 %v1058, %v1058
  %v1187 = vpack.c.b16 %v1059, %v1059
  %v1188 = vpack.c.b16 %v1060, %v1060
  %v1189 = vpack.c.b16 %v1061, %v1061
  %v1190 = vpack.c.b16 %v1062, %v1062
  %v1191 = vpack.c.b16 %v1063, %v1063
  %v1192 = vpack.c.b16 %v1064, %v1064
  %v1193 = vpack.c.b16 %v1065, %v1065
  %v1194 = vpack.c.b16 %v1066, %v1066
  %v1195 = vpack.c.b16 %v1067, %v1067
  %v1196 = vpack.c.b16 %v1068, %v1068
  %v1197 = vpack.c.b16 %v1069, %v1069
  %v1198 = vpack.c.b16 %v1070, %v1070
  %v1199 = vpack.c.b16 %v1071, %v1071
  %v1200 = vpack.c.b16 %v1072, %v1072
  %v1201 = vpack.c.b16 %v1073, %v1073
  %v1202 = vpack.c.b16 %v1074, %v1074
  %v1203 = vpack.c.b16 %v1075, %v1075
  %v1204 = vpack.c.b16 %v1076, %v1076
  %v1205 = vpack.c.b16 %v1077, %v1077
  %v1206 = vpack.c.b16 %v1078, %v1078
  %v1207 = vpack.c.b16 %v1079, %v1079
  %v1208 = vpack.c.b16 %v1080, %v1080
  %v1209 = vpack.c.b16 %v1081, %v1081
  %v1210 = vpack.c.b16 %v1082, %v1082
  %v1211 = vpack.c.b16 %v1083, %v1083
  %v1212 = vpack.c.b16 %v1084, %v1084
  %v1213 = vpack.c.b16 %v1085, %v1085
  %v1214 = vpack.c.b16 %v1086, %v1086
  %v1215 = vpack.c.b16 %v1087, %v1087
  %v1216 = vpack.c.b16 %v1088, %v1088
  %v1217 = vpack.c.b16 %v1089, %v1089
  %v1218 = vpack.c.b16 %v1090, %v1090
  %v1219 = vpack.c.b16 %v1091, %v1091
  %v1220 = vpack.c.b16 %v1092, %v1092
  %v1221 = vpack.c.b16 %v1093, %v1093
  %v1222 = vpack.c.b16 %v1094, %v1094
  %v1223 = vpack.c.b16 %v1095, %v1095
  %v1224 = vpack.c.b16 %v1096, %v1096
  %v1225 = vpack.c.b16 %v1097, %v1097
  %v1226 = vpack.c.b16 %v1098, %v1098
  %v1227 = vpack.c.b16 %v1099, %v1099
  %v1228 = vpack.c.b16 %v1100, %v1100
  %v1229 = vpack.c.b16 %v1101, %v1101
  %v1230 = vpack.c.b16 %v1102, %v1102
  %v1231 = vpack.c.b16 %v1103, %v1103
  %v1232 = vpack.c.b16 %v1104, %v1104
  %v1233 = vpack.c.b16 %v1105, %v1105
  %v1234 = vpack.c.b16 %v1106, %v1106
  %v1235 = vpack.c.b16 %v1107, %v1107
  %v1236 = vpack.c.b16 %v1108, %v1108
  %v1237 = vpack.c.b16 %v1109, %v1109
  %v1238 = vpack.c.b16 %v1110, %v1110
  %v1239 = vpack.c.b16 %v1111, %v1111
  %v1240 = vpack.c.b16 %v1112, %v1112
  %v1241 = vpack.c.b16 %v1113, %v1113
  %v1242 = vpack.c.b16 %v1114, %v1114
  %v1243 = vpack.c.b16 %v1115, %v1115
  %v1244 = vpack.c.b16 %v1116, %v1116
  %v1245 = vpack.c.b16 %v1117, %v1117
  %v1246 = vpack.c.b16 %v1118, %v1118
  %v1247 = vpack.c.b16 %v1119, %v1119
  %v1248 = vpack.c.b16 %v1120, %v1120
  %v1249 = vpack.c.b16 %v1121, %v1121
  %v1250 = vpack.c.b16 %v1122, %v1122
  %v1251 = vpack.c.b16 %v1123, %v1123
  %v1252 = vpack.c.b16 %v1124, %v1124
  %v1253 = vpack.c.b16 %v1125, %v1125
  %v1254 = vpack.c.b16 %v1126, %v1126
  %v1255 = vpack.c.b16 %v1127, %v1127
  %v1256 = vpack.c.b16 %v1128, %v1128
  %v1257 = vpack.c.b16 %v1129, %v1129
  %v1258 = vpack.c.b16 %v1130, %v1130
  %v1259 = vpack.c.b16 %v1131, %v1131
  %v1260 = vpack.c.b16 %v1132, %v1132
  %v1261 = vpack.c.b16 %v1133, %v1133
  %v1262 = vpack.c.b16 %v1134, %v1134
  %v1263 = vpack.c.b16 %v1135, %v1135
  %v1264 = vpack.c.b16 %v1136, %v1136
  %v1265 = vpack.c.b16 %v1137, %v1137
  %v1266 = vpack.c.b16 %v1138, %v1138
  %v1267 = vpack.c.b16 %v1139, %v1139
  %v1268 = vpack.c.b16 %v1140, %v1140
  %v1269 = vpack.c.b16 %v1141, %v1141
  %v1270 = vpack.c.b16 %v1142, %v1142
  %v1271 = vpack.c.b16 %v1143, %v1143
  %v1272 = vpack.c.b16 %v1144, %v1144
  %v1273 = vpack.c.b16 %v1145, %v1145
  %v1274 = vpack.c.b16 %v1146, %v1146
  %v1275 = vpack.c.b16 %v1147, %v1147
  %v1276 = vpack.c.b16 %v1148, %v1148
  %v1277 = vpack.c.b16 %v1149, %v1149
  %v1278 = vpack.c.b16 %v1150, %v1150
  %v1279 = vpack.c.b16 %v1151, %v1151
  %v1280 = vpack.c.b16 %v1152, %v1152
  %v1281 = vpack.c.b16 %v1153, %v1153
  %v1282 = vpack.c.b16 %v1154, %v1154
  %v1283 = vpack.c.b16 %v1155, %v1155
  %v1284 = vpack.c.b16 %v1156, %v1156
  %v1285 = vpack.c.b16 %v1157, %v1157
  %v1286 = vpack.c.b16 %v1158, %v1158
  %v1287 = vpack.c.b16 %v1159, %v1159
  %v1288 = vpack.c.b16 %v1160, %v1160
  %v1289 = vpack.c.b16 %v1161, %v1161
  %v1290 = vpack.c.b16 %v1162, %v1162
  %v1291 = vpack.c.b16 %v1163, %v1163
  %v1292 = vpack.c.b16 %v1164, %v1164
  %v1293 = vpack.c.b16 %v1165, %v1165
  %v1294 = vpack.c.b16 %v1166, %v1166
  %v1295 = vpack.c.b16 %v1167, %v1167
  %v1296 = vpack.c.b16 %v1168, %v1168
  %v1297 = vpack.c.b16 %v1169, %v1169
  %v1298 = vpack.c.b16 %v1170, %v1170
  %v1299 = vpack.c.b16 %v1171, %v1171
  %v1300 = vpack.c.b16 %v1172, %v1172
  %v1301 = vpack.c.b16 %v1173, %v1173
  %v1302 = vpack.c.b16 %v1174, %v1174
  %v1303 = vpack.c.b16 %v1175, %v1175
  %v1304 = vpack.c.b16 %v1176, %v1176
  %v1305 = vpack.c.b16 %v1177, %v1177
  %v1306 = vpack.c.b16 %v1178, %v1178
  %v1307 = vpack.c.b16 %v1179, %v1179
  %1436 = vst [vmem:[%s3] sm:$0xf] %v1180
  %1437 = vst [vmem:[%s3 + $0x4] sm:$0xf] %v1181
  %1438 = vst [vmem:[%s3 + $0x8] sm:$0xf] %v1182
  %1439 = vst [vmem:[%s3 + $0xc] sm:$0xf] %v1183
  %1440 = vst [vmem:[%s3 + $0x10] sm:$0xf] %v1184
  %1441 = vst [vmem:[%s3 + $0x14] sm:$0xf] %v1185
  %1442 = vst [vmem:[%s3 + $0x18] sm:$0xf] %v1186
  %1443 = vst [vmem:[%s3 + $0x1c] sm:$0xf] %v1187
  %1444 = vst [vmem:[%s3 + $0x20] sm:$0xf] %v1188
  %1445 = vst [vmem:[%s3 + $0x24] sm:$0xf] %v1189
  %1446 = vst [vmem:[%s3 + $0x28] sm:$0xf] %v1190
  %1447 = vst [vmem:[%s3 + $0x2c] sm:$0xf] %v1191
  %1448 = vst [vmem:[%s3 + $0x30] sm:$0xf] %v1192
  %1449 = vst [vmem:[%s3 + $0x34] sm:$0xf] %v1193
  %1450 = vst [vmem:[%s3 + $0x38] sm:$0xf] %v1194
  %1451 = vst [vmem:[%s3 + $0x3c] sm:$0xf] %v1195
  %1452 = vst [vmem:[%s3 + $0x40] sm:$0xf] %v1196
  %1453 = vst [vmem:[%s3 + $0x44] sm:$0xf] %v1197
  %1454 = vst [vmem:[%s3 + $0x48] sm:$0xf] %v1198
  %1455 = vst [vmem:[%s3 + $0x4c] sm:$0xf] %v1199
  %1456 = vst [vmem:[%s3 + $0x50] sm:$0xf] %v1200
  %1457 = vst [vmem:[%s3 + $0x54] sm:$0xf] %v1201
  %1458 = vst [vmem:[%s3 + $0x58] sm:$0xf] %v1202
  %1459 = vst [vmem:[%s3 + $0x5c] sm:$0xf] %v1203
  %1460 = vst [vmem:[%s3 + $0x60] sm:$0xf] %v1204
  %1461 = vst [vmem:[%s3 + $0x64] sm:$0xf] %v1205
  %1462 = vst [vmem:[%s3 + $0x68] sm:$0xf] %v1206
  %1463 = vst [vmem:[%s3 + $0x6c] sm:$0xf] %v1207
  %1464 = vst [vmem:[%s3 + $0x70] sm:$0xf] %v1208
  %1465 = vst [vmem:[%s3 + $0x74] sm:$0xf] %v1209
  %1466 = vst [vmem:[%s3 + $0x78] sm:$0xf] %v1210
  %1467 = vst [vmem:[%s3 + $0x7c] sm:$0xf] %v1211
  %1468 = vst [vmem:[%s3 + $0x80] sm:$0xf] %v1212
  %1469 = vst [vmem:[%s3 + $0x84] sm:$0xf] %v1213
  %1470 = vst [vmem:[%s3 + $0x88] sm:$0xf] %v1214
  %1471 = vst [vmem:[%s3 + $0x8c] sm:$0xf] %v1215
  %1472 = vst [vmem:[%s3 + $0x90] sm:$0xf] %v1216
  %1473 = vst [vmem:[%s3 + $0x94] sm:$0xf] %v1217
  %1474 = vst [vmem:[%s3 + $0x98] sm:$0xf] %v1218
  %1475 = vst [vmem:[%s3 + $0x9c] sm:$0xf] %v1219
  %1476 = vst [vmem:[%s3 + $0xa0] sm:$0xf] %v1220
  %1477 = vst [vmem:[%s3 + $0xa4] sm:$0xf] %v1221
  %1478 = vst [vmem:[%s3 + $0xa8] sm:$0xf] %v1222
  %1479 = vst [vmem:[%s3 + $0xac] sm:$0xf] %v1223
  %1480 = vst [vmem:[%s3 + $0xb0] sm:$0xf] %v1224
  %1481 = vst [vmem:[%s3 + $0xb4] sm:$0xf] %v1225
  %1482 = vst [vmem:[%s3 + $0xb8] sm:$0xf] %v1226
  %1483 = vst [vmem:[%s3 + $0xbc] sm:$0xf] %v1227
  %1484 = vst [vmem:[%s3 + $0xc0] sm:$0xf] %v1228
  %1485 = vst [vmem:[%s3 + $0xc4] sm:$0xf] %v1229
  %1486 = vst [vmem:[%s3 + $0xc8] sm:$0xf] %v1230
  %1487 = vst [vmem:[%s3 + $0xcc] sm:$0xf] %v1231
  %1488 = vst [vmem:[%s3 + $0xd0] sm:$0xf] %v1232
  %1489 = vst [vmem:[%s3 + $0xd4] sm:$0xf] %v1233
  %1490 = vst [vmem:[%s3 + $0xd8] sm:$0xf] %v1234
  %1491 = vst [vmem:[%s3 + $0xdc] sm:$0xf] %v1235
  %1492 = vst [vmem:[%s3 + $0xe0] sm:$0xf] %v1236
  %1493 = vst [vmem:[%s3 + $0xe4] sm:$0xf] %v1237
  %1494 = vst [vmem:[%s3 + $0xe8] sm:$0xf] %v1238
  %1495 = vst [vmem:[%s3 + $0xec] sm:$0xf] %v1239
  %1496 = vst [vmem:[%s3 + $0xf0] sm:$0xf] %v1240
  %1497 = vst [vmem:[%s3 + $0xf4] sm:$0xf] %v1241
  %1498 = vst [vmem:[%s3 + $0xf8] sm:$0xf] %v1242
  %1499 = vst [vmem:[%s3 + $0xfc] sm:$0xf] %v1243
  %1500 = vst [vmem:[%s3 + $0x100] sm:$0xf] %v1244
  %1501 = vst [vmem:[%s3 + $0x104] sm:$0xf] %v1245
  %1502 = vst [vmem:[%s3 + $0x108] sm:$0xf] %v1246
  %1503 = vst [vmem:[%s3 + $0x10c] sm:$0xf] %v1247
  %1504 = vst [vmem:[%s3 + $0x110] sm:$0xf] %v1248
  %1505 = vst [vmem:[%s3 + $0x114] sm:$0xf] %v1249
  %1506 = vst [vmem:[%s3 + $0x118] sm:$0xf] %v1250
  %1507 = vst [vmem:[%s3 + $0x11c] sm:$0xf] %v1251
  %1508 = vst [vmem:[%s3 + $0x120] sm:$0xf] %v1252
  %1509 = vst [vmem:[%s3 + $0x124] sm:$0xf] %v1253
  %1510 = vst [vmem:[%s3 + $0x128] sm:$0xf] %v1254
  %1511 = vst [vmem:[%s3 + $0x12c] sm:$0xf] %v1255
  %1512 = vst [vmem:[%s3 + $0x130] sm:$0xf] %v1256
  %1513 = vst [vmem:[%s3 + $0x134] sm:$0xf] %v1257
  %1514 = vst [vmem:[%s3 + $0x138] sm:$0xf] %v1258
  %1515 = vst [vmem:[%s3 + $0x13c] sm:$0xf] %v1259
  %1516 = vst [vmem:[%s3 + $0x140] sm:$0xf] %v1260
  %1517 = vst [vmem:[%s3 + $0x144] sm:$0xf] %v1261
  %1518 = vst [vmem:[%s3 + $0x148] sm:$0xf] %v1262
  %1519 = vst [vmem:[%s3 + $0x14c] sm:$0xf] %v1263
  %1520 = vst [vmem:[%s3 + $0x150] sm:$0xf] %v1264
  %1521 = vst [vmem:[%s3 + $0x154] sm:$0xf] %v1265
  %1522 = vst [vmem:[%s3 + $0x158] sm:$0xf] %v1266
  %1523 = vst [vmem:[%s3 + $0x15c] sm:$0xf] %v1267
  %1524 = vst [vmem:[%s3 + $0x160] sm:$0xf] %v1268
  %1525 = vst [vmem:[%s3 + $0x164] sm:$0xf] %v1269
  %1526 = vst [vmem:[%s3 + $0x168] sm:$0xf] %v1270
  %1527 = vst [vmem:[%s3 + $0x16c] sm:$0xf] %v1271
  %1528 = vst [vmem:[%s3 + $0x170] sm:$0xf] %v1272
  %1529 = vst [vmem:[%s3 + $0x174] sm:$0xf] %v1273
  %1530 = vst [vmem:[%s3 + $0x178] sm:$0xf] %v1274
  %1531 = vst [vmem:[%s3 + $0x17c] sm:$0xf] %v1275
  %1532 = vst [vmem:[%s3 + $0x180] sm:$0xf] %v1276
  %1533 = vst [vmem:[%s3 + $0x184] sm:$0xf] %v1277
  %1534 = vst [vmem:[%s3 + $0x188] sm:$0xf] %v1278
  %1535 = vst [vmem:[%s3 + $0x18c] sm:$0xf] %v1279
  %1536 = vst [vmem:[%s3 + $0x190] sm:$0xf] %v1280
  %1537 = vst [vmem:[%s3 + $0x194] sm:$0xf] %v1281
  %1538 = vst [vmem:[%s3 + $0x198] sm:$0xf] %v1282
  %1539 = vst [vmem:[%s3 + $0x19c] sm:$0xf] %v1283
  %1540 = vst [vmem:[%s3 + $0x1a0] sm:$0xf] %v1284
  %1541 = vst [vmem:[%s3 + $0x1a4] sm:$0xf] %v1285
  %1542 = vst [vmem:[%s3 + $0x1a8] sm:$0xf] %v1286
  %1543 = vst [vmem:[%s3 + $0x1ac] sm:$0xf] %v1287
  %1544 = vst [vmem:[%s3 + $0x1b0] sm:$0xf] %v1288
  %1545 = vst [vmem:[%s3 + $0x1b4] sm:$0xf] %v1289
  %1546 = vst [vmem:[%s3 + $0x1b8] sm:$0xf] %v1290
  %1547 = vst [vmem:[%s3 + $0x1bc] sm:$0xf] %v1291
  %1548 = vst [vmem:[%s3 + $0x1c0] sm:$0xf] %v1292
  %1549 = vst [vmem:[%s3 + $0x1c4] sm:$0xf] %v1293
  %1550 = vst [vmem:[%s3 + $0x1c8] sm:$0xf] %v1294
  %1551 = vst [vmem:[%s3 + $0x1cc] sm:$0xf] %v1295
  %1552 = vst [vmem:[%s3 + $0x1d0] sm:$0xf] %v1296
  %1553 = vst [vmem:[%s3 + $0x1d4] sm:$0xf] %v1297
  %1554 = vst [vmem:[%s3 + $0x1d8] sm:$0xf] %v1298
  %1555 = vst [vmem:[%s3 + $0x1dc] sm:$0xf] %v1299
  %1556 = vst [vmem:[%s3 + $0x1e0] sm:$0xf] %v1300
  %1557 = vst [vmem:[%s3 + $0x1e4] sm:$0xf] %v1301
  %1558 = vst [vmem:[%s3 + $0x1e8] sm:$0xf] %v1302
  %1559 = vst [vmem:[%s3 + $0x1ec] sm:$0xf] %v1303
  %1560 = vst [vmem:[%s3 + $0x1f0] sm:$0xf] %v1304
  %1561 = vst [vmem:[%s3 + $0x1f4] sm:$0xf] %v1305
  %1562 = vst [vmem:[%s3 + $0x1f8] sm:$0xf] %v1306
  %1563 = vst [vmem:[%s3 + $0x1fc] sm:$0xf] %v1307
  // Predicated region
  $region14: #{temporal_video_discriminator_forward.5} parent=0 // pred_check
    _
  $region15: #{temporal_video_discriminator_forward.5} parent=0 // pred_check_branch
    %1565 = sbr.rel (0) target = $region17
  $region16: #{temporal_video_discriminator_forward.5} parent=0 // pred_region
    _
  $region17: #{temporal_video_discriminator_forward.5} parent=0 // pred_fallthru
    _
  // Predicated region
  $region18: #{temporal_video_discriminator_forward.5} parent=0 // pred_check
    _
  $region19: #{temporal_video_discriminator_forward.5} parent=0 // pred_check_branch
    %1567 = sbr.rel (0) target = $region21
  $region20: #{temporal_video_discriminator_forward.5} parent=0 // pred_region
    _
  $region21: #{temporal_video_discriminator_forward.5} parent=0 // pred_fallthru
    _

// kernel: temporal_video_discriminator_forward.4
$region0: #{temporal_video_discriminator_forward.4}
  #allocation0 [shape = 'u32[]', space=smem, size = 0x4, offset = 0x4, fixed_abs, tag = 'smem constant byte address 0x4 - core index']
  #allocation1 [shape = 'u32[144,128]{1,0:T(1,128)}', space=vmem, size = 0x12000, scoped, tag = 'internal scratch']
  #allocation2 [shape = 'f32[1024,128]{1,0:T(8,128)}', space=vmem, size = 0x80000, scoped, tag = 'scratch operand']
  %s0 = inlined_call_operand.vmem [shape: bf16[1024,256], index: 0, kind: input, shape index: {}]
  %s1 = inlined_call_operand.vmem [shape: bf16[256,128], index: 1, kind: input, shape index: {}]
  %s2 = inlined_call_operand.vmem [shape: bf16[1024,128], index: 2, kind: output, shape index: {0}]
  %s3 = inlined_call_operand.vmem [shape: f32[1,2,128], index: 3, kind: output, shape index: {1}]
  %4 = xla_tuple %s2, %s3
  %s5 = sld [smem:[#allocation0]]
  $region34: #{temporal_video_discriminator_forward.4} parent=0
    _
  %s7 = ssub.s32 1, %s5
  %s8 = scalar_select 0, %s7, %s5
  // Predicated region
  $region2: #{temporal_video_discriminator_forward.4} parent=0 // pred_check
    _
  $region3: #{temporal_video_discriminator_forward.4} parent=0 // pred_check_branch
    %10 = sbr.rel (0) target = $region5
  $region4: #{temporal_video_discriminator_forward.4} parent=0 // pred_region
    _
  $region5: #{temporal_video_discriminator_forward.4} parent=0 // pred_fallthru
    _
  // Predicated region
  $region6: #{temporal_video_discriminator_forward.4} parent=0 // pred_check
    _
  $region7: #{temporal_video_discriminator_forward.4} parent=0 // pred_check_branch
    %12 = sbr.rel (0) target = $region9
  $region8: #{temporal_video_discriminator_forward.4} parent=0 // pred_region
    _
  $region9: #{temporal_video_discriminator_forward.4} parent=0 // pred_fallthru
    _
  %p14 = scmp.eq.s32.totalorder 0, 0
  // Predicated region
  $region10: #{temporal_video_discriminator_forward.4} parent=0 // pred_check
    %p15 = pneg %p14
  $region11: #{temporal_video_discriminator_forward.4} parent=0 // pred_check_branch
    %17 = sbr.rel (%p15) target = $region13
  $region12: #{temporal_video_discriminator_forward.4} parent=0 // pred_region
    %18 = vst [vmem:[#allocation2] sm:$0xff] 0.0
    %19 = vst [vmem:[#allocation2 + $0x8] sm:$0xff] 0.0
    %20 = vst [vmem:[#allocation2 + $0x10] sm:$0xff] 0.0
    %21 = vst [vmem:[#allocation2 + $0x18] sm:$0xff] 0.0
    %22 = vst [vmem:[#allocation2 + $0x20] sm:$0xff] 0.0
    %23 = vst [vmem:[#allocation2 + $0x28] sm:$0xff] 0.0
    %24 = vst [vmem:[#allocation2 + $0x30] sm:$0xff] 0.0
    %25 = vst [vmem:[#allocation2 + $0x38] sm:$0xff] 0.0
    %26 = vst [vmem:[#allocation2 + $0x40] sm:$0xff] 0.0
    %27 = vst [vmem:[#allocation2 + $0x48] sm:$0xff] 0.0
    %28 = vst [vmem:[#allocation2 + $0x50] sm:$0xff] 0.0
    %29 = vst [vmem:[#allocation2 + $0x58] sm:$0xff] 0.0
    %30 = vst [vmem:[#allocation2 + $0x60] sm:$0xff] 0.0
    %31 = vst [vmem:[#allocation2 + $0x68] sm:$0xff] 0.0
    %32 = vst [vmem:[#allocation2 + $0x70] sm:$0xff] 0.0
    %33 = vst [vmem:[#allocation2 + $0x78] sm:$0xff] 0.0
    %34 = vst [vmem:[#allocation2 + $0x80] sm:$0xff] 0.0
    %35 = vst [vmem:[#allocation2 + $0x88] sm:$0xff] 0.0
    %36 = vst [vmem:[#allocation2 + $0x90] sm:$0xff] 0.0
    %37 = vst [vmem:[#allocation2 + $0x98] sm:$0xff] 0.0
    %38 = vst [vmem:[#allocation2 + $0xa0] sm:$0xff] 0.0
    %39 = vst [vmem:[#allocation2 + $0xa8] sm:$0xff] 0.0
    %40 = vst [vmem:[#allocation2 + $0xb0] sm:$0xff] 0.0
    %41 = vst [vmem:[#allocation2 + $0xb8] sm:$0xff] 0.0
    %42 = vst [vmem:[#allocation2 + $0xc0] sm:$0xff] 0.0
    %43 = vst [vmem:[#allocation2 + $0xc8] sm:$0xff] 0.0
    %44 = vst [vmem:[#allocation2 + $0xd0] sm:$0xff] 0.0
    %45 = vst [vmem:[#allocation2 + $0xd8] sm:$0xff] 0.0
    %46 = vst [vmem:[#allocation2 + $0xe0] sm:$0xff] 0.0
    %47 = vst [vmem:[#allocation2 + $0xe8] sm:$0xff] 0.0
    %48 = vst [vmem:[#allocation2 + $0xf0] sm:$0xff] 0.0
    %49 = vst [vmem:[#allocation2 + $0xf8] sm:$0xff] 0.0
    %50 = vst [vmem:[#allocation2 + $0x100] sm:$0xff] 0.0
    %51 = vst [vmem:[#allocation2 + $0x108] sm:$0xff] 0.0
    %52 = vst [vmem:[#allocation2 + $0x110] sm:$0xff] 0.0
    %53 = vst [vmem:[#allocation2 + $0x118] sm:$0xff] 0.0
    %54 = vst [vmem:[#allocation2 + $0x120] sm:$0xff] 0.0
    %55 = vst [vmem:[#allocation2 + $0x128] sm:$0xff] 0.0
    %56 = vst [vmem:[#allocation2 + $0x130] sm:$0xff] 0.0
    %57 = vst [vmem:[#allocation2 + $0x138] sm:$0xff] 0.0
    %58 = vst [vmem:[#allocation2 + $0x140] sm:$0xff] 0.0
    %59 = vst [vmem:[#allocation2 + $0x148] sm:$0xff] 0.0
    %60 = vst [vmem:[#allocation2 + $0x150] sm:$0xff] 0.0
    %61 = vst [vmem:[#allocation2 + $0x158] sm:$0xff] 0.0
    %62 = vst [vmem:[#allocation2 + $0x160] sm:$0xff] 0.0
    %63 = vst [vmem:[#allocation2 + $0x168] sm:$0xff] 0.0
    %64 = vst [vmem:[#allocation2 + $0x170] sm:$0xff] 0.0
    %65 = vst [vmem:[#allocation2 + $0x178] sm:$0xff] 0.0
    %66 = vst [vmem:[#allocation2 + $0x180] sm:$0xff] 0.0
    %67 = vst [vmem:[#allocation2 + $0x188] sm:$0xff] 0.0
    %68 = vst [vmem:[#allocation2 + $0x190] sm:$0xff] 0.0
    %69 = vst [vmem:[#allocation2 + $0x198] sm:$0xff] 0.0
    %70 = vst [vmem:[#allocation2 + $0x1a0] sm:$0xff] 0.0
    %71 = vst [vmem:[#allocation2 + $0x1a8] sm:$0xff] 0.0
    %72 = vst [vmem:[#allocation2 + $0x1b0] sm:$0xff] 0.0
    %73 = vst [vmem:[#allocation2 + $0x1b8] sm:$0xff] 0.0
    %74 = vst [vmem:[#allocation2 + $0x1c0] sm:$0xff] 0.0
    %75 = vst [vmem:[#allocation2 + $0x1c8] sm:$0xff] 0.0
    %76 = vst [vmem:[#allocation2 + $0x1d0] sm:$0xff] 0.0
    %77 = vst [vmem:[#allocation2 + $0x1d8] sm:$0xff] 0.0
    %78 = vst [vmem:[#allocation2 + $0x1e0] sm:$0xff] 0.0
    %79 = vst [vmem:[#allocation2 + $0x1e8] sm:$0xff] 0.0
    %80 = vst [vmem:[#allocation2 + $0x1f0] sm:$0xff] 0.0
    %81 = vst [vmem:[#allocation2 + $0x1f8] sm:$0xff] 0.0
    %82 = vst [vmem:[#allocation2 + $0x200] sm:$0xff] 0.0
    %83 = vst [vmem:[#allocation2 + $0x208] sm:$0xff] 0.0
    %84 = vst [vmem:[#allocation2 + $0x210] sm:$0xff] 0.0
    %85 = vst [vmem:[#allocation2 + $0x218] sm:$0xff] 0.0
    %86 = vst [vmem:[#allocation2 + $0x220] sm:$0xff] 0.0
    %87 = vst [vmem:[#allocation2 + $0x228] sm:$0xff] 0.0
    %88 = vst [vmem:[#allocation2 + $0x230] sm:$0xff] 0.0
    %89 = vst [vmem:[#allocation2 + $0x238] sm:$0xff] 0.0
    %90 = vst [vmem:[#allocation2 + $0x240] sm:$0xff] 0.0
    %91 = vst [vmem:[#allocation2 + $0x248] sm:$0xff] 0.0
    %92 = vst [vmem:[#allocation2 + $0x250] sm:$0xff] 0.0
    %93 = vst [vmem:[#allocation2 + $0x258] sm:$0xff] 0.0
    %94 = vst [vmem:[#allocation2 + $0x260] sm:$0xff] 0.0
    %95 = vst [vmem:[#allocation2 + $0x268] sm:$0xff] 0.0
    %96 = vst [vmem:[#allocation2 + $0x270] sm:$0xff] 0.0
    %97 = vst [vmem:[#allocation2 + $0x278] sm:$0xff] 0.0
    %98 = vst [vmem:[#allocation2 + $0x280] sm:$0xff] 0.0
    %99 = vst [vmem:[#allocation2 + $0x288] sm:$0xff] 0.0
    %100 = vst [vmem:[#allocation2 + $0x290] sm:$0xff] 0.0
    %101 = vst [vmem:[#allocation2 + $0x298] sm:$0xff] 0.0
    %102 = vst [vmem:[#allocation2 + $0x2a0] sm:$0xff] 0.0
    %103 = vst [vmem:[#allocation2 + $0x2a8] sm:$0xff] 0.0
    %104 = vst [vmem:[#allocation2 + $0x2b0] sm:$0xff] 0.0
    %105 = vst [vmem:[#allocation2 + $0x2b8] sm:$0xff] 0.0
    %106 = vst [vmem:[#allocation2 + $0x2c0] sm:$0xff] 0.0
    %107 = vst [vmem:[#allocation2 + $0x2c8] sm:$0xff] 0.0
    %108 = vst [vmem:[#allocation2 + $0x2d0] sm:$0xff] 0.0
    %109 = vst [vmem:[#allocation2 + $0x2d8] sm:$0xff] 0.0
    %110 = vst [vmem:[#allocation2 + $0x2e0] sm:$0xff] 0.0
    %111 = vst [vmem:[#allocation2 + $0x2e8] sm:$0xff] 0.0
    %112 = vst [vmem:[#allocation2 + $0x2f0] sm:$0xff] 0.0
    %113 = vst [vmem:[#allocation2 + $0x2f8] sm:$0xff] 0.0
    %114 = vst [vmem:[#allocation2 + $0x300] sm:$0xff] 0.0
    %115 = vst [vmem:[#allocation2 + $0x308] sm:$0xff] 0.0
    %116 = vst [vmem:[#allocation2 + $0x310] sm:$0xff] 0.0
    %117 = vst [vmem:[#allocation2 + $0x318] sm:$0xff] 0.0
    %118 = vst [vmem:[#allocation2 + $0x320] sm:$0xff] 0.0
    %119 = vst [vmem:[#allocation2 + $0x328] sm:$0xff] 0.0
    %120 = vst [vmem:[#allocation2 + $0x330] sm:$0xff] 0.0
    %121 = vst [vmem:[#allocation2 + $0x338] sm:$0xff] 0.0
    %122 = vst [vmem:[#allocation2 + $0x340] sm:$0xff] 0.0
    %123 = vst [vmem:[#allocation2 + $0x348] sm:$0xff] 0.0
    %124 = vst [vmem:[#allocation2 + $0x350] sm:$0xff] 0.0
    %125 = vst [vmem:[#allocation2 + $0x358] sm:$0xff] 0.0
    %126 = vst [vmem:[#allocation2 + $0x360] sm:$0xff] 0.0
    %127 = vst [vmem:[#allocation2 + $0x368] sm:$0xff] 0.0
    %128 = vst [vmem:[#allocation2 + $0x370] sm:$0xff] 0.0
    %129 = vst [vmem:[#allocation2 + $0x378] sm:$0xff] 0.0
    %130 = vst [vmem:[#allocation2 + $0x380] sm:$0xff] 0.0
    %131 = vst [vmem:[#allocation2 + $0x388] sm:$0xff] 0.0
    %132 = vst [vmem:[#allocation2 + $0x390] sm:$0xff] 0.0
    %133 = vst [vmem:[#allocation2 + $0x398] sm:$0xff] 0.0
    %134 = vst [vmem:[#allocation2 + $0x3a0] sm:$0xff] 0.0
    %135 = vst [vmem:[#allocation2 + $0x3a8] sm:$0xff] 0.0
    %136 = vst [vmem:[#allocation2 + $0x3b0] sm:$0xff] 0.0
    %137 = vst [vmem:[#allocation2 + $0x3b8] sm:$0xff] 0.0
    %138 = vst [vmem:[#allocation2 + $0x3c0] sm:$0xff] 0.0
    %139 = vst [vmem:[#allocation2 + $0x3c8] sm:$0xff] 0.0
    %140 = vst [vmem:[#allocation2 + $0x3d0] sm:$0xff] 0.0
    %141 = vst [vmem:[#allocation2 + $0x3d8] sm:$0xff] 0.0
    %142 = vst [vmem:[#allocation2 + $0x3e0] sm:$0xff] 0.0
    %143 = vst [vmem:[#allocation2 + $0x3e8] sm:$0xff] 0.0
    %144 = vst [vmem:[#allocation2 + $0x3f0] sm:$0xff] 0.0
    %145 = vst [vmem:[#allocation2 + $0x3f8] sm:$0xff] 0.0
  $region13: #{temporal_video_discriminator_forward.4} parent=0 // pred_fallthru
    _
  %v146 = vld [vmem:[%s1] sm:$0xf]
  %v147 = vld [vmem:[%s1 + $0x4] sm:$0xf]
  %v148 = vld [vmem:[%s1 + $0x8] sm:$0xf]
  %v149 = vld [vmem:[%s1 + $0xc] sm:$0xf]
  %v150 = vld [vmem:[%s1 + $0x10] sm:$0xf]
  %v151 = vld [vmem:[%s1 + $0x14] sm:$0xf]
  %v152 = vld [vmem:[%s1 + $0x18] sm:$0xf]
  %v153 = vld [vmem:[%s1 + $0x1c] sm:$0xf]
  %v154 = vld [vmem:[%s1 + $0x20] sm:$0xf]
  %v155 = vld [vmem:[%s1 + $0x24] sm:$0xf]
  %v156 = vld [vmem:[%s1 + $0x28] sm:$0xf]
  %v157 = vld [vmem:[%s1 + $0x2c] sm:$0xf]
  %v158 = vld [vmem:[%s1 + $0x30] sm:$0xf]
  %v159 = vld [vmem:[%s1 + $0x34] sm:$0xf]
  %v160 = vld [vmem:[%s1 + $0x38] sm:$0xf]
  %v161 = vld [vmem:[%s1 + $0x3c] sm:$0xf]
  %v162 = vld [vmem:[%s1 + $0x40] sm:$0xf]
  %v163 = vld [vmem:[%s1 + $0x44] sm:$0xf]
  %v164 = vld [vmem:[%s1 + $0x48] sm:$0xf]
  %v165 = vld [vmem:[%s1 + $0x4c] sm:$0xf]
  %v166 = vld [vmem:[%s1 + $0x50] sm:$0xf]
  %v167 = vld [vmem:[%s1 + $0x54] sm:$0xf]
  %v168 = vld [vmem:[%s1 + $0x58] sm:$0xf]
  %v169 = vld [vmem:[%s1 + $0x5c] sm:$0xf]
  %v170 = vld [vmem:[%s1 + $0x60] sm:$0xf]
  %v171 = vld [vmem:[%s1 + $0x64] sm:$0xf]
  %v172 = vld [vmem:[%s1 + $0x68] sm:$0xf]
  %v173 = vld [vmem:[%s1 + $0x6c] sm:$0xf]
  %v174 = vld [vmem:[%s1 + $0x70] sm:$0xf]
  %v175 = vld [vmem:[%s1 + $0x74] sm:$0xf]
  %v176 = vld [vmem:[%s1 + $0x78] sm:$0xf]
  %v177 = vld [vmem:[%s1 + $0x7c] sm:$0xf]
  %v178 = vld [vmem:[#allocation2] sm:$0xff]
  %v179 = vld [vmem:[#allocation2 + $0x8] sm:$0xff]
  %v180 = vld [vmem:[#allocation2 + $0x10] sm:$0xff]
  %v181 = vld [vmem:[#allocation2 + $0x18] sm:$0xff]
  %v182 = vld [vmem:[#allocation2 + $0x20] sm:$0xff]
  %v183 = vld [vmem:[#allocation2 + $0x28] sm:$0xff]
  %v184 = vld [vmem:[#allocation2 + $0x30] sm:$0xff]
  %v185 = vld [vmem:[#allocation2 + $0x38] sm:$0xff]
  %v186 = vld [vmem:[#allocation2 + $0x40] sm:$0xff]
  %v187 = vld [vmem:[#allocation2 + $0x48] sm:$0xff]
  %v188 = vld [vmem:[#allocation2 + $0x50] sm:$0xff]
  %v189 = vld [vmem:[#allocation2 + $0x58] sm:$0xff]
  %v190 = vld [vmem:[#allocation2 + $0x60] sm:$0xff]
  %v191 = vld [vmem:[#allocation2 + $0x68] sm:$0xff]
  %v192 = vld [vmem:[#allocation2 + $0x70] sm:$0xff]
  %v193 = vld [vmem:[#allocation2 + $0x78] sm:$0xff]
  %v194 = vld [vmem:[#allocation2 + $0x80] sm:$0xff]
  %v195 = vld [vmem:[#allocation2 + $0x88] sm:$0xff]
  %v196 = vld [vmem:[#allocation2 + $0x90] sm:$0xff]
  %v197 = vld [vmem:[#allocation2 + $0x98] sm:$0xff]
  %v198 = vld [vmem:[#allocation2 + $0xa0] sm:$0xff]
  %v199 = vld [vmem:[#allocation2 + $0xa8] sm:$0xff]
  %v200 = vld [vmem:[#allocation2 + $0xb0] sm:$0xff]
  %v201 = vld [vmem:[#allocation2 + $0xb8] sm:$0xff]
  %v202 = vld [vmem:[#allocation2 + $0xc0] sm:$0xff]
  %v203 = vld [vmem:[#allocation2 + $0xc8] sm:$0xff]
  %v204 = vld [vmem:[#allocation2 + $0xd0] sm:$0xff]
  %v205 = vld [vmem:[#allocation2 + $0xd8] sm:$0xff]
  %v206 = vld [vmem:[#allocation2 + $0xe0] sm:$0xff]
  %v207 = vld [vmem:[#allocation2 + $0xe8] sm:$0xff]
  %v208 = vld [vmem:[#allocation2 + $0xf0] sm:$0xff]
  %v209 = vld [vmem:[#allocation2 + $0xf8] sm:$0xff]
  %v210 = vld [vmem:[#allocation2 + $0x100] sm:$0xff]
  %v211 = vld [vmem:[#allocation2 + $0x108] sm:$0xff]
  %v212 = vld [vmem:[#allocation2 + $0x110] sm:$0xff]
  %v213 = vld [vmem:[#allocation2 + $0x118] sm:$0xff]
  %v214 = vld [vmem:[#allocation2 + $0x120] sm:$0xff]
  %v215 = vld [vmem:[#allocation2 + $0x128] sm:$0xff]
  %v216 = vld [vmem:[#allocation2 + $0x130] sm:$0xff]
  %v217 = vld [vmem:[#allocation2 + $0x138] sm:$0xff]
  %v218 = vld [vmem:[#allocation2 + $0x140] sm:$0xff]
  %v219 = vld [vmem:[#allocation2 + $0x148] sm:$0xff]
  %v220 = vld [vmem:[#allocation2 + $0x150] sm:$0xff]
  %v221 = vld [vmem:[#allocation2 + $0x158] sm:$0xff]
  %v222 = vld [vmem:[#allocation2 + $0x160] sm:$0xff]
  %v223 = vld [vmem:[#allocation2 + $0x168] sm:$0xff]
  %v224 = vld [vmem:[#allocation2 + $0x170] sm:$0xff]
  %v225 = vld [vmem:[#allocation2 + $0x178] sm:$0xff]
  %v226 = vld [vmem:[#allocation2 + $0x180] sm:$0xff]
  %v227 = vld [vmem:[#allocation2 + $0x188] sm:$0xff]
  %v228 = vld [vmem:[#allocation2 + $0x190] sm:$0xff]
  %v229 = vld [vmem:[#allocation2 + $0x198] sm:$0xff]
  %v230 = vld [vmem:[#allocation2 + $0x1a0] sm:$0xff]
  %v231 = vld [vmem:[#allocation2 + $0x1a8] sm:$0xff]
  %v232 = vld [vmem:[#allocation2 + $0x1b0] sm:$0xff]
  %v233 = vld [vmem:[#allocation2 + $0x1b8] sm:$0xff]
  %v234 = vld [vmem:[#allocation2 + $0x1c0] sm:$0xff]
  %v235 = vld [vmem:[#allocation2 + $0x1c8] sm:$0xff]
  %v236 = vld [vmem:[#allocation2 + $0x1d0] sm:$0xff]
  %v237 = vld [vmem:[#allocation2 + $0x1d8] sm:$0xff]
  %v238 = vld [vmem:[#allocation2 + $0x1e0] sm:$0xff]
  %v239 = vld [vmem:[#allocation2 + $0x1e8] sm:$0xff]
  %v240 = vld [vmem:[#allocation2 + $0x1f0] sm:$0xff]
  %v241 = vld [vmem:[#allocation2 + $0x1f8] sm:$0xff]
  %v242 = vld [vmem:[#allocation2 + $0x200] sm:$0xff]
  %v243 = vld [vmem:[#allocation2 + $0x208] sm:$0xff]
  %v244 = vld [vmem:[#allocation2 + $0x210] sm:$0xff]
  %v245 = vld [vmem:[#allocation2 + $0x218] sm:$0xff]
  %v246 = vld [vmem:[#allocation2 + $0x220] sm:$0xff]
  %v247 = vld [vmem:[#allocation2 + $0x228] sm:$0xff]
  %v248 = vld [vmem:[#allocation2 + $0x230] sm:$0xff]
  %v249 = vld [vmem:[#allocation2 + $0x238] sm:$0xff]
  %v250 = vld [vmem:[#allocation2 + $0x240] sm:$0xff]
  %v251 = vld [vmem:[#allocation2 + $0x248] sm:$0xff]
  %v252 = vld [vmem:[#allocation2 + $0x250] sm:$0xff]
  %v253 = vld [vmem:[#allocation2 + $0x258] sm:$0xff]
  %v254 = vld [vmem:[#allocation2 + $0x260] sm:$0xff]
  %v255 = vld [vmem:[#allocation2 + $0x268] sm:$0xff]
  %v256 = vld [vmem:[#allocation2 + $0x270] sm:$0xff]
  %v257 = vld [vmem:[#allocation2 + $0x278] sm:$0xff]
  %v258 = vld [vmem:[#allocation2 + $0x280] sm:$0xff]
  %v259 = vld [vmem:[#allocation2 + $0x288] sm:$0xff]
  %v260 = vld [vmem:[#allocation2 + $0x290] sm:$0xff]
  %v261 = vld [vmem:[#allocation2 + $0x298] sm:$0xff]
  %v262 = vld [vmem:[#allocation2 + $0x2a0] sm:$0xff]
  %v263 = vld [vmem:[#allocation2 + $0x2a8] sm:$0xff]
  %v264 = vld [vmem:[#allocation2 + $0x2b0] sm:$0xff]
  %v265 = vld [vmem:[#allocation2 + $0x2b8] sm:$0xff]
  %v266 = vld [vmem:[#allocation2 + $0x2c0] sm:$0xff]
  %v267 = vld [vmem:[#allocation2 + $0x2c8] sm:$0xff]
  %v268 = vld [vmem:[#allocation2 + $0x2d0] sm:$0xff]
  %v269 = vld [vmem:[#allocation2 + $0x2d8] sm:$0xff]
  %v270 = vld [vmem:[#allocation2 + $0x2e0] sm:$0xff]
  %v271 = vld [vmem:[#allocation2 + $0x2e8] sm:$0xff]
  %v272 = vld [vmem:[#allocation2 + $0x2f0] sm:$0xff]
  %v273 = vld [vmem:[#allocation2 + $0x2f8] sm:$0xff]
  %v274 = vld [vmem:[#allocation2 + $0x300] sm:$0xff]
  %v275 = vld [vmem:[#allocation2 + $0x308] sm:$0xff]
  %v276 = vld [vmem:[#allocation2 + $0x310] sm:$0xff]
  %v277 = vld [vmem:[#allocation2 + $0x318] sm:$0xff]
  %v278 = vld [vmem:[#allocation2 + $0x320] sm:$0xff]
  %v279 = vld [vmem:[#allocation2 + $0x328] sm:$0xff]
  %v280 = vld [vmem:[#allocation2 + $0x330] sm:$0xff]
  %v281 = vld [vmem:[#allocation2 + $0x338] sm:$0xff]
  %v282 = vld [vmem:[#allocation2 + $0x340] sm:$0xff]
  %v283 = vld [vmem:[#allocation2 + $0x348] sm:$0xff]
  %v284 = vld [vmem:[#allocation2 + $0x350] sm:$0xff]
  %v285 = vld [vmem:[#allocation2 + $0x358] sm:$0xff]
  %v286 = vld [vmem:[#allocation2 + $0x360] sm:$0xff]
  %v287 = vld [vmem:[#allocation2 + $0x368] sm:$0xff]
  %v288 = vld [vmem:[#allocation2 + $0x370] sm:$0xff]
  %v289 = vld [vmem:[#allocation2 + $0x378] sm:$0xff]
  %v290 = vld [vmem:[#allocation2 + $0x380] sm:$0xff]
  %v291 = vld [vmem:[#allocation2 + $0x388] sm:$0xff]
  %v292 = vld [vmem:[#allocation2 + $0x390] sm:$0xff]
  %v293 = vld [vmem:[#allocation2 + $0x398] sm:$0xff]
  %v294 = vld [vmem:[#allocation2 + $0x3a0] sm:$0xff]
  %v295 = vld [vmem:[#allocation2 + $0x3a8] sm:$0xff]
  %v296 = vld [vmem:[#allocation2 + $0x3b0] sm:$0xff]
  %v297 = vld [vmem:[#allocation2 + $0x3b8] sm:$0xff]
  %v298 = vld [vmem:[#allocation2 + $0x3c0] sm:$0xff]
  %v299 = vld [vmem:[#allocation2 + $0x3c8] sm:$0xff]
  %v300 = vld [vmem:[#allocation2 + $0x3d0] sm:$0xff]
  %v301 = vld [vmem:[#allocation2 + $0x3d8] sm:$0xff]
  %v302 = vld [vmem:[#allocation2 + $0x3e0] sm:$0xff]
  %v303 = vld [vmem:[#allocation2 + $0x3e8] sm:$0xff]
  %v304 = vld [vmem:[#allocation2 + $0x3f0] sm:$0xff]
  %v305 = vld [vmem:[#allocation2 + $0x3f8] sm:$0xff]
  %v306 = vld [vmem:[%s0] sm:$0xff]
  %v307 = vld [vmem:[%s0 + $0x8] sm:$0xff]
  %v308 = vld [vmem:[%s0 + $0x10] sm:$0xff]
  %v309 = vld [vmem:[%s0 + $0x18] sm:$0xff]
  %v310 = vld [vmem:[%s0 + $0x20] sm:$0xff]
  %v311 = vld [vmem:[%s0 + $0x28] sm:$0xff]
  %v312 = vld [vmem:[%s0 + $0x30] sm:$0xff]
  %v313 = vld [vmem:[%s0 + $0x38] sm:$0xff]
  %v314 = vld [vmem:[%s0 + $0x40] sm:$0xff]
  %v315 = vld [vmem:[%s0 + $0x48] sm:$0xff]
  %v316 = vld [vmem:[%s0 + $0x50] sm:$0xff]
  %v317 = vld [vmem:[%s0 + $0x58] sm:$0xff]
  %v318 = vld [vmem:[%s0 + $0x60] sm:$0xff]
  %v319 = vld [vmem:[%s0 + $0x68] sm:$0xff]
  %v320 = vld [vmem:[%s0 + $0x70] sm:$0xff]
  %v321 = vld [vmem:[%s0 + $0x78] sm:$0xff]
  %v322 = vld [vmem:[%s0 + $0x80] sm:$0xff]
  %v323 = vld [vmem:[%s0 + $0x88] sm:$0xff]
  %v324 = vld [vmem:[%s0 + $0x90] sm:$0xff]
  %v325 = vld [vmem:[%s0 + $0x98] sm:$0xff]
  %v326 = vld [vmem:[%s0 + $0xa0] sm:$0xff]
  %v327 = vld [vmem:[%s0 + $0xa8] sm:$0xff]
  %v328 = vld [vmem:[%s0 + $0xb0] sm:$0xff]
  %v329 = vld [vmem:[%s0 + $0xb8] sm:$0xff]
  %v330 = vld [vmem:[%s0 + $0xc0] sm:$0xff]
  %v331 = vld [vmem:[%s0 + $0xc8] sm:$0xff]
  %v332 = vld [vmem:[%s0 + $0xd0] sm:$0xff]
  %v333 = vld [vmem:[%s0 + $0xd8] sm:$0xff]
  %v334 = vld [vmem:[%s0 + $0xe0] sm:$0xff]
  %v335 = vld [vmem:[%s0 + $0xe8] sm:$0xff]
  %v336 = vld [vmem:[%s0 + $0xf0] sm:$0xff]
  %v337 = vld [vmem:[%s0 + $0xf8] sm:$0xff]
  %v338 = vld [vmem:[%s0 + $0x100] sm:$0xff]
  %v339 = vld [vmem:[%s0 + $0x108] sm:$0xff]
  %v340 = vld [vmem:[%s0 + $0x110] sm:$0xff]
  %v341 = vld [vmem:[%s0 + $0x118] sm:$0xff]
  %v342 = vld [vmem:[%s0 + $0x120] sm:$0xff]
  %v343 = vld [vmem:[%s0 + $0x128] sm:$0xff]
  %v344 = vld [vmem:[%s0 + $0x130] sm:$0xff]
  %v345 = vld [vmem:[%s0 + $0x138] sm:$0xff]
  %v346 = vld [vmem:[%s0 + $0x140] sm:$0xff]
  %v347 = vld [vmem:[%s0 + $0x148] sm:$0xff]
  %v348 = vld [vmem:[%s0 + $0x150] sm:$0xff]
  %v349 = vld [vmem:[%s0 + $0x158] sm:$0xff]
  %v350 = vld [vmem:[%s0 + $0x160] sm:$0xff]
  %v351 = vld [vmem:[%s0 + $0x168] sm:$0xff]
  %v352 = vld [vmem:[%s0 + $0x170] sm:$0xff]
  %v353 = vld [vmem:[%s0 + $0x178] sm:$0xff]
  %v354 = vld [vmem:[%s0 + $0x180] sm:$0xff]
  %v355 = vld [vmem:[%s0 + $0x188] sm:$0xff]
  %v356 = vld [vmem:[%s0 + $0x190] sm:$0xff]
  %v357 = vld [vmem:[%s0 + $0x198] sm:$0xff]
  %v358 = vld [vmem:[%s0 + $0x1a0] sm:$0xff]
  %v359 = vld [vmem:[%s0 + $0x1a8] sm:$0xff]
  %v360 = vld [vmem:[%s0 + $0x1b0] sm:$0xff]
  %v361 = vld [vmem:[%s0 + $0x1b8] sm:$0xff]
  %v362 = vld [vmem:[%s0 + $0x1c0] sm:$0xff]
  %v363 = vld [vmem:[%s0 + $0x1c8] sm:$0xff]
  %v364 = vld [vmem:[%s0 + $0x1d0] sm:$0xff]
  %v365 = vld [vmem:[%s0 + $0x1d8] sm:$0xff]
  %v366 = vld [vmem:[%s0 + $0x1e0] sm:$0xff]
  %v367 = vld [vmem:[%s0 + $0x1e8] sm:$0xff]
  %v368 = vld [vmem:[%s0 + $0x1f0] sm:$0xff]
  %v369 = vld [vmem:[%s0 + $0x1f8] sm:$0xff]
  %v370 = vld [vmem:[%s0 + $0x200] sm:$0xff]
  %v371 = vld [vmem:[%s0 + $0x208] sm:$0xff]
  %v372 = vld [vmem:[%s0 + $0x210] sm:$0xff]
  %v373 = vld [vmem:[%s0 + $0x218] sm:$0xff]
  %v374 = vld [vmem:[%s0 + $0x220] sm:$0xff]
  %v375 = vld [vmem:[%s0 + $0x228] sm:$0xff]
  %v376 = vld [vmem:[%s0 + $0x230] sm:$0xff]
  %v377 = vld [vmem:[%s0 + $0x238] sm:$0xff]
  %v378 = vld [vmem:[%s0 + $0x240] sm:$0xff]
  %v379 = vld [vmem:[%s0 + $0x248] sm:$0xff]
  %v380 = vld [vmem:[%s0 + $0x250] sm:$0xff]
  %v381 = vld [vmem:[%s0 + $0x258] sm:$0xff]
  %v382 = vld [vmem:[%s0 + $0x260] sm:$0xff]
  %v383 = vld [vmem:[%s0 + $0x268] sm:$0xff]
  %v384 = vld [vmem:[%s0 + $0x270] sm:$0xff]
  %v385 = vld [vmem:[%s0 + $0x278] sm:$0xff]
  %v386 = vld [vmem:[%s0 + $0x280] sm:$0xff]
  %v387 = vld [vmem:[%s0 + $0x288] sm:$0xff]
  %v388 = vld [vmem:[%s0 + $0x290] sm:$0xff]
  %v389 = vld [vmem:[%s0 + $0x298] sm:$0xff]
  %v390 = vld [vmem:[%s0 + $0x2a0] sm:$0xff]
  %v391 = vld [vmem:[%s0 + $0x2a8] sm:$0xff]
  %v392 = vld [vmem:[%s0 + $0x2b0] sm:$0xff]
  %v393 = vld [vmem:[%s0 + $0x2b8] sm:$0xff]
  %v394 = vld [vmem:[%s0 + $0x2c0] sm:$0xff]
  %v395 = vld [vmem:[%s0 + $0x2c8] sm:$0xff]
  %v396 = vld [vmem:[%s0 + $0x2d0] sm:$0xff]
  %v397 = vld [vmem:[%s0 + $0x2d8] sm:$0xff]
  %v398 = vld [vmem:[%s0 + $0x2e0] sm:$0xff]
  %v399 = vld [vmem:[%s0 + $0x2e8] sm:$0xff]
  %v400 = vld [vmem:[%s0 + $0x2f0] sm:$0xff]
  %v401 = vld [vmem:[%s0 + $0x2f8] sm:$0xff]
  %v402 = vld [vmem:[%s0 + $0x300] sm:$0xff]
  %v403 = vld [vmem:[%s0 + $0x308] sm:$0xff]
  %v404 = vld [vmem:[%s0 + $0x310] sm:$0xff]
  %v405 = vld [vmem:[%s0 + $0x318] sm:$0xff]
  %v406 = vld [vmem:[%s0 + $0x320] sm:$0xff]
  %v407 = vld [vmem:[%s0 + $0x328] sm:$0xff]
  %v408 = vld [vmem:[%s0 + $0x330] sm:$0xff]
  %v409 = vld [vmem:[%s0 + $0x338] sm:$0xff]
  %v410 = vld [vmem:[%s0 + $0x340] sm:$0xff]
  %v411 = vld [vmem:[%s0 + $0x348] sm:$0xff]
  %v412 = vld [vmem:[%s0 + $0x350] sm:$0xff]
  %v413 = vld [vmem:[%s0 + $0x358] sm:$0xff]
  %v414 = vld [vmem:[%s0 + $0x360] sm:$0xff]
  %v415 = vld [vmem:[%s0 + $0x368] sm:$0xff]
  %v416 = vld [vmem:[%s0 + $0x370] sm:$0xff]
  %v417 = vld [vmem:[%s0 + $0x378] sm:$0xff]
  %v418 = vld [vmem:[%s0 + $0x380] sm:$0xff]
  %v419 = vld [vmem:[%s0 + $0x388] sm:$0xff]
  %v420 = vld [vmem:[%s0 + $0x390] sm:$0xff]
  %v421 = vld [vmem:[%s0 + $0x398] sm:$0xff]
  %v422 = vld [vmem:[%s0 + $0x3a0] sm:$0xff]
  %v423 = vld [vmem:[%s0 + $0x3a8] sm:$0xff]
  %v424 = vld [vmem:[%s0 + $0x3b0] sm:$0xff]
  %v425 = vld [vmem:[%s0 + $0x3b8] sm:$0xff]
  %v426 = vld [vmem:[%s0 + $0x3c0] sm:$0xff]
  %v427 = vld [vmem:[%s0 + $0x3c8] sm:$0xff]
  %v428 = vld [vmem:[%s0 + $0x3d0] sm:$0xff]
  %v429 = vld [vmem:[%s0 + $0x3d8] sm:$0xff]
  %v430 = vld [vmem:[%s0 + $0x3e0] sm:$0xff]
  %v431 = vld [vmem:[%s0 + $0x3e8] sm:$0xff]
  %v432 = vld [vmem:[%s0 + $0x3f0] sm:$0xff]
  %v433 = vld [vmem:[%s0 + $0x3f8] sm:$0xff]
  %v562 = vunpack.c.l.b16 %v306
  %v563 = vunpack.c.h.b16 %v306
  %v564 = vunpack.c.l.b16 %v307
  %v565 = vunpack.c.h.b16 %v307
  %v566 = vunpack.c.l.b16 %v308
  %v567 = vunpack.c.h.b16 %v308
  %v568 = vunpack.c.l.b16 %v309
  %v569 = vunpack.c.h.b16 %v309
  %v570 = vunpack.c.l.b16 %v310
  %v571 = vunpack.c.h.b16 %v310
  %v572 = vunpack.c.l.b16 %v311
  %v573 = vunpack.c.h.b16 %v311
  %v574 = vunpack.c.l.b16 %v312
  %v575 = vunpack.c.h.b16 %v312
  %v576 = vunpack.c.l.b16 %v313
  %v577 = vunpack.c.h.b16 %v313
  %v578 = vunpack.c.l.b16 %v314
  %v579 = vunpack.c.h.b16 %v314
  %v580 = vunpack.c.l.b16 %v315
  %v581 = vunpack.c.h.b16 %v315
  %v582 = vunpack.c.l.b16 %v316
  %v583 = vunpack.c.h.b16 %v316
  %v584 = vunpack.c.l.b16 %v317
  %v585 = vunpack.c.h.b16 %v317
  %v586 = vunpack.c.l.b16 %v318
  %v587 = vunpack.c.h.b16 %v318
  %v588 = vunpack.c.l.b16 %v319
  %v589 = vunpack.c.h.b16 %v319
  %v590 = vunpack.c.l.b16 %v320
  %v591 = vunpack.c.h.b16 %v320
  %v592 = vunpack.c.l.b16 %v321
  %v593 = vunpack.c.h.b16 %v321
  %v594 = vunpack.c.l.b16 %v322
  %v595 = vunpack.c.h.b16 %v322
  %v596 = vunpack.c.l.b16 %v323
  %v597 = vunpack.c.h.b16 %v323
  %v598 = vunpack.c.l.b16 %v324
  %v599 = vunpack.c.h.b16 %v324
  %v600 = vunpack.c.l.b16 %v325
  %v601 = vunpack.c.h.b16 %v325
  %v602 = vunpack.c.l.b16 %v326
  %v603 = vunpack.c.h.b16 %v326
  %v604 = vunpack.c.l.b16 %v327
  %v605 = vunpack.c.h.b16 %v327
  %v606 = vunpack.c.l.b16 %v328
  %v607 = vunpack.c.h.b16 %v328
  %v608 = vunpack.c.l.b16 %v329
  %v609 = vunpack.c.h.b16 %v329
  %v610 = vunpack.c.l.b16 %v330
  %v611 = vunpack.c.h.b16 %v330
  %v612 = vunpack.c.l.b16 %v331
  %v613 = vunpack.c.h.b16 %v331
  %v614 = vunpack.c.l.b16 %v332
  %v615 = vunpack.c.h.b16 %v332
  %v616 = vunpack.c.l.b16 %v333
  %v617 = vunpack.c.h.b16 %v333
  %v618 = vunpack.c.l.b16 %v334
  %v619 = vunpack.c.h.b16 %v334
  %v620 = vunpack.c.l.b16 %v335
  %v621 = vunpack.c.h.b16 %v335
  %v622 = vunpack.c.l.b16 %v336
  %v623 = vunpack.c.h.b16 %v336
  %v624 = vunpack.c.l.b16 %v337
  %v625 = vunpack.c.h.b16 %v337
  %v626 = vunpack.c.l.b16 %v338
  %v627 = vunpack.c.h.b16 %v338
  %v628 = vunpack.c.l.b16 %v339
  %v629 = vunpack.c.h.b16 %v339
  %v630 = vunpack.c.l.b16 %v340
  %v631 = vunpack.c.h.b16 %v340
  %v632 = vunpack.c.l.b16 %v341
  %v633 = vunpack.c.h.b16 %v341
  %v634 = vunpack.c.l.b16 %v342
  %v635 = vunpack.c.h.b16 %v342
  %v636 = vunpack.c.l.b16 %v343
  %v637 = vunpack.c.h.b16 %v343
  %v638 = vunpack.c.l.b16 %v344
  %v639 = vunpack.c.h.b16 %v344
  %v640 = vunpack.c.l.b16 %v345
  %v641 = vunpack.c.h.b16 %v345
  %v642 = vunpack.c.l.b16 %v346
  %v643 = vunpack.c.h.b16 %v346
  %v644 = vunpack.c.l.b16 %v347
  %v645 = vunpack.c.h.b16 %v347
  %v646 = vunpack.c.l.b16 %v348
  %v647 = vunpack.c.h.b16 %v348
  %v648 = vunpack.c.l.b16 %v349
  %v649 = vunpack.c.h.b16 %v349
  %v650 = vunpack.c.l.b16 %v350
  %v651 = vunpack.c.h.b16 %v350
  %v652 = vunpack.c.l.b16 %v351
  %v653 = vunpack.c.h.b16 %v351
  %v654 = vunpack.c.l.b16 %v352
  %v655 = vunpack.c.h.b16 %v352
  %v656 = vunpack.c.l.b16 %v353
  %v657 = vunpack.c.h.b16 %v353
  %v658 = vunpack.c.l.b16 %v354
  %v659 = vunpack.c.h.b16 %v354
  %v660 = vunpack.c.l.b16 %v355
  %v661 = vunpack.c.h.b16 %v355
  %v662 = vunpack.c.l.b16 %v356
  %v663 = vunpack.c.h.b16 %v356
  %v664 = vunpack.c.l.b16 %v357
  %v665 = vunpack.c.h.b16 %v357
  %v666 = vunpack.c.l.b16 %v358
  %v667 = vunpack.c.h.b16 %v358
  %v668 = vunpack.c.l.b16 %v359
  %v669 = vunpack.c.h.b16 %v359
  %v670 = vunpack.c.l.b16 %v360
  %v671 = vunpack.c.h.b16 %v360
  %v672 = vunpack.c.l.b16 %v361
  %v673 = vunpack.c.h.b16 %v361
  %v674 = vunpack.c.l.b16 %v362
  %v675 = vunpack.c.h.b16 %v362
  %v676 = vunpack.c.l.b16 %v363
  %v677 = vunpack.c.h.b16 %v363
  %v678 = vunpack.c.l.b16 %v364
  %v679 = vunpack.c.h.b16 %v364
  %v680 = vunpack.c.l.b16 %v365
  %v681 = vunpack.c.h.b16 %v365
  %v682 = vunpack.c.l.b16 %v366
  %v683 = vunpack.c.h.b16 %v366
  %v684 = vunpack.c.l.b16 %v367
  %v685 = vunpack.c.h.b16 %v367
  %v686 = vunpack.c.l.b16 %v368
  %v687 = vunpack.c.h.b16 %v368
  %v688 = vunpack.c.l.b16 %v369
  %v689 = vunpack.c.h.b16 %v369
  %v690 = vunpack.c.l.b16 %v370
  %v691 = vunpack.c.h.b16 %v370
  %v692 = vunpack.c.l.b16 %v371
  %v693 = vunpack.c.h.b16 %v371
  %v694 = vunpack.c.l.b16 %v372
  %v695 = vunpack.c.h.b16 %v372
  %v696 = vunpack.c.l.b16 %v373
  %v697 = vunpack.c.h.b16 %v373
  %v698 = vunpack.c.l.b16 %v374
  %v699 = vunpack.c.h.b16 %v374
  %v700 = vunpack.c.l.b16 %v375
  %v701 = vunpack.c.h.b16 %v375
  %v702 = vunpack.c.l.b16 %v376
  %v703 = vunpack.c.h.b16 %v376
  %v704 = vunpack.c.l.b16 %v377
  %v705 = vunpack.c.h.b16 %v377
  %v706 = vunpack.c.l.b16 %v378
  %v707 = vunpack.c.h.b16 %v378
  %v708 = vunpack.c.l.b16 %v379
  %v709 = vunpack.c.h.b16 %v379
  %v710 = vunpack.c.l.b16 %v380
  %v711 = vunpack.c.h.b16 %v380
  %v712 = vunpack.c.l.b16 %v381
  %v713 = vunpack.c.h.b16 %v381
  %v714 = vunpack.c.l.b16 %v382
  %v715 = vunpack.c.h.b16 %v382
  %v716 = vunpack.c.l.b16 %v383
  %v717 = vunpack.c.h.b16 %v383
  %v718 = vunpack.c.l.b16 %v384
  %v719 = vunpack.c.h.b16 %v384
  %v720 = vunpack.c.l.b16 %v385
  %v721 = vunpack.c.h.b16 %v385
  %v722 = vunpack.c.l.b16 %v386
  %v723 = vunpack.c.h.b16 %v386
  %v724 = vunpack.c.l.b16 %v387
  %v725 = vunpack.c.h.b16 %v387
  %v726 = vunpack.c.l.b16 %v388
  %v727 = vunpack.c.h.b16 %v388
  %v728 = vunpack.c.l.b16 %v389
  %v729 = vunpack.c.h.b16 %v389
  %v730 = vunpack.c.l.b16 %v390
  %v731 = vunpack.c.h.b16 %v390
  %v732 = vunpack.c.l.b16 %v391
  %v733 = vunpack.c.h.b16 %v391
  %v734 = vunpack.c.l.b16 %v392
  %v735 = vunpack.c.h.b16 %v392
  %v736 = vunpack.c.l.b16 %v393
  %v737 = vunpack.c.h.b16 %v393
  %v738 = vunpack.c.l.b16 %v394
  %v739 = vunpack.c.h.b16 %v394
  %v740 = vunpack.c.l.b16 %v395
  %v741 = vunpack.c.h.b16 %v395
  %v742 = vunpack.c.l.b16 %v396
  %v743 = vunpack.c.h.b16 %v396
  %v744 = vunpack.c.l.b16 %v397
  %v745 = vunpack.c.h.b16 %v397
  %v746 = vunpack.c.l.b16 %v398
  %v747 = vunpack.c.h.b16 %v398
  %v748 = vunpack.c.l.b16 %v399
  %v749 = vunpack.c.h.b16 %v399
  %v750 = vunpack.c.l.b16 %v400
  %v751 = vunpack.c.h.b16 %v400
  %v752 = vunpack.c.l.b16 %v401
  %v753 = vunpack.c.h.b16 %v401
  %v754 = vunpack.c.l.b16 %v402
  %v755 = vunpack.c.h.b16 %v402
  %v756 = vunpack.c.l.b16 %v403
  %v757 = vunpack.c.h.b16 %v403
  %v758 = vunpack.c.l.b16 %v404
  %v759 = vunpack.c.h.b16 %v404
  %v760 = vunpack.c.l.b16 %v405
  %v761 = vunpack.c.h.b16 %v405
  %v762 = vunpack.c.l.b16 %v406
  %v763 = vunpack.c.h.b16 %v406
  %v764 = vunpack.c.l.b16 %v407
  %v765 = vunpack.c.h.b16 %v407
  %v766 = vunpack.c.l.b16 %v408
  %v767 = vunpack.c.h.b16 %v408
  %v768 = vunpack.c.l.b16 %v409
  %v769 = vunpack.c.h.b16 %v409
  %v770 = vunpack.c.l.b16 %v410
  %v771 = vunpack.c.h.b16 %v410
  %v772 = vunpack.c.l.b16 %v411
  %v773 = vunpack.c.h.b16 %v411
  %v774 = vunpack.c.l.b16 %v412
  %v775 = vunpack.c.h.b16 %v412
  %v776 = vunpack.c.l.b16 %v413
  %v777 = vunpack.c.h.b16 %v413
  %v778 = vunpack.c.l.b16 %v414
  %v779 = vunpack.c.h.b16 %v414
  %v780 = vunpack.c.l.b16 %v415
  %v781 = vunpack.c.h.b16 %v415
  %v782 = vunpack.c.l.b16 %v416
  %v783 = vunpack.c.h.b16 %v416
  %v784 = vunpack.c.l.b16 %v417
  %v785 = vunpack.c.h.b16 %v417
  %v786 = vunpack.c.l.b16 %v418
  %v787 = vunpack.c.h.b16 %v418
  %v788 = vunpack.c.l.b16 %v419
  %v789 = vunpack.c.h.b16 %v419
  %v790 = vunpack.c.l.b16 %v420
  %v791 = vunpack.c.h.b16 %v420
  %v792 = vunpack.c.l.b16 %v421
  %v793 = vunpack.c.h.b16 %v421
  %v794 = vunpack.c.l.b16 %v422
  %v795 = vunpack.c.h.b16 %v422
  %v796 = vunpack.c.l.b16 %v423
  %v797 = vunpack.c.h.b16 %v423
  %v798 = vunpack.c.l.b16 %v424
  %v799 = vunpack.c.h.b16 %v424
  %v800 = vunpack.c.l.b16 %v425
  %v801 = vunpack.c.h.b16 %v425
  %v802 = vunpack.c.l.b16 %v426
  %v803 = vunpack.c.h.b16 %v426
  %v804 = vunpack.c.l.b16 %v427
  %v805 = vunpack.c.h.b16 %v427
  %v806 = vunpack.c.l.b16 %v428
  %v807 = vunpack.c.h.b16 %v428
  %v808 = vunpack.c.l.b16 %v429
  %v809 = vunpack.c.h.b16 %v429
  %v810 = vunpack.c.l.b16 %v430
  %v811 = vunpack.c.h.b16 %v430
  %v812 = vunpack.c.l.b16 %v431
  %v813 = vunpack.c.h.b16 %v431
  %v814 = vunpack.c.l.b16 %v432
  %v815 = vunpack.c.h.b16 %v432
  %v816 = vunpack.c.l.b16 %v433
  %v817 = vunpack.c.h.b16 %v433
  %v818 = vpack.c.b16 %v564, %v562
  %v819 = vpack.c.b16 %v565, %v563
  %v820 = vpack.c.b16 %v568, %v566
  %v821 = vpack.c.b16 %v569, %v567
  %v822 = vpack.c.b16 %v572, %v570
  %v823 = vpack.c.b16 %v573, %v571
  %v824 = vpack.c.b16 %v576, %v574
  %v825 = vpack.c.b16 %v577, %v575
  %v826 = vpack.c.b16 %v580, %v578
  %v827 = vpack.c.b16 %v581, %v579
  %v828 = vpack.c.b16 %v584, %v582
  %v829 = vpack.c.b16 %v585, %v583
  %v830 = vpack.c.b16 %v588, %v586
  %v831 = vpack.c.b16 %v589, %v587
  %v832 = vpack.c.b16 %v592, %v590
  %v833 = vpack.c.b16 %v593, %v591
  %v834 = vpack.c.b16 %v596, %v594
  %v835 = vpack.c.b16 %v597, %v595
  %v836 = vpack.c.b16 %v600, %v598
  %v837 = vpack.c.b16 %v601, %v599
  %v838 = vpack.c.b16 %v604, %v602
  %v839 = vpack.c.b16 %v605, %v603
  %v840 = vpack.c.b16 %v608, %v606
  %v841 = vpack.c.b16 %v609, %v607
  %v842 = vpack.c.b16 %v612, %v610
  %v843 = vpack.c.b16 %v613, %v611
  %v844 = vpack.c.b16 %v616, %v614
  %v845 = vpack.c.b16 %v617, %v615
  %v846 = vpack.c.b16 %v620, %v618
  %v847 = vpack.c.b16 %v621, %v619
  %v848 = vpack.c.b16 %v624, %v622
  %v849 = vpack.c.b16 %v625, %v623
  %v850 = vpack.c.b16 %v628, %v626
  %v851 = vpack.c.b16 %v629, %v627
  %v852 = vpack.c.b16 %v632, %v630
  %v853 = vpack.c.b16 %v633, %v631
  %v854 = vpack.c.b16 %v636, %v634
  %v855 = vpack.c.b16 %v637, %v635
  %v856 = vpack.c.b16 %v640, %v638
  %v857 = vpack.c.b16 %v641, %v639
  %v858 = vpack.c.b16 %v644, %v642
  %v859 = vpack.c.b16 %v645, %v643
  %v860 = vpack.c.b16 %v648, %v646
  %v861 = vpack.c.b16 %v649, %v647
  %v862 = vpack.c.b16 %v652, %v650
  %v863 = vpack.c.b16 %v653, %v651
  %v864 = vpack.c.b16 %v656, %v654
  %v865 = vpack.c.b16 %v657, %v655
  %v866 = vpack.c.b16 %v660, %v658
  %v867 = vpack.c.b16 %v661, %v659
  %v868 = vpack.c.b16 %v664, %v662
  %v869 = vpack.c.b16 %v665, %v663
  %v870 = vpack.c.b16 %v668, %v666
  %v871 = vpack.c.b16 %v669, %v667
  %v872 = vpack.c.b16 %v672, %v670
  %v873 = vpack.c.b16 %v673, %v671
  %v874 = vpack.c.b16 %v676, %v674
  %v875 = vpack.c.b16 %v677, %v675
  %v876 = vpack.c.b16 %v680, %v678
  %v877 = vpack.c.b16 %v681, %v679
  %v878 = vpack.c.b16 %v684, %v682
  %v879 = vpack.c.b16 %v685, %v683
  %v880 = vpack.c.b16 %v688, %v686
  %v881 = vpack.c.b16 %v689, %v687
  %v882 = vpack.c.b16 %v692, %v690
  %v883 = vpack.c.b16 %v693, %v691
  %v884 = vpack.c.b16 %v696, %v694
  %v885 = vpack.c.b16 %v697, %v695
  %v886 = vpack.c.b16 %v700, %v698
  %v887 = vpack.c.b16 %v701, %v699
  %v888 = vpack.c.b16 %v704, %v702
  %v889 = vpack.c.b16 %v705, %v703
  %v890 = vpack.c.b16 %v708, %v706
  %v891 = vpack.c.b16 %v709, %v707
  %v892 = vpack.c.b16 %v712, %v710
  %v893 = vpack.c.b16 %v713, %v711
  %v894 = vpack.c.b16 %v716, %v714
  %v895 = vpack.c.b16 %v717, %v715
  %v896 = vpack.c.b16 %v720, %v718
  %v897 = vpack.c.b16 %v721, %v719
  %v898 = vpack.c.b16 %v724, %v722
  %v899 = vpack.c.b16 %v725, %v723
  %v900 = vpack.c.b16 %v728, %v726
  %v901 = vpack.c.b16 %v729, %v727
  %v902 = vpack.c.b16 %v732, %v730
  %v903 = vpack.c.b16 %v733, %v731
  %v904 = vpack.c.b16 %v736, %v734
  %v905 = vpack.c.b16 %v737, %v735
  %v906 = vpack.c.b16 %v740, %v738
  %v907 = vpack.c.b16 %v741, %v739
  %v908 = vpack.c.b16 %v744, %v742
  %v909 = vpack.c.b16 %v745, %v743
  %v910 = vpack.c.b16 %v748, %v746
  %v911 = vpack.c.b16 %v749, %v747
  %v912 = vpack.c.b16 %v752, %v750
  %v913 = vpack.c.b16 %v753, %v751
  %v914 = vpack.c.b16 %v756, %v754
  %v915 = vpack.c.b16 %v757, %v755
  %v916 = vpack.c.b16 %v760, %v758
  %v917 = vpack.c.b16 %v761, %v759
  %v918 = vpack.c.b16 %v764, %v762
  %v919 = vpack.c.b16 %v765, %v763
  %v920 = vpack.c.b16 %v768, %v766
  %v921 = vpack.c.b16 %v769, %v767
  %v922 = vpack.c.b16 %v772, %v770
  %v923 = vpack.c.b16 %v773, %v771
  %v924 = vpack.c.b16 %v776, %v774
  %v925 = vpack.c.b16 %v777, %v775
  %v926 = vpack.c.b16 %v780, %v778
  %v927 = vpack.c.b16 %v781, %v779
  %v928 = vpack.c.b16 %v784, %v782
  %v929 = vpack.c.b16 %v785, %v783
  %v930 = vpack.c.b16 %v788, %v786
  %v931 = vpack.c.b16 %v789, %v787
  %v932 = vpack.c.b16 %v792, %v790
  %v933 = vpack.c.b16 %v793, %v791
  %v934 = vpack.c.b16 %v796, %v794
  %v935 = vpack.c.b16 %v797, %v795
  %v936 = vpack.c.b16 %v800, %v798
  %v937 = vpack.c.b16 %v801, %v799
  %v938 = vpack.c.b16 %v804, %v802
  %v939 = vpack.c.b16 %v805, %v803
  %v940 = vpack.c.b16 %v808, %v806
  %v941 = vpack.c.b16 %v809, %v807
  %v942 = vpack.c.b16 %v812, %v810
  %v943 = vpack.c.b16 %v813, %v811
  %v944 = vpack.c.b16 %v816, %v814
  %v945 = vpack.c.b16 %v817, %v815
  %v1106 = vunpack.c.l.b16 %v146
  %v1107 = vunpack.c.l.b16 %v147
  %v1108 = vunpack.c.l.b16 %v148
  %v1109 = vunpack.c.l.b16 %v149
  %v1110 = vunpack.c.l.b16 %v150
  %v1111 = vunpack.c.l.b16 %v151
  %v1112 = vunpack.c.l.b16 %v152
  %v1113 = vunpack.c.l.b16 %v153
  %v1114 = vunpack.c.l.b16 %v154
  %v1115 = vunpack.c.l.b16 %v155
  %v1116 = vunpack.c.l.b16 %v156
  %v1117 = vunpack.c.l.b16 %v157
  %v1118 = vunpack.c.l.b16 %v158
  %v1119 = vunpack.c.l.b16 %v159
  %v1120 = vunpack.c.l.b16 %v160
  %v1121 = vunpack.c.l.b16 %v161
  %v1122 = vunpack.c.l.b16 %v162
  %v1123 = vunpack.c.l.b16 %v163
  %v1124 = vunpack.c.l.b16 %v164
  %v1125 = vunpack.c.l.b16 %v165
  %v1126 = vunpack.c.l.b16 %v166
  %v1127 = vunpack.c.l.b16 %v167
  %v1128 = vunpack.c.l.b16 %v168
  %v1129 = vunpack.c.l.b16 %v169
  %v1130 = vunpack.c.l.b16 %v170
  %v1131 = vunpack.c.l.b16 %v171
  %v1132 = vunpack.c.l.b16 %v172
  %v1133 = vunpack.c.l.b16 %v173
  %v1134 = vunpack.c.l.b16 %v174
  %v1135 = vunpack.c.l.b16 %v175
  %v1136 = vunpack.c.l.b16 %v176
  %v1137 = vunpack.c.l.b16 %v177
  %v1138 = vpack.c.b16 %v1107, %v1106
  %v1139 = vpack.c.b16 %v1109, %v1108
  %v1140 = vpack.c.b16 %v1111, %v1110
  %v1141 = vpack.c.b16 %v1113, %v1112
  %v1142 = vpack.c.b16 %v1115, %v1114
  %v1143 = vpack.c.b16 %v1117, %v1116
  %v1144 = vpack.c.b16 %v1119, %v1118
  %v1145 = vpack.c.b16 %v1121, %v1120
  %v1146 = vpack.c.b16 %v1123, %v1122
  %v1147 = vpack.c.b16 %v1125, %v1124
  %v1148 = vpack.c.b16 %v1127, %v1126
  %v1149 = vpack.c.b16 %v1129, %v1128
  %v1150 = vpack.c.b16 %v1131, %v1130
  %v1151 = vpack.c.b16 %v1133, %v1132
  %v1152 = vpack.c.b16 %v1135, %v1134
  %v1153 = vpack.c.b16 %v1137, %v1136
  %1170 = vmatprep.subr.bf16.mxu0 0
  %1171 = vmatpush1.bf16.msra.mxu0 %v1145
  %1172 = vmatprep.subr.bf16.mxu0 0
  %1173 = vmatpush1.bf16.msra.mxu0 %v1144
  %1174 = vmatprep.subr.bf16.mxu0 0
  %1175 = vmatpush1.bf16.msra.mxu0 %v1143
  %1176 = vmatprep.subr.bf16.mxu0 0
  %1177 = vmatpush1.bf16.msra.mxu0 %v1142
  %1178 = vmatprep.subr.bf16.mxu0 0
  %1179 = vmatpush1.bf16.msra.mxu0 %v1141
  %1180 = vmatprep.subr.bf16.mxu0 0
  %1181 = vmatpush1.bf16.msra.mxu0 %v1140
  %1182 = vmatprep.subr.bf16.mxu0 0
  %1183 = vmatpush1.bf16.msra.mxu0 %v1139
  %1184 = vmatprep.subr.bf16.mxu0 0
  %1185 = vmatpush1.bf16.msra.mxu0 %v1138
  %1186 = vmatprep.subr.bf16.mxu0 0
  %1187 = vmatpush2.bf16.msra.mxu0 %v1153
  %1188 = vmatprep.subr.bf16.mxu0 0
  %1189 = vmatpush2.bf16.msra.mxu0 %v1152
  %1190 = vmatprep.subr.bf16.mxu0 0
  %1191 = vmatpush2.bf16.msra.mxu0 %v1151
  %1192 = vmatprep.subr.bf16.mxu0 0
  %1193 = vmatpush2.bf16.msra.mxu0 %v1150
  %1194 = vmatprep.subr.bf16.mxu0 0
  %1195 = vmatpush2.bf16.msra.mxu0 %v1149
  %1196 = vmatprep.subr.bf16.mxu0 0
  %1197 = vmatpush2.bf16.msra.mxu0 %v1148
  %1198 = vmatprep.subr.bf16.mxu0 0
  %1199 = vmatpush2.bf16.msra.mxu0 %v1147
  %1200 = vmatprep.subr.bf16.mxu0 0
  %1201 = vmatpush2.bf16.msra.mxu0 %v1146
  %1202 = vmatprep.mubr.bf16.mxu0 %v819
  %1203 = vmatmul.mubr.bf16.gmra.mxu0 %v818
  %v1204 = vpop.f32.mrf.mxu0
  %v1205 = vadd.f32 0.0, %v1204
  %v1206 = vpop.f32.mrf.mxu0
  %v1207 = vpop.f32.mrf.mxu0
  %v1208 = vadd.f32 0.0, %v1207
  %v1209 = vpop.f32.mrf.mxu0
  %1210 = vmatprep.mubr.bf16.mxu0 %v821
  %1211 = vmatmul.mubr.bf16.gmra.mxu0 %v820
  %v1212 = vpop.f32.mrf.mxu0
  %v1213 = vadd.f32 0.0, %v1212
  %v1214 = vpop.f32.mrf.mxu0
  %v1215 = vpop.f32.mrf.mxu0
  %v1216 = vadd.f32 0.0, %v1215
  %v1217 = vpop.f32.mrf.mxu0
  %1218 = vmatprep.mubr.bf16.mxu0 %v823
  %1219 = vmatmul.mubr.bf16.gmra.mxu0 %v822
  %v1220 = vpop.f32.mrf.mxu0
  %v1221 = vadd.f32 0.0, %v1220
  %v1222 = vpop.f32.mrf.mxu0
  %v1223 = vpop.f32.mrf.mxu0
  %v1224 = vadd.f32 0.0, %v1223
  %v1225 = vpop.f32.mrf.mxu0
  %1226 = vmatprep.mubr.bf16.mxu0 %v825
  %1227 = vmatmul.mubr.bf16.gmra.mxu0 %v824
  %v1228 = vpop.f32.mrf.mxu0
  %v1229 = vadd.f32 0.0, %v1228
  %v1230 = vpop.f32.mrf.mxu0
  %v1231 = vpop.f32.mrf.mxu0
  %v1232 = vadd.f32 0.0, %v1231
  %v1233 = vpop.f32.mrf.mxu0
  %1234 = vmatprep.mubr.bf16.mxu0 %v827
  %1235 = vmatmul.mubr.bf16.gmra.mxu0 %v826
  %v1236 = vpop.f32.mrf.mxu0
  %v1237 = vadd.f32 0.0, %v1236
  %v1238 = vpop.f32.mrf.mxu0
  %v1239 = vpop.f32.mrf.mxu0
  %v1240 = vadd.f32 0.0, %v1239
  %v1241 = vpop.f32.mrf.mxu0
  %1242 = vmatprep.mubr.bf16.mxu0 %v829
  %1243 = vmatmul.mubr.bf16.gmra.mxu0 %v828
  %v1244 = vpop.f32.mrf.mxu0
  %v1245 = vadd.f32 0.0, %v1244
  %v1246 = vpop.f32.mrf.mxu0
  %v1247 = vpop.f32.mrf.mxu0
  %v1248 = vadd.f32 0.0, %v1247
  %v1249 = vpop.f32.mrf.mxu0
  %1250 = vmatprep.mubr.bf16.mxu0 %v831
  %1251 = vmatmul.mubr.bf16.gmra.mxu0 %v830
  %v1252 = vpop.f32.mrf.mxu0
  %v1253 = vadd.f32 0.0, %v1252
  %v1254 = vpop.f32.mrf.mxu0
  %v1255 = vpop.f32.mrf.mxu0
  %v1256 = vadd.f32 0.0, %v1255
  %v1257 = vpop.f32.mrf.mxu0
  %1258 = vmatprep.mubr.bf16.mxu0 %v833
  %1259 = vmatmul.mubr.bf16.gmra.mxu0 %v832
  %v1260 = vpop.f32.mrf.mxu0
  %v1261 = vadd.f32 0.0, %v1260
  %v1262 = vpop.f32.mrf.mxu0
  %v1263 = vpop.f32.mrf.mxu0
  %v1264 = vadd.f32 0.0, %v1263
  %v1265 = vpop.f32.mrf.mxu0
  %1266 = vmatprep.mubr.bf16.mxu0 %v835
  %1267 = vmatmul.mubr.bf16.gmra.mxu0 %v834
  %v1268 = vpop.f32.mrf.mxu0
  %v1269 = vadd.f32 0.0, %v1268
  %v1270 = vpop.f32.mrf.mxu0
  %v1271 = vpop.f32.mrf.mxu0
  %v1272 = vadd.f32 0.0, %v1271
  %v1273 = vpop.f32.mrf.mxu0
  %1274 = vmatprep.mubr.bf16.mxu0 %v837
  %1275 = vmatmul.mubr.bf16.gmra.mxu0 %v836
  %v1276 = vpop.f32.mrf.mxu0
  %v1277 = vadd.f32 0.0, %v1276
  %v1278 = vpop.f32.mrf.mxu0
  %v1279 = vpop.f32.mrf.mxu0
  %v1280 = vadd.f32 0.0, %v1279
  %v1281 = vpop.f32.mrf.mxu0
  %1282 = vmatprep.mubr.bf16.mxu0 %v839
  %1283 = vmatmul.mubr.bf16.gmra.mxu0 %v838
  %v1284 = vpop.f32.mrf.mxu0
  %v1285 = vadd.f32 0.0, %v1284
  %v1286 = vpop.f32.mrf.mxu0
  %v1287 = vpop.f32.mrf.mxu0
  %v1288 = vadd.f32 0.0, %v1287
  %v1289 = vpop.f32.mrf.mxu0
  %1290 = vmatprep.mubr.bf16.mxu0 %v841
  %1291 = vmatmul.mubr.bf16.gmra.mxu0 %v840
  %v1292 = vpop.f32.mrf.mxu0
  %v1293 = vadd.f32 0.0, %v1292
  %v1294 = vpop.f32.mrf.mxu0
  %v1295 = vpop.f32.mrf.mxu0
  %v1296 = vadd.f32 0.0, %v1295
  %v1297 = vpop.f32.mrf.mxu0
  %1298 = vmatprep.mubr.bf16.mxu0 %v843
  %1299 = vmatmul.mubr.bf16.gmra.mxu0 %v842
  %v1300 = vpop.f32.mrf.mxu0
  %v1301 = vadd.f32 0.0, %v1300
  %v1302 = vpop.f32.mrf.mxu0
  %v1303 = vpop.f32.mrf.mxu0
  %v1304 = vadd.f32 0.0, %v1303
  %v1305 = vpop.f32.mrf.mxu0
  %1306 = vmatprep.mubr.bf16.mxu0 %v845
  %1307 = vmatmul.mubr.bf16.gmra.mxu0 %v844
  %v1308 = vpop.f32.mrf.mxu0
  %v1309 = vadd.f32 0.0, %v1308
  %v1310 = vpop.f32.mrf.mxu0
  %v1311 = vpop.f32.mrf.mxu0
  %v1312 = vadd.f32 0.0, %v1311
  %v1313 = vpop.f32.mrf.mxu0
  %1314 = vmatprep.mubr.bf16.mxu0 %v847
  %1315 = vmatmul.mubr.bf16.gmra.mxu0 %v846
  %v1316 = vpop.f32.mrf.mxu0
  %v1317 = vadd.f32 0.0, %v1316
  %v1318 = vpop.f32.mrf.mxu0
  %v1319 = vpop.f32.mrf.mxu0
  %v1320 = vadd.f32 0.0, %v1319
  %v1321 = vpop.f32.mrf.mxu0
  %1322 = vmatprep.mubr.bf16.mxu0 %v849
  %1323 = vmatmul.mubr.bf16.gmra.mxu0 %v848
  %v1324 = vpop.f32.mrf.mxu0
  %v1325 = vadd.f32 0.0, %v1324
  %v1326 = vpop.f32.mrf.mxu0
  %v1327 = vpop.f32.mrf.mxu0
  %v1328 = vadd.f32 0.0, %v1327
  %v1329 = vpop.f32.mrf.mxu0
  %1330 = vmatprep.mubr.bf16.mxu0 %v851
  %1331 = vmatmul.mubr.bf16.gmra.mxu0 %v850
  %v1332 = vpop.f32.mrf.mxu0
  %v1333 = vadd.f32 0.0, %v1332
  %v1334 = vpop.f32.mrf.mxu0
  %v1335 = vpop.f32.mrf.mxu0
  %v1336 = vadd.f32 0.0, %v1335
  %v1337 = vpop.f32.mrf.mxu0
  %1338 = vmatprep.mubr.bf16.mxu0 %v853
  %1339 = vmatmul.mubr.bf16.gmra.mxu0 %v852
  %v1340 = vpop.f32.mrf.mxu0
  %v1341 = vadd.f32 0.0, %v1340
  %v1342 = vpop.f32.mrf.mxu0
  %v1343 = vpop.f32.mrf.mxu0
  %v1344 = vadd.f32 0.0, %v1343
  %v1345 = vpop.f32.mrf.mxu0
  %1346 = vmatprep.mubr.bf16.mxu0 %v855
  %1347 = vmatmul.mubr.bf16.gmra.mxu0 %v854
  %v1348 = vpop.f32.mrf.mxu0
  %v1349 = vadd.f32 0.0, %v1348
  %v1350 = vpop.f32.mrf.mxu0
  %v1351 = vpop.f32.mrf.mxu0
  %v1352 = vadd.f32 0.0, %v1351
  %v1353 = vpop.f32.mrf.mxu0
  %1354 = vmatprep.mubr.bf16.mxu0 %v857
  %1355 = vmatmul.mubr.bf16.gmra.mxu0 %v856
  %v1356 = vpop.f32.mrf.mxu0
  %v1357 = vadd.f32 0.0, %v1356
  %v1358 = vpop.f32.mrf.mxu0
  %v1359 = vpop.f32.mrf.mxu0
  %v1360 = vadd.f32 0.0, %v1359
  %v1361 = vpop.f32.mrf.mxu0
  %1362 = vmatprep.mubr.bf16.mxu0 %v859
  %1363 = vmatmul.mubr.bf16.gmra.mxu0 %v858
  %v1364 = vpop.f32.mrf.mxu0
  %v1365 = vadd.f32 0.0, %v1364
  %v1366 = vpop.f32.mrf.mxu0
  %v1367 = vpop.f32.mrf.mxu0
  %v1368 = vadd.f32 0.0, %v1367
  %v1369 = vpop.f32.mrf.mxu0
  %1370 = vmatprep.mubr.bf16.mxu0 %v861
  %1371 = vmatmul.mubr.bf16.gmra.mxu0 %v860
  %v1372 = vpop.f32.mrf.mxu0
  %v1373 = vadd.f32 0.0, %v1372
  %v1374 = vpop.f32.mrf.mxu0
  %v1375 = vpop.f32.mrf.mxu0
  %v1376 = vadd.f32 0.0, %v1375
  %v1377 = vpop.f32.mrf.mxu0
  %1378 = vmatprep.mubr.bf16.mxu0 %v863
  %1379 = vmatmul.mubr.bf16.gmra.mxu0 %v862
  %v1380 = vpop.f32.mrf.mxu0
  %v1381 = vadd.f32 0.0, %v1380
  %v1382 = vpop.f32.mrf.mxu0
  %v1383 = vpop.f32.mrf.mxu0
  %v1384 = vadd.f32 0.0, %v1383
  %v1385 = vpop.f32.mrf.mxu0
  %1386 = vmatprep.mubr.bf16.mxu0 %v865
  %1387 = vmatmul.mubr.bf16.gmra.mxu0 %v864
  %v1388 = vpop.f32.mrf.mxu0
  %v1389 = vadd.f32 0.0, %v1388
  %v1390 = vpop.f32.mrf.mxu0
  %v1391 = vpop.f32.mrf.mxu0
  %v1392 = vadd.f32 0.0, %v1391
  %v1393 = vpop.f32.mrf.mxu0
  %1394 = vmatprep.mubr.bf16.mxu0 %v867
  %1395 = vmatmul.mubr.bf16.gmra.mxu0 %v866
  %v1396 = vpop.f32.mrf.mxu0
  %v1397 = vadd.f32 0.0, %v1396
  %v1398 = vpop.f32.mrf.mxu0
  %v1399 = vpop.f32.mrf.mxu0
  %v1400 = vadd.f32 0.0, %v1399
  %v1401 = vpop.f32.mrf.mxu0
  %1402 = vmatprep.mubr.bf16.mxu0 %v869
  %1403 = vmatmul.mubr.bf16.gmra.mxu0 %v868
  %v1404 = vpop.f32.mrf.mxu0
  %v1405 = vadd.f32 0.0, %v1404
  %v1406 = vpop.f32.mrf.mxu0
  %v1407 = vpop.f32.mrf.mxu0
  %v1408 = vadd.f32 0.0, %v1407
  %v1409 = vpop.f32.mrf.mxu0
  %1410 = vmatprep.mubr.bf16.mxu0 %v871
  %1411 = vmatmul.mubr.bf16.gmra.mxu0 %v870
  %v1412 = vpop.f32.mrf.mxu0
  %v1413 = vadd.f32 0.0, %v1412
  %v1414 = vpop.f32.mrf.mxu0
  %v1415 = vpop.f32.mrf.mxu0
  %v1416 = vadd.f32 0.0, %v1415
  %v1417 = vpop.f32.mrf.mxu0
  %1418 = vmatprep.mubr.bf16.mxu0 %v873
  %1419 = vmatmul.mubr.bf16.gmra.mxu0 %v872
  %v1420 = vpop.f32.mrf.mxu0
  %v1421 = vadd.f32 0.0, %v1420
  %v1422 = vpop.f32.mrf.mxu0
  %v1423 = vpop.f32.mrf.mxu0
  %v1424 = vadd.f32 0.0, %v1423
  %v1425 = vpop.f32.mrf.mxu0
  %1426 = vmatprep.mubr.bf16.mxu0 %v875
  %1427 = vmatmul.mubr.bf16.gmra.mxu0 %v874
  %v1428 = vpop.f32.mrf.mxu0
  %v1429 = vadd.f32 0.0, %v1428
  %v1430 = vpop.f32.mrf.mxu0
  %v1431 = vpop.f32.mrf.mxu0
  %v1432 = vadd.f32 0.0, %v1431
  %v1433 = vpop.f32.mrf.mxu0
  %1434 = vmatprep.mubr.bf16.mxu0 %v877
  %1435 = vmatmul.mubr.bf16.gmra.mxu0 %v876
  %v1436 = vpop.f32.mrf.mxu0
  %v1437 = vadd.f32 0.0, %v1436
  %v1438 = vpop.f32.mrf.mxu0
  %v1439 = vpop.f32.mrf.mxu0
  %v1440 = vadd.f32 0.0, %v1439
  %v1441 = vpop.f32.mrf.mxu0
  %1442 = vmatprep.mubr.bf16.mxu0 %v879
  %1443 = vmatmul.mubr.bf16.gmra.mxu0 %v878
  %v1444 = vpop.f32.mrf.mxu0
  %v1445 = vadd.f32 0.0, %v1444
  %v1446 = vpop.f32.mrf.mxu0
  %v1447 = vpop.f32.mrf.mxu0
  %v1448 = vadd.f32 0.0, %v1447
  %v1449 = vpop.f32.mrf.mxu0
  %1450 = vmatprep.mubr.bf16.mxu0 %v881
  %1451 = vmatmul.mubr.bf16.gmra.mxu0 %v880
  %v1452 = vpop.f32.mrf.mxu0
  %v1453 = vadd.f32 0.0, %v1452
  %v1454 = vpop.f32.mrf.mxu0
  %v1455 = vpop.f32.mrf.mxu0
  %v1456 = vadd.f32 0.0, %v1455
  %v1457 = vpop.f32.mrf.mxu0
  %1458 = vmatprep.mubr.bf16.mxu0 %v883
  %1459 = vmatmul.mubr.bf16.gmra.mxu0 %v882
  %v1460 = vpop.f32.mrf.mxu0
  %v1461 = vadd.f32 0.0, %v1460
  %v1462 = vpop.f32.mrf.mxu0
  %v1463 = vpop.f32.mrf.mxu0
  %v1464 = vadd.f32 0.0, %v1463
  %v1465 = vpop.f32.mrf.mxu0
  %1466 = vmatprep.mubr.bf16.mxu0 %v885
  %1467 = vmatmul.mubr.bf16.gmra.mxu0 %v884
  %v1468 = vpop.f32.mrf.mxu0
  %v1469 = vadd.f32 0.0, %v1468
  %v1470 = vpop.f32.mrf.mxu0
  %v1471 = vpop.f32.mrf.mxu0
  %v1472 = vadd.f32 0.0, %v1471
  %v1473 = vpop.f32.mrf.mxu0
  %1474 = vmatprep.mubr.bf16.mxu0 %v887
  %1475 = vmatmul.mubr.bf16.gmra.mxu0 %v886
  %v1476 = vpop.f32.mrf.mxu0
  %v1477 = vadd.f32 0.0, %v1476
  %v1478 = vpop.f32.mrf.mxu0
  %v1479 = vpop.f32.mrf.mxu0
  %v1480 = vadd.f32 0.0, %v1479
  %v1481 = vpop.f32.mrf.mxu0
  %1482 = vmatprep.mubr.bf16.mxu0 %v889
  %1483 = vmatmul.mubr.bf16.gmra.mxu0 %v888
  %v1484 = vpop.f32.mrf.mxu0
  %v1485 = vadd.f32 0.0, %v1484
  %v1486 = vpop.f32.mrf.mxu0
  %v1487 = vpop.f32.mrf.mxu0
  %v1488 = vadd.f32 0.0, %v1487
  %v1489 = vpop.f32.mrf.mxu0
  %1490 = vmatprep.mubr.bf16.mxu0 %v891
  %1491 = vmatmul.mubr.bf16.gmra.mxu0 %v890
  %v1492 = vpop.f32.mrf.mxu0
  %v1493 = vadd.f32 0.0, %v1492
  %v1494 = vpop.f32.mrf.mxu0
  %v1495 = vpop.f32.mrf.mxu0
  %v1496 = vadd.f32 0.0, %v1495
  %v1497 = vpop.f32.mrf.mxu0
  %1498 = vmatprep.mubr.bf16.mxu0 %v893
  %1499 = vmatmul.mubr.bf16.gmra.mxu0 %v892
  %v1500 = vpop.f32.mrf.mxu0
  %v1501 = vadd.f32 0.0, %v1500
  %v1502 = vpop.f32.mrf.mxu0
  %v1503 = vpop.f32.mrf.mxu0
  %v1504 = vadd.f32 0.0, %v1503
  %v1505 = vpop.f32.mrf.mxu0
  %1506 = vmatprep.mubr.bf16.mxu0 %v895
  %1507 = vmatmul.mubr.bf16.gmra.mxu0 %v894
  %v1508 = vpop.f32.mrf.mxu0
  %v1509 = vadd.f32 0.0, %v1508
  %v1510 = vpop.f32.mrf.mxu0
  %v1511 = vpop.f32.mrf.mxu0
  %v1512 = vadd.f32 0.0, %v1511
  %v1513 = vpop.f32.mrf.mxu0
  %1514 = vmatprep.mubr.bf16.mxu0 %v897
  %1515 = vmatmul.mubr.bf16.gmra.mxu0 %v896
  %v1516 = vpop.f32.mrf.mxu0
  %v1517 = vadd.f32 0.0, %v1516
  %v1518 = vpop.f32.mrf.mxu0
  %v1519 = vpop.f32.mrf.mxu0
  %v1520 = vadd.f32 0.0, %v1519
  %v1521 = vpop.f32.mrf.mxu0
  %1522 = vmatprep.mubr.bf16.mxu0 %v899
  %1523 = vmatmul.mubr.bf16.gmra.mxu0 %v898
  %v1524 = vpop.f32.mrf.mxu0
  %v1525 = vadd.f32 0.0, %v1524
  %v1526 = vpop.f32.mrf.mxu0
  %v1527 = vpop.f32.mrf.mxu0
  %v1528 = vadd.f32 0.0, %v1527
  %v1529 = vpop.f32.mrf.mxu0
  %1530 = vmatprep.mubr.bf16.mxu0 %v901
  %1531 = vmatmul.mubr.bf16.gmra.mxu0 %v900
  %v1532 = vpop.f32.mrf.mxu0
  %v1533 = vadd.f32 0.0, %v1532
  %v1534 = vpop.f32.mrf.mxu0
  %v1535 = vpop.f32.mrf.mxu0
  %v1536 = vadd.f32 0.0, %v1535
  %v1537 = vpop.f32.mrf.mxu0
  %1538 = vmatprep.mubr.bf16.mxu0 %v903
  %1539 = vmatmul.mubr.bf16.gmra.mxu0 %v902
  %v1540 = vpop.f32.mrf.mxu0
  %v1541 = vadd.f32 0.0, %v1540
  %v1542 = vpop.f32.mrf.mxu0
  %v1543 = vpop.f32.mrf.mxu0
  %v1544 = vadd.f32 0.0, %v1543
  %v1545 = vpop.f32.mrf.mxu0
  %1546 = vmatprep.mubr.bf16.mxu0 %v905
  %1547 = vmatmul.mubr.bf16.gmra.mxu0 %v904
  %v1548 = vpop.f32.mrf.mxu0
  %v1549 = vadd.f32 0.0, %v1548
  %v1550 = vpop.f32.mrf.mxu0
  %v1551 = vpop.f32.mrf.mxu0
  %v1552 = vadd.f32 0.0, %v1551
  %v1553 = vpop.f32.mrf.mxu0
  %1554 = vmatprep.mubr.bf16.mxu0 %v907
  %1555 = vmatmul.mubr.bf16.gmra.mxu0 %v906
  %v1556 = vpop.f32.mrf.mxu0
  %v1557 = vadd.f32 0.0, %v1556
  %v1558 = vpop.f32.mrf.mxu0
  %v1559 = vpop.f32.mrf.mxu0
  %v1560 = vadd.f32 0.0, %v1559
  %v1561 = vpop.f32.mrf.mxu0
  %1562 = vmatprep.mubr.bf16.mxu0 %v909
  %1563 = vmatmul.mubr.bf16.gmra.mxu0 %v908
  %v1564 = vpop.f32.mrf.mxu0
  %v1565 = vadd.f32 0.0, %v1564
  %v1566 = vpop.f32.mrf.mxu0
  %v1567 = vpop.f32.mrf.mxu0
  %v1568 = vadd.f32 0.0, %v1567
  %v1569 = vpop.f32.mrf.mxu0
  %1570 = vmatprep.mubr.bf16.mxu0 %v911
  %1571 = vmatmul.mubr.bf16.gmra.mxu0 %v910
  %v1572 = vpop.f32.mrf.mxu0
  %v1573 = vadd.f32 0.0, %v1572
  %v1574 = vpop.f32.mrf.mxu0
  %v1575 = vpop.f32.mrf.mxu0
  %v1576 = vadd.f32 0.0, %v1575
  %v1577 = vpop.f32.mrf.mxu0
  %1578 = vmatprep.mubr.bf16.mxu0 %v913
  %1579 = vmatmul.mubr.bf16.gmra.mxu0 %v912
  %v1580 = vpop.f32.mrf.mxu0
  %v1581 = vadd.f32 0.0, %v1580
  %v1582 = vpop.f32.mrf.mxu0
  %v1583 = vpop.f32.mrf.mxu0
  %v1584 = vadd.f32 0.0, %v1583
  %v1585 = vpop.f32.mrf.mxu0
  %1586 = vmatprep.mubr.bf16.mxu0 %v915
  %1587 = vmatmul.mubr.bf16.gmra.mxu0 %v914
  %v1588 = vpop.f32.mrf.mxu0
  %v1589 = vadd.f32 0.0, %v1588
  %v1590 = vpop.f32.mrf.mxu0
  %v1591 = vpop.f32.mrf.mxu0
  %v1592 = vadd.f32 0.0, %v1591
  %v1593 = vpop.f32.mrf.mxu0
  %1594 = vmatprep.mubr.bf16.mxu0 %v917
  %1595 = vmatmul.mubr.bf16.gmra.mxu0 %v916
  %v1596 = vpop.f32.mrf.mxu0
  %v1597 = vadd.f32 0.0, %v1596
  %v1598 = vpop.f32.mrf.mxu0
  %v1599 = vpop.f32.mrf.mxu0
  %v1600 = vadd.f32 0.0, %v1599
  %v1601 = vpop.f32.mrf.mxu0
  %1602 = vmatprep.mubr.bf16.mxu0 %v919
  %1603 = vmatmul.mubr.bf16.gmra.mxu0 %v918
  %v1604 = vpop.f32.mrf.mxu0
  %v1605 = vadd.f32 0.0, %v1604
  %v1606 = vpop.f32.mrf.mxu0
  %v1607 = vpop.f32.mrf.mxu0
  %v1608 = vadd.f32 0.0, %v1607
  %v1609 = vpop.f32.mrf.mxu0
  %1610 = vmatprep.mubr.bf16.mxu0 %v921
  %1611 = vmatmul.mubr.bf16.gmra.mxu0 %v920
  %v1612 = vpop.f32.mrf.mxu0
  %v1613 = vadd.f32 0.0, %v1612
  %v1614 = vpop.f32.mrf.mxu0
  %v1615 = vpop.f32.mrf.mxu0
  %v1616 = vadd.f32 0.0, %v1615
  %v1617 = vpop.f32.mrf.mxu0
  %1618 = vmatprep.mubr.bf16.mxu0 %v923
  %1619 = vmatmul.mubr.bf16.gmra.mxu0 %v922
  %v1620 = vpop.f32.mrf.mxu0
  %v1621 = vadd.f32 0.0, %v1620
  %v1622 = vpop.f32.mrf.mxu0
  %v1623 = vpop.f32.mrf.mxu0
  %v1624 = vadd.f32 0.0, %v1623
  %v1625 = vpop.f32.mrf.mxu0
  %1626 = vmatprep.mubr.bf16.mxu0 %v925
  %1627 = vmatmul.mubr.bf16.gmra.mxu0 %v924
  %v1628 = vpop.f32.mrf.mxu0
  %v1629 = vadd.f32 0.0, %v1628
  %v1630 = vpop.f32.mrf.mxu0
  %v1631 = vpop.f32.mrf.mxu0
  %v1632 = vadd.f32 0.0, %v1631
  %v1633 = vpop.f32.mrf.mxu0
  %1634 = vmatprep.mubr.bf16.mxu0 %v927
  %1635 = vmatmul.mubr.bf16.gmra.mxu0 %v926
  %v1636 = vpop.f32.mrf.mxu0
  %v1637 = vadd.f32 0.0, %v1636
  %v1638 = vpop.f32.mrf.mxu0
  %v1639 = vpop.f32.mrf.mxu0
  %v1640 = vadd.f32 0.0, %v1639
  %v1641 = vpop.f32.mrf.mxu0
  %1642 = vmatprep.mubr.bf16.mxu0 %v929
  %1643 = vmatmul.mubr.bf16.gmra.mxu0 %v928
  %v1644 = vpop.f32.mrf.mxu0
  %v1645 = vadd.f32 0.0, %v1644
  %v1646 = vpop.f32.mrf.mxu0
  %v1647 = vpop.f32.mrf.mxu0
  %v1648 = vadd.f32 0.0, %v1647
  %v1649 = vpop.f32.mrf.mxu0
  %1650 = vmatprep.mubr.bf16.mxu0 %v931
  %1651 = vmatmul.mubr.bf16.gmra.mxu0 %v930
  %v1652 = vpop.f32.mrf.mxu0
  %v1653 = vadd.f32 0.0, %v1652
  %v1654 = vpop.f32.mrf.mxu0
  %v1655 = vpop.f32.mrf.mxu0
  %v1656 = vadd.f32 0.0, %v1655
  %v1657 = vpop.f32.mrf.mxu0
  %1658 = vmatprep.mubr.bf16.mxu0 %v933
  %1659 = vmatmul.mubr.bf16.gmra.mxu0 %v932
  %v1660 = vpop.f32.mrf.mxu0
  %v1661 = vadd.f32 0.0, %v1660
  %v1662 = vpop.f32.mrf.mxu0
  %v1663 = vpop.f32.mrf.mxu0
  %v1664 = vadd.f32 0.0, %v1663
  %v1665 = vpop.f32.mrf.mxu0
  %1666 = vmatprep.mubr.bf16.mxu0 %v935
  %1667 = vmatmul.mubr.bf16.gmra.mxu0 %v934
  %v1668 = vpop.f32.mrf.mxu0
  %v1669 = vadd.f32 0.0, %v1668
  %v1670 = vpop.f32.mrf.mxu0
  %v1671 = vpop.f32.mrf.mxu0
  %v1672 = vadd.f32 0.0, %v1671
  %v1673 = vpop.f32.mrf.mxu0
  %1674 = vmatprep.mubr.bf16.mxu0 %v937
  %1675 = vmatmul.mubr.bf16.gmra.mxu0 %v936
  %v1676 = vpop.f32.mrf.mxu0
  %v1677 = vadd.f32 0.0, %v1676
  %v1678 = vpop.f32.mrf.mxu0
  %v1679 = vpop.f32.mrf.mxu0
  %v1680 = vadd.f32 0.0, %v1679
  %v1681 = vpop.f32.mrf.mxu0
  %1682 = vmatprep.mubr.bf16.mxu0 %v939
  %1683 = vmatmul.mubr.bf16.gmra.mxu0 %v938
  %v1684 = vpop.f32.mrf.mxu0
  %v1685 = vadd.f32 0.0, %v1684
  %v1686 = vpop.f32.mrf.mxu0
  %v1687 = vpop.f32.mrf.mxu0
  %v1688 = vadd.f32 0.0, %v1687
  %v1689 = vpop.f32.mrf.mxu0
  %1690 = vmatprep.mubr.bf16.mxu0 %v941
  %1691 = vmatmul.mubr.bf16.gmra.mxu0 %v940
  %v1692 = vpop.f32.mrf.mxu0
  %v1693 = vadd.f32 0.0, %v1692
  %v1694 = vpop.f32.mrf.mxu0
  %v1695 = vpop.f32.mrf.mxu0
  %v1696 = vadd.f32 0.0, %v1695
  %v1697 = vpop.f32.mrf.mxu0
  %1698 = vmatprep.mubr.bf16.mxu0 %v943
  %1699 = vmatmul.mubr.bf16.gmra.mxu0 %v942
  %v1700 = vpop.f32.mrf.mxu0
  %v1701 = vadd.f32 0.0, %v1700
  %v1702 = vpop.f32.mrf.mxu0
  %v1703 = vpop.f32.mrf.mxu0
  %v1704 = vadd.f32 0.0, %v1703
  %v1705 = vpop.f32.mrf.mxu0
  %1706 = vmatprep.mubr.bf16.mxu0 %v945
  %1707 = vmatmul.mubr.bf16.gmra.mxu0 %v944
  %v1708 = vpop.f32.mrf.mxu0
  %v1709 = vadd.f32 0.0, %v1708
  %v1710 = vpop.f32.mrf.mxu0
  %v1711 = vpop.f32.mrf.mxu0
  %v1712 = vadd.f32 0.0, %v1711
  %v1713 = vpop.f32.mrf.mxu0
  %1714 = vdwg.mxu0
  %v1715 = vadd.f32 %v178, %v1205
  %v1716 = vadd.f32 %v179, %v1208
  %v1717 = vadd.f32 %v180, %v1213
  %v1718 = vadd.f32 %v181, %v1216
  %v1719 = vadd.f32 %v182, %v1221
  %v1720 = vadd.f32 %v183, %v1224
  %v1721 = vadd.f32 %v184, %v1229
  %v1722 = vadd.f32 %v185, %v1232
  %v1723 = vadd.f32 %v186, %v1237
  %v1724 = vadd.f32 %v187, %v1240
  %v1725 = vadd.f32 %v188, %v1245
  %v1726 = vadd.f32 %v189, %v1248
  %v1727 = vadd.f32 %v190, %v1253
  %v1728 = vadd.f32 %v191, %v1256
  %v1729 = vadd.f32 %v192, %v1261
  %v1730 = vadd.f32 %v193, %v1264
  %v1731 = vadd.f32 %v194, %v1269
  %v1732 = vadd.f32 %v195, %v1272
  %v1733 = vadd.f32 %v196, %v1277
  %v1734 = vadd.f32 %v197, %v1280
  %v1735 = vadd.f32 %v198, %v1285
  %v1736 = vadd.f32 %v199, %v1288
  %v1737 = vadd.f32 %v200, %v1293
  %v1738 = vadd.f32 %v201, %v1296
  %v1739 = vadd.f32 %v202, %v1301
  %v1740 = vadd.f32 %v203, %v1304
  %v1741 = vadd.f32 %v204, %v1309
  %v1742 = vadd.f32 %v205, %v1312
  %v1743 = vadd.f32 %v206, %v1317
  %v1744 = vadd.f32 %v207, %v1320
  %v1745 = vadd.f32 %v208, %v1325
  %v1746 = vadd.f32 %v209, %v1328
  %v1747 = vadd.f32 %v210, %v1333
  %v1748 = vadd.f32 %v211, %v1336
  %v1749 = vadd.f32 %v212, %v1341
  %v1750 = vadd.f32 %v213, %v1344
  %v1751 = vadd.f32 %v214, %v1349
  %v1752 = vadd.f32 %v215, %v1352
  %v1753 = vadd.f32 %v216, %v1357
  %v1754 = vadd.f32 %v217, %v1360
  %v1755 = vadd.f32 %v218, %v1365
  %v1756 = vadd.f32 %v219, %v1368
  %v1757 = vadd.f32 %v220, %v1373
  %v1758 = vadd.f32 %v221, %v1376
  %v1759 = vadd.f32 %v222, %v1381
  %v1760 = vadd.f32 %v223, %v1384
  %v1761 = vadd.f32 %v224, %v1389
  %v1762 = vadd.f32 %v225, %v1392
  %v1763 = vadd.f32 %v226, %v1397
  %v1764 = vadd.f32 %v227, %v1400
  %v1765 = vadd.f32 %v228, %v1405
  %v1766 = vadd.f32 %v229, %v1408
  %v1767 = vadd.f32 %v230, %v1413
  %v1768 = vadd.f32 %v231, %v1416
  %v1769 = vadd.f32 %v232, %v1421
  %v1770 = vadd.f32 %v233, %v1424
  %v1771 = vadd.f32 %v234, %v1429
  %v1772 = vadd.f32 %v235, %v1432
  %v1773 = vadd.f32 %v236, %v1437
  %v1774 = vadd.f32 %v237, %v1440
  %v1775 = vadd.f32 %v238, %v1445
  %v1776 = vadd.f32 %v239, %v1448
  %v1777 = vadd.f32 %v240, %v1453
  %v1778 = vadd.f32 %v241, %v1456
  %v1779 = vadd.f32 %v242, %v1461
  %v1780 = vadd.f32 %v243, %v1464
  %v1781 = vadd.f32 %v244, %v1469
  %v1782 = vadd.f32 %v245, %v1472
  %v1783 = vadd.f32 %v246, %v1477
  %v1784 = vadd.f32 %v247, %v1480
  %v1785 = vadd.f32 %v248, %v1485
  %v1786 = vadd.f32 %v249, %v1488
  %v1787 = vadd.f32 %v250, %v1493
  %v1788 = vadd.f32 %v251, %v1496
  %v1789 = vadd.f32 %v252, %v1501
  %v1790 = vadd.f32 %v253, %v1504
  %v1791 = vadd.f32 %v254, %v1509
  %v1792 = vadd.f32 %v255, %v1512
  %v1793 = vadd.f32 %v256, %v1517
  %v1794 = vadd.f32 %v257, %v1520
  %v1795 = vadd.f32 %v258, %v1525
  %v1796 = vadd.f32 %v259, %v1528
  %v1797 = vadd.f32 %v260, %v1533
  %v1798 = vadd.f32 %v261, %v1536
  %v1799 = vadd.f32 %v262, %v1541
  %v1800 = vadd.f32 %v263, %v1544
  %v1801 = vadd.f32 %v264, %v1549
  %v1802 = vadd.f32 %v265, %v1552
  %v1803 = vadd.f32 %v266, %v1557
  %v1804 = vadd.f32 %v267, %v1560
  %v1805 = vadd.f32 %v268, %v1565
  %v1806 = vadd.f32 %v269, %v1568
  %v1807 = vadd.f32 %v270, %v1573
  %v1808 = vadd.f32 %v271, %v1576
  %v1809 = vadd.f32 %v272, %v1581
  %v1810 = vadd.f32 %v273, %v1584
  %v1811 = vadd.f32 %v274, %v1589
  %v1812 = vadd.f32 %v275, %v1592
  %v1813 = vadd.f32 %v276, %v1597
  %v1814 = vadd.f32 %v277, %v1600
  %v1815 = vadd.f32 %v278, %v1605
  %v1816 = vadd.f32 %v279, %v1608
  %v1817 = vadd.f32 %v280, %v1613
  %v1818 = vadd.f32 %v281, %v1616
  %v1819 = vadd.f32 %v282, %v1621
  %v1820 = vadd.f32 %v283, %v1624
  %v1821 = vadd.f32 %v284, %v1629
  %v1822 = vadd.f32 %v285, %v1632
  %v1823 = vadd.f32 %v286, %v1637
  %v1824 = vadd.f32 %v287, %v1640
  %v1825 = vadd.f32 %v288, %v1645
  %v1826 = vadd.f32 %v289, %v1648
  %v1827 = vadd.f32 %v290, %v1653
  %v1828 = vadd.f32 %v291, %v1656
  %v1829 = vadd.f32 %v292, %v1661
  %v1830 = vadd.f32 %v293, %v1664
  %v1831 = vadd.f32 %v294, %v1669
  %v1832 = vadd.f32 %v295, %v1672
  %v1833 = vadd.f32 %v296, %v1677
  %v1834 = vadd.f32 %v297, %v1680
  %v1835 = vadd.f32 %v298, %v1685
  %v1836 = vadd.f32 %v299, %v1688
  %v1837 = vadd.f32 %v300, %v1693
  %v1838 = vadd.f32 %v301, %v1696
  %v1839 = vadd.f32 %v302, %v1701
  %v1840 = vadd.f32 %v303, %v1704
  %v1841 = vadd.f32 %v304, %v1709
  %v1842 = vadd.f32 %v305, %v1712
  %1843 = vst [vmem:[#allocation2] sm:$0xff] %v1715
  %1844 = vst [vmem:[#allocation2 + $0x8] sm:$0xff] %v1716
  %1845 = vst [vmem:[#allocation2 + $0x10] sm:$0xff] %v1717
  %1846 = vst [vmem:[#allocation2 + $0x18] sm:$0xff] %v1718
  %1847 = vst [vmem:[#allocation2 + $0x20] sm:$0xff] %v1719
  %1848 = vst [vmem:[#allocation2 + $0x28] sm:$0xff] %v1720
  %1849 = vst [vmem:[#allocation2 + $0x30] sm:$0xff] %v1721
  %1850 = vst [vmem:[#allocation2 + $0x38] sm:$0xff] %v1722
  %1851 = vst [vmem:[#allocation2 + $0x40] sm:$0xff] %v1723
  %1852 = vst [vmem:[#allocation2 + $0x48] sm:$0xff] %v1724
  %1853 = vst [vmem:[#allocation2 + $0x50] sm:$0xff] %v1725
  %1854 = vst [vmem:[#allocation2 + $0x58] sm:$0xff] %v1726
  %1855 = vst [vmem:[#allocation2 + $0x60] sm:$0xff] %v1727
  %1856 = vst [vmem:[#allocation2 + $0x68] sm:$0xff] %v1728
  %1857 = vst [vmem:[#allocation2 + $0x70] sm:$0xff] %v1729
  %1858 = vst [vmem:[#allocation2 + $0x78] sm:$0xff] %v1730
  %1859 = vst [vmem:[#allocation2 + $0x80] sm:$0xff] %v1731
  %1860 = vst [vmem:[#allocation2 + $0x88] sm:$0xff] %v1732
  %1861 = vst [vmem:[#allocation2 + $0x90] sm:$0xff] %v1733
  %1862 = vst [vmem:[#allocation2 + $0x98] sm:$0xff] %v1734
  %1863 = vst [vmem:[#allocation2 + $0xa0] sm:$0xff] %v1735
  %1864 = vst [vmem:[#allocation2 + $0xa8] sm:$0xff] %v1736
  %1865 = vst [vmem:[#allocation2 + $0xb0] sm:$0xff] %v1737
  %1866 = vst [vmem:[#allocation2 + $0xb8] sm:$0xff] %v1738
  %1867 = vst [vmem:[#allocation2 + $0xc0] sm:$0xff] %v1739
  %1868 = vst [vmem:[#allocation2 + $0xc8] sm:$0xff] %v1740
  %1869 = vst [vmem:[#allocation2 + $0xd0] sm:$0xff] %v1741
  %1870 = vst [vmem:[#allocation2 + $0xd8] sm:$0xff] %v1742
  %1871 = vst [vmem:[#allocation2 + $0xe0] sm:$0xff] %v1743
  %1872 = vst [vmem:[#allocation2 + $0xe8] sm:$0xff] %v1744
  %1873 = vst [vmem:[#allocation2 + $0xf0] sm:$0xff] %v1745
  %1874 = vst [vmem:[#allocation2 + $0xf8] sm:$0xff] %v1746
  %1875 = vst [vmem:[#allocation2 + $0x100] sm:$0xff] %v1747
  %1876 = vst [vmem:[#allocation2 + $0x108] sm:$0xff] %v1748
  %1877 = vst [vmem:[#allocation2 + $0x110] sm:$0xff] %v1749
  %1878 = vst [vmem:[#allocation2 + $0x118] sm:$0xff] %v1750
  %1879 = vst [vmem:[#allocation2 + $0x120] sm:$0xff] %v1751
  %1880 = vst [vmem:[#allocation2 + $0x128] sm:$0xff] %v1752
  %1881 = vst [vmem:[#allocation2 + $0x130] sm:$0xff] %v1753
  %1882 = vst [vmem:[#allocation2 + $0x138] sm:$0xff] %v1754
  %1883 = vst [vmem:[#allocation2 + $0x140] sm:$0xff] %v1755
  %1884 = vst [vmem:[#allocation2 + $0x148] sm:$0xff] %v1756
  %1885 = vst [vmem:[#allocation2 + $0x150] sm:$0xff] %v1757
  %1886 = vst [vmem:[#allocation2 + $0x158] sm:$0xff] %v1758
  %1887 = vst [vmem:[#allocation2 + $0x160] sm:$0xff] %v1759
  %1888 = vst [vmem:[#allocation2 + $0x168] sm:$0xff] %v1760
  %1889 = vst [vmem:[#allocation2 + $0x170] sm:$0xff] %v1761
  %1890 = vst [vmem:[#allocation2 + $0x178] sm:$0xff] %v1762
  %1891 = vst [vmem:[#allocation2 + $0x180] sm:$0xff] %v1763
  %1892 = vst [vmem:[#allocation2 + $0x188] sm:$0xff] %v1764
  %1893 = vst [vmem:[#allocation2 + $0x190] sm:$0xff] %v1765
  %1894 = vst [vmem:[#allocation2 + $0x198] sm:$0xff] %v1766
  %1895 = vst [vmem:[#allocation2 + $0x1a0] sm:$0xff] %v1767
  %1896 = vst [vmem:[#allocation2 + $0x1a8] sm:$0xff] %v1768
  %1897 = vst [vmem:[#allocation2 + $0x1b0] sm:$0xff] %v1769
  %1898 = vst [vmem:[#allocation2 + $0x1b8] sm:$0xff] %v1770
  %1899 = vst [vmem:[#allocation2 + $0x1c0] sm:$0xff] %v1771
  %1900 = vst [vmem:[#allocation2 + $0x1c8] sm:$0xff] %v1772
  %1901 = vst [vmem:[#allocation2 + $0x1d0] sm:$0xff] %v1773
  %1902 = vst [vmem:[#allocation2 + $0x1d8] sm:$0xff] %v1774
  %1903 = vst [vmem:[#allocation2 + $0x1e0] sm:$0xff] %v1775
  %1904 = vst [vmem:[#allocation2 + $0x1e8] sm:$0xff] %v1776
  %1905 = vst [vmem:[#allocation2 + $0x1f0] sm:$0xff] %v1777
  %1906 = vst [vmem:[#allocation2 + $0x1f8] sm:$0xff] %v1778
  %1907 = vst [vmem:[#allocation2 + $0x200] sm:$0xff] %v1779
  %1908 = vst [vmem:[#allocation2 + $0x208] sm:$0xff] %v1780
  %1909 = vst [vmem:[#allocation2 + $0x210] sm:$0xff] %v1781
  %1910 = vst [vmem:[#allocation2 + $0x218] sm:$0xff] %v1782
  %1911 = vst [vmem:[#allocation2 + $0x220] sm:$0xff] %v1783
  %1912 = vst [vmem:[#allocation2 + $0x228] sm:$0xff] %v1784
  %1913 = vst [vmem:[#allocation2 + $0x230] sm:$0xff] %v1785
  %1914 = vst [vmem:[#allocation2 + $0x238] sm:$0xff] %v1786
  %1915 = vst [vmem:[#allocation2 + $0x240] sm:$0xff] %v1787
  %1916 = vst [vmem:[#allocation2 + $0x248] sm:$0xff] %v1788
  %1917 = vst [vmem:[#allocation2 + $0x250] sm:$0xff] %v1789
  %1918 = vst [vmem:[#allocation2 + $0x258] sm:$0xff] %v1790
  %1919 = vst [vmem:[#allocation2 + $0x260] sm:$0xff] %v1791
  %1920 = vst [vmem:[#allocation2 + $0x268] sm:$0xff] %v1792
  %1921 = vst [vmem:[#allocation2 + $0x270] sm:$0xff] %v1793
  %1922 = vst [vmem:[#allocation2 + $0x278] sm:$0xff] %v1794
  %1923 = vst [vmem:[#allocation2 + $0x280] sm:$0xff] %v1795
  %1924 = vst [vmem:[#allocation2 + $0x288] sm:$0xff] %v1796
  %1925 = vst [vmem:[#allocation2 + $0x290] sm:$0xff] %v1797
  %1926 = vst [vmem:[#allocation2 + $0x298] sm:$0xff] %v1798
  %1927 = vst [vmem:[#allocation2 + $0x2a0] sm:$0xff] %v1799
  %1928 = vst [vmem:[#allocation2 + $0x2a8] sm:$0xff] %v1800
  %1929 = vst [vmem:[#allocation2 + $0x2b0] sm:$0xff] %v1801
  %1930 = vst [vmem:[#allocation2 + $0x2b8] sm:$0xff] %v1802
  %1931 = vst [vmem:[#allocation2 + $0x2c0] sm:$0xff] %v1803
  %1932 = vst [vmem:[#allocation2 + $0x2c8] sm:$0xff] %v1804
  %1933 = vst [vmem:[#allocation2 + $0x2d0] sm:$0xff] %v1805
  %1934 = vst [vmem:[#allocation2 + $0x2d8] sm:$0xff] %v1806
  %1935 = vst [vmem:[#allocation2 + $0x2e0] sm:$0xff] %v1807
  %1936 = vst [vmem:[#allocation2 + $0x2e8] sm:$0xff] %v1808
  %1937 = vst [vmem:[#allocation2 + $0x2f0] sm:$0xff] %v1809
  %1938 = vst [vmem:[#allocation2 + $0x2f8] sm:$0xff] %v1810
  %1939 = vst [vmem:[#allocation2 + $0x300] sm:$0xff] %v1811
  %1940 = vst [vmem:[#allocation2 + $0x308] sm:$0xff] %v1812
  %1941 = vst [vmem:[#allocation2 + $0x310] sm:$0xff] %v1813
  %1942 = vst [vmem:[#allocation2 + $0x318] sm:$0xff] %v1814
  %1943 = vst [vmem:[#allocation2 + $0x320] sm:$0xff] %v1815
  %1944 = vst [vmem:[#allocation2 + $0x328] sm:$0xff] %v1816
  %1945 = vst [vmem:[#allocation2 + $0x330] sm:$0xff] %v1817
  %1946 = vst [vmem:[#allocation2 + $0x338] sm:$0xff] %v1818
  %1947 = vst [vmem:[#allocation2 + $0x340] sm:$0xff] %v1819
  %1948 = vst [vmem:[#allocation2 + $0x348] sm:$0xff] %v1820
  %1949 = vst [vmem:[#allocation2 + $0x350] sm:$0xff] %v1821
  %1950 = vst [vmem:[#allocation2 + $0x358] sm:$0xff] %v1822
  %1951 = vst [vmem:[#allocation2 + $0x360] sm:$0xff] %v1823
  %1952 = vst [vmem:[#allocation2 + $0x368] sm:$0xff] %v1824
  %1953 = vst [vmem:[#allocation2 + $0x370] sm:$0xff] %v1825
  %1954 = vst [vmem:[#allocation2 + $0x378] sm:$0xff] %v1826
  %1955 = vst [vmem:[#allocation2 + $0x380] sm:$0xff] %v1827
  %1956 = vst [vmem:[#allocation2 + $0x388] sm:$0xff] %v1828
  %1957 = vst [vmem:[#allocation2 + $0x390] sm:$0xff] %v1829
  %1958 = vst [vmem:[#allocation2 + $0x398] sm:$0xff] %v1830
  %1959 = vst [vmem:[#allocation2 + $0x3a0] sm:$0xff] %v1831
  %1960 = vst [vmem:[#allocation2 + $0x3a8] sm:$0xff] %v1832
  %1961 = vst [vmem:[#allocation2 + $0x3b0] sm:$0xff] %v1833
  %1962 = vst [vmem:[#allocation2 + $0x3b8] sm:$0xff] %v1834
  %1963 = vst [vmem:[#allocation2 + $0x3c0] sm:$0xff] %v1835
  %1964 = vst [vmem:[#allocation2 + $0x3c8] sm:$0xff] %v1836
  %1965 = vst [vmem:[#allocation2 + $0x3d0] sm:$0xff] %v1837
  %1966 = vst [vmem:[#allocation2 + $0x3d8] sm:$0xff] %v1838
  %1967 = vst [vmem:[#allocation2 + $0x3e0] sm:$0xff] %v1839
  %1968 = vst [vmem:[#allocation2 + $0x3e8] sm:$0xff] %v1840
  %1969 = vst [vmem:[#allocation2 + $0x3f0] sm:$0xff] %v1841
  %1970 = vst [vmem:[#allocation2 + $0x3f8] sm:$0xff] %v1842
  // Predicated region
  $region14: #{temporal_video_discriminator_forward.4} parent=0 // pred_check
    %p1971 = pneg %p14
  $region15: #{temporal_video_discriminator_forward.4} parent=0 // pred_check_branch
    %1973 = sbr.rel (%p1971) target = $region17
  $region16: #{temporal_video_discriminator_forward.4} parent=0 // pred_region
    %v1974 = vld [vmem:[#allocation2] sm:$0xff]
    %v1975 = vld [vmem:[#allocation2 + $0x8] sm:$0xff]
    %v1976 = vld [vmem:[#allocation2 + $0x10] sm:$0xff]
    %v1977 = vld [vmem:[#allocation2 + $0x18] sm:$0xff]
    %v1978 = vld [vmem:[#allocation2 + $0x20] sm:$0xff]
    %v1979 = vld [vmem:[#allocation2 + $0x28] sm:$0xff]
    %v1980 = vld [vmem:[#allocation2 + $0x30] sm:$0xff]
    %v1981 = vld [vmem:[#allocation2 + $0x38] sm:$0xff]
    %v1982 = vld [vmem:[#allocation2 + $0x40] sm:$0xff]
    %v1983 = vld [vmem:[#allocation2 + $0x48] sm:$0xff]
    %v1984 = vld [vmem:[#allocation2 + $0x50] sm:$0xff]
    %v1985 = vld [vmem:[#allocation2 + $0x58] sm:$0xff]
    %v1986 = vld [vmem:[#allocation2 + $0x60] sm:$0xff]
    %v1987 = vld [vmem:[#allocation2 + $0x68] sm:$0xff]
    %v1988 = vld [vmem:[#allocation2 + $0x70] sm:$0xff]
    %v1989 = vld [vmem:[#allocation2 + $0x78] sm:$0xff]
    %v1990 = vld [vmem:[#allocation2 + $0x80] sm:$0xff]
    %v1991 = vld [vmem:[#allocation2 + $0x88] sm:$0xff]
    %v1992 = vld [vmem:[#allocation2 + $0x90] sm:$0xff]
    %v1993 = vld [vmem:[#allocation2 + $0x98] sm:$0xff]
    %v1994 = vld [vmem:[#allocation2 + $0xa0] sm:$0xff]
    %v1995 = vld [vmem:[#allocation2 + $0xa8] sm:$0xff]
    %v1996 = vld [vmem:[#allocation2 + $0xb0] sm:$0xff]
    %v1997 = vld [vmem:[#allocation2 + $0xb8] sm:$0xff]
    %v1998 = vld [vmem:[#allocation2 + $0xc0] sm:$0xff]
    %v1999 = vld [vmem:[#allocation2 + $0xc8] sm:$0xff]
    %v2000 = vld [vmem:[#allocation2 + $0xd0] sm:$0xff]
    %v2001 = vld [vmem:[#allocation2 + $0xd8] sm:$0xff]
    %v2002 = vld [vmem:[#allocation2 + $0xe0] sm:$0xff]
    %v2003 = vld [vmem:[#allocation2 + $0xe8] sm:$0xff]
    %v2004 = vld [vmem:[#allocation2 + $0xf0] sm:$0xff]
    %v2005 = vld [vmem:[#allocation2 + $0xf8] sm:$0xff]
    %v2006 = vld [vmem:[#allocation2 + $0x100] sm:$0xff]
    %v2007 = vld [vmem:[#allocation2 + $0x108] sm:$0xff]
    %v2008 = vld [vmem:[#allocation2 + $0x110] sm:$0xff]
    %v2009 = vld [vmem:[#allocation2 + $0x118] sm:$0xff]
    %v2010 = vld [vmem:[#allocation2 + $0x120] sm:$0xff]
    %v2011 = vld [vmem:[#allocation2 + $0x128] sm:$0xff]
    %v2012 = vld [vmem:[#allocation2 + $0x130] sm:$0xff]
    %v2013 = vld [vmem:[#allocation2 + $0x138] sm:$0xff]
    %v2014 = vld [vmem:[#allocation2 + $0x140] sm:$0xff]
    %v2015 = vld [vmem:[#allocation2 + $0x148] sm:$0xff]
    %v2016 = vld [vmem:[#allocation2 + $0x150] sm:$0xff]
    %v2017 = vld [vmem:[#allocation2 + $0x158] sm:$0xff]
    %v2018 = vld [vmem:[#allocation2 + $0x160] sm:$0xff]
    %v2019 = vld [vmem:[#allocation2 + $0x168] sm:$0xff]
    %v2020 = vld [vmem:[#allocation2 + $0x170] sm:$0xff]
    %v2021 = vld [vmem:[#allocation2 + $0x178] sm:$0xff]
    %v2022 = vld [vmem:[#allocation2 + $0x180] sm:$0xff]
    %v2023 = vld [vmem:[#allocation2 + $0x188] sm:$0xff]
    %v2024 = vld [vmem:[#allocation2 + $0x190] sm:$0xff]
    %v2025 = vld [vmem:[#allocation2 + $0x198] sm:$0xff]
    %v2026 = vld [vmem:[#allocation2 + $0x1a0] sm:$0xff]
    %v2027 = vld [vmem:[#allocation2 + $0x1a8] sm:$0xff]
    %v2028 = vld [vmem:[#allocation2 + $0x1b0] sm:$0xff]
    %v2029 = vld [vmem:[#allocation2 + $0x1b8] sm:$0xff]
    %v2030 = vld [vmem:[#allocation2 + $0x1c0] sm:$0xff]
    %v2031 = vld [vmem:[#allocation2 + $0x1c8] sm:$0xff]
    %v2032 = vld [vmem:[#allocation2 + $0x1d0] sm:$0xff]
    %v2033 = vld [vmem:[#allocation2 + $0x1d8] sm:$0xff]
    %v2034 = vld [vmem:[#allocation2 + $0x1e0] sm:$0xff]
    %v2035 = vld [vmem:[#allocation2 + $0x1e8] sm:$0xff]
    %v2036 = vld [vmem:[#allocation2 + $0x1f0] sm:$0xff]
    %v2037 = vld [vmem:[#allocation2 + $0x1f8] sm:$0xff]
    %v2038 = vld [vmem:[#allocation2 + $0x200] sm:$0xff]
    %v2039 = vld [vmem:[#allocation2 + $0x208] sm:$0xff]
    %v2040 = vld [vmem:[#allocation2 + $0x210] sm:$0xff]
    %v2041 = vld [vmem:[#allocation2 + $0x218] sm:$0xff]
    %v2042 = vld [vmem:[#allocation2 + $0x220] sm:$0xff]
    %v2043 = vld [vmem:[#allocation2 + $0x228] sm:$0xff]
    %v2044 = vld [vmem:[#allocation2 + $0x230] sm:$0xff]
    %v2045 = vld [vmem:[#allocation2 + $0x238] sm:$0xff]
    %v2046 = vld [vmem:[#allocation2 + $0x240] sm:$0xff]
    %v2047 = vld [vmem:[#allocation2 + $0x248] sm:$0xff]
    %v2048 = vld [vmem:[#allocation2 + $0x250] sm:$0xff]
    %v2049 = vld [vmem:[#allocation2 + $0x258] sm:$0xff]
    %v2050 = vld [vmem:[#allocation2 + $0x260] sm:$0xff]
    %v2051 = vld [vmem:[#allocation2 + $0x268] sm:$0xff]
    %v2052 = vld [vmem:[#allocation2 + $0x270] sm:$0xff]
    %v2053 = vld [vmem:[#allocation2 + $0x278] sm:$0xff]
    %v2054 = vld [vmem:[#allocation2 + $0x280] sm:$0xff]
    %v2055 = vld [vmem:[#allocation2 + $0x288] sm:$0xff]
    %v2056 = vld [vmem:[#allocation2 + $0x290] sm:$0xff]
    %v2057 = vld [vmem:[#allocation2 + $0x298] sm:$0xff]
    %v2058 = vld [vmem:[#allocation2 + $0x2a0] sm:$0xff]
    %v2059 = vld [vmem:[#allocation2 + $0x2a8] sm:$0xff]
    %v2060 = vld [vmem:[#allocation2 + $0x2b0] sm:$0xff]
    %v2061 = vld [vmem:[#allocation2 + $0x2b8] sm:$0xff]
    %v2062 = vld [vmem:[#allocation2 + $0x2c0] sm:$0xff]
    %v2063 = vld [vmem:[#allocation2 + $0x2c8] sm:$0xff]
    %v2064 = vld [vmem:[#allocation2 + $0x2d0] sm:$0xff]
    %v2065 = vld [vmem:[#allocation2 + $0x2d8] sm:$0xff]
    %v2066 = vld [vmem:[#allocation2 + $0x2e0] sm:$0xff]
    %v2067 = vld [vmem:[#allocation2 + $0x2e8] sm:$0xff]
    %v2068 = vld [vmem:[#allocation2 + $0x2f0] sm:$0xff]
    %v2069 = vld [vmem:[#allocation2 + $0x2f8] sm:$0xff]
    %v2070 = vld [vmem:[#allocation2 + $0x300] sm:$0xff]
    %v2071 = vld [vmem:[#allocation2 + $0x308] sm:$0xff]
    %v2072 = vld [vmem:[#allocation2 + $0x310] sm:$0xff]
    %v2073 = vld [vmem:[#allocation2 + $0x318] sm:$0xff]
    %v2074 = vld [vmem:[#allocation2 + $0x320] sm:$0xff]
    %v2075 = vld [vmem:[#allocation2 + $0x328] sm:$0xff]
    %v2076 = vld [vmem:[#allocation2 + $0x330] sm:$0xff]
    %v2077 = vld [vmem:[#allocation2 + $0x338] sm:$0xff]
    %v2078 = vld [vmem:[#allocation2 + $0x340] sm:$0xff]
    %v2079 = vld [vmem:[#allocation2 + $0x348] sm:$0xff]
    %v2080 = vld [vmem:[#allocation2 + $0x350] sm:$0xff]
    %v2081 = vld [vmem:[#allocation2 + $0x358] sm:$0xff]
    %v2082 = vld [vmem:[#allocation2 + $0x360] sm:$0xff]
    %v2083 = vld [vmem:[#allocation2 + $0x368] sm:$0xff]
    %v2084 = vld [vmem:[#allocation2 + $0x370] sm:$0xff]
    %v2085 = vld [vmem:[#allocation2 + $0x378] sm:$0xff]
    %v2086 = vld [vmem:[#allocation2 + $0x380] sm:$0xff]
    %v2087 = vld [vmem:[#allocation2 + $0x388] sm:$0xff]
    %v2088 = vld [vmem:[#allocation2 + $0x390] sm:$0xff]
    %v2089 = vld [vmem:[#allocation2 + $0x398] sm:$0xff]
    %v2090 = vld [vmem:[#allocation2 + $0x3a0] sm:$0xff]
    %v2091 = vld [vmem:[#allocation2 + $0x3a8] sm:$0xff]
    %v2092 = vld [vmem:[#allocation2 + $0x3b0] sm:$0xff]
    %v2093 = vld [vmem:[#allocation2 + $0x3b8] sm:$0xff]
    %v2094 = vld [vmem:[#allocation2 + $0x3c0] sm:$0xff]
    %v2095 = vld [vmem:[#allocation2 + $0x3c8] sm:$0xff]
    %v2096 = vld [vmem:[#allocation2 + $0x3d0] sm:$0xff]
    %v2097 = vld [vmem:[#allocation2 + $0x3d8] sm:$0xff]
    %v2098 = vld [vmem:[#allocation2 + $0x3e0] sm:$0xff]
    %v2099 = vld [vmem:[#allocation2 + $0x3e8] sm:$0xff]
    %v2100 = vld [vmem:[#allocation2 + $0x3f0] sm:$0xff]
    %v2101 = vld [vmem:[#allocation2 + $0x3f8] sm:$0xff]
    %v2102 = vpack.c.bf16 %v1975, %v1974
    %v2103 = vpack.c.bf16 %v1977, %v1976
    %v2104 = vpack.c.bf16 %v1979, %v1978
    %v2105 = vpack.c.bf16 %v1981, %v1980
    %v2106 = vpack.c.bf16 %v1983, %v1982
    %v2107 = vpack.c.bf16 %v1985, %v1984
    %v2108 = vpack.c.bf16 %v1987, %v1986
    %v2109 = vpack.c.bf16 %v1989, %v1988
    %v2110 = vpack.c.bf16 %v1991, %v1990
    %v2111 = vpack.c.bf16 %v1993, %v1992
    %v2112 = vpack.c.bf16 %v1995, %v1994
    %v2113 = vpack.c.bf16 %v1997, %v1996
    %v2114 = vpack.c.bf16 %v1999, %v1998
    %v2115 = vpack.c.bf16 %v2001, %v2000
    %v2116 = vpack.c.bf16 %v2003, %v2002
    %v2117 = vpack.c.bf16 %v2005, %v2004
    %v2118 = vpack.c.bf16 %v2007, %v2006
    %v2119 = vpack.c.bf16 %v2009, %v2008
    %v2120 = vpack.c.bf16 %v2011, %v2010
    %v2121 = vpack.c.bf16 %v2013, %v2012
    %v2122 = vpack.c.bf16 %v2015, %v2014
    %v2123 = vpack.c.bf16 %v2017, %v2016
    %v2124 = vpack.c.bf16 %v2019, %v2018
    %v2125 = vpack.c.bf16 %v2021, %v2020
    %v2126 = vpack.c.bf16 %v2023, %v2022
    %v2127 = vpack.c.bf16 %v2025, %v2024
    %v2128 = vpack.c.bf16 %v2027, %v2026
    %v2129 = vpack.c.bf16 %v2029, %v2028
    %v2130 = vpack.c.bf16 %v2031, %v2030
    %v2131 = vpack.c.bf16 %v2033, %v2032
    %v2132 = vpack.c.bf16 %v2035, %v2034
    %v2133 = vpack.c.bf16 %v2037, %v2036
    %v2134 = vpack.c.bf16 %v2039, %v2038
    %v2135 = vpack.c.bf16 %v2041, %v2040
    %v2136 = vpack.c.bf16 %v2043, %v2042
    %v2137 = vpack.c.bf16 %v2045, %v2044
    %v2138 = vpack.c.bf16 %v2047, %v2046
    %v2139 = vpack.c.bf16 %v2049, %v2048
    %v2140 = vpack.c.bf16 %v2051, %v2050
    %v2141 = vpack.c.bf16 %v2053, %v2052
    %v2142 = vpack.c.bf16 %v2055, %v2054
    %v2143 = vpack.c.bf16 %v2057, %v2056
    %v2144 = vpack.c.bf16 %v2059, %v2058
    %v2145 = vpack.c.bf16 %v2061, %v2060
    %v2146 = vpack.c.bf16 %v2063, %v2062
    %v2147 = vpack.c.bf16 %v2065, %v2064
    %v2148 = vpack.c.bf16 %v2067, %v2066
    %v2149 = vpack.c.bf16 %v2069, %v2068
    %v2150 = vpack.c.bf16 %v2071, %v2070
    %v2151 = vpack.c.bf16 %v2073, %v2072
    %v2152 = vpack.c.bf16 %v2075, %v2074
    %v2153 = vpack.c.bf16 %v2077, %v2076
    %v2154 = vpack.c.bf16 %v2079, %v2078
    %v2155 = vpack.c.bf16 %v2081, %v2080
    %v2156 = vpack.c.bf16 %v2083, %v2082
    %v2157 = vpack.c.bf16 %v2085, %v2084
    %v2158 = vpack.c.bf16 %v2087, %v2086
    %v2159 = vpack.c.bf16 %v2089, %v2088
    %v2160 = vpack.c.bf16 %v2091, %v2090
    %v2161 = vpack.c.bf16 %v2093, %v2092
    %v2162 = vpack.c.bf16 %v2095, %v2094
    %v2163 = vpack.c.bf16 %v2097, %v2096
    %v2164 = vpack.c.bf16 %v2099, %v2098
    %v2165 = vpack.c.bf16 %v2101, %v2100
    %v2230 = vunpack.c.l.b16 %v2102
    %v2231 = vunpack.c.h.b16 %v2102
    %v2232 = vunpack.c.l.b16 %v2103
    %v2233 = vunpack.c.h.b16 %v2103
    %v2234 = vunpack.c.l.b16 %v2104
    %v2235 = vunpack.c.h.b16 %v2104
    %v2236 = vunpack.c.l.b16 %v2105
    %v2237 = vunpack.c.h.b16 %v2105
    %v2238 = vunpack.c.l.b16 %v2106
    %v2239 = vunpack.c.h.b16 %v2106
    %v2240 = vunpack.c.l.b16 %v2107
    %v2241 = vunpack.c.h.b16 %v2107
    %v2242 = vunpack.c.l.b16 %v2108
    %v2243 = vunpack.c.h.b16 %v2108
    %v2244 = vunpack.c.l.b16 %v2109
    %v2245 = vunpack.c.h.b16 %v2109
    %v2246 = vunpack.c.l.b16 %v2110
    %v2247 = vunpack.c.h.b16 %v2110
    %v2248 = vunpack.c.l.b16 %v2111
    %v2249 = vunpack.c.h.b16 %v2111
    %v2250 = vunpack.c.l.b16 %v2112
    %v2251 = vunpack.c.h.b16 %v2112
    %v2252 = vunpack.c.l.b16 %v2113
    %v2253 = vunpack.c.h.b16 %v2113
    %v2254 = vunpack.c.l.b16 %v2114
    %v2255 = vunpack.c.h.b16 %v2114
    %v2256 = vunpack.c.l.b16 %v2115
    %v2257 = vunpack.c.h.b16 %v2115
    %v2258 = vunpack.c.l.b16 %v2116
    %v2259 = vunpack.c.h.b16 %v2116
    %v2260 = vunpack.c.l.b16 %v2117
    %v2261 = vunpack.c.h.b16 %v2117
    %v2262 = vunpack.c.l.b16 %v2118
    %v2263 = vunpack.c.h.b16 %v2118
    %v2264 = vunpack.c.l.b16 %v2119
    %v2265 = vunpack.c.h.b16 %v2119
    %v2266 = vunpack.c.l.b16 %v2120
    %v2267 = vunpack.c.h.b16 %v2120
    %v2268 = vunpack.c.l.b16 %v2121
    %v2269 = vunpack.c.h.b16 %v2121
    %v2270 = vunpack.c.l.b16 %v2122
    %v2271 = vunpack.c.h.b16 %v2122
    %v2272 = vunpack.c.l.b16 %v2123
    %v2273 = vunpack.c.h.b16 %v2123
    %v2274 = vunpack.c.l.b16 %v2124
    %v2275 = vunpack.c.h.b16 %v2124
    %v2276 = vunpack.c.l.b16 %v2125
    %v2277 = vunpack.c.h.b16 %v2125
    %v2278 = vunpack.c.l.b16 %v2126
    %v2279 = vunpack.c.h.b16 %v2126
    %v2280 = vunpack.c.l.b16 %v2127
    %v2281 = vunpack.c.h.b16 %v2127
    %v2282 = vunpack.c.l.b16 %v2128
    %v2283 = vunpack.c.h.b16 %v2128
    %v2284 = vunpack.c.l.b16 %v2129
    %v2285 = vunpack.c.h.b16 %v2129
    %v2286 = vunpack.c.l.b16 %v2130
    %v2287 = vunpack.c.h.b16 %v2130
    %v2288 = vunpack.c.l.b16 %v2131
    %v2289 = vunpack.c.h.b16 %v2131
    %v2290 = vunpack.c.l.b16 %v2132
    %v2291 = vunpack.c.h.b16 %v2132
    %v2292 = vunpack.c.l.b16 %v2133
    %v2293 = vunpack.c.h.b16 %v2133
    %v2294 = vunpack.c.l.b16 %v2134
    %v2295 = vunpack.c.h.b16 %v2134
    %v2296 = vunpack.c.l.b16 %v2135
    %v2297 = vunpack.c.h.b16 %v2135
    %v2298 = vunpack.c.l.b16 %v2136
    %v2299 = vunpack.c.h.b16 %v2136
    %v2300 = vunpack.c.l.b16 %v2137
    %v2301 = vunpack.c.h.b16 %v2137
    %v2302 = vunpack.c.l.b16 %v2138
    %v2303 = vunpack.c.h.b16 %v2138
    %v2304 = vunpack.c.l.b16 %v2139
    %v2305 = vunpack.c.h.b16 %v2139
    %v2306 = vunpack.c.l.b16 %v2140
    %v2307 = vunpack.c.h.b16 %v2140
    %v2308 = vunpack.c.l.b16 %v2141
    %v2309 = vunpack.c.h.b16 %v2141
    %v2310 = vunpack.c.l.b16 %v2142
    %v2311 = vunpack.c.h.b16 %v2142
    %v2312 = vunpack.c.l.b16 %v2143
    %v2313 = vunpack.c.h.b16 %v2143
    %v2314 = vunpack.c.l.b16 %v2144
    %v2315 = vunpack.c.h.b16 %v2144
    %v2316 = vunpack.c.l.b16 %v2145
    %v2317 = vunpack.c.h.b16 %v2145
    %v2318 = vunpack.c.l.b16 %v2146
    %v2319 = vunpack.c.h.b16 %v2146
    %v2320 = vunpack.c.l.b16 %v2147
    %v2321 = vunpack.c.h.b16 %v2147
    %v2322 = vunpack.c.l.b16 %v2148
    %v2323 = vunpack.c.h.b16 %v2148
    %v2324 = vunpack.c.l.b16 %v2149
    %v2325 = vunpack.c.h.b16 %v2149
    %v2326 = vunpack.c.l.b16 %v2150
    %v2327 = vunpack.c.h.b16 %v2150
    %v2328 = vunpack.c.l.b16 %v2151
    %v2329 = vunpack.c.h.b16 %v2151
    %v2330 = vunpack.c.l.b16 %v2152
    %v2331 = vunpack.c.h.b16 %v2152
    %v2332 = vunpack.c.l.b16 %v2153
    %v2333 = vunpack.c.h.b16 %v2153
    %v2334 = vunpack.c.l.b16 %v2154
    %v2335 = vunpack.c.h.b16 %v2154
    %v2336 = vunpack.c.l.b16 %v2155
    %v2337 = vunpack.c.h.b16 %v2155
    %v2338 = vunpack.c.l.b16 %v2156
    %v2339 = vunpack.c.h.b16 %v2156
    %v2340 = vunpack.c.l.b16 %v2157
    %v2341 = vunpack.c.h.b16 %v2157
    %v2342 = vunpack.c.l.b16 %v2158
    %v2343 = vunpack.c.h.b16 %v2158
    %v2344 = vunpack.c.l.b16 %v2159
    %v2345 = vunpack.c.h.b16 %v2159
    %v2346 = vunpack.c.l.b16 %v2160
    %v2347 = vunpack.c.h.b16 %v2160
    %v2348 = vunpack.c.l.b16 %v2161
    %v2349 = vunpack.c.h.b16 %v2161
    %v2350 = vunpack.c.l.b16 %v2162
    %v2351 = vunpack.c.h.b16 %v2162
    %v2352 = vunpack.c.l.b16 %v2163
    %v2353 = vunpack.c.h.b16 %v2163
    %v2354 = vunpack.c.l.b16 %v2164
    %v2355 = vunpack.c.h.b16 %v2164
    %v2356 = vunpack.c.l.b16 %v2165
    %v2357 = vunpack.c.h.b16 %v2165
    %v2358 = vpack.c.b16 %v2230, %v2230
    %v2359 = vpack.c.b16 %v2231, %v2231
    %v2360 = vpack.c.b16 %v2232, %v2232
    %v2361 = vpack.c.b16 %v2233, %v2233
    %v2362 = vpack.c.b16 %v2234, %v2234
    %v2363 = vpack.c.b16 %v2235, %v2235
    %v2364 = vpack.c.b16 %v2236, %v2236
    %v2365 = vpack.c.b16 %v2237, %v2237
    %v2366 = vpack.c.b16 %v2238, %v2238
    %v2367 = vpack.c.b16 %v2239, %v2239
    %v2368 = vpack.c.b16 %v2240, %v2240
    %v2369 = vpack.c.b16 %v2241, %v2241
    %v2370 = vpack.c.b16 %v2242, %v2242
    %v2371 = vpack.c.b16 %v2243, %v2243
    %v2372 = vpack.c.b16 %v2244, %v2244
    %v2373 = vpack.c.b16 %v2245, %v2245
    %v2374 = vpack.c.b16 %v2246, %v2246
    %v2375 = vpack.c.b16 %v2247, %v2247
    %v2376 = vpack.c.b16 %v2248, %v2248
    %v2377 = vpack.c.b16 %v2249, %v2249
    %v2378 = vpack.c.b16 %v2250, %v2250
    %v2379 = vpack.c.b16 %v2251, %v2251
    %v2380 = vpack.c.b16 %v2252, %v2252
    %v2381 = vpack.c.b16 %v2253, %v2253
    %v2382 = vpack.c.b16 %v2254, %v2254
    %v2383 = vpack.c.b16 %v2255, %v2255
    %v2384 = vpack.c.b16 %v2256, %v2256
    %v2385 = vpack.c.b16 %v2257, %v2257
    %v2386 = vpack.c.b16 %v2258, %v2258
    %v2387 = vpack.c.b16 %v2259, %v2259
    %v2388 = vpack.c.b16 %v2260, %v2260
    %v2389 = vpack.c.b16 %v2261, %v2261
    %v2390 = vpack.c.b16 %v2262, %v2262
    %v2391 = vpack.c.b16 %v2263, %v2263
    %v2392 = vpack.c.b16 %v2264, %v2264
    %v2393 = vpack.c.b16 %v2265, %v2265
    %v2394 = vpack.c.b16 %v2266, %v2266
    %v2395 = vpack.c.b16 %v2267, %v2267
    %v2396 = vpack.c.b16 %v2268, %v2268
    %v2397 = vpack.c.b16 %v2269, %v2269
    %v2398 = vpack.c.b16 %v2270, %v2270
    %v2399 = vpack.c.b16 %v2271, %v2271
    %v2400 = vpack.c.b16 %v2272, %v2272
    %v2401 = vpack.c.b16 %v2273, %v2273
    %v2402 = vpack.c.b16 %v2274, %v2274
    %v2403 = vpack.c.b16 %v2275, %v2275
    %v2404 = vpack.c.b16 %v2276, %v2276
    %v2405 = vpack.c.b16 %v2277, %v2277
    %v2406 = vpack.c.b16 %v2278, %v2278
    %v2407 = vpack.c.b16 %v2279, %v2279
    %v2408 = vpack.c.b16 %v2280, %v2280
    %v2409 = vpack.c.b16 %v2281, %v2281
    %v2410 = vpack.c.b16 %v2282, %v2282
    %v2411 = vpack.c.b16 %v2283, %v2283
    %v2412 = vpack.c.b16 %v2284, %v2284
    %v2413 = vpack.c.b16 %v2285, %v2285
    %v2414 = vpack.c.b16 %v2286, %v2286
    %v2415 = vpack.c.b16 %v2287, %v2287
    %v2416 = vpack.c.b16 %v2288, %v2288
    %v2417 = vpack.c.b16 %v2289, %v2289
    %v2418 = vpack.c.b16 %v2290, %v2290
    %v2419 = vpack.c.b16 %v2291, %v2291
    %v2420 = vpack.c.b16 %v2292, %v2292
    %v2421 = vpack.c.b16 %v2293, %v2293
    %v2422 = vpack.c.b16 %v2294, %v2294
    %v2423 = vpack.c.b16 %v2295, %v2295
    %v2424 = vpack.c.b16 %v2296, %v2296
    %v2425 = vpack.c.b16 %v2297, %v2297
    %v2426 = vpack.c.b16 %v2298, %v2298
    %v2427 = vpack.c.b16 %v2299, %v2299
    %v2428 = vpack.c.b16 %v2300, %v2300
    %v2429 = vpack.c.b16 %v2301, %v2301
    %v2430 = vpack.c.b16 %v2302, %v2302
    %v2431 = vpack.c.b16 %v2303, %v2303
    %v2432 = vpack.c.b16 %v2304, %v2304
    %v2433 = vpack.c.b16 %v2305, %v2305
    %v2434 = vpack.c.b16 %v2306, %v2306
    %v2435 = vpack.c.b16 %v2307, %v2307
    %v2436 = vpack.c.b16 %v2308, %v2308
    %v2437 = vpack.c.b16 %v2309, %v2309
    %v2438 = vpack.c.b16 %v2310, %v2310
    %v2439 = vpack.c.b16 %v2311, %v2311
    %v2440 = vpack.c.b16 %v2312, %v2312
    %v2441 = vpack.c.b16 %v2313, %v2313
    %v2442 = vpack.c.b16 %v2314, %v2314
    %v2443 = vpack.c.b16 %v2315, %v2315
    %v2444 = vpack.c.b16 %v2316, %v2316
    %v2445 = vpack.c.b16 %v2317, %v2317
    %v2446 = vpack.c.b16 %v2318, %v2318
    %v2447 = vpack.c.b16 %v2319, %v2319
    %v2448 = vpack.c.b16 %v2320, %v2320
    %v2449 = vpack.c.b16 %v2321, %v2321
    %v2450 = vpack.c.b16 %v2322, %v2322
    %v2451 = vpack.c.b16 %v2323, %v2323
    %v2452 = vpack.c.b16 %v2324, %v2324
    %v2453 = vpack.c.b16 %v2325, %v2325
    %v2454 = vpack.c.b16 %v2326, %v2326
    %v2455 = vpack.c.b16 %v2327, %v2327
    %v2456 = vpack.c.b16 %v2328, %v2328
    %v2457 = vpack.c.b16 %v2329, %v2329
    %v2458 = vpack.c.b16 %v2330, %v2330
    %v2459 = vpack.c.b16 %v2331, %v2331
    %v2460 = vpack.c.b16 %v2332, %v2332
    %v2461 = vpack.c.b16 %v2333, %v2333
    %v2462 = vpack.c.b16 %v2334, %v2334
    %v2463 = vpack.c.b16 %v2335, %v2335
    %v2464 = vpack.c.b16 %v2336, %v2336
    %v2465 = vpack.c.b16 %v2337, %v2337
    %v2466 = vpack.c.b16 %v2338, %v2338
    %v2467 = vpack.c.b16 %v2339, %v2339
    %v2468 = vpack.c.b16 %v2340, %v2340
    %v2469 = vpack.c.b16 %v2341, %v2341
    %v2470 = vpack.c.b16 %v2342, %v2342
    %v2471 = vpack.c.b16 %v2343, %v2343
    %v2472 = vpack.c.b16 %v2344, %v2344
    %v2473 = vpack.c.b16 %v2345, %v2345
    %v2474 = vpack.c.b16 %v2346, %v2346
    %v2475 = vpack.c.b16 %v2347, %v2347
    %v2476 = vpack.c.b16 %v2348, %v2348
    %v2477 = vpack.c.b16 %v2349, %v2349
    %v2478 = vpack.c.b16 %v2350, %v2350
    %v2479 = vpack.c.b16 %v2351, %v2351
    %v2480 = vpack.c.b16 %v2352, %v2352
    %v2481 = vpack.c.b16 %v2353, %v2353
    %v2482 = vpack.c.b16 %v2354, %v2354
    %v2483 = vpack.c.b16 %v2355, %v2355
    %v2484 = vpack.c.b16 %v2356, %v2356
    %v2485 = vpack.c.b16 %v2357, %v2357
    %2614 = vst [vmem:[%s2] sm:$0xf] %v2358
    %2615 = vst [vmem:[%s2 + $0x4] sm:$0xf] %v2359
    %2616 = vst [vmem:[%s2 + $0x8] sm:$0xf] %v2360
    %2617 = vst [vmem:[%s2 + $0xc] sm:$0xf] %v2361
    %2618 = vst [vmem:[%s2 + $0x10] sm:$0xf] %v2362
    %2619 = vst [vmem:[%s2 + $0x14] sm:$0xf] %v2363
    %2620 = vst [vmem:[%s2 + $0x18] sm:$0xf] %v2364
    %2621 = vst [vmem:[%s2 + $0x1c] sm:$0xf] %v2365
    %2622 = vst [vmem:[%s2 + $0x20] sm:$0xf] %v2366
    %2623 = vst [vmem:[%s2 + $0x24] sm:$0xf] %v2367
    %2624 = vst [vmem:[%s2 + $0x28] sm:$0xf] %v2368
    %2625 = vst [vmem:[%s2 + $0x2c] sm:$0xf] %v2369
    %2626 = vst [vmem:[%s2 + $0x30] sm:$0xf] %v2370
    %2627 = vst [vmem:[%s2 + $0x34] sm:$0xf] %v2371
    %2628 = vst [vmem:[%s2 + $0x38] sm:$0xf] %v2372
    %2629 = vst [vmem:[%s2 + $0x3c] sm:$0xf] %v2373
    %2630 = vst [vmem:[%s2 + $0x40] sm:$0xf] %v2374
    %2631 = vst [vmem:[%s2 + $0x44] sm:$0xf] %v2375
    %2632 = vst [vmem:[%s2 + $0x48] sm:$0xf] %v2376
    %2633 = vst [vmem:[%s2 + $0x4c] sm:$0xf] %v2377
    %2634 = vst [vmem:[%s2 + $0x50] sm:$0xf] %v2378
    %2635 = vst [vmem:[%s2 + $0x54] sm:$0xf] %v2379
    %2636 = vst [vmem:[%s2 + $0x58] sm:$0xf] %v2380
    %2637 = vst [vmem:[%s2 + $0x5c] sm:$0xf] %v2381
    %2638 = vst [vmem:[%s2 + $0x60] sm:$0xf] %v2382
    %2639 = vst [vmem:[%s2 + $0x64] sm:$0xf] %v2383
    %2640 = vst [vmem:[%s2 + $0x68] sm:$0xf] %v2384
    %2641 = vst [vmem:[%s2 + $0x6c] sm:$0xf] %v2385
    %2642 = vst [vmem:[%s2 + $0x70] sm:$0xf] %v2386
    %2643 = vst [vmem:[%s2 + $0x74] sm:$0xf] %v2387
    %2644 = vst [vmem:[%s2 + $0x78] sm:$0xf] %v2388
    %2645 = vst [vmem:[%s2 + $0x7c] sm:$0xf] %v2389
    %2646 = vst [vmem:[%s2 + $0x80] sm:$0xf] %v2390
    %2647 = vst [vmem:[%s2 + $0x84] sm:$0xf] %v2391
    %2648 = vst [vmem:[%s2 + $0x88] sm:$0xf] %v2392
    %2649 = vst [vmem:[%s2 + $0x8c] sm:$0xf] %v2393
    %2650 = vst [vmem:[%s2 + $0x90] sm:$0xf] %v2394
    %2651 = vst [vmem:[%s2 + $0x94] sm:$0xf] %v2395
    %2652 = vst [vmem:[%s2 + $0x98] sm:$0xf] %v2396
    %2653 = vst [vmem:[%s2 + $0x9c] sm:$0xf] %v2397
    %2654 = vst [vmem:[%s2 + $0xa0] sm:$0xf] %v2398
    %2655 = vst [vmem:[%s2 + $0xa4] sm:$0xf] %v2399
    %2656 = vst [vmem:[%s2 + $0xa8] sm:$0xf] %v2400
    %2657 = vst [vmem:[%s2 + $0xac] sm:$0xf] %v2401
    %2658 = vst [vmem:[%s2 + $0xb0] sm:$0xf] %v2402
    %2659 = vst [vmem:[%s2 + $0xb4] sm:$0xf] %v2403
    %2660 = vst [vmem:[%s2 + $0xb8] sm:$0xf] %v2404
    %2661 = vst [vmem:[%s2 + $0xbc] sm:$0xf] %v2405
    %2662 = vst [vmem:[%s2 + $0xc0] sm:$0xf] %v2406
    %2663 = vst [vmem:[%s2 + $0xc4] sm:$0xf] %v2407
    %2664 = vst [vmem:[%s2 + $0xc8] sm:$0xf] %v2408
    %2665 = vst [vmem:[%s2 + $0xcc] sm:$0xf] %v2409
    %2666 = vst [vmem:[%s2 + $0xd0] sm:$0xf] %v2410
    %2667 = vst [vmem:[%s2 + $0xd4] sm:$0xf] %v2411
    %2668 = vst [vmem:[%s2 + $0xd8] sm:$0xf] %v2412
    %2669 = vst [vmem:[%s2 + $0xdc] sm:$0xf] %v2413
    %2670 = vst [vmem:[%s2 + $0xe0] sm:$0xf] %v2414
    %2671 = vst [vmem:[%s2 + $0xe4] sm:$0xf] %v2415
    %2672 = vst [vmem:[%s2 + $0xe8] sm:$0xf] %v2416
    %2673 = vst [vmem:[%s2 + $0xec] sm:$0xf] %v2417
    %2674 = vst [vmem:[%s2 + $0xf0] sm:$0xf] %v2418
    %2675 = vst [vmem:[%s2 + $0xf4] sm:$0xf] %v2419
    %2676 = vst [vmem:[%s2 + $0xf8] sm:$0xf] %v2420
    %2677 = vst [vmem:[%s2 + $0xfc] sm:$0xf] %v2421
    %2678 = vst [vmem:[%s2 + $0x100] sm:$0xf] %v2422
    %2679 = vst [vmem:[%s2 + $0x104] sm:$0xf] %v2423
    %2680 = vst [vmem:[%s2 + $0x108] sm:$0xf] %v2424
    %2681 = vst [vmem:[%s2 + $0x10c] sm:$0xf] %v2425
    %2682 = vst [vmem:[%s2 + $0x110] sm:$0xf] %v2426
    %2683 = vst [vmem:[%s2 + $0x114] sm:$0xf] %v2427
    %2684 = vst [vmem:[%s2 + $0x118] sm:$0xf] %v2428
    %2685 = vst [vmem:[%s2 + $0x11c] sm:$0xf] %v2429
    %2686 = vst [vmem:[%s2 + $0x120] sm:$0xf] %v2430
    %2687 = vst [vmem:[%s2 + $0x124] sm:$0xf] %v2431
    %2688 = vst [vmem:[%s2 + $0x128] sm:$0xf] %v2432
    %2689 = vst [vmem:[%s2 + $0x12c] sm:$0xf] %v2433
    %2690 = vst [vmem:[%s2 + $0x130] sm:$0xf] %v2434
    %2691 = vst [vmem:[%s2 + $0x134] sm:$0xf] %v2435
    %2692 = vst [vmem:[%s2 + $0x138] sm:$0xf] %v2436
    %2693 = vst [vmem:[%s2 + $0x13c] sm:$0xf] %v2437
    %2694 = vst [vmem:[%s2 + $0x140] sm:$0xf] %v2438
    %2695 = vst [vmem:[%s2 + $0x144] sm:$0xf] %v2439
    %2696 = vst [vmem:[%s2 + $0x148] sm:$0xf] %v2440
    %2697 = vst [vmem:[%s2 + $0x14c] sm:$0xf] %v2441
    %2698 = vst [vmem:[%s2 + $0x150] sm:$0xf] %v2442
    %2699 = vst [vmem:[%s2 + $0x154] sm:$0xf] %v2443
    %2700 = vst [vmem:[%s2 + $0x158] sm:$0xf] %v2444
    %2701 = vst [vmem:[%s2 + $0x15c] sm:$0xf] %v2445
    %2702 = vst [vmem:[%s2 + $0x160] sm:$0xf] %v2446
    %2703 = vst [vmem:[%s2 + $0x164] sm:$0xf] %v2447
    %2704 = vst [vmem:[%s2 + $0x168] sm:$0xf] %v2448
    %2705 = vst [vmem:[%s2 + $0x16c] sm:$0xf] %v2449
    %2706 = vst [vmem:[%s2 + $0x170] sm:$0xf] %v2450
    %2707 = vst [vmem:[%s2 + $0x174] sm:$0xf] %v2451
    %2708 = vst [vmem:[%s2 + $0x178] sm:$0xf] %v2452
    %2709 = vst [vmem:[%s2 + $0x17c] sm:$0xf] %v2453
    %2710 = vst [vmem:[%s2 + $0x180] sm:$0xf] %v2454
    %2711 = vst [vmem:[%s2 + $0x184] sm:$0xf] %v2455
    %2712 = vst [vmem:[%s2 + $0x188] sm:$0xf] %v2456
    %2713 = vst [vmem:[%s2 + $0x18c] sm:$0xf] %v2457
    %2714 = vst [vmem:[%s2 + $0x190] sm:$0xf] %v2458
    %2715 = vst [vmem:[%s2 + $0x194] sm:$0xf] %v2459
    %2716 = vst [vmem:[%s2 + $0x198] sm:$0xf] %v2460
    %2717 = vst [vmem:[%s2 + $0x19c] sm:$0xf] %v2461
    %2718 = vst [vmem:[%s2 + $0x1a0] sm:$0xf] %v2462
    %2719 = vst [vmem:[%s2 + $0x1a4] sm:$0xf] %v2463
    %2720 = vst [vmem:[%s2 + $0x1a8] sm:$0xf] %v2464
    %2721 = vst [vmem:[%s2 + $0x1ac] sm:$0xf] %v2465
    %2722 = vst [vmem:[%s2 + $0x1b0] sm:$0xf] %v2466
    %2723 = vst [vmem:[%s2 + $0x1b4] sm:$0xf] %v2467
    %2724 = vst [vmem:[%s2 + $0x1b8] sm:$0xf] %v2468
    %2725 = vst [vmem:[%s2 + $0x1bc] sm:$0xf] %v2469
    %2726 = vst [vmem:[%s2 + $0x1c0] sm:$0xf] %v2470
    %2727 = vst [vmem:[%s2 + $0x1c4] sm:$0xf] %v2471
    %2728 = vst [vmem:[%s2 + $0x1c8] sm:$0xf] %v2472
    %2729 = vst [vmem:[%s2 + $0x1cc] sm:$0xf] %v2473
    %2730 = vst [vmem:[%s2 + $0x1d0] sm:$0xf] %v2474
    %2731 = vst [vmem:[%s2 + $0x1d4] sm:$0xf] %v2475
    %2732 = vst [vmem:[%s2 + $0x1d8] sm:$0xf] %v2476
    %2733 = vst [vmem:[%s2 + $0x1dc] sm:$0xf] %v2477
    %2734 = vst [vmem:[%s2 + $0x1e0] sm:$0xf] %v2478
    %2735 = vst [vmem:[%s2 + $0x1e4] sm:$0xf] %v2479
    %2736 = vst [vmem:[%s2 + $0x1e8] sm:$0xf] %v2480
    %2737 = vst [vmem:[%s2 + $0x1ec] sm:$0xf] %v2481
    %2738 = vst [vmem:[%s2 + $0x1f0] sm:$0xf] %v2482
    %2739 = vst [vmem:[%s2 + $0x1f4] sm:$0xf] %v2483
    %2740 = vst [vmem:[%s2 + $0x1f8] sm:$0xf] %v2484
    %2741 = vst [vmem:[%s2 + $0x1fc] sm:$0xf] %v2485
    %v2742 = vadd.f32 %v1974, %v1975
    %v2743 = vadd.f32 %v2742, %v1976
    %v2744 = vadd.f32 %v2743, %v1977
    %v2745 = vadd.f32 %v2744, %v1978
    %v2746 = vadd.f32 %v2745, %v1979
    %v2747 = vadd.f32 %v2746, %v1980
    %v2748 = vadd.f32 %v2747, %v1981
    %v2749 = vadd.f32 %v2748, %v1982
    %v2750 = vadd.f32 %v2749, %v1983
    %v2751 = vadd.f32 %v2750, %v1984
    %v2752 = vadd.f32 %v2751, %v1985
    %v2753 = vadd.f32 %v2752, %v1986
    %v2754 = vadd.f32 %v2753, %v1987
    %v2755 = vadd.f32 %v2754, %v1988
    %v2756 = vadd.f32 %v2755, %v1989
    %v2757 = vadd.f32 %v2756, %v1990
    %v2758 = vadd.f32 %v2757, %v1991
    %v2759 = vadd.f32 %v2758, %v1992
    %v2760 = vadd.f32 %v2759, %v1993
    %v2761 = vadd.f32 %v2760, %v1994
    %v2762 = vadd.f32 %v2761, %v1995
    %v2763 = vadd.f32 %v2762, %v1996
    %v2764 = vadd.f32 %v2763, %v1997
    %v2765 = vadd.f32 %v2764, %v1998
    %v2766 = vadd.f32 %v2765, %v1999
    %v2767 = vadd.f32 %v2766, %v2000
    %v2768 = vadd.f32 %v2767, %v2001
    %v2769 = vadd.f32 %v2768, %v2002
    %v2770 = vadd.f32 %v2769, %v2003
    %v2771 = vadd.f32 %v2770, %v2004
    %v2772 = vadd.f32 %v2771, %v2005
    %v2773 = vadd.f32 %v2772, %v2006
    %v2774 = vadd.f32 %v2773, %v2007
    %v2775 = vadd.f32 %v2774, %v2008
    %v2776 = vadd.f32 %v2775, %v2009
    %v2777 = vadd.f32 %v2776, %v2010
    %v2778 = vadd.f32 %v2777, %v2011
    %v2779 = vadd.f32 %v2778, %v2012
    %v2780 = vadd.f32 %v2779, %v2013
    %v2781 = vadd.f32 %v2780, %v2014
    %v2782 = vadd.f32 %v2781, %v2015
    %v2783 = vadd.f32 %v2782, %v2016
    %v2784 = vadd.f32 %v2783, %v2017
    %v2785 = vadd.f32 %v2784, %v2018
    %v2786 = vadd.f32 %v2785, %v2019
    %v2787 = vadd.f32 %v2786, %v2020
    %v2788 = vadd.f32 %v2787, %v2021
    %v2789 = vadd.f32 %v2788, %v2022
    %v2790 = vadd.f32 %v2789, %v2023
    %v2791 = vadd.f32 %v2790, %v2024
    %v2792 = vadd.f32 %v2791, %v2025
    %v2793 = vadd.f32 %v2792, %v2026
    %v2794 = vadd.f32 %v2793, %v2027
    %v2795 = vadd.f32 %v2794, %v2028
    %v2796 = vadd.f32 %v2795, %v2029
    %v2797 = vadd.f32 %v2796, %v2030
    %v2798 = vadd.f32 %v2797, %v2031
    %v2799 = vadd.f32 %v2798, %v2032
    %v2800 = vadd.f32 %v2799, %v2033
    %v2801 = vadd.f32 %v2800, %v2034
    %v2802 = vadd.f32 %v2801, %v2035
    %v2803 = vadd.f32 %v2802, %v2036
    %v2804 = vadd.f32 %v2803, %v2037
    %v2805 = vadd.f32 %v2804, %v2038
    %v2806 = vadd.f32 %v2805, %v2039
    %v2807 = vadd.f32 %v2806, %v2040
    %v2808 = vadd.f32 %v2807, %v2041
    %v2809 = vadd.f32 %v2808, %v2042
    %v2810 = vadd.f32 %v2809, %v2043
    %v2811 = vadd.f32 %v2810, %v2044
    %v2812 = vadd.f32 %v2811, %v2045
    %v2813 = vadd.f32 %v2812, %v2046
    %v2814 = vadd.f32 %v2813, %v2047
    %v2815 = vadd.f32 %v2814, %v2048
    %v2816 = vadd.f32 %v2815, %v2049
    %v2817 = vadd.f32 %v2816, %v2050
    %v2818 = vadd.f32 %v2817, %v2051
    %v2819 = vadd.f32 %v2818, %v2052
    %v2820 = vadd.f32 %v2819, %v2053
    %v2821 = vadd.f32 %v2820, %v2054
    %v2822 = vadd.f32 %v2821, %v2055
    %v2823 = vadd.f32 %v2822, %v2056
    %v2824 = vadd.f32 %v2823, %v2057
    %v2825 = vadd.f32 %v2824, %v2058
    %v2826 = vadd.f32 %v2825, %v2059
    %v2827 = vadd.f32 %v2826, %v2060
    %v2828 = vadd.f32 %v2827, %v2061
    %v2829 = vadd.f32 %v2828, %v2062
    %v2830 = vadd.f32 %v2829, %v2063
    %v2831 = vadd.f32 %v2830, %v2064
    %v2832 = vadd.f32 %v2831, %v2065
    %v2833 = vadd.f32 %v2832, %v2066
    %v2834 = vadd.f32 %v2833, %v2067
    %v2835 = vadd.f32 %v2834, %v2068
    %v2836 = vadd.f32 %v2835, %v2069
    %v2837 = vadd.f32 %v2836, %v2070
    %v2838 = vadd.f32 %v2837, %v2071
    %v2839 = vadd.f32 %v2838, %v2072
    %v2840 = vadd.f32 %v2839, %v2073
    %v2841 = vadd.f32 %v2840, %v2074
    %v2842 = vadd.f32 %v2841, %v2075
    %v2843 = vadd.f32 %v2842, %v2076
    %v2844 = vadd.f32 %v2843, %v2077
    %v2845 = vadd.f32 %v2844, %v2078
    %v2846 = vadd.f32 %v2845, %v2079
    %v2847 = vadd.f32 %v2846, %v2080
    %v2848 = vadd.f32 %v2847, %v2081
    %v2849 = vadd.f32 %v2848, %v2082
    %v2850 = vadd.f32 %v2849, %v2083
    %v2851 = vadd.f32 %v2850, %v2084
    %v2852 = vadd.f32 %v2851, %v2085
    %v2853 = vadd.f32 %v2852, %v2086
    %v2854 = vadd.f32 %v2853, %v2087
    %v2855 = vadd.f32 %v2854, %v2088
    %v2856 = vadd.f32 %v2855, %v2089
    %v2857 = vadd.f32 %v2856, %v2090
    %v2858 = vadd.f32 %v2857, %v2091
    %v2859 = vadd.f32 %v2858, %v2092
    %v2860 = vadd.f32 %v2859, %v2093
    %v2861 = vadd.f32 %v2860, %v2094
    %v2862 = vadd.f32 %v2861, %v2095
    %v2863 = vadd.f32 %v2862, %v2096
    %v2864 = vadd.f32 %v2863, %v2097
    %v2865 = vadd.f32 %v2864, %v2098
    %v2866 = vadd.f32 %v2865, %v2099
    %v2867 = vadd.f32 %v2866, %v2100
    %v2868 = vadd.f32 %v2867, %v2101
    %v2869 = vrot.slane %v2868, 4
    %v2870 = vadd.f32 %v2868, %v2869
    %v2871 = vrot.slane %v2870, 2
    %v2872 = vadd.f32 %v2870, %v2871
    %v2873 = vrot.slane %v2872, 1
    %v2874 = vadd.f32 %v2872, %v2873
    %v2875 = vmul.f32 %v1974, %v1974
    %v2876 = vmul.f32 %v1975, %v1975
    %v2877 = vmul.f32 %v1976, %v1976
    %v2878 = vmul.f32 %v1977, %v1977
    %v2879 = vmul.f32 %v1978, %v1978
    %v2880 = vmul.f32 %v1979, %v1979
    %v2881 = vmul.f32 %v1980, %v1980
    %v2882 = vmul.f32 %v1981, %v1981
    %v2883 = vmul.f32 %v1982, %v1982
    %v2884 = vmul.f32 %v1983, %v1983
    %v2885 = vmul.f32 %v1984, %v1984
    %v2886 = vmul.f32 %v1985, %v1985
    %v2887 = vmul.f32 %v1986, %v1986
    %v2888 = vmul.f32 %v1987, %v1987
    %v2889 = vmul.f32 %v1988, %v1988
    %v2890 = vmul.f32 %v1989, %v1989
    %v2891 = vmul.f32 %v1990, %v1990
    %v2892 = vmul.f32 %v1991, %v1991
    %v2893 = vmul.f32 %v1992, %v1992
    %v2894 = vmul.f32 %v1993, %v1993
    %v2895 = vmul.f32 %v1994, %v1994
    %v2896 = vmul.f32 %v1995, %v1995
    %v2897 = vmul.f32 %v1996, %v1996
    %v2898 = vmul.f32 %v1997, %v1997
    %v2899 = vmul.f32 %v1998, %v1998
    %v2900 = vmul.f32 %v1999, %v1999
    %v2901 = vmul.f32 %v2000, %v2000
    %v2902 = vmul.f32 %v2001, %v2001
    %v2903 = vmul.f32 %v2002, %v2002
    %v2904 = vmul.f32 %v2003, %v2003
    %v2905 = vmul.f32 %v2004, %v2004
    %v2906 = vmul.f32 %v2005, %v2005
    %v2907 = vmul.f32 %v2006, %v2006
    %v2908 = vmul.f32 %v2007, %v2007
    %v2909 = vmul.f32 %v2008, %v2008
    %v2910 = vmul.f32 %v2009, %v2009
    %v2911 = vmul.f32 %v2010, %v2010
    %v2912 = vmul.f32 %v2011, %v2011
    %v2913 = vmul.f32 %v2012, %v2012
    %v2914 = vmul.f32 %v2013, %v2013
    %v2915 = vmul.f32 %v2014, %v2014
    %v2916 = vmul.f32 %v2015, %v2015
    %v2917 = vmul.f32 %v2016, %v2016
    %v2918 = vmul.f32 %v2017, %v2017
    %v2919 = vmul.f32 %v2018, %v2018
    %v2920 = vmul.f32 %v2019, %v2019
    %v2921 = vmul.f32 %v2020, %v2020
    %v2922 = vmul.f32 %v2021, %v2021
    %v2923 = vmul.f32 %v2022, %v2022
    %v2924 = vmul.f32 %v2023, %v2023
    %v2925 = vmul.f32 %v2024, %v2024
    %v2926 = vmul.f32 %v2025, %v2025
    %v2927 = vmul.f32 %v2026, %v2026
    %v2928 = vmul.f32 %v2027, %v2027
    %v2929 = vmul.f32 %v2028, %v2028
    %v2930 = vmul.f32 %v2029, %v2029
    %v2931 = vmul.f32 %v2030, %v2030
    %v2932 = vmul.f32 %v2031, %v2031
    %v2933 = vmul.f32 %v2032, %v2032
    %v2934 = vmul.f32 %v2033, %v2033
    %v2935 = vmul.f32 %v2034, %v2034
    %v2936 = vmul.f32 %v2035, %v2035
    %v2937 = vmul.f32 %v2036, %v2036
    %v2938 = vmul.f32 %v2037, %v2037
    %v2939 = vmul.f32 %v2038, %v2038
    %v2940 = vmul.f32 %v2039, %v2039
    %v2941 = vmul.f32 %v2040, %v2040
    %v2942 = vmul.f32 %v2041, %v2041
    %v2943 = vmul.f32 %v2042, %v2042
    %v2944 = vmul.f32 %v2043, %v2043
    %v2945 = vmul.f32 %v2044, %v2044
    %v2946 = vmul.f32 %v2045, %v2045
    %v2947 = vmul.f32 %v2046, %v2046
    %v2948 = vmul.f32 %v2047, %v2047
    %v2949 = vmul.f32 %v2048, %v2048
    %v2950 = vmul.f32 %v2049, %v2049
    %v2951 = vmul.f32 %v2050, %v2050
    %v2952 = vmul.f32 %v2051, %v2051
    %v2953 = vmul.f32 %v2052, %v2052
    %v2954 = vmul.f32 %v2053, %v2053
    %v2955 = vmul.f32 %v2054, %v2054
    %v2956 = vmul.f32 %v2055, %v2055
    %v2957 = vmul.f32 %v2056, %v2056
    %v2958 = vmul.f32 %v2057, %v2057
    %v2959 = vmul.f32 %v2058, %v2058
    %v2960 = vmul.f32 %v2059, %v2059
    %v2961 = vmul.f32 %v2060, %v2060
    %v2962 = vmul.f32 %v2061, %v2061
    %v2963 = vmul.f32 %v2062, %v2062
    %v2964 = vmul.f32 %v2063, %v2063
    %v2965 = vmul.f32 %v2064, %v2064
    %v2966 = vmul.f32 %v2065, %v2065
    %v2967 = vmul.f32 %v2066, %v2066
    %v2968 = vmul.f32 %v2067, %v2067
    %v2969 = vmul.f32 %v2068, %v2068
    %v2970 = vmul.f32 %v2069, %v2069
    %v2971 = vmul.f32 %v2070, %v2070
    %v2972 = vmul.f32 %v2071, %v2071
    %v2973 = vmul.f32 %v2072, %v2072
    %v2974 = vmul.f32 %v2073, %v2073
    %v2975 = vmul.f32 %v2074, %v2074
    %v2976 = vmul.f32 %v2075, %v2075
    %v2977 = vmul.f32 %v2076, %v2076
    %v2978 = vmul.f32 %v2077, %v2077
    %v2979 = vmul.f32 %v2078, %v2078
    %v2980 = vmul.f32 %v2079, %v2079
    %v2981 = vmul.f32 %v2080, %v2080
    %v2982 = vmul.f32 %v2081, %v2081
    %v2983 = vmul.f32 %v2082, %v2082
    %v2984 = vmul.f32 %v2083, %v2083
    %v2985 = vmul.f32 %v2084, %v2084
    %v2986 = vmul.f32 %v2085, %v2085
    %v2987 = vmul.f32 %v2086, %v2086
    %v2988 = vmul.f32 %v2087, %v2087
    %v2989 = vmul.f32 %v2088, %v2088
    %v2990 = vmul.f32 %v2089, %v2089
    %v2991 = vmul.f32 %v2090, %v2090
    %v2992 = vmul.f32 %v2091, %v2091
    %v2993 = vmul.f32 %v2092, %v2092
    %v2994 = vmul.f32 %v2093, %v2093
    %v2995 = vmul.f32 %v2094, %v2094
    %v2996 = vmul.f32 %v2095, %v2095
    %v2997 = vmul.f32 %v2096, %v2096
    %v2998 = vmul.f32 %v2097, %v2097
    %v2999 = vmul.f32 %v2098, %v2098
    %v3000 = vmul.f32 %v2099, %v2099
    %v3001 = vmul.f32 %v2100, %v2100
    %v3002 = vmul.f32 %v2101, %v2101
    %v3003 = vadd.f32 %v2875, %v2876
    %v3004 = vadd.f32 %v3003, %v2877
    %v3005 = vadd.f32 %v3004, %v2878
    %v3006 = vadd.f32 %v3005, %v2879
    %v3007 = vadd.f32 %v3006, %v2880
    %v3008 = vadd.f32 %v3007, %v2881
    %v3009 = vadd.f32 %v3008, %v2882
    %v3010 = vadd.f32 %v3009, %v2883
    %v3011 = vadd.f32 %v3010, %v2884
    %v3012 = vadd.f32 %v3011, %v2885
    %v3013 = vadd.f32 %v3012, %v2886
    %v3014 = vadd.f32 %v3013, %v2887
    %v3015 = vadd.f32 %v3014, %v2888
    %v3016 = vadd.f32 %v3015, %v2889
    %v3017 = vadd.f32 %v3016, %v2890
    %v3018 = vadd.f32 %v3017, %v2891
    %v3019 = vadd.f32 %v3018, %v2892
    %v3020 = vadd.f32 %v3019, %v2893
    %v3021 = vadd.f32 %v3020, %v2894
    %v3022 = vadd.f32 %v3021, %v2895
    %v3023 = vadd.f32 %v3022, %v2896
    %v3024 = vadd.f32 %v3023, %v2897
    %v3025 = vadd.f32 %v3024, %v2898
    %v3026 = vadd.f32 %v3025, %v2899
    %v3027 = vadd.f32 %v3026, %v2900
    %v3028 = vadd.f32 %v3027, %v2901
    %v3029 = vadd.f32 %v3028, %v2902
    %v3030 = vadd.f32 %v3029, %v2903
    %v3031 = vadd.f32 %v3030, %v2904
    %v3032 = vadd.f32 %v3031, %v2905
    %v3033 = vadd.f32 %v3032, %v2906
    %v3034 = vadd.f32 %v3033, %v2907
    %v3035 = vadd.f32 %v3034, %v2908
    %v3036 = vadd.f32 %v3035, %v2909
    %v3037 = vadd.f32 %v3036, %v2910
    %v3038 = vadd.f32 %v3037, %v2911
    %v3039 = vadd.f32 %v3038, %v2912
    %v3040 = vadd.f32 %v3039, %v2913
    %v3041 = vadd.f32 %v3040, %v2914
    %v3042 = vadd.f32 %v3041, %v2915
    %v3043 = vadd.f32 %v3042, %v2916
    %v3044 = vadd.f32 %v3043, %v2917
    %v3045 = vadd.f32 %v3044, %v2918
    %v3046 = vadd.f32 %v3045, %v2919
    %v3047 = vadd.f32 %v3046, %v2920
    %v3048 = vadd.f32 %v3047, %v2921
    %v3049 = vadd.f32 %v3048, %v2922
    %v3050 = vadd.f32 %v3049, %v2923
    %v3051 = vadd.f32 %v3050, %v2924
    %v3052 = vadd.f32 %v3051, %v2925
    %v3053 = vadd.f32 %v3052, %v2926
    %v3054 = vadd.f32 %v3053, %v2927
    %v3055 = vadd.f32 %v3054, %v2928
    %v3056 = vadd.f32 %v3055, %v2929
    %v3057 = vadd.f32 %v3056, %v2930
    %v3058 = vadd.f32 %v3057, %v2931
    %v3059 = vadd.f32 %v3058, %v2932
    %v3060 = vadd.f32 %v3059, %v2933
    %v3061 = vadd.f32 %v3060, %v2934
    %v3062 = vadd.f32 %v3061, %v2935
    %v3063 = vadd.f32 %v3062, %v2936
    %v3064 = vadd.f32 %v3063, %v2937
    %v3065 = vadd.f32 %v3064, %v2938
    %v3066 = vadd.f32 %v3065, %v2939
    %v3067 = vadd.f32 %v3066, %v2940
    %v3068 = vadd.f32 %v3067, %v2941
    %v3069 = vadd.f32 %v3068, %v2942
    %v3070 = vadd.f32 %v3069, %v2943
    %v3071 = vadd.f32 %v3070, %v2944
    %v3072 = vadd.f32 %v3071, %v2945
    %v3073 = vadd.f32 %v3072, %v2946
    %v3074 = vadd.f32 %v3073, %v2947
    %v3075 = vadd.f32 %v3074, %v2948
    %v3076 = vadd.f32 %v3075, %v2949
    %v3077 = vadd.f32 %v3076, %v2950
    %v3078 = vadd.f32 %v3077, %v2951
    %v3079 = vadd.f32 %v3078, %v2952
    %v3080 = vadd.f32 %v3079, %v2953
    %v3081 = vadd.f32 %v3080, %v2954
    %v3082 = vadd.f32 %v3081, %v2955
    %v3083 = vadd.f32 %v3082, %v2956
    %v3084 = vadd.f32 %v3083, %v2957
    %v3085 = vadd.f32 %v3084, %v2958
    %v3086 = vadd.f32 %v3085, %v2959
    %v3087 = vadd.f32 %v3086, %v2960
    %v3088 = vadd.f32 %v3087, %v2961
    %v3089 = vadd.f32 %v3088, %v2962
    %v3090 = vadd.f32 %v3089, %v2963
    %v3091 = vadd.f32 %v3090, %v2964
    %v3092 = vadd.f32 %v3091, %v2965
    %v3093 = vadd.f32 %v3092, %v2966
    %v3094 = vadd.f32 %v3093, %v2967
    %v3095 = vadd.f32 %v3094, %v2968
    %v3096 = vadd.f32 %v3095, %v2969
    %v3097 = vadd.f32 %v3096, %v2970
    %v3098 = vadd.f32 %v3097, %v2971
    %v3099 = vadd.f32 %v3098, %v2972
    %v3100 = vadd.f32 %v3099, %v2973
    %v3101 = vadd.f32 %v3100, %v2974
    %v3102 = vadd.f32 %v3101, %v2975
    %v3103 = vadd.f32 %v3102, %v2976
    %v3104 = vadd.f32 %v3103, %v2977
    %v3105 = vadd.f32 %v3104, %v2978
    %v3106 = vadd.f32 %v3105, %v2979
    %v3107 = vadd.f32 %v3106, %v2980
    %v3108 = vadd.f32 %v3107, %v2981
    %v3109 = vadd.f32 %v3108, %v2982
    %v3110 = vadd.f32 %v3109, %v2983
    %v3111 = vadd.f32 %v3110, %v2984
    %v3112 = vadd.f32 %v3111, %v2985
    %v3113 = vadd.f32 %v3112, %v2986
    %v3114 = vadd.f32 %v3113, %v2987
    %v3115 = vadd.f32 %v3114, %v2988
    %v3116 = vadd.f32 %v3115, %v2989
    %v3117 = vadd.f32 %v3116, %v2990
    %v3118 = vadd.f32 %v3117, %v2991
    %v3119 = vadd.f32 %v3118, %v2992
    %v3120 = vadd.f32 %v3119, %v2993
    %v3121 = vadd.f32 %v3120, %v2994
    %v3122 = vadd.f32 %v3121, %v2995
    %v3123 = vadd.f32 %v3122, %v2996
    %v3124 = vadd.f32 %v3123, %v2997
    %v3125 = vadd.f32 %v3124, %v2998
    %v3126 = vadd.f32 %v3125, %v2999
    %v3127 = vadd.f32 %v3126, %v3000
    %v3128 = vadd.f32 %v3127, %v3001
    %v3129 = vadd.f32 %v3128, %v3002
    %v3130 = vrot.slane %v3129, 4
    %v3131 = vadd.f32 %v3129, %v3130
    %v3132 = vrot.slane %v3131, 2
    %v3133 = vadd.f32 %v3131, %v3132
    %v3134 = vrot.slane %v3133, 1
    %v3135 = vadd.f32 %v3133, %v3134
    %vm3136 = vcmask 1040384
    %v3137 = vsel %vm3136, %v2874, %v3135
    %3138 = vst [vmem:[%s3] sm:$0x3] %v3137
  $region17: #{temporal_video_discriminator_forward.4} parent=0 // pred_fallthru
    _
  // Predicated region
  $region18: #{temporal_video_discriminator_forward.4} parent=0 // pred_check
    _
  $region19: #{temporal_video_discriminator_forward.4} parent=0 // pred_check_branch
    %3140 = sbr.rel (0) target = $region21
  $region20: #{temporal_video_discriminator_forward.4} parent=0 // pred_region
    _
  $region21: #{temporal_video_discriminator_forward.4} parent=0 // pred_fallthru
    _
  // Predicated region
  $region22: #{temporal_video_discriminator_forward.4} parent=0 // pred_check
    _
  $region23: #{temporal_video_discriminator_forward.4} parent=0 // pred_check_branch
    %3142 = sbr.rel (0) target = $region25
  $region24: #{temporal_video_discriminator_forward.4} parent=0 // pred_region
    _
  $region25: #{temporal_video_discriminator_forward.4} parent=0 // pred_fallthru
    _
  // Predicated region
  $region26: #{temporal_video_discriminator_forward.4} parent=0 // pred_check
    _
  $region27: #{temporal_video_discriminator_forward.4} parent=0 // pred_check_branch
    %3144 = sbr.rel (0) target = $region29
  $region28: #{temporal_video_discriminator_forward.4} parent=0 // pred_region
    _
  $region29: #{temporal_video_discriminator_forward.4} parent=0 // pred_fallthru
    _
  // Predicated region
  $region30: #{temporal_video_discriminator_forward.4} parent=0 // pred_check
    _
  $region31: #{temporal_video_discriminator_forward.4} parent=0 // pred_check_branch
    %3146 = sbr.rel (0) target = $region33
  $region32: #{temporal_video_discriminator_forward.4} parent=0 // pred_region
    _
  $region33: #{temporal_video_discriminator_forward.4} parent=0 // pred_fallthru
    _

// kernel: temporal_video_discriminator_forward.7
$region0: #{temporal_video_discriminator_forward.7}
  #allocation0 [shape = 'u32[]', space=smem, size = 0x4, offset = 0x4, fixed_abs, tag = 'smem constant byte address 0x4 - core index']
  #allocation1 [shape = 'u32[144,128]{1,0:T(1,128)}', space=vmem, size = 0x12000, scoped, tag = 'internal scratch']
  %s0 = inlined_call_operand.vmem [shape: bf16[256,128], index: 0, kind: input, shape index: {}]
  %s1 = inlined_call_operand.vmem [shape: f32[1,128], index: 1, kind: input, shape index: {}]
  %s2 = inlined_call_operand.vmem [shape: f32[1,128], index: 2, kind: input, shape index: {}]
  %s3 = inlined_call_operand.vmem [shape: bf16[256,128], index: 3, kind: output, shape index: {}]
  %s4 = sld [smem:[#allocation0]]
  $region22: #{temporal_video_discriminator_forward.7} parent=0
    _
  %s6 = ssub.s32 1, %s4
  %s7 = scalar_select 0, %s6, %s4
  // Predicated region
  $region2: #{temporal_video_discriminator_forward.7} parent=0 // pred_check
    _
  $region3: #{temporal_video_discriminator_forward.7} parent=0 // pred_check_branch
    %9 = sbr.rel (0) target = $region5
  $region4: #{temporal_video_discriminator_forward.7} parent=0 // pred_region
    _
  $region5: #{temporal_video_discriminator_forward.7} parent=0 // pred_fallthru
    _
  // Predicated region
  $region6: #{temporal_video_discriminator_forward.7} parent=0 // pred_check
    _
  $region7: #{temporal_video_discriminator_forward.7} parent=0 // pred_check_branch
    %11 = sbr.rel (0) target = $region9
  $region8: #{temporal_video_discriminator_forward.7} parent=0 // pred_region
    _
  $region9: #{temporal_video_discriminator_forward.7} parent=0 // pred_fallthru
    _
  // Predicated region
  $region10: #{temporal_video_discriminator_forward.7} parent=0 // pred_check
    _
  $region11: #{temporal_video_discriminator_forward.7} parent=0 // pred_check_branch
    %13 = sbr.rel (0) target = $region13
  $region12: #{temporal_video_discriminator_forward.7} parent=0 // pred_region
    _
  $region13: #{temporal_video_discriminator_forward.7} parent=0 // pred_fallthru
    _
  %v14 = vld [vmem:[%s0] sm:$0xf]
  %v15 = vld [vmem:[%s0 + $0x4] sm:$0xf]
  %v16 = vld [vmem:[%s0 + $0x8] sm:$0xf]
  %v17 = vld [vmem:[%s0 + $0xc] sm:$0xf]
  %v18 = vld [vmem:[%s0 + $0x10] sm:$0xf]
  %v19 = vld [vmem:[%s0 + $0x14] sm:$0xf]
  %v20 = vld [vmem:[%s0 + $0x18] sm:$0xf]
  %v21 = vld [vmem:[%s0 + $0x1c] sm:$0xf]
  %v22 = vld [vmem:[%s0 + $0x20] sm:$0xf]
  %v23 = vld [vmem:[%s0 + $0x24] sm:$0xf]
  %v24 = vld [vmem:[%s0 + $0x28] sm:$0xf]
  %v25 = vld [vmem:[%s0 + $0x2c] sm:$0xf]
  %v26 = vld [vmem:[%s0 + $0x30] sm:$0xf]
  %v27 = vld [vmem:[%s0 + $0x34] sm:$0xf]
  %v28 = vld [vmem:[%s0 + $0x38] sm:$0xf]
  %v29 = vld [vmem:[%s0 + $0x3c] sm:$0xf]
  %v30 = vld [vmem:[%s0 + $0x40] sm:$0xf]
  %v31 = vld [vmem:[%s0 + $0x44] sm:$0xf]
  %v32 = vld [vmem:[%s0 + $0x48] sm:$0xf]
  %v33 = vld [vmem:[%s0 + $0x4c] sm:$0xf]
  %v34 = vld [vmem:[%s0 + $0x50] sm:$0xf]
  %v35 = vld [vmem:[%s0 + $0x54] sm:$0xf]
  %v36 = vld [vmem:[%s0 + $0x58] sm:$0xf]
  %v37 = vld [vmem:[%s0 + $0x5c] sm:$0xf]
  %v38 = vld [vmem:[%s0 + $0x60] sm:$0xf]
  %v39 = vld [vmem:[%s0 + $0x64] sm:$0xf]
  %v40 = vld [vmem:[%s0 + $0x68] sm:$0xf]
  %v41 = vld [vmem:[%s0 + $0x6c] sm:$0xf]
  %v42 = vld [vmem:[%s0 + $0x70] sm:$0xf]
  %v43 = vld [vmem:[%s0 + $0x74] sm:$0xf]
  %v44 = vld [vmem:[%s0 + $0x78] sm:$0xf]
  %v45 = vld [vmem:[%s0 + $0x7c] sm:$0xf]
  %v46 = vunpack.c.l.bf16 %v14
  %v47 = vunpack.c.l.bf16 %v15
  %v48 = vunpack.c.l.bf16 %v16
  %v49 = vunpack.c.l.bf16 %v17
  %v50 = vunpack.c.l.bf16 %v18
  %v51 = vunpack.c.l.bf16 %v19
  %v52 = vunpack.c.l.bf16 %v20
  %v53 = vunpack.c.l.bf16 %v21
  %v54 = vunpack.c.l.bf16 %v22
  %v55 = vunpack.c.l.bf16 %v23
  %v56 = vunpack.c.l.bf16 %v24
  %v57 = vunpack.c.l.bf16 %v25
  %v58 = vunpack.c.l.bf16 %v26
  %v59 = vunpack.c.l.bf16 %v27
  %v60 = vunpack.c.l.bf16 %v28
  %v61 = vunpack.c.l.bf16 %v29
  %v62 = vunpack.c.l.bf16 %v30
  %v63 = vunpack.c.l.bf16 %v31
  %v64 = vunpack.c.l.bf16 %v32
  %v65 = vunpack.c.l.bf16 %v33
  %v66 = vunpack.c.l.bf16 %v34
  %v67 = vunpack.c.l.bf16 %v35
  %v68 = vunpack.c.l.bf16 %v36
  %v69 = vunpack.c.l.bf16 %v37
  %v70 = vunpack.c.l.bf16 %v38
  %v71 = vunpack.c.l.bf16 %v39
  %v72 = vunpack.c.l.bf16 %v40
  %v73 = vunpack.c.l.bf16 %v41
  %v74 = vunpack.c.l.bf16 %v42
  %v75 = vunpack.c.l.bf16 %v43
  %v76 = vunpack.c.l.bf16 %v44
  %v77 = vunpack.c.l.bf16 %v45
  %v78 = vld [vmem:[%s1] sm:$0x1]
  %v80 = vlaneseq
  %v81 = vshrl.u32 %v80, 7
  %v82 = vsub.s32 0, %v81
  %v83 = vrot.slane %v78, %v82
  %v85 = vmul.f32 %v46, %v83
  %v86 = vmul.f32 %v47, %v83
  %v87 = vmul.f32 %v48, %v83
  %v88 = vmul.f32 %v49, %v83
  %v89 = vmul.f32 %v50, %v83
  %v90 = vmul.f32 %v51, %v83
  %v91 = vmul.f32 %v52, %v83
  %v92 = vmul.f32 %v53, %v83
  %v93 = vmul.f32 %v54, %v83
  %v94 = vmul.f32 %v55, %v83
  %v95 = vmul.f32 %v56, %v83
  %v96 = vmul.f32 %v57, %v83
  %v97 = vmul.f32 %v58, %v83
  %v98 = vmul.f32 %v59, %v83
  %v99 = vmul.f32 %v60, %v83
  %v100 = vmul.f32 %v61, %v83
  %v101 = vmul.f32 %v62, %v83
  %v102 = vmul.f32 %v63, %v83
  %v103 = vmul.f32 %v64, %v83
  %v104 = vmul.f32 %v65, %v83
  %v105 = vmul.f32 %v66, %v83
  %v106 = vmul.f32 %v67, %v83
  %v107 = vmul.f32 %v68, %v83
  %v108 = vmul.f32 %v69, %v83
  %v109 = vmul.f32 %v70, %v83
  %v110 = vmul.f32 %v71, %v83
  %v111 = vmul.f32 %v72, %v83
  %v112 = vmul.f32 %v73, %v83
  %v113 = vmul.f32 %v74, %v83
  %v114 = vmul.f32 %v75, %v83
  %v115 = vmul.f32 %v76, %v83
  %v116 = vmul.f32 %v77, %v83
  %v117 = vld [vmem:[%s2] sm:$0x1]
  %v119 = vlaneseq
  %v120 = vshrl.u32 %v119, 7
  %v121 = vsub.s32 0, %v120
  %v122 = vrot.slane %v117, %v121
  %v124 = vadd.f32 %v85, %v122
  %v125 = vadd.f32 %v86, %v122
  %v126 = vadd.f32 %v87, %v122
  %v127 = vadd.f32 %v88, %v122
  %v128 = vadd.f32 %v89, %v122
  %v129 = vadd.f32 %v90, %v122
  %v130 = vadd.f32 %v91, %v122
  %v131 = vadd.f32 %v92, %v122
  %v132 = vadd.f32 %v93, %v122
  %v133 = vadd.f32 %v94, %v122
  %v134 = vadd.f32 %v95, %v122
  %v135 = vadd.f32 %v96, %v122
  %v136 = vadd.f32 %v97, %v122
  %v137 = vadd.f32 %v98, %v122
  %v138 = vadd.f32 %v99, %v122
  %v139 = vadd.f32 %v100, %v122
  %v140 = vadd.f32 %v101, %v122
  %v141 = vadd.f32 %v102, %v122
  %v142 = vadd.f32 %v103, %v122
  %v143 = vadd.f32 %v104, %v122
  %v144 = vadd.f32 %v105, %v122
  %v145 = vadd.f32 %v106, %v122
  %v146 = vadd.f32 %v107, %v122
  %v147 = vadd.f32 %v108, %v122
  %v148 = vadd.f32 %v109, %v122
  %v149 = vadd.f32 %v110, %v122
  %v150 = vadd.f32 %v111, %v122
  %v151 = vadd.f32 %v112, %v122
  %v152 = vadd.f32 %v113, %v122
  %v153 = vadd.f32 %v114, %v122
  %v154 = vadd.f32 %v115, %v122
  %v155 = vadd.f32 %v116, %v122
  %vm156 = vcmp.ge.f32.partialorder %v124, 0.0
  %vm157 = vcmp.ge.f32.partialorder %v125, 0.0
  %vm158 = vcmp.ge.f32.partialorder %v126, 0.0
  %vm159 = vcmp.ge.f32.partialorder %v127, 0.0
  %vm160 = vcmp.ge.f32.partialorder %v128, 0.0
  %vm161 = vcmp.ge.f32.partialorder %v129, 0.0
  %vm162 = vcmp.ge.f32.partialorder %v130, 0.0
  %vm163 = vcmp.ge.f32.partialorder %v131, 0.0
  %vm164 = vcmp.ge.f32.partialorder %v132, 0.0
  %vm165 = vcmp.ge.f32.partialorder %v133, 0.0
  %vm166 = vcmp.ge.f32.partialorder %v134, 0.0
  %vm167 = vcmp.ge.f32.partialorder %v135, 0.0
  %vm168 = vcmp.ge.f32.partialorder %v136, 0.0
  %vm169 = vcmp.ge.f32.partialorder %v137, 0.0
  %vm170 = vcmp.ge.f32.partialorder %v138, 0.0
  %vm171 = vcmp.ge.f32.partialorder %v139, 0.0
  %vm172 = vcmp.ge.f32.partialorder %v140, 0.0
  %vm173 = vcmp.ge.f32.partialorder %v141, 0.0
  %vm174 = vcmp.ge.f32.partialorder %v142, 0.0
  %vm175 = vcmp.ge.f32.partialorder %v143, 0.0
  %vm176 = vcmp.ge.f32.partialorder %v144, 0.0
  %vm177 = vcmp.ge.f32.partialorder %v145, 0.0
  %vm178 = vcmp.ge.f32.partialorder %v146, 0.0
  %vm179 = vcmp.ge.f32.partialorder %v147, 0.0
  %vm180 = vcmp.ge.f32.partialorder %v148, 0.0
  %vm181 = vcmp.ge.f32.partialorder %v149, 0.0
  %vm182 = vcmp.ge.f32.partialorder %v150, 0.0
  %vm183 = vcmp.ge.f32.partialorder %v151, 0.0
  %vm184 = vcmp.ge.f32.partialorder %v152, 0.0
  %vm185 = vcmp.ge.f32.partialorder %v153, 0.0
  %vm186 = vcmp.ge.f32.partialorder %v154, 0.0
  %vm187 = vcmp.ge.f32.partialorder %v155, 0.0
  %v188 = vmul.f32 %v124, 0.2
  %v189 = vmul.f32 %v125, 0.2
  %v190 = vmul.f32 %v126, 0.2
  %v191 = vmul.f32 %v127, 0.2
  %v192 = vmul.f32 %v128, 0.2
  %v193 = vmul.f32 %v129, 0.2
  %v194 = vmul.f32 %v130, 0.2
  %v195 = vmul.f32 %v131, 0.2
  %v196 = vmul.f32 %v132, 0.2
  %v197 = vmul.f32 %v133, 0.2
  %v198 = vmul.f32 %v134, 0.2
  %v199 = vmul.f32 %v135, 0.2
  %v200 = vmul.f32 %v136, 0.2
  %v201 = vmul.f32 %v137, 0.2
  %v202 = vmul.f32 %v138, 0.2
  %v203 = vmul.f32 %v139, 0.2
  %v204 = vmul.f32 %v140, 0.2
  %v205 = vmul.f32 %v141, 0.2
  %v206 = vmul.f32 %v142, 0.2
  %v207 = vmul.f32 %v143, 0.2
  %v208 = vmul.f32 %v144, 0.2
  %v209 = vmul.f32 %v145, 0.2
  %v210 = vmul.f32 %v146, 0.2
  %v211 = vmul.f32 %v147, 0.2
  %v212 = vmul.f32 %v148, 0.2
  %v213 = vmul.f32 %v149, 0.2
  %v214 = vmul.f32 %v150, 0.2
  %v215 = vmul.f32 %v151, 0.2
  %v216 = vmul.f32 %v152, 0.2
  %v217 = vmul.f32 %v153, 0.2
  %v218 = vmul.f32 %v154, 0.2
  %v219 = vmul.f32 %v155, 0.2
  %v220 = vsel %vm156, %v124, %v188
  %v221 = vsel %vm157, %v125, %v189
  %v222 = vsel %vm158, %v126, %v190
  %v223 = vsel %vm159, %v127, %v191
  %v224 = vsel %vm160, %v128, %v192
  %v225 = vsel %vm161, %v129, %v193
  %v226 = vsel %vm162, %v130, %v194
  %v227 = vsel %vm163, %v131, %v195
  %v228 = vsel %vm164, %v132, %v196
  %v229 = vsel %vm165, %v133, %v197
  %v230 = vsel %vm166, %v134, %v198
  %v231 = vsel %vm167, %v135, %v199
  %v232 = vsel %vm168, %v136, %v200
  %v233 = vsel %vm169, %v137, %v201
  %v234 = vsel %vm170, %v138, %v202
  %v235 = vsel %vm171, %v139, %v203
  %v236 = vsel %vm172, %v140, %v204
  %v237 = vsel %vm173, %v141, %v205
  %v238 = vsel %vm174, %v142, %v206
  %v239 = vsel %vm175, %v143, %v207
  %v240 = vsel %vm176, %v144, %v208
  %v241 = vsel %vm177, %v145, %v209
  %v242 = vsel %vm178, %v146, %v210
  %v243 = vsel %vm179, %v147, %v211
  %v244 = vsel %vm180, %v148, %v212
  %v245 = vsel %vm181, %v149, %v213
  %v246 = vsel %vm182, %v150, %v214
  %v247 = vsel %vm183, %v151, %v215
  %v248 = vsel %vm184, %v152, %v216
  %v249 = vsel %vm185, %v153, %v217
  %v250 = vsel %vm186, %v154, %v218
  %v251 = vsel %vm187, %v155, %v219
  %v252 = vpack.c.bf16 %v221, %v220
  %v253 = vpack.c.bf16 %v223, %v222
  %v254 = vpack.c.bf16 %v225, %v224
  %v255 = vpack.c.bf16 %v227, %v226
  %v256 = vpack.c.bf16 %v229, %v228
  %v257 = vpack.c.bf16 %v231, %v230
  %v258 = vpack.c.bf16 %v233, %v232
  %v259 = vpack.c.bf16 %v235, %v234
  %v260 = vpack.c.bf16 %v237, %v236
  %v261 = vpack.c.bf16 %v239, %v238
  %v262 = vpack.c.bf16 %v241, %v240
  %v263 = vpack.c.bf16 %v243, %v242
  %v264 = vpack.c.bf16 %v245, %v244
  %v265 = vpack.c.bf16 %v247, %v246
  %v266 = vpack.c.bf16 %v249, %v248
  %v267 = vpack.c.bf16 %v251, %v250
  %v284 = vunpack.c.l.b16 %v252
  %v285 = vunpack.c.h.b16 %v252
  %v286 = vunpack.c.l.b16 %v253
  %v287 = vunpack.c.h.b16 %v253
  %v288 = vunpack.c.l.b16 %v254
  %v289 = vunpack.c.h.b16 %v254
  %v290 = vunpack.c.l.b16 %v255
  %v291 = vunpack.c.h.b16 %v255
  %v292 = vunpack.c.l.b16 %v256
  %v293 = vunpack.c.h.b16 %v256
  %v294 = vunpack.c.l.b16 %v257
  %v295 = vunpack.c.h.b16 %v257
  %v296 = vunpack.c.l.b16 %v258
  %v297 = vunpack.c.h.b16 %v258
  %v298 = vunpack.c.l.b16 %v259
  %v299 = vunpack.c.h.b16 %v259
  %v300 = vunpack.c.l.b16 %v260
  %v301 = vunpack.c.h.b16 %v260
  %v302 = vunpack.c.l.b16 %v261
  %v303 = vunpack.c.h.b16 %v261
  %v304 = vunpack.c.l.b16 %v262
  %v305 = vunpack.c.h.b16 %v262
  %v306 = vunpack.c.l.b16 %v263
  %v307 = vunpack.c.h.b16 %v263
  %v308 = vunpack.c.l.b16 %v264
  %v309 = vunpack.c.h.b16 %v264
  %v310 = vunpack.c.l.b16 %v265
  %v311 = vunpack.c.h.b16 %v265
  %v312 = vunpack.c.l.b16 %v266
  %v313 = vunpack.c.h.b16 %v266
  %v314 = vunpack.c.l.b16 %v267
  %v315 = vunpack.c.h.b16 %v267
  %v316 = vpack.c.b16 %v284, %v284
  %v317 = vpack.c.b16 %v285, %v285
  %v318 = vpack.c.b16 %v286, %v286
  %v319 = vpack.c.b16 %v287, %v287
  %v320 = vpack.c.b16 %v288, %v288
  %v321 = vpack.c.b16 %v289, %v289
  %v322 = vpack.c.b16 %v290, %v290
  %v323 = vpack.c.b16 %v291, %v291
  %v324 = vpack.c.b16 %v292, %v292
  %v325 = vpack.c.b16 %v293, %v293
  %v326 = vpack.c.b16 %v294, %v294
  %v327 = vpack.c.b16 %v295, %v295
  %v328 = vpack.c.b16 %v296, %v296
  %v329 = vpack.c.b16 %v297, %v297
  %v330 = vpack.c.b16 %v298, %v298
  %v331 = vpack.c.b16 %v299, %v299
  %v332 = vpack.c.b16 %v300, %v300
  %v333 = vpack.c.b16 %v301, %v301
  %v334 = vpack.c.b16 %v302, %v302
  %v335 = vpack.c.b16 %v303, %v303
  %v336 = vpack.c.b16 %v304, %v304
  %v337 = vpack.c.b16 %v305, %v305
  %v338 = vpack.c.b16 %v306, %v306
  %v339 = vpack.c.b16 %v307, %v307
  %v340 = vpack.c.b16 %v308, %v308
  %v341 = vpack.c.b16 %v309, %v309
  %v342 = vpack.c.b16 %v310, %v310
  %v343 = vpack.c.b16 %v311, %v311
  %v344 = vpack.c.b16 %v312, %v312
  %v345 = vpack.c.b16 %v313, %v313
  %v346 = vpack.c.b16 %v314, %v314
  %v347 = vpack.c.b16 %v315, %v315
  %380 = vst [vmem:[%s3] sm:$0xf] %v316
  %381 = vst [vmem:[%s3 + $0x4] sm:$0xf] %v317
  %382 = vst [vmem:[%s3 + $0x8] sm:$0xf] %v318
  %383 = vst [vmem:[%s3 + $0xc] sm:$0xf] %v319
  %384 = vst [vmem:[%s3 + $0x10] sm:$0xf] %v320
  %385 = vst [vmem:[%s3 + $0x14] sm:$0xf] %v321
  %386 = vst [vmem:[%s3 + $0x18] sm:$0xf] %v322
  %387 = vst [vmem:[%s3 + $0x1c] sm:$0xf] %v323
  %388 = vst [vmem:[%s3 + $0x20] sm:$0xf] %v324
  %389 = vst [vmem:[%s3 + $0x24] sm:$0xf] %v325
  %390 = vst [vmem:[%s3 + $0x28] sm:$0xf] %v326
  %391 = vst [vmem:[%s3 + $0x2c] sm:$0xf] %v327
  %392 = vst [vmem:[%s3 + $0x30] sm:$0xf] %v328
  %393 = vst [vmem:[%s3 + $0x34] sm:$0xf] %v329
  %394 = vst [vmem:[%s3 + $0x38] sm:$0xf] %v330
  %395 = vst [vmem:[%s3 + $0x3c] sm:$0xf] %v331
  %396 = vst [vmem:[%s3 + $0x40] sm:$0xf] %v332
  %397 = vst [vmem:[%s3 + $0x44] sm:$0xf] %v333
  %398 = vst [vmem:[%s3 + $0x48] sm:$0xf] %v334
  %399 = vst [vmem:[%s3 + $0x4c] sm:$0xf] %v335
  %400 = vst [vmem:[%s3 + $0x50] sm:$0xf] %v336
  %401 = vst [vmem:[%s3 + $0x54] sm:$0xf] %v337
  %402 = vst [vmem:[%s3 + $0x58] sm:$0xf] %v338
  %403 = vst [vmem:[%s3 + $0x5c] sm:$0xf] %v339
  %404 = vst [vmem:[%s3 + $0x60] sm:$0xf] %v340
  %405 = vst [vmem:[%s3 + $0x64] sm:$0xf] %v341
  %406 = vst [vmem:[%s3 + $0x68] sm:$0xf] %v342
  %407 = vst [vmem:[%s3 + $0x6c] sm:$0xf] %v343
  %408 = vst [vmem:[%s3 + $0x70] sm:$0xf] %v344
  %409 = vst [vmem:[%s3 + $0x74] sm:$0xf] %v345
  %410 = vst [vmem:[%s3 + $0x78] sm:$0xf] %v346
  %411 = vst [vmem:[%s3 + $0x7c] sm:$0xf] %v347
  // Predicated region
  $region14: #{temporal_video_discriminator_forward.7} parent=0 // pred_check
    _
  $region15: #{temporal_video_discriminator_forward.7} parent=0 // pred_check_branch
    %413 = sbr.rel (0) target = $region17
  $region16: #{temporal_video_discriminator_forward.7} parent=0 // pred_region
    _
  $region17: #{temporal_video_discriminator_forward.7} parent=0 // pred_fallthru
    _
  // Predicated region
  $region18: #{temporal_video_discriminator_forward.7} parent=0 // pred_check
    _
  $region19: #{temporal_video_discriminator_forward.7} parent=0 // pred_check_branch
    %415 = sbr.rel (0) target = $region21
  $region20: #{temporal_video_discriminator_forward.7} parent=0 // pred_region
    _
  $region21: #{temporal_video_discriminator_forward.7} parent=0 // pred_fallthru
    _

// kernel: temporal_video_discriminator_forward.6
$region0: #{temporal_video_discriminator_forward.6}
  #allocation0 [shape = 'u32[]', space=smem, size = 0x4, offset = 0x4, fixed_abs, tag = 'smem constant byte address 0x4 - core index']
  #allocation1 [shape = 'u32[144,128]{1,0:T(1,128)}', space=vmem, size = 0x12000, scoped, tag = 'internal scratch']
  #allocation2 [shape = 'f32[256,128]{1,0:T(8,128)}', space=vmem, size = 0x20000, scoped, tag = 'scratch operand']
  %s0 = inlined_call_operand.vmem [shape: bf16[256,768], index: 0, kind: input, shape index: {}]
  %s1 = inlined_call_operand.vmem [shape: bf16[768,128], index: 1, kind: input, shape index: {}]
  %s2 = inlined_call_operand.vmem [shape: bf16[256,128], index: 2, kind: output, shape index: {0}]
  %s3 = inlined_call_operand.vmem [shape: f32[1,2,128], index: 3, kind: output, shape index: {1}]
  %4 = xla_tuple %s2, %s3
  %s5 = sld [smem:[#allocation0]]
  $region34: #{temporal_video_discriminator_forward.6} parent=0
    _
  %s7 = ssub.s32 1, %s5
  %s8 = scalar_select 0, %s7, %s5
  // Predicated region
  $region2: #{temporal_video_discriminator_forward.6} parent=0 // pred_check
    _
  $region3: #{temporal_video_discriminator_forward.6} parent=0 // pred_check_branch
    %10 = sbr.rel (0) target = $region5
  $region4: #{temporal_video_discriminator_forward.6} parent=0 // pred_region
    _
  $region5: #{temporal_video_discriminator_forward.6} parent=0 // pred_fallthru
    _
  // Predicated region
  $region6: #{temporal_video_discriminator_forward.6} parent=0 // pred_check
    _
  $region7: #{temporal_video_discriminator_forward.6} parent=0 // pred_check_branch
    %12 = sbr.rel (0) target = $region9
  $region8: #{temporal_video_discriminator_forward.6} parent=0 // pred_region
    _
  $region9: #{temporal_video_discriminator_forward.6} parent=0 // pred_fallthru
    _
  %p14 = scmp.eq.s32.totalorder 0, 0
  // Predicated region
  $region10: #{temporal_video_discriminator_forward.6} parent=0 // pred_check
    %p15 = pneg %p14
  $region11: #{temporal_video_discriminator_forward.6} parent=0 // pred_check_branch
    %17 = sbr.rel (%p15) target = $region13
  $region12: #{temporal_video_discriminator_forward.6} parent=0 // pred_region
    %18 = vst [vmem:[#allocation2] sm:$0xff] 0.0
    %19 = vst [vmem:[#allocation2 + $0x8] sm:$0xff] 0.0
    %20 = vst [vmem:[#allocation2 + $0x10] sm:$0xff] 0.0
    %21 = vst [vmem:[#allocation2 + $0x18] sm:$0xff] 0.0
    %22 = vst [vmem:[#allocation2 + $0x20] sm:$0xff] 0.0
    %23 = vst [vmem:[#allocation2 + $0x28] sm:$0xff] 0.0
    %24 = vst [vmem:[#allocation2 + $0x30] sm:$0xff] 0.0
    %25 = vst [vmem:[#allocation2 + $0x38] sm:$0xff] 0.0
    %26 = vst [vmem:[#allocation2 + $0x40] sm:$0xff] 0.0
    %27 = vst [vmem:[#allocation2 + $0x48] sm:$0xff] 0.0
    %28 = vst [vmem:[#allocation2 + $0x50] sm:$0xff] 0.0
    %29 = vst [vmem:[#allocation2 + $0x58] sm:$0xff] 0.0
    %30 = vst [vmem:[#allocation2 + $0x60] sm:$0xff] 0.0
    %31 = vst [vmem:[#allocation2 + $0x68] sm:$0xff] 0.0
    %32 = vst [vmem:[#allocation2 + $0x70] sm:$0xff] 0.0
    %33 = vst [vmem:[#allocation2 + $0x78] sm:$0xff] 0.0
    %34 = vst [vmem:[#allocation2 + $0x80] sm:$0xff] 0.0
    %35 = vst [vmem:[#allocation2 + $0x88] sm:$0xff] 0.0
    %36 = vst [vmem:[#allocation2 + $0x90] sm:$0xff] 0.0
    %37 = vst [vmem:[#allocation2 + $0x98] sm:$0xff] 0.0
    %38 = vst [vmem:[#allocation2 + $0xa0] sm:$0xff] 0.0
    %39 = vst [vmem:[#allocation2 + $0xa8] sm:$0xff] 0.0
    %40 = vst [vmem:[#allocation2 + $0xb0] sm:$0xff] 0.0
    %41 = vst [vmem:[#allocation2 + $0xb8] sm:$0xff] 0.0
    %42 = vst [vmem:[#allocation2 + $0xc0] sm:$0xff] 0.0
    %43 = vst [vmem:[#allocation2 + $0xc8] sm:$0xff] 0.0
    %44 = vst [vmem:[#allocation2 + $0xd0] sm:$0xff] 0.0
    %45 = vst [vmem:[#allocation2 + $0xd8] sm:$0xff] 0.0
    %46 = vst [vmem:[#allocation2 + $0xe0] sm:$0xff] 0.0
    %47 = vst [vmem:[#allocation2 + $0xe8] sm:$0xff] 0.0
    %48 = vst [vmem:[#allocation2 + $0xf0] sm:$0xff] 0.0
    %49 = vst [vmem:[#allocation2 + $0xf8] sm:$0xff] 0.0
  $region13: #{temporal_video_discriminator_forward.6} parent=0 // pred_fallthru
    _
  %v50 = vld [vmem:[%s1] sm:$0xf]
  %v51 = vld [vmem:[%s1 + $0x4] sm:$0xf]
  %v52 = vld [vmem:[%s1 + $0x8] sm:$0xf]
  %v53 = vld [vmem:[%s1 + $0xc] sm:$0xf]
  %v54 = vld [vmem:[%s1 + $0x10] sm:$0xf]
  %v55 = vld [vmem:[%s1 + $0x14] sm:$0xf]
  %v56 = vld [vmem:[%s1 + $0x18] sm:$0xf]
  %v57 = vld [vmem:[%s1 + $0x1c] sm:$0xf]
  %v58 = vld [vmem:[%s1 + $0x20] sm:$0xf]
  %v59 = vld [vmem:[%s1 + $0x24] sm:$0xf]
  %v60 = vld [vmem:[%s1 + $0x28] sm:$0xf]
  %v61 = vld [vmem:[%s1 + $0x2c] sm:$0xf]
  %v62 = vld [vmem:[%s1 + $0x30] sm:$0xf]
  %v63 = vld [vmem:[%s1 + $0x34] sm:$0xf]
  %v64 = vld [vmem:[%s1 + $0x38] sm:$0xf]
  %v65 = vld [vmem:[%s1 + $0x3c] sm:$0xf]
  %v66 = vld [vmem:[%s1 + $0x40] sm:$0xf]
  %v67 = vld [vmem:[%s1 + $0x44] sm:$0xf]
  %v68 = vld [vmem:[%s1 + $0x48] sm:$0xf]
  %v69 = vld [vmem:[%s1 + $0x4c] sm:$0xf]
  %v70 = vld [vmem:[%s1 + $0x50] sm:$0xf]
  %v71 = vld [vmem:[%s1 + $0x54] sm:$0xf]
  %v72 = vld [vmem:[%s1 + $0x58] sm:$0xf]
  %v73 = vld [vmem:[%s1 + $0x5c] sm:$0xf]
  %v74 = vld [vmem:[%s1 + $0x60] sm:$0xf]
  %v75 = vld [vmem:[%s1 + $0x64] sm:$0xf]
  %v76 = vld [vmem:[%s1 + $0x68] sm:$0xf]
  %v77 = vld [vmem:[%s1 + $0x6c] sm:$0xf]
  %v78 = vld [vmem:[%s1 + $0x70] sm:$0xf]
  %v79 = vld [vmem:[%s1 + $0x74] sm:$0xf]
  %v80 = vld [vmem:[%s1 + $0x78] sm:$0xf]
  %v81 = vld [vmem:[%s1 + $0x7c] sm:$0xf]
  %v82 = vld [vmem:[%s1 + $0x80] sm:$0xf]
  %v83 = vld [vmem:[%s1 + $0x84] sm:$0xf]
  %v84 = vld [vmem:[%s1 + $0x88] sm:$0xf]
  %v85 = vld [vmem:[%s1 + $0x8c] sm:$0xf]
  %v86 = vld [vmem:[%s1 + $0x90] sm:$0xf]
  %v87 = vld [vmem:[%s1 + $0x94] sm:$0xf]
  %v88 = vld [vmem:[%s1 + $0x98] sm:$0xf]
  %v89 = vld [vmem:[%s1 + $0x9c] sm:$0xf]
  %v90 = vld [vmem:[%s1 + $0xa0] sm:$0xf]
  %v91 = vld [vmem:[%s1 + $0xa4] sm:$0xf]
  %v92 = vld [vmem:[%s1 + $0xa8] sm:$0xf]
  %v93 = vld [vmem:[%s1 + $0xac] sm:$0xf]
  %v94 = vld [vmem:[%s1 + $0xb0] sm:$0xf]
  %v95 = vld [vmem:[%s1 + $0xb4] sm:$0xf]
  %v96 = vld [vmem:[%s1 + $0xb8] sm:$0xf]
  %v97 = vld [vmem:[%s1 + $0xbc] sm:$0xf]
  %v98 = vld [vmem:[%s1 + $0xc0] sm:$0xf]
  %v99 = vld [vmem:[%s1 + $0xc4] sm:$0xf]
  %v100 = vld [vmem:[%s1 + $0xc8] sm:$0xf]
  %v101 = vld [vmem:[%s1 + $0xcc] sm:$0xf]
  %v102 = vld [vmem:[%s1 + $0xd0] sm:$0xf]
  %v103 = vld [vmem:[%s1 + $0xd4] sm:$0xf]
  %v104 = vld [vmem:[%s1 + $0xd8] sm:$0xf]
  %v105 = vld [vmem:[%s1 + $0xdc] sm:$0xf]
  %v106 = vld [vmem:[%s1 + $0xe0] sm:$0xf]
  %v107 = vld [vmem:[%s1 + $0xe4] sm:$0xf]
  %v108 = vld [vmem:[%s1 + $0xe8] sm:$0xf]
  %v109 = vld [vmem:[%s1 + $0xec] sm:$0xf]
  %v110 = vld [vmem:[%s1 + $0xf0] sm:$0xf]
  %v111 = vld [vmem:[%s1 + $0xf4] sm:$0xf]
  %v112 = vld [vmem:[%s1 + $0xf8] sm:$0xf]
  %v113 = vld [vmem:[%s1 + $0xfc] sm:$0xf]
  %v114 = vld [vmem:[%s1 + $0x100] sm:$0xf]
  %v115 = vld [vmem:[%s1 + $0x104] sm:$0xf]
  %v116 = vld [vmem:[%s1 + $0x108] sm:$0xf]
  %v117 = vld [vmem:[%s1 + $0x10c] sm:$0xf]
  %v118 = vld [vmem:[%s1 + $0x110] sm:$0xf]
  %v119 = vld [vmem:[%s1 + $0x114] sm:$0xf]
  %v120 = vld [vmem:[%s1 + $0x118] sm:$0xf]
  %v121 = vld [vmem:[%s1 + $0x11c] sm:$0xf]
  %v122 = vld [vmem:[%s1 + $0x120] sm:$0xf]
  %v123 = vld [vmem:[%s1 + $0x124] sm:$0xf]
  %v124 = vld [vmem:[%s1 + $0x128] sm:$0xf]
  %v125 = vld [vmem:[%s1 + $0x12c] sm:$0xf]
  %v126 = vld [vmem:[%s1 + $0x130] sm:$0xf]
  %v127 = vld [vmem:[%s1 + $0x134] sm:$0xf]
  %v128 = vld [vmem:[%s1 + $0x138] sm:$0xf]
  %v129 = vld [vmem:[%s1 + $0x13c] sm:$0xf]
  %v130 = vld [vmem:[%s1 + $0x140] sm:$0xf]
  %v131 = vld [vmem:[%s1 + $0x144] sm:$0xf]
  %v132 = vld [vmem:[%s1 + $0x148] sm:$0xf]
  %v133 = vld [vmem:[%s1 + $0x14c] sm:$0xf]
  %v134 = vld [vmem:[%s1 + $0x150] sm:$0xf]
  %v135 = vld [vmem:[%s1 + $0x154] sm:$0xf]
  %v136 = vld [vmem:[%s1 + $0x158] sm:$0xf]
  %v137 = vld [vmem:[%s1 + $0x15c] sm:$0xf]
  %v138 = vld [vmem:[%s1 + $0x160] sm:$0xf]
  %v139 = vld [vmem:[%s1 + $0x164] sm:$0xf]
  %v140 = vld [vmem:[%s1 + $0x168] sm:$0xf]
  %v141 = vld [vmem:[%s1 + $0x16c] sm:$0xf]
  %v142 = vld [vmem:[%s1 + $0x170] sm:$0xf]
  %v143 = vld [vmem:[%s1 + $0x174] sm:$0xf]
  %v144 = vld [vmem:[%s1 + $0x178] sm:$0xf]
  %v145 = vld [vmem:[%s1 + $0x17c] sm:$0xf]
  %v146 = vld [vmem:[#allocation2] sm:$0xff]
  %v147 = vld [vmem:[#allocation2 + $0x8] sm:$0xff]
  %v148 = vld [vmem:[#allocation2 + $0x10] sm:$0xff]
  %v149 = vld [vmem:[#allocation2 + $0x18] sm:$0xff]
  %v150 = vld [vmem:[#allocation2 + $0x20] sm:$0xff]
  %v151 = vld [vmem:[#allocation2 + $0x28] sm:$0xff]
  %v152 = vld [vmem:[#allocation2 + $0x30] sm:$0xff]
  %v153 = vld [vmem:[#allocation2 + $0x38] sm:$0xff]
  %v154 = vld [vmem:[#allocation2 + $0x40] sm:$0xff]
  %v155 = vld [vmem:[#allocation2 + $0x48] sm:$0xff]
  %v156 = vld [vmem:[#allocation2 + $0x50] sm:$0xff]
  %v157 = vld [vmem:[#allocation2 + $0x58] sm:$0xff]
  %v158 = vld [vmem:[#allocation2 + $0x60] sm:$0xff]
  %v159 = vld [vmem:[#allocation2 + $0x68] sm:$0xff]
  %v160 = vld [vmem:[#allocation2 + $0x70] sm:$0xff]
  %v161 = vld [vmem:[#allocation2 + $0x78] sm:$0xff]
  %v162 = vld [vmem:[#allocation2 + $0x80] sm:$0xff]
  %v163 = vld [vmem:[#allocation2 + $0x88] sm:$0xff]
  %v164 = vld [vmem:[#allocation2 + $0x90] sm:$0xff]
  %v165 = vld [vmem:[#allocation2 + $0x98] sm:$0xff]
  %v166 = vld [vmem:[#allocation2 + $0xa0] sm:$0xff]
  %v167 = vld [vmem:[#allocation2 + $0xa8] sm:$0xff]
  %v168 = vld [vmem:[#allocation2 + $0xb0] sm:$0xff]
  %v169 = vld [vmem:[#allocation2 + $0xb8] sm:$0xff]
  %v170 = vld [vmem:[#allocation2 + $0xc0] sm:$0xff]
  %v171 = vld [vmem:[#allocation2 + $0xc8] sm:$0xff]
  %v172 = vld [vmem:[#allocation2 + $0xd0] sm:$0xff]
  %v173 = vld [vmem:[#allocation2 + $0xd8] sm:$0xff]
  %v174 = vld [vmem:[#allocation2 + $0xe0] sm:$0xff]
  %v175 = vld [vmem:[#allocation2 + $0xe8] sm:$0xff]
  %v176 = vld [vmem:[#allocation2 + $0xf0] sm:$0xff]
  %v177 = vld [vmem:[#allocation2 + $0xf8] sm:$0xff]
  %v178 = vld [vmem:[%s0] sm:$0xff]
  %v179 = vld [vmem:[%s0 + $0x8] sm:$0xff]
  %v180 = vld [vmem:[%s0 + $0x10] sm:$0xff]
  %v181 = vld [vmem:[%s0 + $0x18] sm:$0xff]
  %v182 = vld [vmem:[%s0 + $0x20] sm:$0xff]
  %v183 = vld [vmem:[%s0 + $0x28] sm:$0xff]
  %v184 = vld [vmem:[%s0 + $0x30] sm:$0xff]
  %v185 = vld [vmem:[%s0 + $0x38] sm:$0xff]
  %v186 = vld [vmem:[%s0 + $0x40] sm:$0xff]
  %v187 = vld [vmem:[%s0 + $0x48] sm:$0xff]
  %v188 = vld [vmem:[%s0 + $0x50] sm:$0xff]
  %v189 = vld [vmem:[%s0 + $0x58] sm:$0xff]
  %v190 = vld [vmem:[%s0 + $0x60] sm:$0xff]
  %v191 = vld [vmem:[%s0 + $0x68] sm:$0xff]
  %v192 = vld [vmem:[%s0 + $0x70] sm:$0xff]
  %v193 = vld [vmem:[%s0 + $0x78] sm:$0xff]
  %v194 = vld [vmem:[%s0 + $0x80] sm:$0xff]
  %v195 = vld [vmem:[%s0 + $0x88] sm:$0xff]
  %v196 = vld [vmem:[%s0 + $0x90] sm:$0xff]
  %v197 = vld [vmem:[%s0 + $0x98] sm:$0xff]
  %v198 = vld [vmem:[%s0 + $0xa0] sm:$0xff]
  %v199 = vld [vmem:[%s0 + $0xa8] sm:$0xff]
  %v200 = vld [vmem:[%s0 + $0xb0] sm:$0xff]
  %v201 = vld [vmem:[%s0 + $0xb8] sm:$0xff]
  %v202 = vld [vmem:[%s0 + $0xc0] sm:$0xff]
  %v203 = vld [vmem:[%s0 + $0xc8] sm:$0xff]
  %v204 = vld [vmem:[%s0 + $0xd0] sm:$0xff]
  %v205 = vld [vmem:[%s0 + $0xd8] sm:$0xff]
  %v206 = vld [vmem:[%s0 + $0xe0] sm:$0xff]
  %v207 = vld [vmem:[%s0 + $0xe8] sm:$0xff]
  %v208 = vld [vmem:[%s0 + $0xf0] sm:$0xff]
  %v209 = vld [vmem:[%s0 + $0xf8] sm:$0xff]
  %v210 = vld [vmem:[%s0 + $0x100] sm:$0xff]
  %v211 = vld [vmem:[%s0 + $0x108] sm:$0xff]
  %v212 = vld [vmem:[%s0 + $0x110] sm:$0xff]
  %v213 = vld [vmem:[%s0 + $0x118] sm:$0xff]
  %v214 = vld [vmem:[%s0 + $0x120] sm:$0xff]
  %v215 = vld [vmem:[%s0 + $0x128] sm:$0xff]
  %v216 = vld [vmem:[%s0 + $0x130] sm:$0xff]
  %v217 = vld [vmem:[%s0 + $0x138] sm:$0xff]
  %v218 = vld [vmem:[%s0 + $0x140] sm:$0xff]
  %v219 = vld [vmem:[%s0 + $0x148] sm:$0xff]
  %v220 = vld [vmem:[%s0 + $0x150] sm:$0xff]
  %v221 = vld [vmem:[%s0 + $0x158] sm:$0xff]
  %v222 = vld [vmem:[%s0 + $0x160] sm:$0xff]
  %v223 = vld [vmem:[%s0 + $0x168] sm:$0xff]
  %v224 = vld [vmem:[%s0 + $0x170] sm:$0xff]
  %v225 = vld [vmem:[%s0 + $0x178] sm:$0xff]
  %v226 = vld [vmem:[%s0 + $0x180] sm:$0xff]
  %v227 = vld [vmem:[%s0 + $0x188] sm:$0xff]
  %v228 = vld [vmem:[%s0 + $0x190] sm:$0xff]
  %v229 = vld [vmem:[%s0 + $0x198] sm:$0xff]
  %v230 = vld [vmem:[%s0 + $0x1a0] sm:$0xff]
  %v231 = vld [vmem:[%s0 + $0x1a8] sm:$0xff]
  %v232 = vld [vmem:[%s0 + $0x1b0] sm:$0xff]
  %v233 = vld [vmem:[%s0 + $0x1b8] sm:$0xff]
  %v234 = vld [vmem:[%s0 + $0x1c0] sm:$0xff]
  %v235 = vld [vmem:[%s0 + $0x1c8] sm:$0xff]
  %v236 = vld [vmem:[%s0 + $0x1d0] sm:$0xff]
  %v237 = vld [vmem:[%s0 + $0x1d8] sm:$0xff]
  %v238 = vld [vmem:[%s0 + $0x1e0] sm:$0xff]
  %v239 = vld [vmem:[%s0 + $0x1e8] sm:$0xff]
  %v240 = vld [vmem:[%s0 + $0x1f0] sm:$0xff]
  %v241 = vld [vmem:[%s0 + $0x1f8] sm:$0xff]
  %v242 = vld [vmem:[%s0 + $0x200] sm:$0xff]
  %v243 = vld [vmem:[%s0 + $0x208] sm:$0xff]
  %v244 = vld [vmem:[%s0 + $0x210] sm:$0xff]
  %v245 = vld [vmem:[%s0 + $0x218] sm:$0xff]
  %v246 = vld [vmem:[%s0 + $0x220] sm:$0xff]
  %v247 = vld [vmem:[%s0 + $0x228] sm:$0xff]
  %v248 = vld [vmem:[%s0 + $0x230] sm:$0xff]
  %v249 = vld [vmem:[%s0 + $0x238] sm:$0xff]
  %v250 = vld [vmem:[%s0 + $0x240] sm:$0xff]
  %v251 = vld [vmem:[%s0 + $0x248] sm:$0xff]
  %v252 = vld [vmem:[%s0 + $0x250] sm:$0xff]
  %v253 = vld [vmem:[%s0 + $0x258] sm:$0xff]
  %v254 = vld [vmem:[%s0 + $0x260] sm:$0xff]
  %v255 = vld [vmem:[%s0 + $0x268] sm:$0xff]
  %v256 = vld [vmem:[%s0 + $0x270] sm:$0xff]
  %v257 = vld [vmem:[%s0 + $0x278] sm:$0xff]
  %v258 = vld [vmem:[%s0 + $0x280] sm:$0xff]
  %v259 = vld [vmem:[%s0 + $0x288] sm:$0xff]
  %v260 = vld [vmem:[%s0 + $0x290] sm:$0xff]
  %v261 = vld [vmem:[%s0 + $0x298] sm:$0xff]
  %v262 = vld [vmem:[%s0 + $0x2a0] sm:$0xff]
  %v263 = vld [vmem:[%s0 + $0x2a8] sm:$0xff]
  %v264 = vld [vmem:[%s0 + $0x2b0] sm:$0xff]
  %v265 = vld [vmem:[%s0 + $0x2b8] sm:$0xff]
  %v266 = vld [vmem:[%s0 + $0x2c0] sm:$0xff]
  %v267 = vld [vmem:[%s0 + $0x2c8] sm:$0xff]
  %v268 = vld [vmem:[%s0 + $0x2d0] sm:$0xff]
  %v269 = vld [vmem:[%s0 + $0x2d8] sm:$0xff]
  %v270 = vld [vmem:[%s0 + $0x2e0] sm:$0xff]
  %v271 = vld [vmem:[%s0 + $0x2e8] sm:$0xff]
  %v272 = vld [vmem:[%s0 + $0x2f0] sm:$0xff]
  %v273 = vld [vmem:[%s0 + $0x2f8] sm:$0xff]
  %v370 = vunpack.c.l.b16 %v178
  %v371 = vunpack.c.h.b16 %v178
  %v372 = vunpack.c.l.b16 %v179
  %v373 = vunpack.c.h.b16 %v179
  %v374 = vunpack.c.l.b16 %v180
  %v375 = vunpack.c.h.b16 %v180
  %v376 = vunpack.c.l.b16 %v181
  %v377 = vunpack.c.h.b16 %v181
  %v378 = vunpack.c.l.b16 %v182
  %v379 = vunpack.c.h.b16 %v182
  %v380 = vunpack.c.l.b16 %v183
  %v381 = vunpack.c.h.b16 %v183
  %v382 = vunpack.c.l.b16 %v184
  %v383 = vunpack.c.h.b16 %v184
  %v384 = vunpack.c.l.b16 %v185
  %v385 = vunpack.c.h.b16 %v185
  %v386 = vunpack.c.l.b16 %v186
  %v387 = vunpack.c.h.b16 %v186
  %v388 = vunpack.c.l.b16 %v187
  %v389 = vunpack.c.h.b16 %v187
  %v390 = vunpack.c.l.b16 %v188
  %v391 = vunpack.c.h.b16 %v188
  %v392 = vunpack.c.l.b16 %v189
  %v393 = vunpack.c.h.b16 %v189
  %v394 = vunpack.c.l.b16 %v190
  %v395 = vunpack.c.h.b16 %v190
  %v396 = vunpack.c.l.b16 %v191
  %v397 = vunpack.c.h.b16 %v191
  %v398 = vunpack.c.l.b16 %v192
  %v399 = vunpack.c.h.b16 %v192
  %v400 = vunpack.c.l.b16 %v193
  %v401 = vunpack.c.h.b16 %v193
  %v402 = vunpack.c.l.b16 %v194
  %v403 = vunpack.c.h.b16 %v194
  %v404 = vunpack.c.l.b16 %v195
  %v405 = vunpack.c.h.b16 %v195
  %v406 = vunpack.c.l.b16 %v196
  %v407 = vunpack.c.h.b16 %v196
  %v408 = vunpack.c.l.b16 %v197
  %v409 = vunpack.c.h.b16 %v197
  %v410 = vunpack.c.l.b16 %v198
  %v411 = vunpack.c.h.b16 %v198
  %v412 = vunpack.c.l.b16 %v199
  %v413 = vunpack.c.h.b16 %v199
  %v414 = vunpack.c.l.b16 %v200
  %v415 = vunpack.c.h.b16 %v200
  %v416 = vunpack.c.l.b16 %v201
  %v417 = vunpack.c.h.b16 %v201
  %v418 = vunpack.c.l.b16 %v202
  %v419 = vunpack.c.h.b16 %v202
  %v420 = vunpack.c.l.b16 %v203
  %v421 = vunpack.c.h.b16 %v203
  %v422 = vunpack.c.l.b16 %v204
  %v423 = vunpack.c.h.b16 %v204
  %v424 = vunpack.c.l.b16 %v205
  %v425 = vunpack.c.h.b16 %v205
  %v426 = vunpack.c.l.b16 %v206
  %v427 = vunpack.c.h.b16 %v206
  %v428 = vunpack.c.l.b16 %v207
  %v429 = vunpack.c.h.b16 %v207
  %v430 = vunpack.c.l.b16 %v208
  %v431 = vunpack.c.h.b16 %v208
  %v432 = vunpack.c.l.b16 %v209
  %v433 = vunpack.c.h.b16 %v209
  %v434 = vunpack.c.l.b16 %v210
  %v435 = vunpack.c.h.b16 %v210
  %v436 = vunpack.c.l.b16 %v211
  %v437 = vunpack.c.h.b16 %v211
  %v438 = vunpack.c.l.b16 %v212
  %v439 = vunpack.c.h.b16 %v212
  %v440 = vunpack.c.l.b16 %v213
  %v441 = vunpack.c.h.b16 %v213
  %v442 = vunpack.c.l.b16 %v214
  %v443 = vunpack.c.h.b16 %v214
  %v444 = vunpack.c.l.b16 %v215
  %v445 = vunpack.c.h.b16 %v215
  %v446 = vunpack.c.l.b16 %v216
  %v447 = vunpack.c.h.b16 %v216
  %v448 = vunpack.c.l.b16 %v217
  %v449 = vunpack.c.h.b16 %v217
  %v450 = vunpack.c.l.b16 %v218
  %v451 = vunpack.c.h.b16 %v218
  %v452 = vunpack.c.l.b16 %v219
  %v453 = vunpack.c.h.b16 %v219
  %v454 = vunpack.c.l.b16 %v220
  %v455 = vunpack.c.h.b16 %v220
  %v456 = vunpack.c.l.b16 %v221
  %v457 = vunpack.c.h.b16 %v221
  %v458 = vunpack.c.l.b16 %v222
  %v459 = vunpack.c.h.b16 %v222
  %v460 = vunpack.c.l.b16 %v223
  %v461 = vunpack.c.h.b16 %v223
  %v462 = vunpack.c.l.b16 %v224
  %v463 = vunpack.c.h.b16 %v224
  %v464 = vunpack.c.l.b16 %v225
  %v465 = vunpack.c.h.b16 %v225
  %v466 = vunpack.c.l.b16 %v226
  %v467 = vunpack.c.h.b16 %v226
  %v468 = vunpack.c.l.b16 %v227
  %v469 = vunpack.c.h.b16 %v227
  %v470 = vunpack.c.l.b16 %v228
  %v471 = vunpack.c.h.b16 %v228
  %v472 = vunpack.c.l.b16 %v229
  %v473 = vunpack.c.h.b16 %v229
  %v474 = vunpack.c.l.b16 %v230
  %v475 = vunpack.c.h.b16 %v230
  %v476 = vunpack.c.l.b16 %v231
  %v477 = vunpack.c.h.b16 %v231
  %v478 = vunpack.c.l.b16 %v232
  %v479 = vunpack.c.h.b16 %v232
  %v480 = vunpack.c.l.b16 %v233
  %v481 = vunpack.c.h.b16 %v233
  %v482 = vunpack.c.l.b16 %v234
  %v483 = vunpack.c.h.b16 %v234
  %v484 = vunpack.c.l.b16 %v235
  %v485 = vunpack.c.h.b16 %v235
  %v486 = vunpack.c.l.b16 %v236
  %v487 = vunpack.c.h.b16 %v236
  %v488 = vunpack.c.l.b16 %v237
  %v489 = vunpack.c.h.b16 %v237
  %v490 = vunpack.c.l.b16 %v238
  %v491 = vunpack.c.h.b16 %v238
  %v492 = vunpack.c.l.b16 %v239
  %v493 = vunpack.c.h.b16 %v239
  %v494 = vunpack.c.l.b16 %v240
  %v495 = vunpack.c.h.b16 %v240
  %v496 = vunpack.c.l.b16 %v241
  %v497 = vunpack.c.h.b16 %v241
  %v498 = vunpack.c.l.b16 %v242
  %v499 = vunpack.c.h.b16 %v242
  %v500 = vunpack.c.l.b16 %v243
  %v501 = vunpack.c.h.b16 %v243
  %v502 = vunpack.c.l.b16 %v244
  %v503 = vunpack.c.h.b16 %v244
  %v504 = vunpack.c.l.b16 %v245
  %v505 = vunpack.c.h.b16 %v245
  %v506 = vunpack.c.l.b16 %v246
  %v507 = vunpack.c.h.b16 %v246
  %v508 = vunpack.c.l.b16 %v247
  %v509 = vunpack.c.h.b16 %v247
  %v510 = vunpack.c.l.b16 %v248
  %v511 = vunpack.c.h.b16 %v248
  %v512 = vunpack.c.l.b16 %v249
  %v513 = vunpack.c.h.b16 %v249
  %v514 = vunpack.c.l.b16 %v250
  %v515 = vunpack.c.h.b16 %v250
  %v516 = vunpack.c.l.b16 %v251
  %v517 = vunpack.c.h.b16 %v251
  %v518 = vunpack.c.l.b16 %v252
  %v519 = vunpack.c.h.b16 %v252
  %v520 = vunpack.c.l.b16 %v253
  %v521 = vunpack.c.h.b16 %v253
  %v522 = vunpack.c.l.b16 %v254
  %v523 = vunpack.c.h.b16 %v254
  %v524 = vunpack.c.l.b16 %v255
  %v525 = vunpack.c.h.b16 %v255
  %v526 = vunpack.c.l.b16 %v256
  %v527 = vunpack.c.h.b16 %v256
  %v528 = vunpack.c.l.b16 %v257
  %v529 = vunpack.c.h.b16 %v257
  %v530 = vunpack.c.l.b16 %v258
  %v531 = vunpack.c.h.b16 %v258
  %v532 = vunpack.c.l.b16 %v259
  %v533 = vunpack.c.h.b16 %v259
  %v534 = vunpack.c.l.b16 %v260
  %v535 = vunpack.c.h.b16 %v260
  %v536 = vunpack.c.l.b16 %v261
  %v537 = vunpack.c.h.b16 %v261
  %v538 = vunpack.c.l.b16 %v262
  %v539 = vunpack.c.h.b16 %v262
  %v540 = vunpack.c.l.b16 %v263
  %v541 = vunpack.c.h.b16 %v263
  %v542 = vunpack.c.l.b16 %v264
  %v543 = vunpack.c.h.b16 %v264
  %v544 = vunpack.c.l.b16 %v265
  %v545 = vunpack.c.h.b16 %v265
  %v546 = vunpack.c.l.b16 %v266
  %v547 = vunpack.c.h.b16 %v266
  %v548 = vunpack.c.l.b16 %v267
  %v549 = vunpack.c.h.b16 %v267
  %v550 = vunpack.c.l.b16 %v268
  %v551 = vunpack.c.h.b16 %v268
  %v552 = vunpack.c.l.b16 %v269
  %v553 = vunpack.c.h.b16 %v269
  %v554 = vunpack.c.l.b16 %v270
  %v555 = vunpack.c.h.b16 %v270
  %v556 = vunpack.c.l.b16 %v271
  %v557 = vunpack.c.h.b16 %v271
  %v558 = vunpack.c.l.b16 %v272
  %v559 = vunpack.c.h.b16 %v272
  %v560 = vunpack.c.l.b16 %v273
  %v561 = vunpack.c.h.b16 %v273
  %v562 = vpack.c.b16 %v376, %v370
  %v563 = vpack.c.b16 %v377, %v371
  %v564 = vpack.c.b16 %v378, %v372
  %v565 = vpack.c.b16 %v379, %v373
  %v566 = vpack.c.b16 %v380, %v374
  %v567 = vpack.c.b16 %v381, %v375
  %v568 = vpack.c.b16 %v388, %v382
  %v569 = vpack.c.b16 %v389, %v383
  %v570 = vpack.c.b16 %v390, %v384
  %v571 = vpack.c.b16 %v391, %v385
  %v572 = vpack.c.b16 %v392, %v386
  %v573 = vpack.c.b16 %v393, %v387
  %v574 = vpack.c.b16 %v400, %v394
  %v575 = vpack.c.b16 %v401, %v395
  %v576 = vpack.c.b16 %v402, %v396
  %v577 = vpack.c.b16 %v403, %v397
  %v578 = vpack.c.b16 %v404, %v398
  %v579 = vpack.c.b16 %v405, %v399
  %v580 = vpack.c.b16 %v412, %v406
  %v581 = vpack.c.b16 %v413, %v407
  %v582 = vpack.c.b16 %v414, %v408
  %v583 = vpack.c.b16 %v415, %v409
  %v584 = vpack.c.b16 %v416, %v410
  %v585 = vpack.c.b16 %v417, %v411
  %v586 = vpack.c.b16 %v424, %v418
  %v587 = vpack.c.b16 %v425, %v419
  %v588 = vpack.c.b16 %v426, %v420
  %v589 = vpack.c.b16 %v427, %v421
  %v590 = vpack.c.b16 %v428, %v422
  %v591 = vpack.c.b16 %v429, %v423
  %v592 = vpack.c.b16 %v436, %v430
  %v593 = vpack.c.b16 %v437, %v431
  %v594 = vpack.c.b16 %v438, %v432
  %v595 = vpack.c.b16 %v439, %v433
  %v596 = vpack.c.b16 %v440, %v434
  %v597 = vpack.c.b16 %v441, %v435
  %v598 = vpack.c.b16 %v448, %v442
  %v599 = vpack.c.b16 %v449, %v443
  %v600 = vpack.c.b16 %v450, %v444
  %v601 = vpack.c.b16 %v451, %v445
  %v602 = vpack.c.b16 %v452, %v446
  %v603 = vpack.c.b16 %v453, %v447
  %v604 = vpack.c.b16 %v460, %v454
  %v605 = vpack.c.b16 %v461, %v455
  %v606 = vpack.c.b16 %v462, %v456
  %v607 = vpack.c.b16 %v463, %v457
  %v608 = vpack.c.b16 %v464, %v458
  %v609 = vpack.c.b16 %v465, %v459
  %v610 = vpack.c.b16 %v472, %v466
  %v611 = vpack.c.b16 %v473, %v467
  %v612 = vpack.c.b16 %v474, %v468
  %v613 = vpack.c.b16 %v475, %v469
  %v614 = vpack.c.b16 %v476, %v470
  %v615 = vpack.c.b16 %v477, %v471
  %v616 = vpack.c.b16 %v484, %v478
  %v617 = vpack.c.b16 %v485, %v479
  %v618 = vpack.c.b16 %v486, %v480
  %v619 = vpack.c.b16 %v487, %v481
  %v620 = vpack.c.b16 %v488, %v482
  %v621 = vpack.c.b16 %v489, %v483
  %v622 = vpack.c.b16 %v496, %v490
  %v623 = vpack.c.b16 %v497, %v491
  %v624 = vpack.c.b16 %v498, %v492
  %v625 = vpack.c.b16 %v499, %v493
  %v626 = vpack.c.b16 %v500, %v494
  %v627 = vpack.c.b16 %v501, %v495
  %v628 = vpack.c.b16 %v508, %v502
  %v629 = vpack.c.b16 %v509, %v503
  %v630 = vpack.c.b16 %v510, %v504
  %v631 = vpack.c.b16 %v511, %v505
  %v632 = vpack.c.b16 %v512, %v506
  %v633 = vpack.c.b16 %v513, %v507
  %v634 = vpack.c.b16 %v520, %v514
  %v635 = vpack.c.b16 %v521, %v515
  %v636 = vpack.c.b16 %v522, %v516
  %v637 = vpack.c.b16 %v523, %v517
  %v638 = vpack.c.b16 %v524, %v518
  %v639 = vpack.c.b16 %v525, %v519
  %v640 = vpack.c.b16 %v532, %v526
  %v641 = vpack.c.b16 %v533, %v527
  %v642 = vpack.c.b16 %v534, %v528
  %v643 = vpack.c.b16 %v535, %v529
  %v644 = vpack.c.b16 %v536, %v530
  %v645 = vpack.c.b16 %v537, %v531
  %v646 = vpack.c.b16 %v544, %v538
  %v647 = vpack.c.b16 %v545, %v539
  %v648 = vpack.c.b16 %v546, %v540
  %v649 = vpack.c.b16 %v547, %v541
  %v650 = vpack.c.b16 %v548, %v542
  %v651 = vpack.c.b16 %v549, %v543
  %v652 = vpack.c.b16 %v556, %v550
  %v653 = vpack.c.b16 %v557, %v551
  %v654 = vpack.c.b16 %v558, %v552
  %v655 = vpack.c.b16 %v559, %v553
  %v656 = vpack.c.b16 %v560, %v554
  %v657 = vpack.c.b16 %v561, %v555
  %v850 = vunpack.c.l.b16 %v50
  %v851 = vunpack.c.l.b16 %v51
  %v852 = vunpack.c.l.b16 %v52
  %v853 = vunpack.c.l.b16 %v53
  %v854 = vunpack.c.l.b16 %v54
  %v855 = vunpack.c.l.b16 %v55
  %v856 = vunpack.c.l.b16 %v56
  %v857 = vunpack.c.l.b16 %v57
  %v858 = vunpack.c.l.b16 %v58
  %v859 = vunpack.c.l.b16 %v59
  %v860 = vunpack.c.l.b16 %v60
  %v861 = vunpack.c.l.b16 %v61
  %v862 = vunpack.c.l.b16 %v62
  %v863 = vunpack.c.l.b16 %v63
  %v864 = vunpack.c.l.b16 %v64
  %v865 = vunpack.c.l.b16 %v65
  %v866 = vunpack.c.l.b16 %v66
  %v867 = vunpack.c.l.b16 %v67
  %v868 = vunpack.c.l.b16 %v68
  %v869 = vunpack.c.l.b16 %v69
  %v870 = vunpack.c.l.b16 %v70
  %v871 = vunpack.c.l.b16 %v71
  %v872 = vunpack.c.l.b16 %v72
  %v873 = vunpack.c.l.b16 %v73
  %v874 = vunpack.c.l.b16 %v74
  %v875 = vunpack.c.l.b16 %v75
  %v876 = vunpack.c.l.b16 %v76
  %v877 = vunpack.c.l.b16 %v77
  %v878 = vunpack.c.l.b16 %v78
  %v879 = vunpack.c.l.b16 %v79
  %v880 = vunpack.c.l.b16 %v80
  %v881 = vunpack.c.l.b16 %v81
  %v882 = vunpack.c.l.b16 %v82
  %v883 = vunpack.c.l.b16 %v83
  %v884 = vunpack.c.l.b16 %v84
  %v885 = vunpack.c.l.b16 %v85
  %v886 = vunpack.c.l.b16 %v86
  %v887 = vunpack.c.l.b16 %v87
  %v888 = vunpack.c.l.b16 %v88
  %v889 = vunpack.c.l.b16 %v89
  %v890 = vunpack.c.l.b16 %v90
  %v891 = vunpack.c.l.b16 %v91
  %v892 = vunpack.c.l.b16 %v92
  %v893 = vunpack.c.l.b16 %v93
  %v894 = vunpack.c.l.b16 %v94
  %v895 = vunpack.c.l.b16 %v95
  %v896 = vunpack.c.l.b16 %v96
  %v897 = vunpack.c.l.b16 %v97
  %v898 = vunpack.c.l.b16 %v98
  %v899 = vunpack.c.l.b16 %v99
  %v900 = vunpack.c.l.b16 %v100
  %v901 = vunpack.c.l.b16 %v101
  %v902 = vunpack.c.l.b16 %v102
  %v903 = vunpack.c.l.b16 %v103
  %v904 = vunpack.c.l.b16 %v104
  %v905 = vunpack.c.l.b16 %v105
  %v906 = vunpack.c.l.b16 %v106
  %v907 = vunpack.c.l.b16 %v107
  %v908 = vunpack.c.l.b16 %v108
  %v909 = vunpack.c.l.b16 %v109
  %v910 = vunpack.c.l.b16 %v110
  %v911 = vunpack.c.l.b16 %v111
  %v912 = vunpack.c.l.b16 %v112
  %v913 = vunpack.c.l.b16 %v113
  %v914 = vunpack.c.l.b16 %v114
  %v915 = vunpack.c.l.b16 %v115
  %v916 = vunpack.c.l.b16 %v116
  %v917 = vunpack.c.l.b16 %v117
  %v918 = vunpack.c.l.b16 %v118
  %v919 = vunpack.c.l.b16 %v119
  %v920 = vunpack.c.l.b16 %v120
  %v921 = vunpack.c.l.b16 %v121
  %v922 = vunpack.c.l.b16 %v122
  %v923 = vunpack.c.l.b16 %v123
  %v924 = vunpack.c.l.b16 %v124
  %v925 = vunpack.c.l.b16 %v125
  %v926 = vunpack.c.l.b16 %v126
  %v927 = vunpack.c.l.b16 %v127
  %v928 = vunpack.c.l.b16 %v128
  %v929 = vunpack.c.l.b16 %v129
  %v930 = vunpack.c.l.b16 %v130
  %v931 = vunpack.c.l.b16 %v131
  %v932 = vunpack.c.l.b16 %v132
  %v933 = vunpack.c.l.b16 %v133
  %v934 = vunpack.c.l.b16 %v134
  %v935 = vunpack.c.l.b16 %v135
  %v936 = vunpack.c.l.b16 %v136
  %v937 = vunpack.c.l.b16 %v137
  %v938 = vunpack.c.l.b16 %v138
  %v939 = vunpack.c.l.b16 %v139
  %v940 = vunpack.c.l.b16 %v140
  %v941 = vunpack.c.l.b16 %v141
  %v942 = vunpack.c.l.b16 %v142
  %v943 = vunpack.c.l.b16 %v143
  %v944 = vunpack.c.l.b16 %v144
  %v945 = vunpack.c.l.b16 %v145
  %v946 = vpack.c.b16 %v851, %v850
  %v947 = vpack.c.b16 %v853, %v852
  %v948 = vpack.c.b16 %v855, %v854
  %v949 = vpack.c.b16 %v857, %v856
  %v950 = vpack.c.b16 %v859, %v858
  %v951 = vpack.c.b16 %v861, %v860
  %v952 = vpack.c.b16 %v863, %v862
  %v953 = vpack.c.b16 %v865, %v864
  %v954 = vpack.c.b16 %v867, %v866
  %v955 = vpack.c.b16 %v869, %v868
  %v956 = vpack.c.b16 %v871, %v870
  %v957 = vpack.c.b16 %v873, %v872
  %v958 = vpack.c.b16 %v875, %v874
  %v959 = vpack.c.b16 %v877, %v876
  %v960 = vpack.c.b16 %v879, %v878
  %v961 = vpack.c.b16 %v881, %v880
  %v962 = vpack.c.b16 %v883, %v882
  %v963 = vpack.c.b16 %v885, %v884
  %v964 = vpack.c.b16 %v887, %v886
  %v965 = vpack.c.b16 %v889, %v888
  %v966 = vpack.c.b16 %v891, %v890
  %v967 = vpack.c.b16 %v893, %v892
  %v968 = vpack.c.b16 %v895, %v894
  %v969 = vpack.c.b16 %v897, %v896
  %v970 = vpack.c.b16 %v899, %v898
  %v971 = vpack.c.b16 %v901, %v900
  %v972 = vpack.c.b16 %v903, %v902
  %v973 = vpack.c.b16 %v905, %v904
  %v974 = vpack.c.b16 %v907, %v906
  %v975 = vpack.c.b16 %v909, %v908
  %v976 = vpack.c.b16 %v911, %v910
  %v977 = vpack.c.b16 %v913, %v912
  %v978 = vpack.c.b16 %v915, %v914
  %v979 = vpack.c.b16 %v917, %v916
  %v980 = vpack.c.b16 %v919, %v918
  %v981 = vpack.c.b16 %v921, %v920
  %v982 = vpack.c.b16 %v923, %v922
  %v983 = vpack.c.b16 %v925, %v924
  %v984 = vpack.c.b16 %v927, %v926
  %v985 = vpack.c.b16 %v929, %v928
  %v986 = vpack.c.b16 %v931, %v930
  %v987 = vpack.c.b16 %v933, %v932
  %v988 = vpack.c.b16 %v935, %v934
  %v989 = vpack.c.b16 %v937, %v936
  %v990 = vpack.c.b16 %v939, %v938
  %v991 = vpack.c.b16 %v941, %v940
  %v992 = vpack.c.b16 %v943, %v942
  %v993 = vpack.c.b16 %v945, %v944
  %1042 = vmatprep.subr.bf16.mxu0 0
  %1043 = vmatpush1.bf16.msra.mxu0 %v953
  %1044 = vmatprep.subr.bf16.mxu0 0
  %1045 = vmatpush1.bf16.msra.mxu0 %v952
  %1046 = vmatprep.subr.bf16.mxu0 0
  %1047 = vmatpush1.bf16.msra.mxu0 %v951
  %1048 = vmatprep.subr.bf16.mxu0 0
  %1049 = vmatpush1.bf16.msra.mxu0 %v950
  %1050 = vmatprep.subr.bf16.mxu0 0
  %1051 = vmatpush1.bf16.msra.mxu0 %v949
  %1052 = vmatprep.subr.bf16.mxu0 0
  %1053 = vmatpush1.bf16.msra.mxu0 %v948
  %1054 = vmatprep.subr.bf16.mxu0 0
  %1055 = vmatpush1.bf16.msra.mxu0 %v947
  %1056 = vmatprep.subr.bf16.mxu0 0
  %1057 = vmatpush1.bf16.msra.mxu0 %v946
  %1058 = vmatprep.subr.bf16.mxu0 0
  %1059 = vmatpush2.bf16.msra.mxu0 %v961
  %1060 = vmatprep.subr.bf16.mxu0 0
  %1061 = vmatpush2.bf16.msra.mxu0 %v960
  %1062 = vmatprep.subr.bf16.mxu0 0
  %1063 = vmatpush2.bf16.msra.mxu0 %v959
  %1064 = vmatprep.subr.bf16.mxu0 0
  %1065 = vmatpush2.bf16.msra.mxu0 %v958
  %1066 = vmatprep.subr.bf16.mxu0 0
  %1067 = vmatpush2.bf16.msra.mxu0 %v957
  %1068 = vmatprep.subr.bf16.mxu0 0
  %1069 = vmatpush2.bf16.msra.mxu0 %v956
  %1070 = vmatprep.subr.bf16.mxu0 0
  %1071 = vmatpush2.bf16.msra.mxu0 %v955
  %1072 = vmatprep.subr.bf16.mxu0 0
  %1073 = vmatpush2.bf16.msra.mxu0 %v954
  %1074 = vmatprep.mubr.bf16.mxu0 %v563
  %1075 = vmatmul.mubr.bf16.gmra.mxu0 %v562
  %v1076 = vpop.f32.mrf.mxu0
  %v1077 = vadd.f32 0.0, %v1076
  %v1078 = vpop.f32.mrf.mxu0
  %v1079 = vpop.f32.mrf.mxu0
  %v1080 = vadd.f32 0.0, %v1079
  %v1081 = vpop.f32.mrf.mxu0
  %1082 = vmatprep.mubr.bf16.mxu0 %v569
  %1083 = vmatmul.mubr.bf16.gmra.mxu0 %v568
  %v1084 = vpop.f32.mrf.mxu0
  %v1085 = vadd.f32 0.0, %v1084
  %v1086 = vpop.f32.mrf.mxu0
  %v1087 = vpop.f32.mrf.mxu0
  %v1088 = vadd.f32 0.0, %v1087
  %v1089 = vpop.f32.mrf.mxu0
  %1090 = vmatprep.mubr.bf16.mxu0 %v575
  %1091 = vmatmul.mubr.bf16.gmra.mxu0 %v574
  %v1092 = vpop.f32.mrf.mxu0
  %v1093 = vadd.f32 0.0, %v1092
  %v1094 = vpop.f32.mrf.mxu0
  %v1095 = vpop.f32.mrf.mxu0
  %v1096 = vadd.f32 0.0, %v1095
  %v1097 = vpop.f32.mrf.mxu0
  %1098 = vmatprep.mubr.bf16.mxu0 %v581
  %1099 = vmatmul.mubr.bf16.gmra.mxu0 %v580
  %v1100 = vpop.f32.mrf.mxu0
  %v1101 = vadd.f32 0.0, %v1100
  %v1102 = vpop.f32.mrf.mxu0
  %v1103 = vpop.f32.mrf.mxu0
  %v1104 = vadd.f32 0.0, %v1103
  %v1105 = vpop.f32.mrf.mxu0
  %1106 = vmatprep.mubr.bf16.mxu0 %v587
  %1107 = vmatmul.mubr.bf16.gmra.mxu0 %v586
  %v1108 = vpop.f32.mrf.mxu0
  %v1109 = vadd.f32 0.0, %v1108
  %v1110 = vpop.f32.mrf.mxu0
  %v1111 = vpop.f32.mrf.mxu0
  %v1112 = vadd.f32 0.0, %v1111
  %v1113 = vpop.f32.mrf.mxu0
  %1114 = vmatprep.mubr.bf16.mxu0 %v593
  %1115 = vmatmul.mubr.bf16.gmra.mxu0 %v592
  %v1116 = vpop.f32.mrf.mxu0
  %v1117 = vadd.f32 0.0, %v1116
  %v1118 = vpop.f32.mrf.mxu0
  %v1119 = vpop.f32.mrf.mxu0
  %v1120 = vadd.f32 0.0, %v1119
  %v1121 = vpop.f32.mrf.mxu0
  %1122 = vmatprep.mubr.bf16.mxu0 %v599
  %1123 = vmatmul.mubr.bf16.gmra.mxu0 %v598
  %v1124 = vpop.f32.mrf.mxu0
  %v1125 = vadd.f32 0.0, %v1124
  %v1126 = vpop.f32.mrf.mxu0
  %v1127 = vpop.f32.mrf.mxu0
  %v1128 = vadd.f32 0.0, %v1127
  %v1129 = vpop.f32.mrf.mxu0
  %1130 = vmatprep.mubr.bf16.mxu0 %v605
  %1131 = vmatmul.mubr.bf16.gmra.mxu0 %v604
  %v1132 = vpop.f32.mrf.mxu0
  %v1133 = vadd.f32 0.0, %v1132
  %v1134 = vpop.f32.mrf.mxu0
  %v1135 = vpop.f32.mrf.mxu0
  %v1136 = vadd.f32 0.0, %v1135
  %v1137 = vpop.f32.mrf.mxu0
  %1138 = vmatprep.mubr.bf16.mxu0 %v611
  %1139 = vmatmul.mubr.bf16.gmra.mxu0 %v610
  %v1140 = vpop.f32.mrf.mxu0
  %v1141 = vadd.f32 0.0, %v1140
  %v1142 = vpop.f32.mrf.mxu0
  %v1143 = vpop.f32.mrf.mxu0
  %v1144 = vadd.f32 0.0, %v1143
  %v1145 = vpop.f32.mrf.mxu0
  %1146 = vmatprep.mubr.bf16.mxu0 %v617
  %1147 = vmatmul.mubr.bf16.gmra.mxu0 %v616
  %v1148 = vpop.f32.mrf.mxu0
  %v1149 = vadd.f32 0.0, %v1148
  %v1150 = vpop.f32.mrf.mxu0
  %v1151 = vpop.f32.mrf.mxu0
  %v1152 = vadd.f32 0.0, %v1151
  %v1153 = vpop.f32.mrf.mxu0
  %1154 = vmatprep.mubr.bf16.mxu0 %v623
  %1155 = vmatmul.mubr.bf16.gmra.mxu0 %v622
  %v1156 = vpop.f32.mrf.mxu0
  %v1157 = vadd.f32 0.0, %v1156
  %v1158 = vpop.f32.mrf.mxu0
  %v1159 = vpop.f32.mrf.mxu0
  %v1160 = vadd.f32 0.0, %v1159
  %v1161 = vpop.f32.mrf.mxu0
  %1162 = vmatprep.mubr.bf16.mxu0 %v629
  %1163 = vmatmul.mubr.bf16.gmra.mxu0 %v628
  %v1164 = vpop.f32.mrf.mxu0
  %v1165 = vadd.f32 0.0, %v1164
  %v1166 = vpop.f32.mrf.mxu0
  %v1167 = vpop.f32.mrf.mxu0
  %v1168 = vadd.f32 0.0, %v1167
  %v1169 = vpop.f32.mrf.mxu0
  %1170 = vmatprep.mubr.bf16.mxu0 %v635
  %1171 = vmatmul.mubr.bf16.gmra.mxu0 %v634
  %v1172 = vpop.f32.mrf.mxu0
  %v1173 = vadd.f32 0.0, %v1172
  %v1174 = vpop.f32.mrf.mxu0
  %v1175 = vpop.f32.mrf.mxu0
  %v1176 = vadd.f32 0.0, %v1175
  %v1177 = vpop.f32.mrf.mxu0
  %1178 = vmatprep.mubr.bf16.mxu0 %v641
  %1179 = vmatmul.mubr.bf16.gmra.mxu0 %v640
  %v1180 = vpop.f32.mrf.mxu0
  %v1181 = vadd.f32 0.0, %v1180
  %v1182 = vpop.f32.mrf.mxu0
  %v1183 = vpop.f32.mrf.mxu0
  %v1184 = vadd.f32 0.0, %v1183
  %v1185 = vpop.f32.mrf.mxu0
  %1186 = vmatprep.mubr.bf16.mxu0 %v647
  %1187 = vmatmul.mubr.bf16.gmra.mxu0 %v646
  %v1188 = vpop.f32.mrf.mxu0
  %v1189 = vadd.f32 0.0, %v1188
  %v1190 = vpop.f32.mrf.mxu0
  %v1191 = vpop.f32.mrf.mxu0
  %v1192 = vadd.f32 0.0, %v1191
  %v1193 = vpop.f32.mrf.mxu0
  %1194 = vmatprep.mubr.bf16.mxu0 %v653
  %1195 = vmatmul.mubr.bf16.gmra.mxu0 %v652
  %v1196 = vpop.f32.mrf.mxu0
  %v1197 = vadd.f32 0.0, %v1196
  %v1198 = vpop.f32.mrf.mxu0
  %v1199 = vpop.f32.mrf.mxu0
  %v1200 = vadd.f32 0.0, %v1199
  %v1201 = vpop.f32.mrf.mxu0
  %1202 = vdwg.mxu0
  %1203 = vmatprep.subr.bf16.mxu0 0
  %1204 = vmatpush1.bf16.msra.mxu0 %v969
  %1205 = vmatprep.subr.bf16.mxu0 0
  %1206 = vmatpush1.bf16.msra.mxu0 %v968
  %1207 = vmatprep.subr.bf16.mxu0 0
  %1208 = vmatpush1.bf16.msra.mxu0 %v967
  %1209 = vmatprep.subr.bf16.mxu0 0
  %1210 = vmatpush1.bf16.msra.mxu0 %v966
  %1211 = vmatprep.subr.bf16.mxu0 0
  %1212 = vmatpush1.bf16.msra.mxu0 %v965
  %1213 = vmatprep.subr.bf16.mxu0 0
  %1214 = vmatpush1.bf16.msra.mxu0 %v964
  %1215 = vmatprep.subr.bf16.mxu0 0
  %1216 = vmatpush1.bf16.msra.mxu0 %v963
  %1217 = vmatprep.subr.bf16.mxu0 0
  %1218 = vmatpush1.bf16.msra.mxu0 %v962
  %1219 = vmatprep.subr.bf16.mxu0 0
  %1220 = vmatpush2.bf16.msra.mxu0 %v977
  %1221 = vmatprep.subr.bf16.mxu0 0
  %1222 = vmatpush2.bf16.msra.mxu0 %v976
  %1223 = vmatprep.subr.bf16.mxu0 0
  %1224 = vmatpush2.bf16.msra.mxu0 %v975
  %1225 = vmatprep.subr.bf16.mxu0 0
  %1226 = vmatpush2.bf16.msra.mxu0 %v974
  %1227 = vmatprep.subr.bf16.mxu0 0
  %1228 = vmatpush2.bf16.msra.mxu0 %v973
  %1229 = vmatprep.subr.bf16.mxu0 0
  %1230 = vmatpush2.bf16.msra.mxu0 %v972
  %1231 = vmatprep.subr.bf16.mxu0 0
  %1232 = vmatpush2.bf16.msra.mxu0 %v971
  %1233 = vmatprep.subr.bf16.mxu0 0
  %1234 = vmatpush2.bf16.msra.mxu0 %v970
  %1235 = vmatprep.mubr.bf16.mxu0 %v565
  %1236 = vmatmul.mubr.bf16.gmra.mxu0 %v564
  %v1237 = vpop.f32.mrf.mxu0
  %v1238 = vadd.f32 %v1077, %v1237
  %v1239 = vpop.f32.mrf.mxu0
  %v1240 = vpop.f32.mrf.mxu0
  %v1241 = vadd.f32 %v1080, %v1240
  %v1242 = vpop.f32.mrf.mxu0
  %1243 = vmatprep.mubr.bf16.mxu0 %v571
  %1244 = vmatmul.mubr.bf16.gmra.mxu0 %v570
  %v1245 = vpop.f32.mrf.mxu0
  %v1246 = vadd.f32 %v1085, %v1245
  %v1247 = vpop.f32.mrf.mxu0
  %v1248 = vpop.f32.mrf.mxu0
  %v1249 = vadd.f32 %v1088, %v1248
  %v1250 = vpop.f32.mrf.mxu0
  %1251 = vmatprep.mubr.bf16.mxu0 %v577
  %1252 = vmatmul.mubr.bf16.gmra.mxu0 %v576
  %v1253 = vpop.f32.mrf.mxu0
  %v1254 = vadd.f32 %v1093, %v1253
  %v1255 = vpop.f32.mrf.mxu0
  %v1256 = vpop.f32.mrf.mxu0
  %v1257 = vadd.f32 %v1096, %v1256
  %v1258 = vpop.f32.mrf.mxu0
  %1259 = vmatprep.mubr.bf16.mxu0 %v583
  %1260 = vmatmul.mubr.bf16.gmra.mxu0 %v582
  %v1261 = vpop.f32.mrf.mxu0
  %v1262 = vadd.f32 %v1101, %v1261
  %v1263 = vpop.f32.mrf.mxu0
  %v1264 = vpop.f32.mrf.mxu0
  %v1265 = vadd.f32 %v1104, %v1264
  %v1266 = vpop.f32.mrf.mxu0
  %1267 = vmatprep.mubr.bf16.mxu0 %v589
  %1268 = vmatmul.mubr.bf16.gmra.mxu0 %v588
  %v1269 = vpop.f32.mrf.mxu0
  %v1270 = vadd.f32 %v1109, %v1269
  %v1271 = vpop.f32.mrf.mxu0
  %v1272 = vpop.f32.mrf.mxu0
  %v1273 = vadd.f32 %v1112, %v1272
  %v1274 = vpop.f32.mrf.mxu0
  %1275 = vmatprep.mubr.bf16.mxu0 %v595
  %1276 = vmatmul.mubr.bf16.gmra.mxu0 %v594
  %v1277 = vpop.f32.mrf.mxu0
  %v1278 = vadd.f32 %v1117, %v1277
  %v1279 = vpop.f32.mrf.mxu0
  %v1280 = vpop.f32.mrf.mxu0
  %v1281 = vadd.f32 %v1120, %v1280
  %v1282 = vpop.f32.mrf.mxu0
  %1283 = vmatprep.mubr.bf16.mxu0 %v601
  %1284 = vmatmul.mubr.bf16.gmra.mxu0 %v600
  %v1285 = vpop.f32.mrf.mxu0
  %v1286 = vadd.f32 %v1125, %v1285
  %v1287 = vpop.f32.mrf.mxu0
  %v1288 = vpop.f32.mrf.mxu0
  %v1289 = vadd.f32 %v1128, %v1288
  %v1290 = vpop.f32.mrf.mxu0
  %1291 = vmatprep.mubr.bf16.mxu0 %v607
  %1292 = vmatmul.mubr.bf16.gmra.mxu0 %v606
  %v1293 = vpop.f32.mrf.mxu0
  %v1294 = vadd.f32 %v1133, %v1293
  %v1295 = vpop.f32.mrf.mxu0
  %v1296 = vpop.f32.mrf.mxu0
  %v1297 = vadd.f32 %v1136, %v1296
  %v1298 = vpop.f32.mrf.mxu0
  %1299 = vmatprep.mubr.bf16.mxu0 %v613
  %1300 = vmatmul.mubr.bf16.gmra.mxu0 %v612
  %v1301 = vpop.f32.mrf.mxu0
  %v1302 = vadd.f32 %v1141, %v1301
  %v1303 = vpop.f32.mrf.mxu0
  %v1304 = vpop.f32.mrf.mxu0
  %v1305 = vadd.f32 %v1144, %v1304
  %v1306 = vpop.f32.mrf.mxu0
  %1307 = vmatprep.mubr.bf16.mxu0 %v619
  %1308 = vmatmul.mubr.bf16.gmra.mxu0 %v618
  %v1309 = vpop.f32.mrf.mxu0
  %v1310 = vadd.f32 %v1149, %v1309
  %v1311 = vpop.f32.mrf.mxu0
  %v1312 = vpop.f32.mrf.mxu0
  %v1313 = vadd.f32 %v1152, %v1312
  %v1314 = vpop.f32.mrf.mxu0
  %1315 = vmatprep.mubr.bf16.mxu0 %v625
  %1316 = vmatmul.mubr.bf16.gmra.mxu0 %v624
  %v1317 = vpop.f32.mrf.mxu0
  %v1318 = vadd.f32 %v1157, %v1317
  %v1319 = vpop.f32.mrf.mxu0
  %v1320 = vpop.f32.mrf.mxu0
  %v1321 = vadd.f32 %v1160, %v1320
  %v1322 = vpop.f32.mrf.mxu0
  %1323 = vmatprep.mubr.bf16.mxu0 %v631
  %1324 = vmatmul.mubr.bf16.gmra.mxu0 %v630
  %v1325 = vpop.f32.mrf.mxu0
  %v1326 = vadd.f32 %v1165, %v1325
  %v1327 = vpop.f32.mrf.mxu0
  %v1328 = vpop.f32.mrf.mxu0
  %v1329 = vadd.f32 %v1168, %v1328
  %v1330 = vpop.f32.mrf.mxu0
  %1331 = vmatprep.mubr.bf16.mxu0 %v637
  %1332 = vmatmul.mubr.bf16.gmra.mxu0 %v636
  %v1333 = vpop.f32.mrf.mxu0
  %v1334 = vadd.f32 %v1173, %v1333
  %v1335 = vpop.f32.mrf.mxu0
  %v1336 = vpop.f32.mrf.mxu0
  %v1337 = vadd.f32 %v1176, %v1336
  %v1338 = vpop.f32.mrf.mxu0
  %1339 = vmatprep.mubr.bf16.mxu0 %v643
  %1340 = vmatmul.mubr.bf16.gmra.mxu0 %v642
  %v1341 = vpop.f32.mrf.mxu0
  %v1342 = vadd.f32 %v1181, %v1341
  %v1343 = vpop.f32.mrf.mxu0
  %v1344 = vpop.f32.mrf.mxu0
  %v1345 = vadd.f32 %v1184, %v1344
  %v1346 = vpop.f32.mrf.mxu0
  %1347 = vmatprep.mubr.bf16.mxu0 %v649
  %1348 = vmatmul.mubr.bf16.gmra.mxu0 %v648
  %v1349 = vpop.f32.mrf.mxu0
  %v1350 = vadd.f32 %v1189, %v1349
  %v1351 = vpop.f32.mrf.mxu0
  %v1352 = vpop.f32.mrf.mxu0
  %v1353 = vadd.f32 %v1192, %v1352
  %v1354 = vpop.f32.mrf.mxu0
  %1355 = vmatprep.mubr.bf16.mxu0 %v655
  %1356 = vmatmul.mubr.bf16.gmra.mxu0 %v654
  %v1357 = vpop.f32.mrf.mxu0
  %v1358 = vadd.f32 %v1197, %v1357
  %v1359 = vpop.f32.mrf.mxu0
  %v1360 = vpop.f32.mrf.mxu0
  %v1361 = vadd.f32 %v1200, %v1360
  %v1362 = vpop.f32.mrf.mxu0
  %1363 = vdwg.mxu0
  %1364 = vmatprep.subr.bf16.mxu0 0
  %1365 = vmatpush1.bf16.msra.mxu0 %v985
  %1366 = vmatprep.subr.bf16.mxu0 0
  %1367 = vmatpush1.bf16.msra.mxu0 %v984
  %1368 = vmatprep.subr.bf16.mxu0 0
  %1369 = vmatpush1.bf16.msra.mxu0 %v983
  %1370 = vmatprep.subr.bf16.mxu0 0
  %1371 = vmatpush1.bf16.msra.mxu0 %v982
  %1372 = vmatprep.subr.bf16.mxu0 0
  %1373 = vmatpush1.bf16.msra.mxu0 %v981
  %1374 = vmatprep.subr.bf16.mxu0 0
  %1375 = vmatpush1.bf16.msra.mxu0 %v980
  %1376 = vmatprep.subr.bf16.mxu0 0
  %1377 = vmatpush1.bf16.msra.mxu0 %v979
  %1378 = vmatprep.subr.bf16.mxu0 0
  %1379 = vmatpush1.bf16.msra.mxu0 %v978
  %1380 = vmatprep.subr.bf16.mxu0 0
  %1381 = vmatpush2.bf16.msra.mxu0 %v993
  %1382 = vmatprep.subr.bf16.mxu0 0
  %1383 = vmatpush2.bf16.msra.mxu0 %v992
  %1384 = vmatprep.subr.bf16.mxu0 0
  %1385 = vmatpush2.bf16.msra.mxu0 %v991
  %1386 = vmatprep.subr.bf16.mxu0 0
  %1387 = vmatpush2.bf16.msra.mxu0 %v990
  %1388 = vmatprep.subr.bf16.mxu0 0
  %1389 = vmatpush2.bf16.msra.mxu0 %v989
  %1390 = vmatprep.subr.bf16.mxu0 0
  %1391 = vmatpush2.bf16.msra.mxu0 %v988
  %1392 = vmatprep.subr.bf16.mxu0 0
  %1393 = vmatpush2.bf16.msra.mxu0 %v987
  %1394 = vmatprep.subr.bf16.mxu0 0
  %1395 = vmatpush2.bf16.msra.mxu0 %v986
  %1396 = vmatprep.mubr.bf16.mxu0 %v567
  %1397 = vmatmul.mubr.bf16.gmra.mxu0 %v566
  %v1398 = vpop.f32.mrf.mxu0
  %v1399 = vadd.f32 %v1238, %v1398
  %v1400 = vpop.f32.mrf.mxu0
  %v1401 = vpop.f32.mrf.mxu0
  %v1402 = vadd.f32 %v1241, %v1401
  %v1403 = vpop.f32.mrf.mxu0
  %1404 = vmatprep.mubr.bf16.mxu0 %v573
  %1405 = vmatmul.mubr.bf16.gmra.mxu0 %v572
  %v1406 = vpop.f32.mrf.mxu0
  %v1407 = vadd.f32 %v1246, %v1406
  %v1408 = vpop.f32.mrf.mxu0
  %v1409 = vpop.f32.mrf.mxu0
  %v1410 = vadd.f32 %v1249, %v1409
  %v1411 = vpop.f32.mrf.mxu0
  %1412 = vmatprep.mubr.bf16.mxu0 %v579
  %1413 = vmatmul.mubr.bf16.gmra.mxu0 %v578
  %v1414 = vpop.f32.mrf.mxu0
  %v1415 = vadd.f32 %v1254, %v1414
  %v1416 = vpop.f32.mrf.mxu0
  %v1417 = vpop.f32.mrf.mxu0
  %v1418 = vadd.f32 %v1257, %v1417
  %v1419 = vpop.f32.mrf.mxu0
  %1420 = vmatprep.mubr.bf16.mxu0 %v585
  %1421 = vmatmul.mubr.bf16.gmra.mxu0 %v584
  %v1422 = vpop.f32.mrf.mxu0
  %v1423 = vadd.f32 %v1262, %v1422
  %v1424 = vpop.f32.mrf.mxu0
  %v1425 = vpop.f32.mrf.mxu0
  %v1426 = vadd.f32 %v1265, %v1425
  %v1427 = vpop.f32.mrf.mxu0
  %1428 = vmatprep.mubr.bf16.mxu0 %v591
  %1429 = vmatmul.mubr.bf16.gmra.mxu0 %v590
  %v1430 = vpop.f32.mrf.mxu0
  %v1431 = vadd.f32 %v1270, %v1430
  %v1432 = vpop.f32.mrf.mxu0
  %v1433 = vpop.f32.mrf.mxu0
  %v1434 = vadd.f32 %v1273, %v1433
  %v1435 = vpop.f32.mrf.mxu0
  %1436 = vmatprep.mubr.bf16.mxu0 %v597
  %1437 = vmatmul.mubr.bf16.gmra.mxu0 %v596
  %v1438 = vpop.f32.mrf.mxu0
  %v1439 = vadd.f32 %v1278, %v1438
  %v1440 = vpop.f32.mrf.mxu0
  %v1441 = vpop.f32.mrf.mxu0
  %v1442 = vadd.f32 %v1281, %v1441
  %v1443 = vpop.f32.mrf.mxu0
  %1444 = vmatprep.mubr.bf16.mxu0 %v603
  %1445 = vmatmul.mubr.bf16.gmra.mxu0 %v602
  %v1446 = vpop.f32.mrf.mxu0
  %v1447 = vadd.f32 %v1286, %v1446
  %v1448 = vpop.f32.mrf.mxu0
  %v1449 = vpop.f32.mrf.mxu0
  %v1450 = vadd.f32 %v1289, %v1449
  %v1451 = vpop.f32.mrf.mxu0
  %1452 = vmatprep.mubr.bf16.mxu0 %v609
  %1453 = vmatmul.mubr.bf16.gmra.mxu0 %v608
  %v1454 = vpop.f32.mrf.mxu0
  %v1455 = vadd.f32 %v1294, %v1454
  %v1456 = vpop.f32.mrf.mxu0
  %v1457 = vpop.f32.mrf.mxu0
  %v1458 = vadd.f32 %v1297, %v1457
  %v1459 = vpop.f32.mrf.mxu0
  %1460 = vmatprep.mubr.bf16.mxu0 %v615
  %1461 = vmatmul.mubr.bf16.gmra.mxu0 %v614
  %v1462 = vpop.f32.mrf.mxu0
  %v1463 = vadd.f32 %v1302, %v1462
  %v1464 = vpop.f32.mrf.mxu0
  %v1465 = vpop.f32.mrf.mxu0
  %v1466 = vadd.f32 %v1305, %v1465
  %v1467 = vpop.f32.mrf.mxu0
  %1468 = vmatprep.mubr.bf16.mxu0 %v621
  %1469 = vmatmul.mubr.bf16.gmra.mxu0 %v620
  %v1470 = vpop.f32.mrf.mxu0
  %v1471 = vadd.f32 %v1310, %v1470
  %v1472 = vpop.f32.mrf.mxu0
  %v1473 = vpop.f32.mrf.mxu0
  %v1474 = vadd.f32 %v1313, %v1473
  %v1475 = vpop.f32.mrf.mxu0
  %1476 = vmatprep.mubr.bf16.mxu0 %v627
  %1477 = vmatmul.mubr.bf16.gmra.mxu0 %v626
  %v1478 = vpop.f32.mrf.mxu0
  %v1479 = vadd.f32 %v1318, %v1478
  %v1480 = vpop.f32.mrf.mxu0
  %v1481 = vpop.f32.mrf.mxu0
  %v1482 = vadd.f32 %v1321, %v1481
  %v1483 = vpop.f32.mrf.mxu0
  %1484 = vmatprep.mubr.bf16.mxu0 %v633
  %1485 = vmatmul.mubr.bf16.gmra.mxu0 %v632
  %v1486 = vpop.f32.mrf.mxu0
  %v1487 = vadd.f32 %v1326, %v1486
  %v1488 = vpop.f32.mrf.mxu0
  %v1489 = vpop.f32.mrf.mxu0
  %v1490 = vadd.f32 %v1329, %v1489
  %v1491 = vpop.f32.mrf.mxu0
  %1492 = vmatprep.mubr.bf16.mxu0 %v639
  %1493 = vmatmul.mubr.bf16.gmra.mxu0 %v638
  %v1494 = vpop.f32.mrf.mxu0
  %v1495 = vadd.f32 %v1334, %v1494
  %v1496 = vpop.f32.mrf.mxu0
  %v1497 = vpop.f32.mrf.mxu0
  %v1498 = vadd.f32 %v1337, %v1497
  %v1499 = vpop.f32.mrf.mxu0
  %1500 = vmatprep.mubr.bf16.mxu0 %v645
  %1501 = vmatmul.mubr.bf16.gmra.mxu0 %v644
  %v1502 = vpop.f32.mrf.mxu0
  %v1503 = vadd.f32 %v1342, %v1502
  %v1504 = vpop.f32.mrf.mxu0
  %v1505 = vpop.f32.mrf.mxu0
  %v1506 = vadd.f32 %v1345, %v1505
  %v1507 = vpop.f32.mrf.mxu0
  %1508 = vmatprep.mubr.bf16.mxu0 %v651
  %1509 = vmatmul.mubr.bf16.gmra.mxu0 %v650
  %v1510 = vpop.f32.mrf.mxu0
  %v1511 = vadd.f32 %v1350, %v1510
  %v1512 = vpop.f32.mrf.mxu0
  %v1513 = vpop.f32.mrf.mxu0
  %v1514 = vadd.f32 %v1353, %v1513
  %v1515 = vpop.f32.mrf.mxu0
  %1516 = vmatprep.mubr.bf16.mxu0 %v657
  %1517 = vmatmul.mubr.bf16.gmra.mxu0 %v656
  %v1518 = vpop.f32.mrf.mxu0
  %v1519 = vadd.f32 %v1358, %v1518
  %v1520 = vpop.f32.mrf.mxu0
  %v1521 = vpop.f32.mrf.mxu0
  %v1522 = vadd.f32 %v1361, %v1521
  %v1523 = vpop.f32.mrf.mxu0
  %1524 = vdwg.mxu0
  %v1525 = vadd.f32 %v146, %v1399
  %v1526 = vadd.f32 %v147, %v1402
  %v1527 = vadd.f32 %v148, %v1407
  %v1528 = vadd.f32 %v149, %v1410
  %v1529 = vadd.f32 %v150, %v1415
  %v1530 = vadd.f32 %v151, %v1418
  %v1531 = vadd.f32 %v152, %v1423
  %v1532 = vadd.f32 %v153, %v1426
  %v1533 = vadd.f32 %v154, %v1431
  %v1534 = vadd.f32 %v155, %v1434
  %v1535 = vadd.f32 %v156, %v1439
  %v1536 = vadd.f32 %v157, %v1442
  %v1537 = vadd.f32 %v158, %v1447
  %v1538 = vadd.f32 %v159, %v1450
  %v1539 = vadd.f32 %v160, %v1455
  %v1540 = vadd.f32 %v161, %v1458
  %v1541 = vadd.f32 %v162, %v1463
  %v1542 = vadd.f32 %v163, %v1466
  %v1543 = vadd.f32 %v164, %v1471
  %v1544 = vadd.f32 %v165, %v1474
  %v1545 = vadd.f32 %v166, %v1479
  %v1546 = vadd.f32 %v167, %v1482
  %v1547 = vadd.f32 %v168, %v1487
  %v1548 = vadd.f32 %v169, %v1490
  %v1549 = vadd.f32 %v170, %v1495
  %v1550 = vadd.f32 %v171, %v1498
  %v1551 = vadd.f32 %v172, %v1503
  %v1552 = vadd.f32 %v173, %v1506
  %v1553 = vadd.f32 %v174, %v1511
  %v1554 = vadd.f32 %v175, %v1514
  %v1555 = vadd.f32 %v176, %v1519
  %v1556 = vadd.f32 %v177, %v1522
  %1557 = vst [vmem:[#allocation2] sm:$0xff] %v1525
  %1558 = vst [vmem:[#allocation2 + $0x8] sm:$0xff] %v1526
  %1559 = vst [vmem:[#allocation2 + $0x10] sm:$0xff] %v1527
  %1560 = vst [vmem:[#allocation2 + $0x18] sm:$0xff] %v1528
  %1561 = vst [vmem:[#allocation2 + $0x20] sm:$0xff] %v1529
  %1562 = vst [vmem:[#allocation2 + $0x28] sm:$0xff] %v1530
  %1563 = vst [vmem:[#allocation2 + $0x30] sm:$0xff] %v1531
  %1564 = vst [vmem:[#allocation2 + $0x38] sm:$0xff] %v1532
  %1565 = vst [vmem:[#allocation2 + $0x40] sm:$0xff] %v1533
  %1566 = vst [vmem:[#allocation2 + $0x48] sm:$0xff] %v1534
  %1567 = vst [vmem:[#allocation2 + $0x50] sm:$0xff] %v1535
  %1568 = vst [vmem:[#allocation2 + $0x58] sm:$0xff] %v1536
  %1569 = vst [vmem:[#allocation2 + $0x60] sm:$0xff] %v1537
  %1570 = vst [vmem:[#allocation2 + $0x68] sm:$0xff] %v1538
  %1571 = vst [vmem:[#allocation2 + $0x70] sm:$0xff] %v1539
  %1572 = vst [vmem:[#allocation2 + $0x78] sm:$0xff] %v1540
  %1573 = vst [vmem:[#allocation2 + $0x80] sm:$0xff] %v1541
  %1574 = vst [vmem:[#allocation2 + $0x88] sm:$0xff] %v1542
  %1575 = vst [vmem:[#allocation2 + $0x90] sm:$0xff] %v1543
  %1576 = vst [vmem:[#allocation2 + $0x98] sm:$0xff] %v1544
  %1577 = vst [vmem:[#allocation2 + $0xa0] sm:$0xff] %v1545
  %1578 = vst [vmem:[#allocation2 + $0xa8] sm:$0xff] %v1546
  %1579 = vst [vmem:[#allocation2 + $0xb0] sm:$0xff] %v1547
  %1580 = vst [vmem:[#allocation2 + $0xb8] sm:$0xff] %v1548
  %1581 = vst [vmem:[#allocation2 + $0xc0] sm:$0xff] %v1549
  %1582 = vst [vmem:[#allocation2 + $0xc8] sm:$0xff] %v1550
  %1583 = vst [vmem:[#allocation2 + $0xd0] sm:$0xff] %v1551
  %1584 = vst [vmem:[#allocation2 + $0xd8] sm:$0xff] %v1552
  %1585 = vst [vmem:[#allocation2 + $0xe0] sm:$0xff] %v1553
  %1586 = vst [vmem:[#allocation2 + $0xe8] sm:$0xff] %v1554
  %1587 = vst [vmem:[#allocation2 + $0xf0] sm:$0xff] %v1555
  %1588 = vst [vmem:[#allocation2 + $0xf8] sm:$0xff] %v1556
  // Predicated region
  $region14: #{temporal_video_discriminator_forward.6} parent=0 // pred_check
    %p1589 = pneg %p14
  $region15: #{temporal_video_discriminator_forward.6} parent=0 // pred_check_branch
    %1591 = sbr.rel (%p1589) target = $region17
  $region16: #{temporal_video_discriminator_forward.6} parent=0 // pred_region
    %v1592 = vld [vmem:[#allocation2] sm:$0xff]
    %v1593 = vld [vmem:[#allocation2 + $0x8] sm:$0xff]
    %v1594 = vld [vmem:[#allocation2 + $0x10] sm:$0xff]
    %v1595 = vld [vmem:[#allocation2 + $0x18] sm:$0xff]
    %v1596 = vld [vmem:[#allocation2 + $0x20] sm:$0xff]
    %v1597 = vld [vmem:[#allocation2 + $0x28] sm:$0xff]
    %v1598 = vld [vmem:[#allocation2 + $0x30] sm:$0xff]
    %v1599 = vld [vmem:[#allocation2 + $0x38] sm:$0xff]
    %v1600 = vld [vmem:[#allocation2 + $0x40] sm:$0xff]
    %v1601 = vld [vmem:[#allocation2 + $0x48] sm:$0xff]
    %v1602 = vld [vmem:[#allocation2 + $0x50] sm:$0xff]
    %v1603 = vld [vmem:[#allocation2 + $0x58] sm:$0xff]
    %v1604 = vld [vmem:[#allocation2 + $0x60] sm:$0xff]
    %v1605 = vld [vmem:[#allocation2 + $0x68] sm:$0xff]
    %v1606 = vld [vmem:[#allocation2 + $0x70] sm:$0xff]
    %v1607 = vld [vmem:[#allocation2 + $0x78] sm:$0xff]
    %v1608 = vld [vmem:[#allocation2 + $0x80] sm:$0xff]
    %v1609 = vld [vmem:[#allocation2 + $0x88] sm:$0xff]
    %v1610 = vld [vmem:[#allocation2 + $0x90] sm:$0xff]
    %v1611 = vld [vmem:[#allocation2 + $0x98] sm:$0xff]
    %v1612 = vld [vmem:[#allocation2 + $0xa0] sm:$0xff]
    %v1613 = vld [vmem:[#allocation2 + $0xa8] sm:$0xff]
    %v1614 = vld [vmem:[#allocation2 + $0xb0] sm:$0xff]
    %v1615 = vld [vmem:[#allocation2 + $0xb8] sm:$0xff]
    %v1616 = vld [vmem:[#allocation2 + $0xc0] sm:$0xff]
    %v1617 = vld [vmem:[#allocation2 + $0xc8] sm:$0xff]
    %v1618 = vld [vmem:[#allocation2 + $0xd0] sm:$0xff]
    %v1619 = vld [vmem:[#allocation2 + $0xd8] sm:$0xff]
    %v1620 = vld [vmem:[#allocation2 + $0xe0] sm:$0xff]
    %v1621 = vld [vmem:[#allocation2 + $0xe8] sm:$0xff]
    %v1622 = vld [vmem:[#allocation2 + $0xf0] sm:$0xff]
    %v1623 = vld [vmem:[#allocation2 + $0xf8] sm:$0xff]
    %v1624 = vpack.c.bf16 %v1593, %v1592
    %v1625 = vpack.c.bf16 %v1595, %v1594
    %v1626 = vpack.c.bf16 %v1597, %v1596
    %v1627 = vpack.c.bf16 %v1599, %v1598
    %v1628 = vpack.c.bf16 %v1601, %v1600
    %v1629 = vpack.c.bf16 %v1603, %v1602
    %v1630 = vpack.c.bf16 %v1605, %v1604
    %v1631 = vpack.c.bf16 %v1607, %v1606
    %v1632 = vpack.c.bf16 %v1609, %v1608
    %v1633 = vpack.c.bf16 %v1611, %v1610
    %v1634 = vpack.c.bf16 %v1613, %v1612
    %v1635 = vpack.c.bf16 %v1615, %v1614
    %v1636 = vpack.c.bf16 %v1617, %v1616
    %v1637 = vpack.c.bf16 %v1619, %v1618
    %v1638 = vpack.c.bf16 %v1621, %v1620
    %v1639 = vpack.c.bf16 %v1623, %v1622
    %v1656 = vunpack.c.l.b16 %v1624
    %v1657 = vunpack.c.h.b16 %v1624
    %v1658 = vunpack.c.l.b16 %v1625
    %v1659 = vunpack.c.h.b16 %v1625
    %v1660 = vunpack.c.l.b16 %v1626
    %v1661 = vunpack.c.h.b16 %v1626
    %v1662 = vunpack.c.l.b16 %v1627
    %v1663 = vunpack.c.h.b16 %v1627
    %v1664 = vunpack.c.l.b16 %v1628
    %v1665 = vunpack.c.h.b16 %v1628
    %v1666 = vunpack.c.l.b16 %v1629
    %v1667 = vunpack.c.h.b16 %v1629
    %v1668 = vunpack.c.l.b16 %v1630
    %v1669 = vunpack.c.h.b16 %v1630
    %v1670 = vunpack.c.l.b16 %v1631
    %v1671 = vunpack.c.h.b16 %v1631
    %v1672 = vunpack.c.l.b16 %v1632
    %v1673 = vunpack.c.h.b16 %v1632
    %v1674 = vunpack.c.l.b16 %v1633
    %v1675 = vunpack.c.h.b16 %v1633
    %v1676 = vunpack.c.l.b16 %v1634
    %v1677 = vunpack.c.h.b16 %v1634
    %v1678 = vunpack.c.l.b16 %v1635
    %v1679 = vunpack.c.h.b16 %v1635
    %v1680 = vunpack.c.l.b16 %v1636
    %v1681 = vunpack.c.h.b16 %v1636
    %v1682 = vunpack.c.l.b16 %v1637
    %v1683 = vunpack.c.h.b16 %v1637
    %v1684 = vunpack.c.l.b16 %v1638
    %v1685 = vunpack.c.h.b16 %v1638
    %v1686 = vunpack.c.l.b16 %v1639
    %v1687 = vunpack.c.h.b16 %v1639
    %v1688 = vpack.c.b16 %v1656, %v1656
    %v1689 = vpack.c.b16 %v1657, %v1657
    %v1690 = vpack.c.b16 %v1658, %v1658
    %v1691 = vpack.c.b16 %v1659, %v1659
    %v1692 = vpack.c.b16 %v1660, %v1660
    %v1693 = vpack.c.b16 %v1661, %v1661
    %v1694 = vpack.c.b16 %v1662, %v1662
    %v1695 = vpack.c.b16 %v1663, %v1663
    %v1696 = vpack.c.b16 %v1664, %v1664
    %v1697 = vpack.c.b16 %v1665, %v1665
    %v1698 = vpack.c.b16 %v1666, %v1666
    %v1699 = vpack.c.b16 %v1667, %v1667
    %v1700 = vpack.c.b16 %v1668, %v1668
    %v1701 = vpack.c.b16 %v1669, %v1669
    %v1702 = vpack.c.b16 %v1670, %v1670
    %v1703 = vpack.c.b16 %v1671, %v1671
    %v1704 = vpack.c.b16 %v1672, %v1672
    %v1705 = vpack.c.b16 %v1673, %v1673
    %v1706 = vpack.c.b16 %v1674, %v1674
    %v1707 = vpack.c.b16 %v1675, %v1675
    %v1708 = vpack.c.b16 %v1676, %v1676
    %v1709 = vpack.c.b16 %v1677, %v1677
    %v1710 = vpack.c.b16 %v1678, %v1678
    %v1711 = vpack.c.b16 %v1679, %v1679
    %v1712 = vpack.c.b16 %v1680, %v1680
    %v1713 = vpack.c.b16 %v1681, %v1681
    %v1714 = vpack.c.b16 %v1682, %v1682
    %v1715 = vpack.c.b16 %v1683, %v1683
    %v1716 = vpack.c.b16 %v1684, %v1684
    %v1717 = vpack.c.b16 %v1685, %v1685
    %v1718 = vpack.c.b16 %v1686, %v1686
    %v1719 = vpack.c.b16 %v1687, %v1687
    %1752 = vst [vmem:[%s2] sm:$0xf] %v1688
    %1753 = vst [vmem:[%s2 + $0x4] sm:$0xf] %v1689
    %1754 = vst [vmem:[%s2 + $0x8] sm:$0xf] %v1690
    %1755 = vst [vmem:[%s2 + $0xc] sm:$0xf] %v1691
    %1756 = vst [vmem:[%s2 + $0x10] sm:$0xf] %v1692
    %1757 = vst [vmem:[%s2 + $0x14] sm:$0xf] %v1693
    %1758 = vst [vmem:[%s2 + $0x18] sm:$0xf] %v1694
    %1759 = vst [vmem:[%s2 + $0x1c] sm:$0xf] %v1695
    %1760 = vst [vmem:[%s2 + $0x20] sm:$0xf] %v1696
    %1761 = vst [vmem:[%s2 + $0x24] sm:$0xf] %v1697
    %1762 = vst [vmem:[%s2 + $0x28] sm:$0xf] %v1698
    %1763 = vst [vmem:[%s2 + $0x2c] sm:$0xf] %v1699
    %1764 = vst [vmem:[%s2 + $0x30] sm:$0xf] %v1700
    %1765 = vst [vmem:[%s2 + $0x34] sm:$0xf] %v1701
    %1766 = vst [vmem:[%s2 + $0x38] sm:$0xf] %v1702
    %1767 = vst [vmem:[%s2 + $0x3c] sm:$0xf] %v1703
    %1768 = vst [vmem:[%s2 + $0x40] sm:$0xf] %v1704
    %1769 = vst [vmem:[%s2 + $0x44] sm:$0xf] %v1705
    %1770 = vst [vmem:[%s2 + $0x48] sm:$0xf] %v1706
    %1771 = vst [vmem:[%s2 + $0x4c] sm:$0xf] %v1707
    %1772 = vst [vmem:[%s2 + $0x50] sm:$0xf] %v1708
    %1773 = vst [vmem:[%s2 + $0x54] sm:$0xf] %v1709
    %1774 = vst [vmem:[%s2 + $0x58] sm:$0xf] %v1710
    %1775 = vst [vmem:[%s2 + $0x5c] sm:$0xf] %v1711
    %1776 = vst [vmem:[%s2 + $0x60] sm:$0xf] %v1712
    %1777 = vst [vmem:[%s2 + $0x64] sm:$0xf] %v1713
    %1778 = vst [vmem:[%s2 + $0x68] sm:$0xf] %v1714
    %1779 = vst [vmem:[%s2 + $0x6c] sm:$0xf] %v1715
    %1780 = vst [vmem:[%s2 + $0x70] sm:$0xf] %v1716
    %1781 = vst [vmem:[%s2 + $0x74] sm:$0xf] %v1717
    %1782 = vst [vmem:[%s2 + $0x78] sm:$0xf] %v1718
    %1783 = vst [vmem:[%s2 + $0x7c] sm:$0xf] %v1719
    %v1784 = vadd.f32 %v1592, %v1593
    %v1785 = vadd.f32 %v1784, %v1594
    %v1786 = vadd.f32 %v1785, %v1595
    %v1787 = vadd.f32 %v1786, %v1596
    %v1788 = vadd.f32 %v1787, %v1597
    %v1789 = vadd.f32 %v1788, %v1598
    %v1790 = vadd.f32 %v1789, %v1599
    %v1791 = vadd.f32 %v1790, %v1600
    %v1792 = vadd.f32 %v1791, %v1601
    %v1793 = vadd.f32 %v1792, %v1602
    %v1794 = vadd.f32 %v1793, %v1603
    %v1795 = vadd.f32 %v1794, %v1604
    %v1796 = vadd.f32 %v1795, %v1605
    %v1797 = vadd.f32 %v1796, %v1606
    %v1798 = vadd.f32 %v1797, %v1607
    %v1799 = vadd.f32 %v1798, %v1608
    %v1800 = vadd.f32 %v1799, %v1609
    %v1801 = vadd.f32 %v1800, %v1610
    %v1802 = vadd.f32 %v1801, %v1611
    %v1803 = vadd.f32 %v1802, %v1612
    %v1804 = vadd.f32 %v1803, %v1613
    %v1805 = vadd.f32 %v1804, %v1614
    %v1806 = vadd.f32 %v1805, %v1615
    %v1807 = vadd.f32 %v1806, %v1616
    %v1808 = vadd.f32 %v1807, %v1617
    %v1809 = vadd.f32 %v1808, %v1618
    %v1810 = vadd.f32 %v1809, %v1619
    %v1811 = vadd.f32 %v1810, %v1620
    %v1812 = vadd.f32 %v1811, %v1621
    %v1813 = vadd.f32 %v1812, %v1622
    %v1814 = vadd.f32 %v1813, %v1623
    %v1815 = vrot.slane %v1814, 4
    %v1816 = vadd.f32 %v1814, %v1815
    %v1817 = vrot.slane %v1816, 2
    %v1818 = vadd.f32 %v1816, %v1817
    %v1819 = vrot.slane %v1818, 1
    %v1820 = vadd.f32 %v1818, %v1819
    %v1821 = vmul.f32 %v1592, %v1592
    %v1822 = vmul.f32 %v1593, %v1593
    %v1823 = vmul.f32 %v1594, %v1594
    %v1824 = vmul.f32 %v1595, %v1595
    %v1825 = vmul.f32 %v1596, %v1596
    %v1826 = vmul.f32 %v1597, %v1597
    %v1827 = vmul.f32 %v1598, %v1598
    %v1828 = vmul.f32 %v1599, %v1599
    %v1829 = vmul.f32 %v1600, %v1600
    %v1830 = vmul.f32 %v1601, %v1601
    %v1831 = vmul.f32 %v1602, %v1602
    %v1832 = vmul.f32 %v1603, %v1603
    %v1833 = vmul.f32 %v1604, %v1604
    %v1834 = vmul.f32 %v1605, %v1605
    %v1835 = vmul.f32 %v1606, %v1606
    %v1836 = vmul.f32 %v1607, %v1607
    %v1837 = vmul.f32 %v1608, %v1608
    %v1838 = vmul.f32 %v1609, %v1609
    %v1839 = vmul.f32 %v1610, %v1610
    %v1840 = vmul.f32 %v1611, %v1611
    %v1841 = vmul.f32 %v1612, %v1612
    %v1842 = vmul.f32 %v1613, %v1613
    %v1843 = vmul.f32 %v1614, %v1614
    %v1844 = vmul.f32 %v1615, %v1615
    %v1845 = vmul.f32 %v1616, %v1616
    %v1846 = vmul.f32 %v1617, %v1617
    %v1847 = vmul.f32 %v1618, %v1618
    %v1848 = vmul.f32 %v1619, %v1619
    %v1849 = vmul.f32 %v1620, %v1620
    %v1850 = vmul.f32 %v1621, %v1621
    %v1851 = vmul.f32 %v1622, %v1622
    %v1852 = vmul.f32 %v1623, %v1623
    %v1853 = vadd.f32 %v1821, %v1822
    %v1854 = vadd.f32 %v1853, %v1823
    %v1855 = vadd.f32 %v1854, %v1824
    %v1856 = vadd.f32 %v1855, %v1825
    %v1857 = vadd.f32 %v1856, %v1826
    %v1858 = vadd.f32 %v1857, %v1827
    %v1859 = vadd.f32 %v1858, %v1828
    %v1860 = vadd.f32 %v1859, %v1829
    %v1861 = vadd.f32 %v1860, %v1830
    %v1862 = vadd.f32 %v1861, %v1831
    %v1863 = vadd.f32 %v1862, %v1832
    %v1864 = vadd.f32 %v1863, %v1833
    %v1865 = vadd.f32 %v1864, %v1834
    %v1866 = vadd.f32 %v1865, %v1835
    %v1867 = vadd.f32 %v1866, %v1836
    %v1868 = vadd.f32 %v1867, %v1837
    %v1869 = vadd.f32 %v1868, %v1838
    %v1870 = vadd.f32 %v1869, %v1839
    %v1871 = vadd.f32 %v1870, %v1840
    %v1872 = vadd.f32 %v1871, %v1841
    %v1873 = vadd.f32 %v1872, %v1842
    %v1874 = vadd.f32 %v1873, %v1843
    %v1875 = vadd.f32 %v1874, %v1844
    %v1876 = vadd.f32 %v1875, %v1845
    %v1877 = vadd.f32 %v1876, %v1846
    %v1878 = vadd.f32 %v1877, %v1847
    %v1879 = vadd.f32 %v1878, %v1848
    %v1880 = vadd.f32 %v1879, %v1849
    %v1881 = vadd.f32 %v1880, %v1850
    %v1882 = vadd.f32 %v1881, %v1851
    %v1883 = vadd.f32 %v1882, %v1852
    %v1884 = vrot.slane %v1883, 4
    %v1885 = vadd.f32 %v1883, %v1884
    %v1886 = vrot.slane %v1885, 2
    %v1887 = vadd.f32 %v1885, %v1886
    %v1888 = vrot.slane %v1887, 1
    %v1889 = vadd.f32 %v1887, %v1888
    %vm1890 = vcmask 1040384
    %v1891 = vsel %vm1890, %v1820, %v1889
    %1892 = vst [vmem:[%s3] sm:$0x3] %v1891
  $region17: #{temporal_video_discriminator_forward.6} parent=0 // pred_fallthru
    _
  // Predicated region
  $region18: #{temporal_video_discriminator_forward.6} parent=0 // pred_check
    _
  $region19: #{temporal_video_discriminator_forward.6} parent=0 // pred_check_branch
    %1894 = sbr.rel (0) target = $region21
  $region20: #{temporal_video_discriminator_forward.6} parent=0 // pred_region
    _
  $region21: #{temporal_video_discriminator_forward.6} parent=0 // pred_fallthru
    _
  // Predicated region
  $region22: #{temporal_video_discriminator_forward.6} parent=0 // pred_check
    _
  $region23: #{temporal_video_discriminator_forward.6} parent=0 // pred_check_branch
    %1896 = sbr.rel (0) target = $region25
  $region24: #{temporal_video_discriminator_forward.6} parent=0 // pred_region
    _
  $region25: #{temporal_video_discriminator_forward.6} parent=0 // pred_fallthru
    _
  // Predicated region
  $region26: #{temporal_video_discriminator_forward.6} parent=0 // pred_check
    _
  $region27: #{temporal_video_discriminator_forward.6} parent=0 // pred_check_branch
    %1898 = sbr.rel (0) target = $region29
  $region28: #{temporal_video_discriminator_forward.6} parent=0 // pred_region
    _
  $region29: #{temporal_video_discriminator_forward.6} parent=0 // pred_fallthru
    _
  // Predicated region
  $region30: #{temporal_video_discriminator_forward.6} parent=0 // pred_check
    _
  $region31: #{temporal_video_discriminator_forward.6} parent=0 // pred_check_branch
    %1900 = sbr.rel (0) target = $region33
  $region32: #{temporal_video_discriminator_forward.6} parent=0 // pred_region
    _
  $region33: #{temporal_video_discriminator_forward.6} parent=0 // pred_fallthru
    _

</llo_original>
